<compile_context>
chip_gen: v5e
topology: v5e:2x2
jax: 0.10.0
libtpu: 0.0.40
codegen_flags: <defaults>
</compile_context>

<pallas_src>
import functools

import jax
import jax.numpy as jnp
from jax.experimental import pallas as pl
from jax.experimental.pallas import tpu as pltpu

EPS = 1e-5
SLOPE = 0.2
_COUT_PAD = 128  # lane padding for the final conv's output channels


def _vmem():
    return pl.BlockSpec(memory_space=pltpu.MemorySpace.VMEM)


# ----------------------------------------------------------------------------
# Fused generator kernel
# ----------------------------------------------------------------------------
def _make_generator_kernel(B, s, c0, ngf, nc, img_size):
    HW = img_size * img_size

    def upsample2x(x2, b, h, w, c):
        # nearest 2x upsample on row-major rows (b, h, w) -> rows (b, 2h, 2w)
        t = jnp.concatenate([x2[:, None, :], x2[:, None, :]], axis=1)       # (bhw, 2, c)
        t = t.reshape(b * h * w * 2, c)                                     # rows (b,h,2w)
        t = t.reshape(b * h, 2 * w, c)
        t = jnp.concatenate([t[:, None, :, :], t[:, None, :, :]], axis=1)   # (bh, 2, 2w, c)
        return t.reshape(b * h * 2 * 2 * w, c)                              # rows (b,2h,2w)

    def conv3x3(x2, b, h, w, cin, w_flat):
        # 3x3 / stride 1 / pad 1 conv as ONE im2col matmul.
        # x2: (b*h*w, cin) rows ordered (b, h, w); w_flat: (9*cin, cout),
        # rows ordered (dy, dx, cin) -- matches the tap concatenation below.
        x4 = x2.reshape(b, h, w, cin)
        zr = jnp.zeros((b, 1, w, cin), jnp.float32)
        xp = jnp.concatenate([zr, x4, zr], axis=1)            # (b, h+2, w, cin)
        zc = jnp.zeros((b, h + 2, 1, cin), jnp.float32)
        xp = jnp.concatenate([zc, xp, zc], axis=2)            # (b, h+2, w+2, cin)
        taps = [xp[:, dy:dy + h, dx:dx + w, :]
                for dy in range(3) for dx in range(3)]        # 9 x (b, h, w, cin)
        patch = jnp.concatenate(taps, axis=3)                 # (b, h, w, 9*cin)
        patch = patch.reshape(b * h * w, 9 * cin)
        return jnp.dot(patch, w_flat, preferred_element_type=jnp.float32)

    def batchnorm(x2, g, bt):
        # training-mode BN (biased variance), single-pass statistics
        inv_n = 1.0 / x2.shape[0]
        mean = jnp.sum(x2, axis=0, keepdims=True) * inv_n
        ex2 = jnp.sum(x2 * x2, axis=0, keepdims=True) * inv_n
        var = jnp.maximum(ex2 - mean * mean, 0.0)
        scale = jax.lax.rsqrt(var + EPS) * g
        return (x2 - mean) * scale + bt

    def lrelu(x):
        return jnp.maximum(x, SLOPE * x)

    def kernel(z_ref, l1w_ref, l1b_ref, g0_ref, b0_ref,
               w1_ref, g1_ref, b1_ref, w2_ref, g2_ref, b2_ref,
               w3_ref, b3_ref, o_ref):
        # ---- Linear (weight columns pre-permuted to (h, w, c) ordering) ----
        h0 = jnp.dot(z_ref[...], l1w_ref[...],
                     preferred_element_type=jnp.float32) + l1b_ref[...]     # (B, s*s*c0)
        # split (B, s*s*c0) into rows (b, h, w) x channels c  (no minor-dim reshape)
        pieces = [h0[:, None, p * c0:(p + 1) * c0] for p in range(s * s)]
        a0 = jnp.concatenate(pieces, axis=1).reshape(B * s * s, c0)         # (B*s*s, c0)
        # ---- BatchNorm2d(c0) ----
        a0 = batchnorm(a0, g0_ref[...], b0_ref[...])
        # ---- Upsample + Conv(c0 -> c0, no bias) + BN + LeakyReLU ----
        u1 = upsample2x(a0, B, s, s, c0)                                    # (B*2s*2s, c0)
        c1 = conv3x3(u1, B, 2 * s, 2 * s, c0, w1_ref[...])
        c1 = lrelu(batchnorm(c1, g1_ref[...], b1_ref[...]))
        # ---- Upsample + Conv(c0 -> ngf, no bias) + BN + LeakyReLU ----
        u2 = upsample2x(c1, B, 2 * s, 2 * s, c0)                            # (B*HW, c0)
        c2 = conv3x3(u2, B, img_size, img_size, c0, w2_ref[...])
        c2 = lrelu(batchnorm(c2, g2_ref[...], b2_ref[...]))
        # ---- Conv(ngf -> nc, +bias) + Sigmoid, lane-dense output ----
        c3 = conv3x3(c2, B, img_size, img_size, ngf, w3_ref[...])           # (B*HW, 128)
        c3 = c3 + b3_ref[...]
        yt = c3.T                                                           # (128, B*HW) aligned transpose
        y = jax.nn.sigmoid(yt[0:nc, :])                                     # (nc, B*HW)
        for b in range(B):                                                  # tiny static loop
            o_ref[b * nc:(b + 1) * nc, :] = y[:, b * HW:(b + 1) * HW]

    return kernel


# ----------------------------------------------------------------------------
# Forward wrapper (single fused pallas_call; output reshape is free)
# ----------------------------------------------------------------------------
def generator_forward(z, kp, *, nz, ngf, img_size, nc):
    del nz  # shape is carried by the arrays
    B = z.shape[0]
    s = img_size // 4
    c0 = ngf * 2
    kernel = _make_generator_kernel(B, s, c0, ngf, nc, img_size)
    out = pl.pallas_call(
        kernel,
        out_shape=jax.ShapeDtypeStruct((B * nc, img_size * img_size), jnp.float32),
        in_specs=[_vmem()] * 13,
        out_specs=_vmem(),
    )(z, kp["l1_w"], kp["l1_b"], kp["bn0_g"], kp["bn0_b"],
      kp["conv1_w"], kp["bn1_g"], kp["bn1_b"],
      kp["conv2_w"], kp["bn2_g"], kp["bn2_b"],
      kp["conv3_w"], kp["conv3_b"])
    return out.reshape(B, nc, img_size, img_size)


# ----------------------------------------------------------------------------
# Parameters: PyTorch-layout init + one-time repacking for the kernel
# ----------------------------------------------------------------------------
def init_params_torch_layout(key, *, nz, ngf, img_size, nc):
    s = img_size // 4
    c0 = ngf * 2
    l1_out = c0 * s * s
    ks = jax.random.split(key, 6)

    def nrm(k, shape, scale=0.05):
        return (scale * jax.random.normal(k, shape)).astype(jnp.float32)

    return {
        "l1_w": nrm(ks[0], (l1_out, nz)),          # nn.Linear weight (out, in)
        "l1_b": nrm(ks[1], (l1_out,)),
        "bn0_g": jnp.ones((c0,), jnp.float32), "bn0_b": jnp.zeros((c0,), jnp.float32),
        "conv1_w": nrm(ks[2], (c0, c0, 3, 3)),     # nn.Conv2d weight (Cout, Cin, 3, 3)
        "bn1_g": jnp.ones((c0,), jnp.float32), "bn1_b": jnp.zeros((c0,), jnp.float32),
        "conv2_w": nrm(ks[3], (ngf, c0, 3, 3)),
        "bn2_g": jnp.ones((ngf,), jnp.float32), "bn2_b": jnp.zeros((ngf,), jnp.float32),
        "conv3_w": nrm(ks[4], (nc, ngf, 3, 3)),
        "conv3_b": nrm(ks[5], (nc,)),
    }


def prepare_params(p, *, nz, ngf, img_size, nc):
    """One-time repack of PyTorch-layout params into the kernel's layout."""
    s = img_size // 4
    c0 = ngf * 2

    def conv_w(w):  # (Cout, Cin, 3, 3) -> (9*Cin, Cout), rows ordered (dy, dx, cin)
        cout, cin = w.shape[0], w.shape[1]
        return jnp.transpose(w, (2, 3, 1, 0)).reshape(9 * cin, cout)

    # Linear: permute columns so its output is already (h, w, c)-ordered NHWC.
    l1_w = jnp.transpose(p["l1_w"])                                  # (nz, c0*s*s), cols (c,h,w)
    l1_w = l1_w.reshape(nz, c0, s, s).transpose(0, 2, 3, 1).reshape(nz, s * s * c0)
    l1_b = p["l1_b"].reshape(c0, s, s).transpose(1, 2, 0).reshape(1, s * s * c0)

    # Final conv: lane-pad Cout (nc -> 128) with zeros for a lane-dense epilogue.
    w3 = conv_w(p["conv3_w"])                                        # (9*ngf, nc)
    w3p = jnp.zeros((w3.shape[0], _COUT_PAD), jnp.float32).at[:, :nc].set(w3)
    b3p = jnp.zeros((1, _COUT_PAD), jnp.float32).at[0, :nc].set(p["conv3_b"])

    return {
        "l1_w": l1_w, "l1_b": l1_b,
        "bn0_g": p["bn0_g"].reshape(1, c0), "bn0_b": p["bn0_b"].reshape(1, c0),
        "conv1_w": conv_w(p["conv1_w"]),
        "bn1_g": p["bn1_g"].reshape(1, c0), "bn1_b": p["bn1_b"].reshape(1, c0),
        "conv2_w": conv_w(p["conv2_w"]),
        "bn2_g": p["bn2_g"].reshape(1, ngf), "bn2_b": p["bn2_b"].reshape(1, ngf),
        "conv3_w": w3p, "conv3_b": b3p,
    }


# ----------------------------------------------------------------------------
# Pure-JAX reference (PyTorch semantics, NCHW) for a sanity check
# ----------------------------------------------------------------------------
def reference_forward(z, tp, *, nz, ngf, img_size, nc):
    del nz
    s = img_size // 4
    c0 = ngf * 2
    B = z.shape[0]
    hp = jax.lax.Precision.HIGHEST

    def bn(x, g, b):
        mean = x.mean(axis=(0, 2, 3), keepdims=True)
        var = ((x - mean) ** 2).mean(axis=(0, 2, 3), keepdims=True)
        return (x - mean) / jnp.sqrt(var + EPS) * g.reshape(1, -1, 1, 1) + b.reshape(1, -1, 1, 1)

    def up(x):
        return jnp.repeat(jnp.repeat(x, 2, axis=2), 2, axis=3)

    def conv(x, w, bias=None):
        y = jax.lax.conv_general_dilated(
            x, w, window_strides=(1, 1), padding=((1, 1), (1, 1)),
            dimension_numbers=("NCHW", "OIHW", "NCHW"), precision=hp)
        if bias is not None:
            y = y + bias.reshape(1, -1, 1, 1)
        return y

    x = (jnp.dot(z, tp["l1_w"].T, precision=hp) + tp["l1_b"]).reshape(B, c0, s, s)
    x = bn(x, tp["bn0_g"], tp["bn0_b"])
    x = up(x)
    x = conv(x, tp["conv1_w"])
    x = bn(x, tp["bn1_g"], tp["bn1_b"])
    x = jnp.maximum(x, SLOPE * x)
    x = up(x)
    x = conv(x, tp["conv2_w"])
    x = bn(x, tp["bn2_g"], tp["bn2_b"])
    x = jnp.maximum(x, SLOPE * x)
    x = conv(x, tp["conv3_w"], tp["conv3_b"])
    return jax.nn.sigmoid(x)


# ----------------------------------------------------------------------------
if __name__ == "__main__":
    NZ, NGF, IMG_SIZE, NC, BATCH = 32, 16, 16, 3, 2

    key = jax.random.PRNGKey(0)
    k_param, k_z = jax.random.split(key)
    torch_params = init_params_torch_layout(k_param, nz=NZ, ngf=NGF,
                                            img_size=IMG_SIZE, nc=NC)
    kparams = prepare_params(torch_params, nz=NZ, ngf=NGF,
                             img_size=IMG_SIZE, nc=NC)
    z = jax.random.normal(k_z, (BATCH, NZ), dtype=jnp.float32)

    fwd = jax.jit(functools.partial(generator_forward, nz=NZ, ngf=NGF,
                                    img_size=IMG_SIZE, nc=NC))
    img = fwd(z, kparams)
    jax.block_until_ready(img)

    assert img.shape == (BATCH, NC, IMG_SIZE, IMG_SIZE), img.shape
    assert bool(jnp.all(jnp.isfinite(img)))
    assert bool(jnp.all((img >= 0.0) & (img <= 1.0)))     # sigmoid range

    ref = reference_forward(z, torch_params, nz=NZ, ngf=NGF,
                            img_size=IMG_SIZE, nc=NC)
    max_err = float(jnp.max(jnp.abs(img - ref)))
    assert max_err < 3e-2, f"mismatch vs reference: {max_err}"

    print("KERNEL_OK")
</pallas_src>

<mosaic_0001>
module attributes {stable_mosaic.version = 11 : i64} {
  func.func @kernel(%arg0: memref<2x32xf32, #tpu.memory_space<vmem>>, %arg1: memref<32x512xf32, #tpu.memory_space<vmem>>, %arg2: memref<1x512xf32, #tpu.memory_space<vmem>>, %arg3: memref<1x32xf32, #tpu.memory_space<vmem>>, %arg4: memref<1x32xf32, #tpu.memory_space<vmem>>, %arg5: memref<288x32xf32, #tpu.memory_space<vmem>>, %arg6: memref<1x32xf32, #tpu.memory_space<vmem>>, %arg7: memref<1x32xf32, #tpu.memory_space<vmem>>, %arg8: memref<288x16xf32, #tpu.memory_space<vmem>>, %arg9: memref<1x16xf32, #tpu.memory_space<vmem>>, %arg10: memref<1x16xf32, #tpu.memory_space<vmem>>, %arg11: memref<144x128xf32, #tpu.memory_space<vmem>>, %arg12: memref<1x128xf32, #tpu.memory_space<vmem>>, %arg13: memref<6x256xf32, #tpu.memory_space<vmem>>) attributes {dimension_semantics = [], scalar_prefetch = 0 : i64, scratch_operands = 0 : i64, tpu.core_type = #tpu.core_type<tc>} {
    %c0 = arith.constant 0 : index
    %c0_0 = arith.constant 0 : index
    %0 = vector.load %arg0[%c0, %c0_0] : memref<2x32xf32, #tpu.memory_space<vmem>>, vector<2x32xf32>
    %c0_1 = arith.constant 0 : index
    %c0_2 = arith.constant 0 : index
    %1 = vector.load %arg1[%c0_1, %c0_2] : memref<32x512xf32, #tpu.memory_space<vmem>>, vector<32x512xf32>
    %cst = arith.constant dense<0.000000e+00> : vector<2x512xf32>
    %2 = tpu.matmul %0, %1, %cst {dimension_numbers = #tpu.dot_dimension_numbers<[1], [0], [0], [1], [0, 0, 1, 1], [], []>} : vector<2x32xf32>, vector<32x512xf32>, vector<2x512xf32> -> vector<2x512xf32>
    %c0_3 = arith.constant 0 : index
    %c0_4 = arith.constant 0 : index
    %3 = vector.load %arg2[%c0_3, %c0_4] : memref<1x512xf32, #tpu.memory_space<vmem>>, vector<1x512xf32>
    %4 = vector.broadcast %3 : vector<1x512xf32> to vector<2x512xf32>
    %5 = arith.addf %2, %4 : vector<2x512xf32>
    %6 = vector.extract_strided_slice %5 {offsets = [0, 0], sizes = [2, 32], strides = [1, 1]} : vector<2x512xf32> to vector<2x32xf32>
    %7 = vector.shape_cast %6 : vector<2x32xf32> to vector<2x1x32xf32>
    %8 = vector.extract_strided_slice %5 {offsets = [0, 32], sizes = [2, 32], strides = [1, 1]} : vector<2x512xf32> to vector<2x32xf32>
    %9 = vector.shape_cast %8 : vector<2x32xf32> to vector<2x1x32xf32>
    %10 = vector.extract_strided_slice %5 {offsets = [0, 64], sizes = [2, 32], strides = [1, 1]} : vector<2x512xf32> to vector<2x32xf32>
    %11 = vector.shape_cast %10 : vector<2x32xf32> to vector<2x1x32xf32>
    %12 = vector.extract_strided_slice %5 {offsets = [0, 96], sizes = [2, 32], strides = [1, 1]} : vector<2x512xf32> to vector<2x32xf32>
    %13 = vector.shape_cast %12 : vector<2x32xf32> to vector<2x1x32xf32>
    %14 = vector.extract_strided_slice %5 {offsets = [0, 128], sizes = [2, 32], strides = [1, 1]} : vector<2x512xf32> to vector<2x32xf32>
    %15 = vector.shape_cast %14 : vector<2x32xf32> to vector<2x1x32xf32>
    %16 = vector.extract_strided_slice %5 {offsets = [0, 160], sizes = [2, 32], strides = [1, 1]} : vector<2x512xf32> to vector<2x32xf32>
    %17 = vector.shape_cast %16 : vector<2x32xf32> to vector<2x1x32xf32>
    %18 = vector.extract_strided_slice %5 {offsets = [0, 192], sizes = [2, 32], strides = [1, 1]} : vector<2x512xf32> to vector<2x32xf32>
    %19 = vector.shape_cast %18 : vector<2x32xf32> to vector<2x1x32xf32>
    %20 = vector.extract_strided_slice %5 {offsets = [0, 224], sizes = [2, 32], strides = [1, 1]} : vector<2x512xf32> to vector<2x32xf32>
    %21 = vector.shape_cast %20 : vector<2x32xf32> to vector<2x1x32xf32>
    %22 = vector.extract_strided_slice %5 {offsets = [0, 256], sizes = [2, 32], strides = [1, 1]} : vector<2x512xf32> to vector<2x32xf32>
    %23 = vector.shape_cast %22 : vector<2x32xf32> to vector<2x1x32xf32>
    %24 = vector.extract_strided_slice %5 {offsets = [0, 288], sizes = [2, 32], strides = [1, 1]} : vector<2x512xf32> to vector<2x32xf32>
    %25 = vector.shape_cast %24 : vector<2x32xf32> to vector<2x1x32xf32>
    %26 = vector.extract_strided_slice %5 {offsets = [0, 320], sizes = [2, 32], strides = [1, 1]} : vector<2x512xf32> to vector<2x32xf32>
    %27 = vector.shape_cast %26 : vector<2x32xf32> to vector<2x1x32xf32>
    %28 = vector.extract_strided_slice %5 {offsets = [0, 352], sizes = [2, 32], strides = [1, 1]} : vector<2x512xf32> to vector<2x32xf32>
    %29 = vector.shape_cast %28 : vector<2x32xf32> to vector<2x1x32xf32>
    %30 = vector.extract_strided_slice %5 {offsets = [0, 384], sizes = [2, 32], strides = [1, 1]} : vector<2x512xf32> to vector<2x32xf32>
    %31 = vector.shape_cast %30 : vector<2x32xf32> to vector<2x1x32xf32>
    %32 = vector.extract_strided_slice %5 {offsets = [0, 416], sizes = [2, 32], strides = [1, 1]} : vector<2x512xf32> to vector<2x32xf32>
    %33 = vector.shape_cast %32 : vector<2x32xf32> to vector<2x1x32xf32>
    %34 = vector.extract_strided_slice %5 {offsets = [0, 448], sizes = [2, 32], strides = [1, 1]} : vector<2x512xf32> to vector<2x32xf32>
    %35 = vector.shape_cast %34 : vector<2x32xf32> to vector<2x1x32xf32>
    %36 = vector.extract_strided_slice %5 {offsets = [0, 480], sizes = [2, 32], strides = [1, 1]} : vector<2x512xf32> to vector<2x32xf32>
    %37 = vector.shape_cast %36 : vector<2x32xf32> to vector<2x1x32xf32>
    %38 = tpu.concatenate %7, %9, %11, %13, %15, %17, %19, %21, %23, %25, %27, %29, %31, %33, %35, %37 in 1 : vector<2x1x32xf32>, vector<2x1x32xf32>, vector<2x1x32xf32>, vector<2x1x32xf32>, vector<2x1x32xf32>, vector<2x1x32xf32>, vector<2x1x32xf32>, vector<2x1x32xf32>, vector<2x1x32xf32>, vector<2x1x32xf32>, vector<2x1x32xf32>, vector<2x1x32xf32>, vector<2x1x32xf32>, vector<2x1x32xf32>, vector<2x1x32xf32>, vector<2x1x32xf32> -> vector<2x16x32xf32>
    %39 = vector.shape_cast %38 : vector<2x16x32xf32> to vector<32x32xf32>
    %c0_5 = arith.constant 0 : index
    %c0_6 = arith.constant 0 : index
    %40 = vector.load %arg3[%c0_5, %c0_6] : memref<1x32xf32, #tpu.memory_space<vmem>>, vector<1x32xf32>
    %c0_7 = arith.constant 0 : index
    %c0_8 = arith.constant 0 : index
    %41 = vector.load %arg4[%c0_7, %c0_8] : memref<1x32xf32, #tpu.memory_space<vmem>>, vector<1x32xf32>
    %cst_9 = arith.constant dense<0.000000e+00> : vector<32xf32>
    %42 = vector.multi_reduction <add>, %39, %cst_9 [0] : vector<32x32xf32> to vector<32xf32>
    %43 = vector.shape_cast %42 : vector<32xf32> to vector<1x32xf32>
    %cst_10 = arith.constant 3.125000e-02 : f32
    %44 = vector.broadcast %cst_10 : f32 to vector<1x32xf32>
    %45 = arith.mulf %43, %44 : vector<1x32xf32>
    %46 = arith.mulf %39, %39 : vector<32x32xf32>
    %cst_11 = arith.constant dense<0.000000e+00> : vector<32xf32>
    %47 = vector.multi_reduction <add>, %46, %cst_11 [0] : vector<32x32xf32> to vector<32xf32>
    %48 = vector.shape_cast %47 : vector<32xf32> to vector<1x32xf32>
    %cst_12 = arith.constant 3.125000e-02 : f32
    %49 = vector.broadcast %cst_12 : f32 to vector<1x32xf32>
    %50 = arith.mulf %48, %49 : vector<1x32xf32>
    %51 = arith.mulf %45, %45 : vector<1x32xf32>
    %52 = arith.subf %50, %51 : vector<1x32xf32>
    %cst_13 = arith.constant 0.000000e+00 : f32
    %53 = vector.broadcast %cst_13 : f32 to vector<1x32xf32>
    %54 = arith.maximumf %52, %53 : vector<1x32xf32>
    %cst_14 = arith.constant 9.99999974E-6 : f32
    %55 = vector.broadcast %cst_14 : f32 to vector<1x32xf32>
    %56 = arith.addf %54, %55 : vector<1x32xf32>
    %57 = math.rsqrt %56 : vector<1x32xf32>
    %58 = arith.mulf %57, %40 : vector<1x32xf32>
    %59 = vector.broadcast %45 : vector<1x32xf32> to vector<32x32xf32>
    %60 = arith.subf %39, %59 : vector<32x32xf32>
    %61 = vector.broadcast %58 : vector<1x32xf32> to vector<32x32xf32>
    %62 = arith.mulf %60, %61 : vector<32x32xf32>
    %63 = vector.broadcast %41 : vector<1x32xf32> to vector<32x32xf32>
    %64 = arith.addf %62, %63 : vector<32x32xf32>
    %65 = vector.shape_cast %64 : vector<32x32xf32> to vector<32x1x32xf32>
    %66 = vector.shape_cast %64 : vector<32x32xf32> to vector<32x1x32xf32>
    %67 = tpu.concatenate %65, %66 in 1 : vector<32x1x32xf32>, vector<32x1x32xf32> -> vector<32x2x32xf32>
    %68 = vector.shape_cast %67 : vector<32x2x32xf32> to vector<64x32xf32>
    %69 = vector.shape_cast %68 : vector<64x32xf32> to vector<8x8x32xf32>
    %70 = vector.shape_cast %69 : vector<8x8x32xf32> to vector<8x1x8x32xf32>
    %71 = vector.shape_cast %69 : vector<8x8x32xf32> to vector<8x1x8x32xf32>
    %72 = tpu.concatenate %70, %71 in 1 : vector<8x1x8x32xf32>, vector<8x1x8x32xf32> -> vector<8x2x8x32xf32>
    %73 = vector.shape_cast %72 : vector<8x2x8x32xf32> to vector<128x32xf32>
    %c0_15 = arith.constant 0 : index
    %c0_16 = arith.constant 0 : index
    %74 = vector.load %arg5[%c0_15, %c0_16] : memref<288x32xf32, #tpu.memory_space<vmem>>, vector<288x32xf32>
    %75 = vector.shape_cast %73 : vector<128x32xf32> to vector<2x8x8x32xf32>
    %cst_17 = arith.constant 0.000000e+00 : f32
    %76 = vector.broadcast %cst_17 : f32 to vector<2x1x8x32xf32>
    %77 = tpu.concatenate %76, %75, %76 in 1 : vector<2x1x8x32xf32>, vector<2x8x8x32xf32>, vector<2x1x8x32xf32> -> vector<2x10x8x32xf32>
    %cst_18 = arith.constant 0.000000e+00 : f32
    %78 = vector.broadcast %cst_18 : f32 to vector<2x10x1x32xf32>
    %79 = tpu.concatenate %78, %77, %78 in 2 : vector<2x10x1x32xf32>, vector<2x10x8x32xf32>, vector<2x10x1x32xf32> -> vector<2x10x10x32xf32>
    %80 = vector.extract_strided_slice %79 {offsets = [0, 0, 0, 0], sizes = [2, 8, 8, 32], strides = [1, 1, 1, 1]} : vector<2x10x10x32xf32> to vector<2x8x8x32xf32>
    %81 = vector.extract_strided_slice %79 {offsets = [0, 0, 1, 0], sizes = [2, 8, 8, 32], strides = [1, 1, 1, 1]} : vector<2x10x10x32xf32> to vector<2x8x8x32xf32>
    %82 = vector.extract_strided_slice %79 {offsets = [0, 0, 2, 0], sizes = [2, 8, 8, 32], strides = [1, 1, 1, 1]} : vector<2x10x10x32xf32> to vector<2x8x8x32xf32>
    %83 = vector.extract_strided_slice %79 {offsets = [0, 1, 0, 0], sizes = [2, 8, 8, 32], strides = [1, 1, 1, 1]} : vector<2x10x10x32xf32> to vector<2x8x8x32xf32>
    %84 = vector.extract_strided_slice %79 {offsets = [0, 1, 1, 0], sizes = [2, 8, 8, 32], strides = [1, 1, 1, 1]} : vector<2x10x10x32xf32> to vector<2x8x8x32xf32>
    %85 = vector.extract_strided_slice %79 {offsets = [0, 1, 2, 0], sizes = [2, 8, 8, 32], strides = [1, 1, 1, 1]} : vector<2x10x10x32xf32> to vector<2x8x8x32xf32>
    %86 = vector.extract_strided_slice %79 {offsets = [0, 2, 0, 0], sizes = [2, 8, 8, 32], strides = [1, 1, 1, 1]} : vector<2x10x10x32xf32> to vector<2x8x8x32xf32>
    %87 = vector.extract_strided_slice %79 {offsets = [0, 2, 1, 0], sizes = [2, 8, 8, 32], strides = [1, 1, 1, 1]} : vector<2x10x10x32xf32> to vector<2x8x8x32xf32>
    %88 = vector.extract_strided_slice %79 {offsets = [0, 2, 2, 0], sizes = [2, 8, 8, 32], strides = [1, 1, 1, 1]} : vector<2x10x10x32xf32> to vector<2x8x8x32xf32>
    %89 = tpu.concatenate %80, %81, %82, %83, %84, %85, %86, %87, %88 in 3 : vector<2x8x8x32xf32>, vector<2x8x8x32xf32>, vector<2x8x8x32xf32>, vector<2x8x8x32xf32>, vector<2x8x8x32xf32>, vector<2x8x8x32xf32>, vector<2x8x8x32xf32>, vector<2x8x8x32xf32>, vector<2x8x8x32xf32> -> vector<2x8x8x288xf32>
    %90 = vector.shape_cast %89 : vector<2x8x8x288xf32> to vector<128x288xf32>
    %cst_19 = arith.constant dense<0.000000e+00> : vector<128x32xf32>
    %91 = tpu.matmul %90, %74, %cst_19 {dimension_numbers = #tpu.dot_dimension_numbers<[1], [0], [0], [1], [0, 0, 1, 1], [], []>} : vector<128x288xf32>, vector<288x32xf32>, vector<128x32xf32> -> vector<128x32xf32>
    %c0_20 = arith.constant 0 : index
    %c0_21 = arith.constant 0 : index
    %92 = vector.load %arg6[%c0_20, %c0_21] : memref<1x32xf32, #tpu.memory_space<vmem>>, vector<1x32xf32>
    %c0_22 = arith.constant 0 : index
    %c0_23 = arith.constant 0 : index
    %93 = vector.load %arg7[%c0_22, %c0_23] : memref<1x32xf32, #tpu.memory_space<vmem>>, vector<1x32xf32>
    %cst_24 = arith.constant dense<0.000000e+00> : vector<32xf32>
    %94 = vector.multi_reduction <add>, %91, %cst_24 [0] : vector<128x32xf32> to vector<32xf32>
    %95 = vector.shape_cast %94 : vector<32xf32> to vector<1x32xf32>
    %cst_25 = arith.constant 7.812500e-03 : f32
    %96 = vector.broadcast %cst_25 : f32 to vector<1x32xf32>
    %97 = arith.mulf %95, %96 : vector<1x32xf32>
    %98 = arith.mulf %91, %91 : vector<128x32xf32>
    %cst_26 = arith.constant dense<0.000000e+00> : vector<32xf32>
    %99 = vector.multi_reduction <add>, %98, %cst_26 [0] : vector<128x32xf32> to vector<32xf32>
    %100 = vector.shape_cast %99 : vector<32xf32> to vector<1x32xf32>
    %cst_27 = arith.constant 7.812500e-03 : f32
    %101 = vector.broadcast %cst_27 : f32 to vector<1x32xf32>
    %102 = arith.mulf %100, %101 : vector<1x32xf32>
    %103 = arith.mulf %97, %97 : vector<1x32xf32>
    %104 = arith.subf %102, %103 : vector<1x32xf32>
    %cst_28 = arith.constant 0.000000e+00 : f32
    %105 = vector.broadcast %cst_28 : f32 to vector<1x32xf32>
    %106 = arith.maximumf %104, %105 : vector<1x32xf32>
    %cst_29 = arith.constant 9.99999974E-6 : f32
    %107 = vector.broadcast %cst_29 : f32 to vector<1x32xf32>
    %108 = arith.addf %106, %107 : vector<1x32xf32>
    %109 = math.rsqrt %108 : vector<1x32xf32>
    %110 = arith.mulf %109, %92 : vector<1x32xf32>
    %111 = vector.broadcast %97 : vector<1x32xf32> to vector<128x32xf32>
    %112 = arith.subf %91, %111 : vector<128x32xf32>
    %113 = vector.broadcast %110 : vector<1x32xf32> to vector<128x32xf32>
    %114 = arith.mulf %112, %113 : vector<128x32xf32>
    %115 = vector.broadcast %93 : vector<1x32xf32> to vector<128x32xf32>
    %116 = arith.addf %114, %115 : vector<128x32xf32>
    %cst_30 = arith.constant 2.000000e-01 : f32
    %117 = vector.broadcast %cst_30 : f32 to vector<128x32xf32>
    %118 = arith.mulf %117, %116 : vector<128x32xf32>
    %119 = arith.maximumf %116, %118 : vector<128x32xf32>
    %120 = vector.shape_cast %119 : vector<128x32xf32> to vector<128x1x32xf32>
    %121 = vector.shape_cast %119 : vector<128x32xf32> to vector<128x1x32xf32>
    %122 = tpu.concatenate %120, %121 in 1 : vector<128x1x32xf32>, vector<128x1x32xf32> -> vector<128x2x32xf32>
    %123 = vector.shape_cast %122 : vector<128x2x32xf32> to vector<256x32xf32>
    %124 = vector.shape_cast %123 : vector<256x32xf32> to vector<16x16x32xf32>
    %125 = vector.shape_cast %124 : vector<16x16x32xf32> to vector<16x1x16x32xf32>
    %126 = vector.shape_cast %124 : vector<16x16x32xf32> to vector<16x1x16x32xf32>
    %127 = tpu.concatenate %125, %126 in 1 : vector<16x1x16x32xf32>, vector<16x1x16x32xf32> -> vector<16x2x16x32xf32>
    %128 = vector.shape_cast %127 : vector<16x2x16x32xf32> to vector<512x32xf32>
    %c0_31 = arith.constant 0 : index
    %c0_32 = arith.constant 0 : index
    %129 = vector.load %arg8[%c0_31, %c0_32] : memref<288x16xf32, #tpu.memory_space<vmem>>, vector<288x16xf32>
    %130 = vector.shape_cast %128 : vector<512x32xf32> to vector<2x16x16x32xf32>
    %cst_33 = arith.constant 0.000000e+00 : f32
    %131 = vector.broadcast %cst_33 : f32 to vector<2x1x16x32xf32>
    %132 = tpu.concatenate %131, %130, %131 in 1 : vector<2x1x16x32xf32>, vector<2x16x16x32xf32>, vector<2x1x16x32xf32> -> vector<2x18x16x32xf32>
    %cst_34 = arith.constant 0.000000e+00 : f32
    %133 = vector.broadcast %cst_34 : f32 to vector<2x18x1x32xf32>
    %134 = tpu.concatenate %133, %132, %133 in 2 : vector<2x18x1x32xf32>, vector<2x18x16x32xf32>, vector<2x18x1x32xf32> -> vector<2x18x18x32xf32>
    %135 = vector.extract_strided_slice %134 {offsets = [0, 0, 0, 0], sizes = [2, 16, 16, 32], strides = [1, 1, 1, 1]} : vector<2x18x18x32xf32> to vector<2x16x16x32xf32>
    %136 = vector.extract_strided_slice %134 {offsets = [0, 0, 1, 0], sizes = [2, 16, 16, 32], strides = [1, 1, 1, 1]} : vector<2x18x18x32xf32> to vector<2x16x16x32xf32>
    %137 = vector.extract_strided_slice %134 {offsets = [0, 0, 2, 0], sizes = [2, 16, 16, 32], strides = [1, 1, 1, 1]} : vector<2x18x18x32xf32> to vector<2x16x16x32xf32>
    %138 = vector.extract_strided_slice %134 {offsets = [0, 1, 0, 0], sizes = [2, 16, 16, 32], strides = [1, 1, 1, 1]} : vector<2x18x18x32xf32> to vector<2x16x16x32xf32>
    %139 = vector.extract_strided_slice %134 {offsets = [0, 1, 1, 0], sizes = [2, 16, 16, 32], strides = [1, 1, 1, 1]} : vector<2x18x18x32xf32> to vector<2x16x16x32xf32>
    %140 = vector.extract_strided_slice %134 {offsets = [0, 1, 2, 0], sizes = [2, 16, 16, 32], strides = [1, 1, 1, 1]} : vector<2x18x18x32xf32> to vector<2x16x16x32xf32>
    %141 = vector.extract_strided_slice %134 {offsets = [0, 2, 0, 0], sizes = [2, 16, 16, 32], strides = [1, 1, 1, 1]} : vector<2x18x18x32xf32> to vector<2x16x16x32xf32>
    %142 = vector.extract_strided_slice %134 {offsets = [0, 2, 1, 0], sizes = [2, 16, 16, 32], strides = [1, 1, 1, 1]} : vector<2x18x18x32xf32> to vector<2x16x16x32xf32>
    %143 = vector.extract_strided_slice %134 {offsets = [0, 2, 2, 0], sizes = [2, 16, 16, 32], strides = [1, 1, 1, 1]} : vector<2x18x18x32xf32> to vector<2x16x16x32xf32>
    %144 = tpu.concatenate %135, %136, %137, %138, %139, %140, %141, %142, %143 in 3 : vector<2x16x16x32xf32>, vector<2x16x16x32xf32>, vector<2x16x16x32xf32>, vector<2x16x16x32xf32>, vector<2x16x16x32xf32>, vector<2x16x16x32xf32>, vector<2x16x16x32xf32>, vector<2x16x16x32xf32>, vector<2x16x16x32xf32> -> vector<2x16x16x288xf32>
    %145 = vector.shape_cast %144 : vector<2x16x16x288xf32> to vector<512x288xf32>
    %cst_35 = arith.constant dense<0.000000e+00> : vector<512x16xf32>
    %146 = tpu.matmul %145, %129, %cst_35 {dimension_numbers = #tpu.dot_dimension_numbers<[1], [0], [0], [1], [0, 0, 1, 1], [], []>} : vector<512x288xf32>, vector<288x16xf32>, vector<512x16xf32> -> vector<512x16xf32>
    %c0_36 = arith.constant 0 : index
    %c0_37 = arith.constant 0 : index
    %147 = vector.load %arg9[%c0_36, %c0_37] : memref<1x16xf32, #tpu.memory_space<vmem>>, vector<1x16xf32>
    %c0_38 = arith.constant 0 : index
    %c0_39 = arith.constant 0 : index
    %148 = vector.load %arg10[%c0_38, %c0_39] : memref<1x16xf32, #tpu.memory_space<vmem>>, vector<1x16xf32>
    %cst_40 = arith.constant dense<0.000000e+00> : vector<16xf32>
    %149 = vector.multi_reduction <add>, %146, %cst_40 [0] : vector<512x16xf32> to vector<16xf32>
    %150 = vector.shape_cast %149 : vector<16xf32> to vector<1x16xf32>
    %cst_41 = arith.constant 0.001953125 : f32
    %151 = vector.broadcast %cst_41 : f32 to vector<1x16xf32>
    %152 = arith.mulf %150, %151 : vector<1x16xf32>
    %153 = arith.mulf %146, %146 : vector<512x16xf32>
    %cst_42 = arith.constant dense<0.000000e+00> : vector<16xf32>
    %154 = vector.multi_reduction <add>, %153, %cst_42 [0] : vector<512x16xf32> to vector<16xf32>
    %155 = vector.shape_cast %154 : vector<16xf32> to vector<1x16xf32>
    %cst_43 = arith.constant 0.001953125 : f32
    %156 = vector.broadcast %cst_43 : f32 to vector<1x16xf32>
    %157 = arith.mulf %155, %156 : vector<1x16xf32>
    %158 = arith.mulf %152, %152 : vector<1x16xf32>
    %159 = arith.subf %157, %158 : vector<1x16xf32>
    %cst_44 = arith.constant 0.000000e+00 : f32
    %160 = vector.broadcast %cst_44 : f32 to vector<1x16xf32>
    %161 = arith.maximumf %159, %160 : vector<1x16xf32>
    %cst_45 = arith.constant 9.99999974E-6 : f32
    %162 = vector.broadcast %cst_45 : f32 to vector<1x16xf32>
    %163 = arith.addf %161, %162 : vector<1x16xf32>
    %164 = math.rsqrt %163 : vector<1x16xf32>
    %165 = arith.mulf %164, %147 : vector<1x16xf32>
    %166 = vector.broadcast %152 : vector<1x16xf32> to vector<512x16xf32>
    %167 = arith.subf %146, %166 : vector<512x16xf32>
    %168 = vector.broadcast %165 : vector<1x16xf32> to vector<512x16xf32>
    %169 = arith.mulf %167, %168 : vector<512x16xf32>
    %170 = vector.broadcast %148 : vector<1x16xf32> to vector<512x16xf32>
    %171 = arith.addf %169, %170 : vector<512x16xf32>
    %cst_46 = arith.constant 2.000000e-01 : f32
    %172 = vector.broadcast %cst_46 : f32 to vector<512x16xf32>
    %173 = arith.mulf %172, %171 : vector<512x16xf32>
    %174 = arith.maximumf %171, %173 : vector<512x16xf32>
    %c0_47 = arith.constant 0 : index
    %c0_48 = arith.constant 0 : index
    %175 = vector.load %arg11[%c0_47, %c0_48] : memref<144x128xf32, #tpu.memory_space<vmem>>, vector<144x128xf32>
    %176 = vector.shape_cast %174 : vector<512x16xf32> to vector<2x16x16x16xf32>
    %cst_49 = arith.constant 0.000000e+00 : f32
    %177 = vector.broadcast %cst_49 : f32 to vector<2x1x16x16xf32>
    %178 = tpu.concatenate %177, %176, %177 in 1 : vector<2x1x16x16xf32>, vector<2x16x16x16xf32>, vector<2x1x16x16xf32> -> vector<2x18x16x16xf32>
    %cst_50 = arith.constant 0.000000e+00 : f32
    %179 = vector.broadcast %cst_50 : f32 to vector<2x18x1x16xf32>
    %180 = tpu.concatenate %179, %178, %179 in 2 : vector<2x18x1x16xf32>, vector<2x18x16x16xf32>, vector<2x18x1x16xf32> -> vector<2x18x18x16xf32>
    %181 = vector.extract_strided_slice %180 {offsets = [0, 0, 0, 0], sizes = [2, 16, 16, 16], strides = [1, 1, 1, 1]} : vector<2x18x18x16xf32> to vector<2x16x16x16xf32>
    %182 = vector.extract_strided_slice %180 {offsets = [0, 0, 1, 0], sizes = [2, 16, 16, 16], strides = [1, 1, 1, 1]} : vector<2x18x18x16xf32> to vector<2x16x16x16xf32>
    %183 = vector.extract_strided_slice %180 {offsets = [0, 0, 2, 0], sizes = [2, 16, 16, 16], strides = [1, 1, 1, 1]} : vector<2x18x18x16xf32> to vector<2x16x16x16xf32>
    %184 = vector.extract_strided_slice %180 {offsets = [0, 1, 0, 0], sizes = [2, 16, 16, 16], strides = [1, 1, 1, 1]} : vector<2x18x18x16xf32> to vector<2x16x16x16xf32>
    %185 = vector.extract_strided_slice %180 {offsets = [0, 1, 1, 0], sizes = [2, 16, 16, 16], strides = [1, 1, 1, 1]} : vector<2x18x18x16xf32> to vector<2x16x16x16xf32>
    %186 = vector.extract_strided_slice %180 {offsets = [0, 1, 2, 0], sizes = [2, 16, 16, 16], strides = [1, 1, 1, 1]} : vector<2x18x18x16xf32> to vector<2x16x16x16xf32>
    %187 = vector.extract_strided_slice %180 {offsets = [0, 2, 0, 0], sizes = [2, 16, 16, 16], strides = [1, 1, 1, 1]} : vector<2x18x18x16xf32> to vector<2x16x16x16xf32>
    %188 = vector.extract_strided_slice %180 {offsets = [0, 2, 1, 0], sizes = [2, 16, 16, 16], strides = [1, 1, 1, 1]} : vector<2x18x18x16xf32> to vector<2x16x16x16xf32>
    %189 = vector.extract_strided_slice %180 {offsets = [0, 2, 2, 0], sizes = [2, 16, 16, 16], strides = [1, 1, 1, 1]} : vector<2x18x18x16xf32> to vector<2x16x16x16xf32>
    %190 = tpu.concatenate %181, %182, %183, %184, %185, %186, %187, %188, %189 in 3 : vector<2x16x16x16xf32>, vector<2x16x16x16xf32>, vector<2x16x16x16xf32>, vector<2x16x16x16xf32>, vector<2x16x16x16xf32>, vector<2x16x16x16xf32>, vector<2x16x16x16xf32>, vector<2x16x16x16xf32>, vector<2x16x16x16xf32> -> vector<2x16x16x144xf32>
    %191 = vector.shape_cast %190 : vector<2x16x16x144xf32> to vector<512x144xf32>
    %cst_51 = arith.constant dense<0.000000e+00> : vector<512x128xf32>
    %192 = tpu.matmul %191, %175, %cst_51 {dimension_numbers = #tpu.dot_dimension_numbers<[1], [0], [0], [1], [0, 0, 1, 1], [], []>} : vector<512x144xf32>, vector<144x128xf32>, vector<512x128xf32> -> vector<512x128xf32>
    %c0_52 = arith.constant 0 : index
    %c0_53 = arith.constant 0 : index
    %193 = vector.load %arg12[%c0_52, %c0_53] : memref<1x128xf32, #tpu.memory_space<vmem>>, vector<1x128xf32>
    %194 = vector.broadcast %193 : vector<1x128xf32> to vector<512x128xf32>
    %195 = arith.addf %192, %194 : vector<512x128xf32>
    %196 = tpu.transpose %195, [1, 0] : vector<512x128xf32> -> vector<128x512xf32>
    %197 = vector.extract_strided_slice %196 {offsets = [0, 0], sizes = [3, 512], strides = [1, 1]} : vector<128x512xf32> to vector<3x512xf32>
    %198 = arith.negf %197 : vector<3x512xf32>
    %199 = math.exp %198 : vector<3x512xf32>
    %cst_54 = arith.constant 1.000000e+00 : f32
    %200 = vector.broadcast %cst_54 : f32 to vector<3x512xf32>
    %201 = arith.addf %200, %199 : vector<3x512xf32>
    %202 = arith.divf %200, %201 : vector<3x512xf32>
    %203 = vector.extract_strided_slice %202 {offsets = [0, 0], sizes = [3, 256], strides = [1, 1]} : vector<3x512xf32> to vector<3x256xf32>
    %c0_55 = arith.constant 0 : index
    %c0_56 = arith.constant 0 : index
    %204 = vector.load %arg13[%c0_55, %c0_56] : memref<6x256xf32, #tpu.memory_space<vmem>>, vector<3x256xf32>
    tpu.vector_store %arg13[%c0_55, %c0_56], %203 {strides = array<i32>} : memref<6x256xf32, #tpu.memory_space<vmem>>, vector<3x256xf32>,
    %205 = vector.extract_strided_slice %202 {offsets = [0, 256], sizes = [3, 256], strides = [1, 1]} : vector<3x512xf32> to vector<3x256xf32>
    %c3 = arith.constant 3 : index
    %c0_57 = arith.constant 0 : index
    %206 = vector.load %arg13[%c3, %c0_57] : memref<6x256xf32, #tpu.memory_space<vmem>>, vector<3x256xf32>
    tpu.vector_store %arg13[%c3, %c0_57], %205 {strides = array<i32>} : memref<6x256xf32, #tpu.memory_space<vmem>>, vector<3x256xf32>,
    return
  }
}

</mosaic_0001>

<llo_original>
// kernel: generator_forward.1
$region0: #{generator_forward.1}
  #allocation0 [shape = 'u32[]', space=smem, size = 0x4, offset = 0x4, fixed_abs, tag = 'smem constant byte address 0x4 - core index']
  #allocation1 [shape = 'u32[72,128]{1,0:T(1,128)}', space=vmem, size = 0x9000, scoped, tag = 'internal scratch']
  %s0 = inlined_call_operand.vmem [shape: f32[2,32], index: 0, kind: input, shape index: {}]
  %s1 = inlined_call_operand.vmem [shape: f32[32,512], index: 1, kind: input, shape index: {}]
  %s2 = inlined_call_operand.vmem [shape: f32[1,512], index: 2, kind: input, shape index: {}]
  %s3 = inlined_call_operand.vmem [shape: f32[1,32], index: 3, kind: input, shape index: {}]
  %s4 = inlined_call_operand.vmem [shape: f32[1,32], index: 4, kind: input, shape index: {}]
  %s5 = inlined_call_operand.vmem [shape: f32[288,32], index: 5, kind: input, shape index: {}]
  %s6 = inlined_call_operand.vmem [shape: f32[1,32], index: 6, kind: input, shape index: {}]
  %s7 = inlined_call_operand.vmem [shape: f32[1,32], index: 7, kind: input, shape index: {}]
  %s8 = inlined_call_operand.vmem [shape: f32[288,16], index: 8, kind: input, shape index: {}]
  %s9 = inlined_call_operand.vmem [shape: f32[1,16], index: 9, kind: input, shape index: {}]
  %s10 = inlined_call_operand.vmem [shape: f32[1,16], index: 10, kind: input, shape index: {}]
  %s11 = inlined_call_operand.vmem [shape: f32[144,128], index: 11, kind: input, shape index: {}]
  %s12 = inlined_call_operand.vmem [shape: f32[1,128], index: 12, kind: input, shape index: {}]
  %s13 = inlined_call_operand.vmem [shape: f32[6,256], index: 13, kind: output, shape index: {}]
  %s14 = sld [smem:[#allocation0]]
  $region62: #{generator_forward.1} parent=0
    _
  %s16 = ssub.s32 1, %s14
  %s17 = scalar_select 0, %s16, %s14
  // Predicated region
  $region2: #{generator_forward.1} parent=0 // pred_check
    _
  $region3: #{generator_forward.1} parent=0 // pred_check_branch
    %19 = sbr.rel (0) target = $region5
  $region4: #{generator_forward.1} parent=0 // pred_region
    _
  $region5: #{generator_forward.1} parent=0 // pred_fallthru
    _
  // Predicated region
  $region6: #{generator_forward.1} parent=0 // pred_check
    _
  $region7: #{generator_forward.1} parent=0 // pred_check_branch
    %21 = sbr.rel (0) target = $region9
  $region8: #{generator_forward.1} parent=0 // pred_region
    _
  $region9: #{generator_forward.1} parent=0 // pred_fallthru
    _
  // Predicated region
  $region10: #{generator_forward.1} parent=0 // pred_check
    _
  $region11: #{generator_forward.1} parent=0 // pred_check_branch
    %23 = sbr.rel (0) target = $region13
  $region12: #{generator_forward.1} parent=0 // pred_region
    _
  $region13: #{generator_forward.1} parent=0 // pred_fallthru
    _
  // Predicated region
  $region14: #{generator_forward.1} parent=0 // pred_check
    _
  $region15: #{generator_forward.1} parent=0 // pred_check_branch
    %25 = sbr.rel (0) target = $region17
  $region16: #{generator_forward.1} parent=0 // pred_region
    _
  $region17: #{generator_forward.1} parent=0 // pred_fallthru
    _
  // Predicated region
  $region18: #{generator_forward.1} parent=0 // pred_check
    _
  $region19: #{generator_forward.1} parent=0 // pred_check_branch
    %27 = sbr.rel (0) target = $region21
  $region20: #{generator_forward.1} parent=0 // pred_region
    _
  $region21: #{generator_forward.1} parent=0 // pred_fallthru
    _
  // Predicated region
  $region22: #{generator_forward.1} parent=0 // pred_check
    _
  $region23: #{generator_forward.1} parent=0 // pred_check_branch
    %29 = sbr.rel (0) target = $region25
  $region24: #{generator_forward.1} parent=0 // pred_region
    _
  $region25: #{generator_forward.1} parent=0 // pred_fallthru
    _
  // Predicated region
  $region26: #{generator_forward.1} parent=0 // pred_check
    _
  $region27: #{generator_forward.1} parent=0 // pred_check_branch
    %31 = sbr.rel (0) target = $region29
  $region28: #{generator_forward.1} parent=0 // pred_region
    _
  $region29: #{generator_forward.1} parent=0 // pred_fallthru
    _
  // Predicated region
  $region30: #{generator_forward.1} parent=0 // pred_check
    _
  $region31: #{generator_forward.1} parent=0 // pred_check_branch
    %33 = sbr.rel (0) target = $region33
  $region32: #{generator_forward.1} parent=0 // pred_region
    _
  $region33: #{generator_forward.1} parent=0 // pred_fallthru
    _
  // Predicated region
  $region34: #{generator_forward.1} parent=0 // pred_check
    _
  $region35: #{generator_forward.1} parent=0 // pred_check_branch
    %35 = sbr.rel (0) target = $region37
  $region36: #{generator_forward.1} parent=0 // pred_region
    _
  $region37: #{generator_forward.1} parent=0 // pred_fallthru
    _
  // Predicated region
  $region38: #{generator_forward.1} parent=0 // pred_check
    _
  $region39: #{generator_forward.1} parent=0 // pred_check_branch
    %37 = sbr.rel (0) target = $region41
  $region40: #{generator_forward.1} parent=0 // pred_region
    _
  $region41: #{generator_forward.1} parent=0 // pred_fallthru
    _
  // Predicated region
  $region42: #{generator_forward.1} parent=0 // pred_check
    _
  $region43: #{generator_forward.1} parent=0 // pred_check_branch
    %39 = sbr.rel (0) target = $region45
  $region44: #{generator_forward.1} parent=0 // pred_region
    _
  $region45: #{generator_forward.1} parent=0 // pred_fallthru
    _
  // Predicated region
  $region46: #{generator_forward.1} parent=0 // pred_check
    _
  $region47: #{generator_forward.1} parent=0 // pred_check_branch
    %41 = sbr.rel (0) target = $region49
  $region48: #{generator_forward.1} parent=0 // pred_region
    _
  $region49: #{generator_forward.1} parent=0 // pred_fallthru
    _
  // Predicated region
  $region50: #{generator_forward.1} parent=0 // pred_check
    _
  $region51: #{generator_forward.1} parent=0 // pred_check_branch
    %43 = sbr.rel (0) target = $region53
  $region52: #{generator_forward.1} parent=0 // pred_region
    _
  $region53: #{generator_forward.1} parent=0 // pred_fallthru
    _
  %v44 = vld [vmem:[%s0] sm:$0x3]
  %v45 = vld [vmem:[%s1] sm:$0xff]
  %v46 = vld [vmem:[%s1 + $0x8] sm:$0xff]
  %v47 = vld [vmem:[%s1 + $0x10] sm:$0xff]
  %v48 = vld [vmem:[%s1 + $0x18] sm:$0xff]
  %v49 = vld [vmem:[%s1 + $0x20] sm:$0xff]
  %v50 = vld [vmem:[%s1 + $0x28] sm:$0xff]
  %v51 = vld [vmem:[%s1 + $0x30] sm:$0xff]
  %v52 = vld [vmem:[%s1 + $0x38] sm:$0xff]
  %v53 = vld [vmem:[%s1 + $0x40] sm:$0xff]
  %v54 = vld [vmem:[%s1 + $0x48] sm:$0xff]
  %v55 = vld [vmem:[%s1 + $0x50] sm:$0xff]
  %v56 = vld [vmem:[%s1 + $0x58] sm:$0xff]
  %v57 = vld [vmem:[%s1 + $0x60] sm:$0xff]
  %v58 = vld [vmem:[%s1 + $0x68] sm:$0xff]
  %v59 = vld [vmem:[%s1 + $0x70] sm:$0xff]
  %v60 = vld [vmem:[%s1 + $0x78] sm:$0xff]
  %v61 = vld [vmem:[%s2] sm:$0xf]
  %v63 = vperm.slane %v61, 0
  %v64 = vperm.slane %v61, 1
  %v65 = vperm.slane %v61, 2
  %v66 = vperm.slane %v61, 3
  %vm71 = vcmask 261120
  %v73 = vsel %vm71, %v44, 0
  %75 = vmatpush.msra.mxu0 0.0
  %76 = vmatpush.msra.mxu0 0.0
  %77 = vmatpush.msra.mxu0 0.0
  %78 = vmatpush.msra.mxu0 0.0
  %79 = vmatpush.msra.mxu0 0.0
  %80 = vmatpush.msra.mxu0 0.0
  %81 = vmatpush.msra.mxu0 0.0
  %82 = vmatpush.msra.mxu0 0.0
  %83 = vmatpush.msra.mxu0 0.0
  %84 = vmatpush.msra.mxu0 0.0
  %85 = vmatpush.msra.mxu0 0.0
  %86 = vmatpush.msra.mxu0 0.0
  %87 = vmatpush.msra.mxu0 %v57
  %88 = vmatpush.msra.mxu0 %v53
  %89 = vmatpush.msra.mxu0 %v49
  %90 = vmatpush.msra.mxu0 %v45
  %91 = vmatmul.f32.gmra.mxu0 %v73
  %v92 = vpop.f32.mrf.mxu0
  %v93 = vadd.f32 %v63, %v92
  %94 = vdwg.mxu0
  %95 = vmatpush.msra.mxu0 0.0
  %96 = vmatpush.msra.mxu0 0.0
  %97 = vmatpush.msra.mxu0 0.0
  %98 = vmatpush.msra.mxu0 0.0
  %99 = vmatpush.msra.mxu0 0.0
  %100 = vmatpush.msra.mxu0 0.0
  %101 = vmatpush.msra.mxu0 0.0
  %102 = vmatpush.msra.mxu0 0.0
  %103 = vmatpush.msra.mxu0 0.0
  %104 = vmatpush.msra.mxu0 0.0
  %105 = vmatpush.msra.mxu0 0.0
  %106 = vmatpush.msra.mxu0 0.0
  %107 = vmatpush.msra.mxu0 %v58
  %108 = vmatpush.msra.mxu0 %v54
  %109 = vmatpush.msra.mxu0 %v50
  %110 = vmatpush.msra.mxu0 %v46
  %111 = vmatmul.f32.gmra.mxu0 %v73
  %v112 = vpop.f32.mrf.mxu0
  %v113 = vadd.f32 %v64, %v112
  %114 = vdwg.mxu0
  %115 = vmatpush.msra.mxu0 0.0
  %116 = vmatpush.msra.mxu0 0.0
  %117 = vmatpush.msra.mxu0 0.0
  %118 = vmatpush.msra.mxu0 0.0
  %119 = vmatpush.msra.mxu0 0.0
  %120 = vmatpush.msra.mxu0 0.0
  %121 = vmatpush.msra.mxu0 0.0
  %122 = vmatpush.msra.mxu0 0.0
  %123 = vmatpush.msra.mxu0 0.0
  %124 = vmatpush.msra.mxu0 0.0
  %125 = vmatpush.msra.mxu0 0.0
  %126 = vmatpush.msra.mxu0 0.0
  %127 = vmatpush.msra.mxu0 %v59
  %128 = vmatpush.msra.mxu0 %v55
  %129 = vmatpush.msra.mxu0 %v51
  %130 = vmatpush.msra.mxu0 %v47
  %131 = vmatmul.f32.gmra.mxu0 %v73
  %v132 = vpop.f32.mrf.mxu0
  %v133 = vadd.f32 %v65, %v132
  %134 = vdwg.mxu0
  %135 = vmatpush.msra.mxu0 0.0
  %136 = vmatpush.msra.mxu0 0.0
  %137 = vmatpush.msra.mxu0 0.0
  %138 = vmatpush.msra.mxu0 0.0
  %139 = vmatpush.msra.mxu0 0.0
  %140 = vmatpush.msra.mxu0 0.0
  %141 = vmatpush.msra.mxu0 0.0
  %142 = vmatpush.msra.mxu0 0.0
  %143 = vmatpush.msra.mxu0 0.0
  %144 = vmatpush.msra.mxu0 0.0
  %145 = vmatpush.msra.mxu0 0.0
  %146 = vmatpush.msra.mxu0 0.0
  %147 = vmatpush.msra.mxu0 %v60
  %148 = vmatpush.msra.mxu0 %v56
  %149 = vmatpush.msra.mxu0 %v52
  %150 = vmatpush.msra.mxu0 %v48
  %151 = vmatmul.f32.gmra.mxu0 %v73
  %v152 = vpop.f32.mrf.mxu0
  %v153 = vadd.f32 %v66, %v152
  %154 = vdwg.mxu0
  %v156 = vrot.slane %v93, 1
  %v159 = vrot.slane %v113, 1
  %v161 = vrot.slane %v133, 1
  %v164 = vrot.slane %v153, 1
  %v165 = vperm.slane %v93, 0
  %v166 = vperm.slane %v156, 0
  %167 = vrot.lane.b32.xlu0 %v165, 96
  %v168 = vpop.permute.xlu0 %167
  %169 = vrot.lane.b32.xlu0 %v166, 96
  %v170 = vpop.permute.xlu0 %169
  %173 = vrot.lane.b32.xlu0 %v165, 64
  %v174 = vpop.permute.xlu0 %173
  %175 = vrot.lane.b32.xlu0 %v166, 64
  %v176 = vpop.permute.xlu0 %175
  %179 = vrot.lane.b32.xlu0 %v165, 32
  %v180 = vpop.permute.xlu0 %179
  %181 = vrot.lane.b32.xlu0 %v166, 32
  %v182 = vpop.permute.xlu0 %181
  %v185 = vperm.slane %v113, 0
  %v186 = vperm.slane %v159, 0
  %189 = vrot.lane.b32.xlu0 %v185, 96
  %v190 = vpop.permute.xlu0 %189
  %191 = vrot.lane.b32.xlu0 %v186, 96
  %v192 = vpop.permute.xlu0 %191
  %195 = vrot.lane.b32.xlu0 %v185, 64
  %v196 = vpop.permute.xlu0 %195
  %197 = vrot.lane.b32.xlu0 %v186, 64
  %v198 = vpop.permute.xlu0 %197
  %201 = vrot.lane.b32.xlu0 %v185, 32
  %v202 = vpop.permute.xlu0 %201
  %203 = vrot.lane.b32.xlu0 %v186, 32
  %v204 = vpop.permute.xlu0 %203
  %v207 = vperm.slane %v133, 0
  %v208 = vperm.slane %v161, 0
  %209 = vrot.lane.b32.xlu0 %v207, 96
  %v210 = vpop.permute.xlu0 %209
  %211 = vrot.lane.b32.xlu0 %v208, 96
  %v212 = vpop.permute.xlu0 %211
  %215 = vrot.lane.b32.xlu0 %v207, 64
  %v216 = vpop.permute.xlu0 %215
  %217 = vrot.lane.b32.xlu0 %v208, 64
  %v218 = vpop.permute.xlu0 %217
  %221 = vrot.lane.b32.xlu0 %v207, 32
  %v222 = vpop.permute.xlu0 %221
  %223 = vrot.lane.b32.xlu0 %v208, 32
  %v224 = vpop.permute.xlu0 %223
  %v227 = vperm.slane %v153, 0
  %v228 = vperm.slane %v164, 0
  %231 = vrot.lane.b32.xlu0 %v227, 96
  %v232 = vpop.permute.xlu0 %231
  %233 = vrot.lane.b32.xlu0 %v228, 96
  %v234 = vpop.permute.xlu0 %233
  %237 = vrot.lane.b32.xlu0 %v227, 64
  %v238 = vpop.permute.xlu0 %237
  %239 = vrot.lane.b32.xlu0 %v228, 64
  %v240 = vpop.permute.xlu0 %239
  %243 = vrot.lane.b32.xlu0 %v227, 32
  %v244 = vpop.permute.xlu0 %243
  %245 = vrot.lane.b32.xlu0 %v228, 32
  %v246 = vpop.permute.xlu0 %245
  %vm249 = vcmask 1040384
  %v250 = vsel %vm249, %v93, %v168
  %v251 = vsel %vm249, %v156, %v170
  %vm252 = vcmask 1041408
  %v253 = vsel %vm252, %v250, %v174
  %v254 = vsel %vm252, %v251, %v176
  %vm255 = vcmask 1042432
  %v256 = vsel %vm255, %v253, %v180
  %v257 = vsel %vm255, %v254, %v182
  %vm258 = vcmask 1043456
  %v259 = vsel %vm258, %v256, %v185
  %v260 = vsel %vm258, %v257, %v186
  %vm261 = vcmask 1044480
  %v262 = vsel %vm261, %v259, %v190
  %v263 = vsel %vm261, %v260, %v192
  %vm264 = vcmask 1045504
  %v265 = vsel %vm264, %v262, %v196
  %v266 = vsel %vm264, %v263, %v198
  %vm267 = vcmask 1046528
  %v268 = vsel %vm267, %v265, %v202
  %v269 = vsel %vm267, %v266, %v204
  %v270 = vsel %vm249, %v133, %v210
  %v271 = vsel %vm249, %v161, %v212
  %v272 = vsel %vm252, %v270, %v216
  %v273 = vsel %vm252, %v271, %v218
  %v274 = vsel %vm255, %v272, %v222
  %v275 = vsel %vm255, %v273, %v224
  %v276 = vsel %vm258, %v274, %v227
  %v277 = vsel %vm258, %v275, %v228
  %v278 = vsel %vm261, %v276, %v232
  %v279 = vsel %vm261, %v277, %v234
  %v280 = vsel %vm264, %v278, %v238
  %v281 = vsel %vm264, %v279, %v240
  %v282 = vsel %vm267, %v280, %v244
  %v283 = vsel %vm267, %v281, %v246
  %v284 = vld [vmem:[%s3] sm:$0x1]
  %v285 = vld [vmem:[%s4] sm:$0x1]
  %v286 = vsel %vm71, %v268, 0.0
  %v287 = vsel %vm71, %v282, 0.0
  %v288 = vadd.f32 %v286, %v287
  %v289 = vsel %vm71, %v269, 0.0
  %v290 = vadd.f32 %v288, %v289
  %v291 = vsel %vm71, %v283, 0.0
  %v292 = vadd.f32 %v290, %v291
  %v293 = vrot.slane %v292, 4
  %v294 = vadd.f32 %v292, %v293
  %v295 = vrot.slane %v294, 2
  %v296 = vadd.f32 %v294, %v295
  %v297 = vrot.slane %v296, 1
  %v298 = vadd.f32 %v296, %v297
  %v299 = vmul.f32 %v298, 0.03125
  %v300 = vmul.f32 %v268, %v268
  %v301 = vmul.f32 %v282, %v282
  %v302 = vmul.f32 %v269, %v269
  %v303 = vmul.f32 %v283, %v283
  %v304 = vsel %vm71, %v300, 0.0
  %v305 = vsel %vm71, %v301, 0.0
  %v306 = vadd.f32 %v304, %v305
  %v307 = vsel %vm71, %v302, 0.0
  %v308 = vadd.f32 %v306, %v307
  %v309 = vsel %vm71, %v303, 0.0
  %v310 = vadd.f32 %v308, %v309
  %v311 = vrot.slane %v310, 4
  %v312 = vadd.f32 %v310, %v311
  %v313 = vrot.slane %v312, 2
  %v314 = vadd.f32 %v312, %v313
  %v315 = vrot.slane %v314, 1
  %v316 = vadd.f32 %v314, %v315
  %v317 = vmul.f32 %v316, 0.03125
  %v318 = vmul.f32 %v299, %v299
  %v319 = vsub.f32 %v317, %v318
  %v320 = vmax.f32 %v319, 0.0
  %v321 = vadd.f32 %v320, 1e-05
  %v322 = vrsqrt.pop %v321
  %v323 = vmul.f32 %v322, %v321
  %v324 = vmul.f32 %v323, %v322
  %v325 = vmul.f32 0.5, %v324
  %v326 = vsub.f32 1.5, %v325
  %v327 = vmul.f32 %v322, %v326
  %vm328 = vweird.f32 %v321
  %vm329 = vweird.f32 %v322
  %vm330 = vmor %vm328, %vm329
  %v331 = vsel %vm330, %v322, %v327
  %v332 = vmul.f32 %v331, %v284
  %v333 = vsub.f32 %v268, %v299
  %v334 = vsub.f32 %v282, %v299
  %v335 = vsub.f32 %v269, %v299
  %v336 = vsub.f32 %v283, %v299
  %v337 = vperm.slane %v332, 0
  %v338 = vmul.f32 %v333, %v337
  %v339 = vmul.f32 %v334, %v337
  %v340 = vmul.f32 %v335, %v337
  %v341 = vmul.f32 %v336, %v337
  %v343 = vperm.slane %v285, 0
  %v345 = vadd.f32 %v338, %v343
  %v346 = vadd.f32 %v339, %v343
  %v347 = vadd.f32 %v340, %v343
  %v348 = vadd.f32 %v341, %v343
  %v353 = vrot.slane %v345, 1
  %v354 = vrot.slane %v345, 2
  %v355 = vrot.slane %v345, 3
  %v356 = vrot.slane %v345, 4
  %v357 = vrot.slane %v345, 5
  %v358 = vrot.slane %v345, 6
  %v359 = vrot.slane %v345, 7
  %v360 = vrot.slane %v346, 1
  %v361 = vrot.slane %v346, 2
  %v362 = vrot.slane %v346, 3
  %v363 = vrot.slane %v346, 4
  %v364 = vrot.slane %v346, 5
  %v365 = vrot.slane %v346, 6
  %v366 = vrot.slane %v346, 7
  %v367 = vrot.slane %v347, 1
  %v368 = vrot.slane %v347, 2
  %v369 = vrot.slane %v347, 3
  %v370 = vrot.slane %v347, 4
  %v371 = vrot.slane %v347, 5
  %v372 = vrot.slane %v347, 6
  %v373 = vrot.slane %v347, 7
  %v374 = vrot.slane %v348, 1
  %v375 = vrot.slane %v348, 2
  %v376 = vrot.slane %v348, 3
  %v377 = vrot.slane %v348, 4
  %v378 = vrot.slane %v348, 5
  %v379 = vrot.slane %v348, 6
  %v380 = vrot.slane %v348, 7
  %v409 = vperm.slane %v345, 0
  %v410 = vperm.slane %v353, 0
  %v411 = vperm.slane %v354, 0
  %v412 = vperm.slane %v355, 0
  %v413 = vperm.slane %v356, 0
  %v414 = vperm.slane %v357, 0
  %v415 = vperm.slane %v358, 0
  %v416 = vperm.slane %v359, 0
  %v417 = vperm.slane %v346, 0
  %v418 = vperm.slane %v360, 0
  %v419 = vperm.slane %v361, 0
  %v420 = vperm.slane %v362, 0
  %v421 = vperm.slane %v363, 0
  %v422 = vperm.slane %v364, 0
  %v423 = vperm.slane %v365, 0
  %v424 = vperm.slane %v366, 0
  %v425 = vperm.slane %v347, 0
  %v426 = vperm.slane %v367, 0
  %v427 = vperm.slane %v368, 0
  %v428 = vperm.slane %v369, 0
  %v429 = vperm.slane %v370, 0
  %v430 = vperm.slane %v371, 0
  %v431 = vperm.slane %v372, 0
  %v432 = vperm.slane %v373, 0
  %v433 = vperm.slane %v348, 0
  %v434 = vperm.slane %v374, 0
  %v435 = vperm.slane %v375, 0
  %v436 = vperm.slane %v376, 0
  %v437 = vperm.slane %v377, 0
  %v438 = vperm.slane %v378, 0
  %v439 = vperm.slane %v379, 0
  %v440 = vperm.slane %v380, 0
  %v473 = vsel %vm249, %v345, %v409
  %v474 = vsel %vm249, %v353, %v410
  %v475 = vsel %vm249, %v354, %v411
  %v476 = vsel %vm249, %v355, %v412
  %v477 = vsel %vm249, %v356, %v413
  %v478 = vsel %vm249, %v357, %v414
  %v479 = vsel %vm249, %v358, %v415
  %v480 = vsel %vm249, %v359, %v416
  %v481 = vsel %vm249, %v346, %v417
  %v482 = vsel %vm249, %v360, %v418
  %v483 = vsel %vm249, %v361, %v419
  %v484 = vsel %vm249, %v362, %v420
  %v485 = vsel %vm249, %v363, %v421
  %v486 = vsel %vm249, %v364, %v422
  %v487 = vsel %vm249, %v365, %v423
  %v488 = vsel %vm249, %v366, %v424
  %v489 = vsel %vm249, %v347, %v425
  %v490 = vsel %vm249, %v367, %v426
  %v491 = vsel %vm249, %v368, %v427
  %v492 = vsel %vm249, %v369, %v428
  %v493 = vsel %vm249, %v370, %v429
  %v494 = vsel %vm249, %v371, %v430
  %v495 = vsel %vm249, %v372, %v431
  %v496 = vsel %vm249, %v373, %v432
  %v497 = vsel %vm249, %v348, %v433
  %v498 = vsel %vm249, %v374, %v434
  %v499 = vsel %vm249, %v375, %v435
  %v500 = vsel %vm249, %v376, %v436
  %v501 = vsel %vm249, %v377, %v437
  %v502 = vsel %vm249, %v378, %v438
  %v503 = vsel %vm249, %v379, %v439
  %v504 = vsel %vm249, %v380, %v440
  %v505 = vld [vmem:[%s5] sm:$0xff]
  %v506 = vld [vmem:[%s5 + $0x8] sm:$0xff]
  %v507 = vld [vmem:[%s5 + $0x10] sm:$0xff]
  %v508 = vld [vmem:[%s5 + $0x18] sm:$0xff]
  %v509 = vld [vmem:[%s5 + $0x20] sm:$0xff]
  %v510 = vld [vmem:[%s5 + $0x28] sm:$0xff]
  %v511 = vld [vmem:[%s5 + $0x30] sm:$0xff]
  %v512 = vld [vmem:[%s5 + $0x38] sm:$0xff]
  %v513 = vld [vmem:[%s5 + $0x40] sm:$0xff]
  %v514 = vld [vmem:[%s5 + $0x48] sm:$0xff]
  %v515 = vld [vmem:[%s5 + $0x50] sm:$0xff]
  %v516 = vld [vmem:[%s5 + $0x58] sm:$0xff]
  %v517 = vld [vmem:[%s5 + $0x60] sm:$0xff]
  %v518 = vld [vmem:[%s5 + $0x68] sm:$0xff]
  %v519 = vld [vmem:[%s5 + $0x70] sm:$0xff]
  %v520 = vld [vmem:[%s5 + $0x78] sm:$0xff]
  %v521 = vld [vmem:[%s5 + $0x80] sm:$0xff]
  %v522 = vld [vmem:[%s5 + $0x88] sm:$0xff]
  %v523 = vld [vmem:[%s5 + $0x90] sm:$0xff]
  %v524 = vld [vmem:[%s5 + $0x98] sm:$0xff]
  %v525 = vld [vmem:[%s5 + $0xa0] sm:$0xff]
  %v526 = vld [vmem:[%s5 + $0xa8] sm:$0xff]
  %v527 = vld [vmem:[%s5 + $0xb0] sm:$0xff]
  %v528 = vld [vmem:[%s5 + $0xb8] sm:$0xff]
  %v529 = vld [vmem:[%s5 + $0xc0] sm:$0xff]
  %v530 = vld [vmem:[%s5 + $0xc8] sm:$0xff]
  %v531 = vld [vmem:[%s5 + $0xd0] sm:$0xff]
  %v532 = vld [vmem:[%s5 + $0xd8] sm:$0xff]
  %v533 = vld [vmem:[%s5 + $0xe0] sm:$0xff]
  %v534 = vld [vmem:[%s5 + $0xe8] sm:$0xff]
  %v535 = vld [vmem:[%s5 + $0xf0] sm:$0xff]
  %v536 = vld [vmem:[%s5 + $0xf8] sm:$0xff]
  %v537 = vld [vmem:[%s5 + $0x100] sm:$0xff]
  %v538 = vld [vmem:[%s5 + $0x108] sm:$0xff]
  %v539 = vld [vmem:[%s5 + $0x110] sm:$0xff]
  %v540 = vld [vmem:[%s5 + $0x118] sm:$0xff]
  %573 = vst [vmem:[#allocation1] ss:$4 sm:$0xff] %v473
  %s574 = scalar_lea.vmem [#allocation1], 1
  %575 = vst [vmem:[%s574] ss:$4 sm:$0xff] %v474
  %s576 = scalar_lea.vmem [#allocation1], 2
  %577 = vst [vmem:[%s576] ss:$4 sm:$0xff] %v475
  %s578 = scalar_lea.vmem [#allocation1], 3
  %579 = vst [vmem:[%s578] ss:$4 sm:$0xff] %v476
  %v580 = vld.sshfl [vmem:[#allocation1] sm:$0xff pattern:$0x73625140]
  %s581 = scalar_lea.vmem [#allocation1], 32
  %582 = vst [vmem:[%s581] ss:$4 sm:$0xff] %v473
  %s583 = scalar_lea.vmem [#allocation1], 33
  %584 = vst [vmem:[%s583] ss:$4 sm:$0xff] %v474
  %s585 = scalar_lea.vmem [#allocation1], 34
  %586 = vst [vmem:[%s585] ss:$4 sm:$0xff] %v475
  %s587 = scalar_lea.vmem [#allocation1], 35
  %588 = vst [vmem:[%s587] ss:$4 sm:$0xff] %v476
  %v589 = vld.sshfl [vmem:[#allocation1 + $0x20] sm:$0xff pattern:$0x73625140]
  %590 = vst [vmem:[#allocation1] ss:$4 sm:$0xff] %v477
  %591 = vst [vmem:[%s574] ss:$4 sm:$0xff] %v478
  %592 = vst [vmem:[%s576] ss:$4 sm:$0xff] %v479
  %593 = vst [vmem:[%s578] ss:$4 sm:$0xff] %v480
  %v594 = vld.sshfl [vmem:[#allocation1] sm:$0xff pattern:$0x73625140]
  %595 = vst [vmem:[%s581] ss:$4 sm:$0xff] %v477
  %596 = vst [vmem:[%s583] ss:$4 sm:$0xff] %v478
  %597 = vst [vmem:[%s585] ss:$4 sm:$0xff] %v479
  %598 = vst [vmem:[%s587] ss:$4 sm:$0xff] %v480
  %v599 = vld.sshfl [vmem:[#allocation1 + $0x20] sm:$0xff pattern:$0x73625140]
  %600 = vst [vmem:[#allocation1] ss:$4 sm:$0xff] %v481
  %601 = vst [vmem:[%s574] ss:$4 sm:$0xff] %v482
  %602 = vst [vmem:[%s576] ss:$4 sm:$0xff] %v483
  %603 = vst [vmem:[%s578] ss:$4 sm:$0xff] %v484
  %v604 = vld.sshfl [vmem:[#allocation1] sm:$0xff pattern:$0x73625140]
  %605 = vst [vmem:[%s581] ss:$4 sm:$0xff] %v481
  %606 = vst [vmem:[%s583] ss:$4 sm:$0xff] %v482
  %607 = vst [vmem:[%s585] ss:$4 sm:$0xff] %v483
  %608 = vst [vmem:[%s587] ss:$4 sm:$0xff] %v484
  %v609 = vld.sshfl [vmem:[#allocation1 + $0x20] sm:$0xff pattern:$0x73625140]
  %610 = vst [vmem:[#allocation1] ss:$4 sm:$0xff] %v485
  %611 = vst [vmem:[%s574] ss:$4 sm:$0xff] %v486
  %612 = vst [vmem:[%s576] ss:$4 sm:$0xff] %v487
  %613 = vst [vmem:[%s578] ss:$4 sm:$0xff] %v488
  %v614 = vld.sshfl [vmem:[#allocation1] sm:$0xff pattern:$0x73625140]
  %615 = vst [vmem:[%s581] ss:$4 sm:$0xff] %v485
  %616 = vst [vmem:[%s583] ss:$4 sm:$0xff] %v486
  %617 = vst [vmem:[%s585] ss:$4 sm:$0xff] %v487
  %618 = vst [vmem:[%s587] ss:$4 sm:$0xff] %v488
  %v619 = vld.sshfl [vmem:[#allocation1 + $0x20] sm:$0xff pattern:$0x73625140]
  %620 = vst [vmem:[#allocation1] ss:$4 sm:$0xff] %v489
  %621 = vst [vmem:[%s574] ss:$4 sm:$0xff] %v490
  %622 = vst [vmem:[%s576] ss:$4 sm:$0xff] %v491
  %623 = vst [vmem:[%s578] ss:$4 sm:$0xff] %v492
  %v624 = vld.sshfl [vmem:[#allocation1] sm:$0xff pattern:$0x73625140]
  %625 = vst [vmem:[%s581] ss:$4 sm:$0xff] %v489
  %626 = vst [vmem:[%s583] ss:$4 sm:$0xff] %v490
  %627 = vst [vmem:[%s585] ss:$4 sm:$0xff] %v491
  %628 = vst [vmem:[%s587] ss:$4 sm:$0xff] %v492
  %v629 = vld.sshfl [vmem:[#allocation1 + $0x20] sm:$0xff pattern:$0x73625140]
  %630 = vst [vmem:[#allocation1] ss:$4 sm:$0xff] %v493
  %631 = vst [vmem:[%s574] ss:$4 sm:$0xff] %v494
  %632 = vst [vmem:[%s576] ss:$4 sm:$0xff] %v495
  %633 = vst [vmem:[%s578] ss:$4 sm:$0xff] %v496
  %v634 = vld.sshfl [vmem:[#allocation1] sm:$0xff pattern:$0x73625140]
  %635 = vst [vmem:[%s581] ss:$4 sm:$0xff] %v493
  %636 = vst [vmem:[%s583] ss:$4 sm:$0xff] %v494
  %637 = vst [vmem:[%s585] ss:$4 sm:$0xff] %v495
  %638 = vst [vmem:[%s587] ss:$4 sm:$0xff] %v496
  %v639 = vld.sshfl [vmem:[#allocation1 + $0x20] sm:$0xff pattern:$0x73625140]
  %640 = vst [vmem:[#allocation1] ss:$4 sm:$0xff] %v497
  %641 = vst [vmem:[%s574] ss:$4 sm:$0xff] %v498
  %642 = vst [vmem:[%s576] ss:$4 sm:$0xff] %v499
  %643 = vst [vmem:[%s578] ss:$4 sm:$0xff] %v500
  %v644 = vld.sshfl [vmem:[#allocation1] sm:$0xff pattern:$0x73625140]
  %645 = vst [vmem:[%s581] ss:$4 sm:$0xff] %v497
  %646 = vst [vmem:[%s583] ss:$4 sm:$0xff] %v498
  %647 = vst [vmem:[%s585] ss:$4 sm:$0xff] %v499
  %648 = vst [vmem:[%s587] ss:$4 sm:$0xff] %v500
  %v649 = vld.sshfl [vmem:[#allocation1 + $0x20] sm:$0xff pattern:$0x73625140]
  %650 = vst [vmem:[#allocation1] ss:$4 sm:$0xff] %v501
  %651 = vst [vmem:[%s574] ss:$4 sm:$0xff] %v502
  %652 = vst [vmem:[%s576] ss:$4 sm:$0xff] %v503
  %653 = vst [vmem:[%s578] ss:$4 sm:$0xff] %v504
  %v654 = vld.sshfl [vmem:[#allocation1] sm:$0xff pattern:$0x73625140]
  %655 = vst [vmem:[%s581] ss:$4 sm:$0xff] %v501
  %656 = vst [vmem:[%s583] ss:$4 sm:$0xff] %v502
  %657 = vst [vmem:[%s585] ss:$4 sm:$0xff] %v503
  %658 = vst [vmem:[%s587] ss:$4 sm:$0xff] %v504
  %v659 = vld.sshfl [vmem:[#allocation1 + $0x20] sm:$0xff pattern:$0x73625140]
  %v661 = vrot.slane 0.0, 7
  %v662 = vrot.slane %v580, 7
  %v663 = vrot.slane %v589, 7
  %v664 = vrot.slane %v594, 7
  %v665 = vrot.slane %v599, 7
  %v666 = vrot.slane %v604, 7
  %v667 = vrot.slane %v609, 7
  %v668 = vrot.slane %v614, 7
  %v669 = vrot.slane %v619, 7
  %v670 = vrot.slane %v624, 7
  %v671 = vrot.slane %v629, 7
  %v672 = vrot.slane %v634, 7
  %v673 = vrot.slane %v639, 7
  %v674 = vrot.slane %v644, 7
  %v675 = vrot.slane %v649, 7
  %v676 = vrot.slane %v654, 7
  %v677 = vrot.slane %v659, 7
  %v695 = vsel %vm249, 0.0, %v661
  %v696 = vsel %vm249, 0.0, %v662
  %v697 = vsel %vm249, 0.0, %v663
  %v698 = vsel %vm249, 0.0, %v664
  %v699 = vsel %vm249, 0.0, %v665
  %v700 = vsel %vm249, 0.0, %v666
  %v701 = vsel %vm249, 0.0, %v667
  %v702 = vsel %vm249, 0.0, %v668
  %v703 = vsel %vm249, 0.0, %v669
  %v704 = vsel %vm249, 0.0, %v670
  %v705 = vsel %vm249, 0.0, %v671
  %v706 = vsel %vm249, 0.0, %v672
  %v707 = vsel %vm249, 0.0, %v673
  %v708 = vsel %vm249, 0.0, %v674
  %v709 = vsel %vm249, 0.0, %v675
  %v710 = vsel %vm249, 0.0, %v676
  %v711 = vsel %vm249, 0.0, %v677
  %v712 = vsel %vm249, %v661, 0.0
  %v713 = vsel %vm249, %v662, 0.0
  %v714 = vsel %vm249, %v663, 0.0
  %v715 = vsel %vm249, %v664, 0.0
  %v716 = vsel %vm249, %v665, 0.0
  %v717 = vsel %vm249, %v666, 0.0
  %v718 = vsel %vm249, %v667, 0.0
  %v719 = vsel %vm249, %v668, 0.0
  %v720 = vsel %vm249, %v669, 0.0
  %v721 = vsel %vm249, %v670, 0.0
  %v722 = vsel %vm249, %v671, 0.0
  %v723 = vsel %vm249, %v672, 0.0
  %v724 = vsel %vm249, %v673, 0.0
  %v725 = vsel %vm249, %v674, 0.0
  %v726 = vsel %vm249, %v675, 0.0
  %v727 = vsel %vm249, %v676, 0.0
  %v728 = vsel %vm249, %v677, 0.0
  %v759 = vrot.slane %v695, 1
  %v760 = vrot.slane %v712, 1
  %v761 = vsel %vm267, %v759, %v760
  %v762 = vrot.slane %v696, 1
  %v763 = vrot.slane %v713, 1
  %v764 = vsel %vm267, %v762, %v763
  %v765 = vrot.slane %v697, 1
  %v766 = vrot.slane %v714, 1
  %v767 = vsel %vm267, %v765, %v766
  %v768 = vrot.slane %v698, 1
  %v769 = vrot.slane %v715, 1
  %v770 = vsel %vm267, %v768, %v769
  %v771 = vrot.slane %v699, 1
  %v772 = vrot.slane %v716, 1
  %v773 = vsel %vm267, %v771, %v772
  %v774 = vrot.slane %v700, 1
  %v775 = vrot.slane %v717, 1
  %v776 = vsel %vm267, %v774, %v775
  %v777 = vrot.slane %v701, 1
  %v778 = vrot.slane %v718, 1
  %v779 = vsel %vm267, %v777, %v778
  %v780 = vrot.slane %v702, 1
  %v781 = vrot.slane %v719, 1
  %v782 = vsel %vm267, %v780, %v781
  %v783 = vrot.slane %v704, 1
  %v784 = vrot.slane %v721, 1
  %v785 = vsel %vm267, %v783, %v784
  %v786 = vrot.slane %v705, 1
  %v787 = vrot.slane %v722, 1
  %v788 = vsel %vm267, %v786, %v787
  %v789 = vrot.slane %v706, 1
  %v790 = vrot.slane %v723, 1
  %v791 = vsel %vm267, %v789, %v790
  %v792 = vrot.slane %v707, 1
  %v793 = vrot.slane %v724, 1
  %v794 = vsel %vm267, %v792, %v793
  %v795 = vrot.slane %v708, 1
  %v796 = vrot.slane %v725, 1
  %v797 = vsel %vm267, %v795, %v796
  %v798 = vrot.slane %v709, 1
  %v799 = vrot.slane %v726, 1
  %v800 = vsel %vm267, %v798, %v799
  %v801 = vrot.slane %v710, 1
  %v802 = vrot.slane %v727, 1
  %v803 = vsel %vm267, %v801, %v802
  %804 = vrot.lane.b32.xlu0 %v761, 32
  %v805 = vpop.permute.xlu0 %804
  %806 = vrot.lane.b32.xlu0 %v764, 32
  %v807 = vpop.permute.xlu0 %806
  %808 = vrot.lane.b32.xlu0 %v767, 32
  %v809 = vpop.permute.xlu0 %808
  %810 = vrot.lane.b32.xlu0 %v770, 32
  %v811 = vpop.permute.xlu0 %810
  %812 = vrot.lane.b32.xlu0 %v773, 32
  %v813 = vpop.permute.xlu0 %812
  %814 = vrot.lane.b32.xlu0 %v776, 32
  %v815 = vpop.permute.xlu0 %814
  %816 = vrot.lane.b32.xlu0 %v779, 32
  %v817 = vpop.permute.xlu0 %816
  %818 = vrot.lane.b32.xlu0 %v782, 32
  %v819 = vpop.permute.xlu0 %818
  %820 = vrot.lane.b32.xlu0 %v785, 32
  %v821 = vpop.permute.xlu0 %820
  %822 = vrot.lane.b32.xlu0 %v788, 32
  %v823 = vpop.permute.xlu0 %822
  %824 = vrot.lane.b32.xlu0 %v791, 32
  %v825 = vpop.permute.xlu0 %824
  %826 = vrot.lane.b32.xlu0 %v794, 32
  %v827 = vpop.permute.xlu0 %826
  %828 = vrot.lane.b32.xlu0 %v797, 32
  %v829 = vpop.permute.xlu0 %828
  %830 = vrot.lane.b32.xlu0 %v800, 32
  %v831 = vpop.permute.xlu0 %830
  %832 = vrot.lane.b32.xlu0 %v803, 32
  %v833 = vpop.permute.xlu0 %832
  %v849 = vrot.slane %v695, 2
  %v850 = vrot.slane %v712, 2
  %v851 = vsel %vm264, %v849, %v850
  %v852 = vrot.slane %v696, 2
  %v853 = vrot.slane %v713, 2
  %v854 = vsel %vm264, %v852, %v853
  %v855 = vrot.slane %v697, 2
  %v856 = vrot.slane %v714, 2
  %v857 = vsel %vm264, %v855, %v856
  %v858 = vrot.slane %v698, 2
  %v859 = vrot.slane %v715, 2
  %v860 = vsel %vm264, %v858, %v859
  %v861 = vrot.slane %v699, 2
  %v862 = vrot.slane %v716, 2
  %v863 = vsel %vm264, %v861, %v862
  %v864 = vrot.slane %v700, 2
  %v865 = vrot.slane %v717, 2
  %v866 = vsel %vm264, %v864, %v865
  %v867 = vrot.slane %v701, 2
  %v868 = vrot.slane %v718, 2
  %v869 = vsel %vm264, %v867, %v868
  %v870 = vrot.slane %v702, 2
  %v871 = vrot.slane %v719, 2
  %v872 = vsel %vm264, %v870, %v871
  %v873 = vrot.slane %v704, 2
  %v874 = vrot.slane %v721, 2
  %v875 = vsel %vm264, %v873, %v874
  %v876 = vrot.slane %v705, 2
  %v877 = vrot.slane %v722, 2
  %v878 = vsel %vm264, %v876, %v877
  %v879 = vrot.slane %v706, 2
  %v880 = vrot.slane %v723, 2
  %v881 = vsel %vm264, %v879, %v880
  %v882 = vrot.slane %v707, 2
  %v883 = vrot.slane %v724, 2
  %v884 = vsel %vm264, %v882, %v883
  %v885 = vrot.slane %v708, 2
  %v886 = vrot.slane %v725, 2
  %v887 = vsel %vm264, %v885, %v886
  %v888 = vrot.slane %v709, 2
  %v889 = vrot.slane %v726, 2
  %v890 = vsel %vm264, %v888, %v889
  %v891 = vrot.slane %v710, 2
  %v892 = vrot.slane %v727, 2
  %v893 = vsel %vm264, %v891, %v892
  %894 = vrot.lane.b32.xlu0 %v851, 64
  %v895 = vpop.permute.xlu0 %894
  %896 = vrot.lane.b32.xlu0 %v854, 64
  %v897 = vpop.permute.xlu0 %896
  %898 = vrot.lane.b32.xlu0 %v857, 64
  %v899 = vpop.permute.xlu0 %898
  %900 = vrot.lane.b32.xlu0 %v860, 64
  %v901 = vpop.permute.xlu0 %900
  %902 = vrot.lane.b32.xlu0 %v863, 64
  %v903 = vpop.permute.xlu0 %902
  %904 = vrot.lane.b32.xlu0 %v866, 64
  %v905 = vpop.permute.xlu0 %904
  %906 = vrot.lane.b32.xlu0 %v869, 64
  %v907 = vpop.permute.xlu0 %906
  %908 = vrot.lane.b32.xlu0 %v872, 64
  %v909 = vpop.permute.xlu0 %908
  %910 = vrot.lane.b32.xlu0 %v875, 64
  %v911 = vpop.permute.xlu0 %910
  %912 = vrot.lane.b32.xlu0 %v878, 64
  %v913 = vpop.permute.xlu0 %912
  %914 = vrot.lane.b32.xlu0 %v881, 64
  %v915 = vpop.permute.xlu0 %914
  %916 = vrot.lane.b32.xlu0 %v884, 64
  %v917 = vpop.permute.xlu0 %916
  %918 = vrot.lane.b32.xlu0 %v887, 64
  %v919 = vpop.permute.xlu0 %918
  %920 = vrot.lane.b32.xlu0 %v890, 64
  %v921 = vpop.permute.xlu0 %920
  %922 = vrot.lane.b32.xlu0 %v893, 64
  %v923 = vpop.permute.xlu0 %922
  %941 = vrot.lane.b32.xlu0 %v696, 96
  %v942 = vpop.permute.xlu0 %941
  %943 = vrot.lane.b32.xlu0 %v697, 96
  %v944 = vpop.permute.xlu0 %943
  %945 = vrot.lane.b32.xlu0 %v698, 96
  %v946 = vpop.permute.xlu0 %945
  %947 = vrot.lane.b32.xlu0 %v699, 96
  %v948 = vpop.permute.xlu0 %947
  %949 = vrot.lane.b32.xlu0 %v700, 96
  %v950 = vpop.permute.xlu0 %949
  %951 = vrot.lane.b32.xlu0 %v701, 96
  %v952 = vpop.permute.xlu0 %951
  %953 = vrot.lane.b32.xlu0 %v702, 96
  %v954 = vpop.permute.xlu0 %953
  %955 = vrot.lane.b32.xlu0 %v703, 96
  %v956 = vpop.permute.xlu0 %955
  %957 = vrot.lane.b32.xlu0 %v704, 96
  %v958 = vpop.permute.xlu0 %957
  %959 = vrot.lane.b32.xlu0 %v705, 96
  %v960 = vpop.permute.xlu0 %959
  %961 = vrot.lane.b32.xlu0 %v706, 96
  %v962 = vpop.permute.xlu0 %961
  %963 = vrot.lane.b32.xlu0 %v707, 96
  %v964 = vpop.permute.xlu0 %963
  %965 = vrot.lane.b32.xlu0 %v708, 96
  %v966 = vpop.permute.xlu0 %965
  %967 = vrot.lane.b32.xlu0 %v709, 96
  %v968 = vpop.permute.xlu0 %967
  %969 = vrot.lane.b32.xlu0 %v710, 96
  %v970 = vpop.permute.xlu0 %969
  %971 = vrot.lane.b32.xlu0 %v711, 96
  %v972 = vpop.permute.xlu0 %971
  %v991 = vrot.slane %v703, 1
  %v992 = vrot.slane %v720, 1
  %v993 = vsel %vm267, %v991, %v992
  %v994 = vrot.slane %v711, 1
  %v995 = vrot.slane %v728, 1
  %v996 = vsel %vm267, %v994, %v995
  %v1013 = vrot.slane %v703, 2
  %v1014 = vrot.slane %v720, 2
  %v1015 = vsel %vm264, %v1013, %v1014
  %v1016 = vrot.slane %v711, 2
  %v1017 = vrot.slane %v728, 2
  %v1018 = vsel %vm264, %v1016, %v1017
  %1019 = vrot.lane.b32.xlu0 %v854, 32
  %v1020 = vpop.permute.xlu0 %1019
  %1021 = vrot.lane.b32.xlu0 %v857, 32
  %v1022 = vpop.permute.xlu0 %1021
  %1023 = vrot.lane.b32.xlu0 %v860, 32
  %v1024 = vpop.permute.xlu0 %1023
  %1025 = vrot.lane.b32.xlu0 %v863, 32
  %v1026 = vpop.permute.xlu0 %1025
  %1027 = vrot.lane.b32.xlu0 %v866, 32
  %v1028 = vpop.permute.xlu0 %1027
  %1029 = vrot.lane.b32.xlu0 %v869, 32
  %v1030 = vpop.permute.xlu0 %1029
  %1031 = vrot.lane.b32.xlu0 %v872, 32
  %v1032 = vpop.permute.xlu0 %1031
  %1033 = vrot.lane.b32.xlu0 %v1015, 32
  %v1034 = vpop.permute.xlu0 %1033
  %1035 = vrot.lane.b32.xlu0 %v875, 32
  %v1036 = vpop.permute.xlu0 %1035
  %1037 = vrot.lane.b32.xlu0 %v878, 32
  %v1038 = vpop.permute.xlu0 %1037
  %1039 = vrot.lane.b32.xlu0 %v881, 32
  %v1040 = vpop.permute.xlu0 %1039
  %1041 = vrot.lane.b32.xlu0 %v884, 32
  %v1042 = vpop.permute.xlu0 %1041
  %1043 = vrot.lane.b32.xlu0 %v887, 32
  %v1044 = vpop.permute.xlu0 %1043
  %1045 = vrot.lane.b32.xlu0 %v890, 32
  %v1046 = vpop.permute.xlu0 %1045
  %1047 = vrot.lane.b32.xlu0 %v893, 32
  %v1048 = vpop.permute.xlu0 %1047
  %1049 = vrot.lane.b32.xlu0 %v1018, 32
  %v1050 = vpop.permute.xlu0 %1049
  %1067 = vrot.lane.b32.xlu0 %v697, 64
  %v1068 = vpop.permute.xlu0 %1067
  %1069 = vrot.lane.b32.xlu0 %v698, 64
  %v1070 = vpop.permute.xlu0 %1069
  %1071 = vrot.lane.b32.xlu0 %v699, 64
  %v1072 = vpop.permute.xlu0 %1071
  %1073 = vrot.lane.b32.xlu0 %v700, 64
  %v1074 = vpop.permute.xlu0 %1073
  %1075 = vrot.lane.b32.xlu0 %v701, 64
  %v1076 = vpop.permute.xlu0 %1075
  %1077 = vrot.lane.b32.xlu0 %v702, 64
  %v1078 = vpop.permute.xlu0 %1077
  %1079 = vrot.lane.b32.xlu0 %v703, 64
  %v1080 = vpop.permute.xlu0 %1079
  %1081 = vrot.lane.b32.xlu0 %v695, 64
  %v1082 = vpop.permute.xlu0 %1081
  %1083 = vrot.lane.b32.xlu0 %v705, 64
  %v1084 = vpop.permute.xlu0 %1083
  %1085 = vrot.lane.b32.xlu0 %v706, 64
  %v1086 = vpop.permute.xlu0 %1085
  %1087 = vrot.lane.b32.xlu0 %v707, 64
  %v1088 = vpop.permute.xlu0 %1087
  %1089 = vrot.lane.b32.xlu0 %v708, 64
  %v1090 = vpop.permute.xlu0 %1089
  %1091 = vrot.lane.b32.xlu0 %v709, 64
  %v1092 = vpop.permute.xlu0 %1091
  %1093 = vrot.lane.b32.xlu0 %v710, 64
  %v1094 = vpop.permute.xlu0 %1093
  %1095 = vrot.lane.b32.xlu0 %v711, 64
  %v1096 = vpop.permute.xlu0 %1095
  %1112 = vrot.lane.b32.xlu0 %v767, 96
  %v1113 = vpop.permute.xlu0 %1112
  %1114 = vrot.lane.b32.xlu0 %v770, 96
  %v1115 = vpop.permute.xlu0 %1114
  %1116 = vrot.lane.b32.xlu0 %v773, 96
  %v1117 = vpop.permute.xlu0 %1116
  %1118 = vrot.lane.b32.xlu0 %v776, 96
  %v1119 = vpop.permute.xlu0 %1118
  %1120 = vrot.lane.b32.xlu0 %v779, 96
  %v1121 = vpop.permute.xlu0 %1120
  %1122 = vrot.lane.b32.xlu0 %v782, 96
  %v1123 = vpop.permute.xlu0 %1122
  %1124 = vrot.lane.b32.xlu0 %v993, 96
  %v1125 = vpop.permute.xlu0 %1124
  %1126 = vrot.lane.b32.xlu0 %v761, 96
  %v1127 = vpop.permute.xlu0 %1126
  %1128 = vrot.lane.b32.xlu0 %v788, 96
  %v1129 = vpop.permute.xlu0 %1128
  %1130 = vrot.lane.b32.xlu0 %v791, 96
  %v1131 = vpop.permute.xlu0 %1130
  %1132 = vrot.lane.b32.xlu0 %v794, 96
  %v1133 = vpop.permute.xlu0 %1132
  %1134 = vrot.lane.b32.xlu0 %v797, 96
  %v1135 = vpop.permute.xlu0 %1134
  %1136 = vrot.lane.b32.xlu0 %v800, 96
  %v1137 = vpop.permute.xlu0 %1136
  %1138 = vrot.lane.b32.xlu0 %v803, 96
  %v1139 = vpop.permute.xlu0 %1138
  %1140 = vrot.lane.b32.xlu0 %v996, 96
  %v1141 = vpop.permute.xlu0 %1140
  %v1157 = vsel %vm71, %v695, %v805
  %v1158 = vsel %vm71, %v696, %v807
  %v1159 = vsel %vm71, %v697, %v809
  %v1160 = vsel %vm71, %v698, %v811
  %v1161 = vsel %vm71, %v699, %v813
  %v1162 = vsel %vm71, %v700, %v815
  %v1163 = vsel %vm71, %v701, %v817
  %v1164 = vsel %vm71, %v702, %v819
  %v1165 = vsel %vm71, %v704, %v821
  %v1166 = vsel %vm71, %v705, %v823
  %v1167 = vsel %vm71, %v706, %v825
  %v1168 = vsel %vm71, %v707, %v827
  %v1169 = vsel %vm71, %v708, %v829
  %v1170 = vsel %vm71, %v709, %v831
  %v1171 = vsel %vm71, %v710, %v833
  %vm1172 = vcmask 523264
  %v1173 = vsel %vm1172, %v1157, %v895
  %v1174 = vsel %vm1172, %v1158, %v897
  %v1175 = vsel %vm1172, %v1159, %v899
  %v1176 = vsel %vm1172, %v1160, %v901
  %v1177 = vsel %vm1172, %v1161, %v903
  %v1178 = vsel %vm1172, %v1162, %v905
  %v1179 = vsel %vm1172, %v1163, %v907
  %v1180 = vsel %vm1172, %v1164, %v909
  %v1181 = vsel %vm1172, %v1165, %v911
  %v1182 = vsel %vm1172, %v1166, %v913
  %v1183 = vsel %vm1172, %v1167, %v915
  %v1184 = vsel %vm1172, %v1168, %v917
  %v1185 = vsel %vm1172, %v1169, %v919
  %v1186 = vsel %vm1172, %v1170, %v921
  %v1187 = vsel %vm1172, %v1171, %v923
  %vm1188 = vcmask 785408
  %v1189 = vsel %vm1188, %v1173, %v942
  %v1190 = vsel %vm1188, %v1174, %v944
  %v1191 = vsel %vm1188, %v1175, %v946
  %v1192 = vsel %vm1188, %v1176, %v948
  %v1193 = vsel %vm1188, %v1177, %v950
  %v1194 = vsel %vm1188, %v1178, %v952
  %v1195 = vsel %vm1188, %v1179, %v954
  %v1196 = vsel %vm1188, %v1180, %v956
  %v1197 = vsel %vm1188, %v1173, %v958
  %v1198 = vsel %vm1188, %v1181, %v960
  %v1199 = vsel %vm1188, %v1182, %v962
  %v1200 = vsel %vm1188, %v1183, %v964
  %v1201 = vsel %vm1188, %v1184, %v966
  %v1202 = vsel %vm1188, %v1185, %v968
  %v1203 = vsel %vm1188, %v1186, %v970
  %v1204 = vsel %vm1188, %v1187, %v972
  %v1205 = vsel %vm71, %v764, %v1020
  %v1206 = vsel %vm71, %v767, %v1022
  %v1207 = vsel %vm71, %v770, %v1024
  %v1208 = vsel %vm71, %v773, %v1026
  %v1209 = vsel %vm71, %v776, %v1028
  %v1210 = vsel %vm71, %v779, %v1030
  %v1211 = vsel %vm71, %v782, %v1032
  %v1212 = vsel %vm71, %v993, %v1034
  %v1213 = vsel %vm71, %v785, %v1036
  %v1214 = vsel %vm71, %v788, %v1038
  %v1215 = vsel %vm71, %v791, %v1040
  %v1216 = vsel %vm71, %v794, %v1042
  %v1217 = vsel %vm71, %v797, %v1044
  %v1218 = vsel %vm71, %v800, %v1046
  %v1219 = vsel %vm71, %v803, %v1048
  %v1220 = vsel %vm71, %v996, %v1050
  %v1221 = vsel %vm1172, %v1205, %v1068
  %v1222 = vsel %vm1172, %v1206, %v1070
  %v1223 = vsel %vm1172, %v1207, %v1072
  %v1224 = vsel %vm1172, %v1208, %v1074
  %v1225 = vsel %vm1172, %v1209, %v1076
  %v1226 = vsel %vm1172, %v1210, %v1078
  %v1227 = vsel %vm1172, %v1211, %v1080
  %v1228 = vsel %vm1172, %v1212, %v1082
  %v1229 = vsel %vm1172, %v1213, %v1084
  %v1230 = vsel %vm1172, %v1214, %v1086
  %v1231 = vsel %vm1172, %v1215, %v1088
  %v1232 = vsel %vm1172, %v1216, %v1090
  %v1233 = vsel %vm1172, %v1217, %v1092
  %v1234 = vsel %vm1172, %v1218, %v1094
  %v1235 = vsel %vm1172, %v1219, %v1096
  %v1236 = vsel %vm1172, %v1220, %v1082
  %v1237 = vsel %vm1188, %v1221, %v1113
  %v1238 = vsel %vm1188, %v1222, %v1115
  %v1239 = vsel %vm1188, %v1223, %v1117
  %v1240 = vsel %vm1188, %v1224, %v1119
  %v1241 = vsel %vm1188, %v1225, %v1121
  %v1242 = vsel %vm1188, %v1226, %v1123
  %v1243 = vsel %vm1188, %v1227, %v1125
  %v1244 = vsel %vm1188, %v1228, %v1127
  %v1245 = vsel %vm1188, %v1229, %v1129
  %v1246 = vsel %vm1188, %v1230, %v1131
  %v1247 = vsel %vm1188, %v1231, %v1133
  %v1248 = vsel %vm1188, %v1232, %v1135
  %v1249 = vsel %vm1188, %v1233, %v1137
  %v1250 = vsel %vm1188, %v1234, %v1139
  %v1251 = vsel %vm1188, %v1235, %v1141
  %v1252 = vsel %vm1188, %v1236, %v1127
  %v1253 = vsel %vm71, %v857, 0
  %v1255 = vsel %vm71, %v860, 0
  %v1257 = vsel %vm71, %v863, 0
  %v1259 = vsel %vm71, %v866, 0
  %v1261 = vsel %vm71, %v869, 0
  %v1263 = vsel %vm71, %v872, 0
  %v1265 = vsel %vm71, %v1015, 0
  %v1267 = vsel %vm71, %v851, 0
  %v1269 = vsel %vm71, %v878, 0
  %v1271 = vsel %vm71, %v881, 0
  %v1273 = vsel %vm71, %v884, 0
  %v1275 = vsel %vm71, %v887, 0
  %v1277 = vsel %vm71, %v890, 0
  %v1279 = vsel %vm71, %v893, 0
  %v1281 = vsel %vm71, %v1018, 0
  %1283 = vmatpush.msra.mxu0 %v520
  %1284 = vmatpush.msra.mxu0 %v519
  %1285 = vmatpush.msra.mxu0 %v518
  %1286 = vmatpush.msra.mxu0 %v517
  %1287 = vmatpush.msra.mxu0 %v516
  %1288 = vmatpush.msra.mxu0 %v515
  %1289 = vmatpush.msra.mxu0 %v514
  %1290 = vmatpush.msra.mxu0 %v513
  %1291 = vmatpush.msra.mxu0 %v512
  %1292 = vmatpush.msra.mxu0 %v511
  %1293 = vmatpush.msra.mxu0 %v510
  %1294 = vmatpush.msra.mxu0 %v509
  %1295 = vmatpush.msra.mxu0 %v508
  %1296 = vmatpush.msra.mxu0 %v507
  %1297 = vmatpush.msra.mxu0 %v506
  %1298 = vmatpush.msra.mxu0 %v505
  %1299 = vmatmul.f32.gmra.mxu0 %v1189
  %v1300 = vpop.f32.mrf.mxu0
  %v1301 = vadd.f32 0.0, %v1300
  %1302 = vmatmul.f32.gmra.mxu0 %v1190
  %v1303 = vpop.f32.mrf.mxu0
  %v1304 = vadd.f32 0.0, %v1303
  %1305 = vmatmul.f32.gmra.mxu0 %v1191
  %v1306 = vpop.f32.mrf.mxu0
  %v1307 = vadd.f32 0.0, %v1306
  %1308 = vmatmul.f32.gmra.mxu0 %v1192
  %v1309 = vpop.f32.mrf.mxu0
  %v1310 = vadd.f32 0.0, %v1309
  %1311 = vmatmul.f32.gmra.mxu0 %v1193
  %v1312 = vpop.f32.mrf.mxu0
  %v1313 = vadd.f32 0.0, %v1312
  %1314 = vmatmul.f32.gmra.mxu0 %v1194
  %v1315 = vpop.f32.mrf.mxu0
  %v1316 = vadd.f32 0.0, %v1315
  %1317 = vmatmul.f32.gmra.mxu0 %v1195
  %v1318 = vpop.f32.mrf.mxu0
  %v1319 = vadd.f32 0.0, %v1318
  %1320 = vmatmul.f32.gmra.mxu0 %v1196
  %v1321 = vpop.f32.mrf.mxu0
  %v1322 = vadd.f32 0.0, %v1321
  %1323 = vmatmul.f32.gmra.mxu0 %v1197
  %v1324 = vpop.f32.mrf.mxu0
  %v1325 = vadd.f32 0.0, %v1324
  %1326 = vmatmul.f32.gmra.mxu0 %v1198
  %v1327 = vpop.f32.mrf.mxu0
  %v1328 = vadd.f32 0.0, %v1327
  %1329 = vmatmul.f32.gmra.mxu0 %v1199
  %v1330 = vpop.f32.mrf.mxu0
  %v1331 = vadd.f32 0.0, %v1330
  %1332 = vmatmul.f32.gmra.mxu0 %v1200
  %v1333 = vpop.f32.mrf.mxu0
  %v1334 = vadd.f32 0.0, %v1333
  %1335 = vmatmul.f32.gmra.mxu0 %v1201
  %v1336 = vpop.f32.mrf.mxu0
  %v1337 = vadd.f32 0.0, %v1336
  %1338 = vmatmul.f32.gmra.mxu0 %v1202
  %v1339 = vpop.f32.mrf.mxu0
  %v1340 = vadd.f32 0.0, %v1339
  %1341 = vmatmul.f32.gmra.mxu0 %v1203
  %v1342 = vpop.f32.mrf.mxu0
  %v1343 = vadd.f32 0.0, %v1342
  %1344 = vmatmul.f32.gmra.mxu0 %v1204
  %v1345 = vpop.f32.mrf.mxu0
  %v1346 = vadd.f32 0.0, %v1345
  %1347 = vdwg.mxu0
  %1348 = vmatpush.msra.mxu0 %v536
  %1349 = vmatpush.msra.mxu0 %v535
  %1350 = vmatpush.msra.mxu0 %v534
  %1351 = vmatpush.msra.mxu0 %v533
  %1352 = vmatpush.msra.mxu0 %v532
  %1353 = vmatpush.msra.mxu0 %v531
  %1354 = vmatpush.msra.mxu0 %v530
  %1355 = vmatpush.msra.mxu0 %v529
  %1356 = vmatpush.msra.mxu0 %v528
  %1357 = vmatpush.msra.mxu0 %v527
  %1358 = vmatpush.msra.mxu0 %v526
  %1359 = vmatpush.msra.mxu0 %v525
  %1360 = vmatpush.msra.mxu0 %v524
  %1361 = vmatpush.msra.mxu0 %v523
  %1362 = vmatpush.msra.mxu0 %v522
  %1363 = vmatpush.msra.mxu0 %v521
  %1364 = vmatmul.f32.gmra.mxu0 %v1237
  %v1365 = vpop.f32.mrf.mxu0
  %v1366 = vadd.f32 %v1301, %v1365
  %1367 = vmatmul.f32.gmra.mxu0 %v1238
  %v1368 = vpop.f32.mrf.mxu0
  %v1369 = vadd.f32 %v1304, %v1368
  %1370 = vmatmul.f32.gmra.mxu0 %v1239
  %v1371 = vpop.f32.mrf.mxu0
  %v1372 = vadd.f32 %v1307, %v1371
  %1373 = vmatmul.f32.gmra.mxu0 %v1240
  %v1374 = vpop.f32.mrf.mxu0
  %v1375 = vadd.f32 %v1310, %v1374
  %1376 = vmatmul.f32.gmra.mxu0 %v1241
  %v1377 = vpop.f32.mrf.mxu0
  %v1378 = vadd.f32 %v1313, %v1377
  %1379 = vmatmul.f32.gmra.mxu0 %v1242
  %v1380 = vpop.f32.mrf.mxu0
  %v1381 = vadd.f32 %v1316, %v1380
  %1382 = vmatmul.f32.gmra.mxu0 %v1243
  %v1383 = vpop.f32.mrf.mxu0
  %v1384 = vadd.f32 %v1319, %v1383
  %1385 = vmatmul.f32.gmra.mxu0 %v1244
  %v1386 = vpop.f32.mrf.mxu0
  %v1387 = vadd.f32 %v1322, %v1386
  %1388 = vmatmul.f32.gmra.mxu0 %v1245
  %v1389 = vpop.f32.mrf.mxu0
  %v1390 = vadd.f32 %v1325, %v1389
  %1391 = vmatmul.f32.gmra.mxu0 %v1246
  %v1392 = vpop.f32.mrf.mxu0
  %v1393 = vadd.f32 %v1328, %v1392
  %1394 = vmatmul.f32.gmra.mxu0 %v1247
  %v1395 = vpop.f32.mrf.mxu0
  %v1396 = vadd.f32 %v1331, %v1395
  %1397 = vmatmul.f32.gmra.mxu0 %v1248
  %v1398 = vpop.f32.mrf.mxu0
  %v1399 = vadd.f32 %v1334, %v1398
  %1400 = vmatmul.f32.gmra.mxu0 %v1249
  %v1401 = vpop.f32.mrf.mxu0
  %v1402 = vadd.f32 %v1337, %v1401
  %1403 = vmatmul.f32.gmra.mxu0 %v1250
  %v1404 = vpop.f32.mrf.mxu0
  %v1405 = vadd.f32 %v1340, %v1404
  %1406 = vmatmul.f32.gmra.mxu0 %v1251
  %v1407 = vpop.f32.mrf.mxu0
  %v1408 = vadd.f32 %v1343, %v1407
  %1409 = vmatmul.f32.gmra.mxu0 %v1252
  %v1410 = vpop.f32.mrf.mxu0
  %v1411 = vadd.f32 %v1346, %v1410
  %1412 = vdwg.mxu0
  %1413 = vmatpush.msra.mxu0 0.0
  %1414 = vmatpush.msra.mxu0 0.0
  %1415 = vmatpush.msra.mxu0 0.0
  %1416 = vmatpush.msra.mxu0 0.0
  %1417 = vmatpush.msra.mxu0 0.0
  %1418 = vmatpush.msra.mxu0 0.0
  %1419 = vmatpush.msra.mxu0 0.0
  %1420 = vmatpush.msra.mxu0 0.0
  %1421 = vmatpush.msra.mxu0 0.0
  %1422 = vmatpush.msra.mxu0 0.0
  %1423 = vmatpush.msra.mxu0 0.0
  %1424 = vmatpush.msra.mxu0 0.0
  %1425 = vmatpush.msra.mxu0 %v540
  %1426 = vmatpush.msra.mxu0 %v539
  %1427 = vmatpush.msra.mxu0 %v538
  %1428 = vmatpush.msra.mxu0 %v537
  %1429 = vmatmul.f32.gmra.mxu0 %v1253
  %v1430 = vpop.f32.mrf.mxu0
  %v1431 = vadd.f32 %v1366, %v1430
  %1432 = vmatmul.f32.gmra.mxu0 %v1255
  %v1433 = vpop.f32.mrf.mxu0
  %v1434 = vadd.f32 %v1369, %v1433
  %1435 = vmatmul.f32.gmra.mxu0 %v1257
  %v1436 = vpop.f32.mrf.mxu0
  %v1437 = vadd.f32 %v1372, %v1436
  %1438 = vmatmul.f32.gmra.mxu0 %v1259
  %v1439 = vpop.f32.mrf.mxu0
  %v1440 = vadd.f32 %v1375, %v1439
  %1441 = vmatmul.f32.gmra.mxu0 %v1261
  %v1442 = vpop.f32.mrf.mxu0
  %v1443 = vadd.f32 %v1378, %v1442
  %1444 = vmatmul.f32.gmra.mxu0 %v1263
  %v1445 = vpop.f32.mrf.mxu0
  %v1446 = vadd.f32 %v1381, %v1445
  %1447 = vmatmul.f32.gmra.mxu0 %v1265
  %v1448 = vpop.f32.mrf.mxu0
  %v1449 = vadd.f32 %v1384, %v1448
  %1450 = vmatmul.f32.gmra.mxu0 %v1267
  %v1451 = vpop.f32.mrf.mxu0
  %v1452 = vadd.f32 %v1387, %v1451
  %1453 = vmatmul.f32.gmra.mxu0 %v1269
  %v1454 = vpop.f32.mrf.mxu0
  %v1455 = vadd.f32 %v1390, %v1454
  %1456 = vmatmul.f32.gmra.mxu0 %v1271
  %v1457 = vpop.f32.mrf.mxu0
  %v1458 = vadd.f32 %v1393, %v1457
  %1459 = vmatmul.f32.gmra.mxu0 %v1273
  %v1460 = vpop.f32.mrf.mxu0
  %v1461 = vadd.f32 %v1396, %v1460
  %1462 = vmatmul.f32.gmra.mxu0 %v1275
  %v1463 = vpop.f32.mrf.mxu0
  %v1464 = vadd.f32 %v1399, %v1463
  %1465 = vmatmul.f32.gmra.mxu0 %v1277
  %v1466 = vpop.f32.mrf.mxu0
  %v1467 = vadd.f32 %v1402, %v1466
  %1468 = vmatmul.f32.gmra.mxu0 %v1279
  %v1469 = vpop.f32.mrf.mxu0
  %v1470 = vadd.f32 %v1405, %v1469
  %1471 = vmatmul.f32.gmra.mxu0 %v1281
  %v1472 = vpop.f32.mrf.mxu0
  %v1473 = vadd.f32 %v1408, %v1472
  %1474 = vmatmul.f32.gmra.mxu0 %v1267
  %v1475 = vpop.f32.mrf.mxu0
  %v1476 = vadd.f32 %v1411, %v1475
  %1477 = vdwg.mxu0
  %v1478 = vld [vmem:[%s6] sm:$0x1]
  %v1479 = vld [vmem:[%s7] sm:$0x1]
  %v1480 = vsel %vm71, %v1431, 0.0
  %v1481 = vsel %vm71, %v1434, 0.0
  %v1482 = vadd.f32 %v1480, %v1481
  %v1483 = vsel %vm71, %v1437, 0.0
  %v1484 = vadd.f32 %v1482, %v1483
  %v1485 = vsel %vm71, %v1440, 0.0
  %v1486 = vadd.f32 %v1484, %v1485
  %v1487 = vsel %vm71, %v1443, 0.0
  %v1488 = vadd.f32 %v1486, %v1487
  %v1489 = vsel %vm71, %v1446, 0.0
  %v1490 = vadd.f32 %v1488, %v1489
  %v1491 = vsel %vm71, %v1449, 0.0
  %v1492 = vadd.f32 %v1490, %v1491
  %v1493 = vsel %vm71, %v1452, 0.0
  %v1494 = vadd.f32 %v1492, %v1493
  %v1495 = vsel %vm71, %v1455, 0.0
  %v1496 = vadd.f32 %v1494, %v1495
  %v1497 = vsel %vm71, %v1458, 0.0
  %v1498 = vadd.f32 %v1496, %v1497
  %v1499 = vsel %vm71, %v1461, 0.0
  %v1500 = vadd.f32 %v1498, %v1499
  %v1501 = vsel %vm71, %v1464, 0.0
  %v1502 = vadd.f32 %v1500, %v1501
  %v1503 = vsel %vm71, %v1467, 0.0
  %v1504 = vadd.f32 %v1502, %v1503
  %v1505 = vsel %vm71, %v1470, 0.0
  %v1506 = vadd.f32 %v1504, %v1505
  %v1507 = vsel %vm71, %v1473, 0.0
  %v1508 = vadd.f32 %v1506, %v1507
  %v1509 = vsel %vm71, %v1476, 0.0
  %v1510 = vadd.f32 %v1508, %v1509
  %v1511 = vrot.slane %v1510, 4
  %v1512 = vadd.f32 %v1510, %v1511
  %v1513 = vrot.slane %v1512, 2
  %v1514 = vadd.f32 %v1512, %v1513
  %v1515 = vrot.slane %v1514, 1
  %v1516 = vadd.f32 %v1514, %v1515
  %v1517 = vmul.f32 %v1516, 0.0078125
  %v1518 = vmul.f32 %v1431, %v1431
  %v1519 = vmul.f32 %v1434, %v1434
  %v1520 = vmul.f32 %v1437, %v1437
  %v1521 = vmul.f32 %v1440, %v1440
  %v1522 = vmul.f32 %v1443, %v1443
  %v1523 = vmul.f32 %v1446, %v1446
  %v1524 = vmul.f32 %v1449, %v1449
  %v1525 = vmul.f32 %v1452, %v1452
  %v1526 = vmul.f32 %v1455, %v1455
  %v1527 = vmul.f32 %v1458, %v1458
  %v1528 = vmul.f32 %v1461, %v1461
  %v1529 = vmul.f32 %v1464, %v1464
  %v1530 = vmul.f32 %v1467, %v1467
  %v1531 = vmul.f32 %v1470, %v1470
  %v1532 = vmul.f32 %v1473, %v1473
  %v1533 = vmul.f32 %v1476, %v1476
  %v1534 = vsel %vm71, %v1518, 0.0
  %v1535 = vsel %vm71, %v1519, 0.0
  %v1536 = vadd.f32 %v1534, %v1535
  %v1537 = vsel %vm71, %v1520, 0.0
  %v1538 = vadd.f32 %v1536, %v1537
  %v1539 = vsel %vm71, %v1521, 0.0
  %v1540 = vadd.f32 %v1538, %v1539
  %v1541 = vsel %vm71, %v1522, 0.0
  %v1542 = vadd.f32 %v1540, %v1541
  %v1543 = vsel %vm71, %v1523, 0.0
  %v1544 = vadd.f32 %v1542, %v1543
  %v1545 = vsel %vm71, %v1524, 0.0
  %v1546 = vadd.f32 %v1544, %v1545
  %v1547 = vsel %vm71, %v1525, 0.0
  %v1548 = vadd.f32 %v1546, %v1547
  %v1549 = vsel %vm71, %v1526, 0.0
  %v1550 = vadd.f32 %v1548, %v1549
  %v1551 = vsel %vm71, %v1527, 0.0
  %v1552 = vadd.f32 %v1550, %v1551
  %v1553 = vsel %vm71, %v1528, 0.0
  %v1554 = vadd.f32 %v1552, %v1553
  %v1555 = vsel %vm71, %v1529, 0.0
  %v1556 = vadd.f32 %v1554, %v1555
  %v1557 = vsel %vm71, %v1530, 0.0
  %v1558 = vadd.f32 %v1556, %v1557
  %v1559 = vsel %vm71, %v1531, 0.0
  %v1560 = vadd.f32 %v1558, %v1559
  %v1561 = vsel %vm71, %v1532, 0.0
  %v1562 = vadd.f32 %v1560, %v1561
  %v1563 = vsel %vm71, %v1533, 0.0
  %v1564 = vadd.f32 %v1562, %v1563
  %v1565 = vrot.slane %v1564, 4
  %v1566 = vadd.f32 %v1564, %v1565
  %v1567 = vrot.slane %v1566, 2
  %v1568 = vadd.f32 %v1566, %v1567
  %v1569 = vrot.slane %v1568, 1
  %v1570 = vadd.f32 %v1568, %v1569
  %v1571 = vmul.f32 %v1570, 0.0078125
  %v1572 = vmul.f32 %v1517, %v1517
  %v1573 = vsub.f32 %v1571, %v1572
  %v1574 = vmax.f32 %v1573, 0.0
  %v1575 = vadd.f32 %v1574, 1e-05
  %v1576 = vrsqrt.pop %v1575
  %v1577 = vmul.f32 %v1576, %v1575
  %v1578 = vmul.f32 %v1577, %v1576
  %v1579 = vmul.f32 0.5, %v1578
  %v1580 = vsub.f32 1.5, %v1579
  %v1581 = vmul.f32 %v1576, %v1580
  %vm1582 = vweird.f32 %v1575
  %vm1583 = vweird.f32 %v1576
  %vm1584 = vmor %vm1582, %vm1583
  %v1585 = vsel %vm1584, %v1576, %v1581
  %v1586 = vmul.f32 %v1585, %v1478
  %v1587 = vsub.f32 %v1431, %v1517
  %v1588 = vsub.f32 %v1434, %v1517
  %v1589 = vsub.f32 %v1437, %v1517
  %v1590 = vsub.f32 %v1440, %v1517
  %v1591 = vsub.f32 %v1443, %v1517
  %v1592 = vsub.f32 %v1446, %v1517
  %v1593 = vsub.f32 %v1449, %v1517
  %v1594 = vsub.f32 %v1452, %v1517
  %v1595 = vsub.f32 %v1455, %v1517
  %v1596 = vsub.f32 %v1458, %v1517
  %v1597 = vsub.f32 %v1461, %v1517
  %v1598 = vsub.f32 %v1464, %v1517
  %v1599 = vsub.f32 %v1467, %v1517
  %v1600 = vsub.f32 %v1470, %v1517
  %v1601 = vsub.f32 %v1473, %v1517
  %v1602 = vsub.f32 %v1476, %v1517
  %v1603 = vperm.slane %v1586, 0
  %v1604 = vmul.f32 %v1587, %v1603
  %v1605 = vmul.f32 %v1588, %v1603
  %v1606 = vmul.f32 %v1589, %v1603
  %v1607 = vmul.f32 %v1590, %v1603
  %v1608 = vmul.f32 %v1591, %v1603
  %v1609 = vmul.f32 %v1592, %v1603
  %v1610 = vmul.f32 %v1593, %v1603
  %v1611 = vmul.f32 %v1594, %v1603
  %v1612 = vmul.f32 %v1595, %v1603
  %v1613 = vmul.f32 %v1596, %v1603
  %v1614 = vmul.f32 %v1597, %v1603
  %v1615 = vmul.f32 %v1598, %v1603
  %v1616 = vmul.f32 %v1599, %v1603
  %v1617 = vmul.f32 %v1600, %v1603
  %v1618 = vmul.f32 %v1601, %v1603
  %v1619 = vmul.f32 %v1602, %v1603
  %v1621 = vperm.slane %v1479, 0
  %v1623 = vadd.f32 %v1604, %v1621
  %v1624 = vadd.f32 %v1605, %v1621
  %v1625 = vadd.f32 %v1606, %v1621
  %v1626 = vadd.f32 %v1607, %v1621
  %v1627 = vadd.f32 %v1608, %v1621
  %v1628 = vadd.f32 %v1609, %v1621
  %v1629 = vadd.f32 %v1610, %v1621
  %v1630 = vadd.f32 %v1611, %v1621
  %v1631 = vadd.f32 %v1612, %v1621
  %v1632 = vadd.f32 %v1613, %v1621
  %v1633 = vadd.f32 %v1614, %v1621
  %v1634 = vadd.f32 %v1615, %v1621
  %v1635 = vadd.f32 %v1616, %v1621
  %v1636 = vadd.f32 %v1617, %v1621
  %v1637 = vadd.f32 %v1618, %v1621
  %v1638 = vadd.f32 %v1619, %v1621
  %v1639 = vmul.f32 %v1623, 0.2
  %v1640 = vmul.f32 %v1624, 0.2
  %v1641 = vmul.f32 %v1625, 0.2
  %v1642 = vmul.f32 %v1626, 0.2
  %v1643 = vmul.f32 %v1627, 0.2
  %v1644 = vmul.f32 %v1628, 0.2
  %v1645 = vmul.f32 %v1629, 0.2
  %v1646 = vmul.f32 %v1630, 0.2
  %v1647 = vmul.f32 %v1631, 0.2
  %v1648 = vmul.f32 %v1632, 0.2
  %v1649 = vmul.f32 %v1633, 0.2
  %v1650 = vmul.f32 %v1634, 0.2
  %v1651 = vmul.f32 %v1635, 0.2
  %v1652 = vmul.f32 %v1636, 0.2
  %v1653 = vmul.f32 %v1637, 0.2
  %v1654 = vmul.f32 %v1638, 0.2
  %v1655 = vmax.f32 %v1623, %v1639
  %v1656 = vmax.f32 %v1624, %v1640
  %v1657 = vmax.f32 %v1625, %v1641
  %v1658 = vmax.f32 %v1626, %v1642
  %v1659 = vmax.f32 %v1627, %v1643
  %v1660 = vmax.f32 %v1628, %v1644
  %v1661 = vmax.f32 %v1629, %v1645
  %v1662 = vmax.f32 %v1630, %v1646
  %v1663 = vmax.f32 %v1631, %v1647
  %v1664 = vmax.f32 %v1632, %v1648
  %v1665 = vmax.f32 %v1633, %v1649
  %v1666 = vmax.f32 %v1634, %v1650
  %v1667 = vmax.f32 %v1635, %v1651
  %v1668 = vmax.f32 %v1636, %v1652
  %v1669 = vmax.f32 %v1637, %v1653
  %v1670 = vmax.f32 %v1638, %v1654
  %v1687 = vrot.slane %v1655, 1
  %v1688 = vrot.slane %v1655, 2
  %v1689 = vrot.slane %v1655, 3
  %v1690 = vrot.slane %v1655, 4
  %v1691 = vrot.slane %v1655, 5
  %v1692 = vrot.slane %v1655, 6
  %v1693 = vrot.slane %v1655, 7
  %v1694 = vrot.slane %v1656, 1
  %v1695 = vrot.slane %v1656, 2
  %v1696 = vrot.slane %v1656, 3
  %v1697 = vrot.slane %v1656, 4
  %v1698 = vrot.slane %v1656, 5
  %v1699 = vrot.slane %v1656, 6
  %v1700 = vrot.slane %v1656, 7
  %v1701 = vrot.slane %v1657, 1
  %v1702 = vrot.slane %v1657, 2
  %v1703 = vrot.slane %v1657, 3
  %v1704 = vrot.slane %v1657, 4
  %v1705 = vrot.slane %v1657, 5
  %v1706 = vrot.slane %v1657, 6
  %v1707 = vrot.slane %v1657, 7
  %v1708 = vrot.slane %v1658, 1
  %v1709 = vrot.slane %v1658, 2
  %v1710 = vrot.slane %v1658, 3
  %v1711 = vrot.slane %v1658, 4
  %v1712 = vrot.slane %v1658, 5
  %v1713 = vrot.slane %v1658, 6
  %v1714 = vrot.slane %v1658, 7
  %v1715 = vrot.slane %v1659, 1
  %v1716 = vrot.slane %v1659, 2
  %v1717 = vrot.slane %v1659, 3
  %v1718 = vrot.slane %v1659, 4
  %v1719 = vrot.slane %v1659, 5
  %v1720 = vrot.slane %v1659, 6
  %v1721 = vrot.slane %v1659, 7
  %v1722 = vrot.slane %v1660, 1
  %v1723 = vrot.slane %v1660, 2
  %v1724 = vrot.slane %v1660, 3
  %v1725 = vrot.slane %v1660, 4
  %v1726 = vrot.slane %v1660, 5
  %v1727 = vrot.slane %v1660, 6
  %v1728 = vrot.slane %v1660, 7
  %v1729 = vrot.slane %v1661, 1
  %v1730 = vrot.slane %v1661, 2
  %v1731 = vrot.slane %v1661, 3
  %v1732 = vrot.slane %v1661, 4
  %v1733 = vrot.slane %v1661, 5
  %v1734 = vrot.slane %v1661, 6
  %v1735 = vrot.slane %v1661, 7
  %v1736 = vrot.slane %v1662, 1
  %v1737 = vrot.slane %v1662, 2
  %v1738 = vrot.slane %v1662, 3
  %v1739 = vrot.slane %v1662, 4
  %v1740 = vrot.slane %v1662, 5
  %v1741 = vrot.slane %v1662, 6
  %v1742 = vrot.slane %v1662, 7
  %v1743 = vrot.slane %v1663, 1
  %v1744 = vrot.slane %v1663, 2
  %v1745 = vrot.slane %v1663, 3
  %v1746 = vrot.slane %v1663, 4
  %v1747 = vrot.slane %v1663, 5
  %v1748 = vrot.slane %v1663, 6
  %v1749 = vrot.slane %v1663, 7
  %v1750 = vrot.slane %v1664, 1
  %v1751 = vrot.slane %v1664, 2
  %v1752 = vrot.slane %v1664, 3
  %v1753 = vrot.slane %v1664, 4
  %v1754 = vrot.slane %v1664, 5
  %v1755 = vrot.slane %v1664, 6
  %v1756 = vrot.slane %v1664, 7
  %v1757 = vrot.slane %v1665, 1
  %v1758 = vrot.slane %v1665, 2
  %v1759 = vrot.slane %v1665, 3
  %v1760 = vrot.slane %v1665, 4
  %v1761 = vrot.slane %v1665, 5
  %v1762 = vrot.slane %v1665, 6
  %v1763 = vrot.slane %v1665, 7
  %v1764 = vrot.slane %v1666, 1
  %v1765 = vrot.slane %v1666, 2
  %v1766 = vrot.slane %v1666, 3
  %v1767 = vrot.slane %v1666, 4
  %v1768 = vrot.slane %v1666, 5
  %v1769 = vrot.slane %v1666, 6
  %v1770 = vrot.slane %v1666, 7
  %v1771 = vrot.slane %v1667, 1
  %v1772 = vrot.slane %v1667, 2
  %v1773 = vrot.slane %v1667, 3
  %v1774 = vrot.slane %v1667, 4
  %v1775 = vrot.slane %v1667, 5
  %v1776 = vrot.slane %v1667, 6
  %v1777 = vrot.slane %v1667, 7
  %v1778 = vrot.slane %v1668, 1
  %v1779 = vrot.slane %v1668, 2
  %v1780 = vrot.slane %v1668, 3
  %v1781 = vrot.slane %v1668, 4
  %v1782 = vrot.slane %v1668, 5
  %v1783 = vrot.slane %v1668, 6
  %v1784 = vrot.slane %v1668, 7
  %v1785 = vrot.slane %v1669, 1
  %v1786 = vrot.slane %v1669, 2
  %v1787 = vrot.slane %v1669, 3
  %v1788 = vrot.slane %v1669, 4
  %v1789 = vrot.slane %v1669, 5
  %v1790 = vrot.slane %v1669, 6
  %v1791 = vrot.slane %v1669, 7
  %v1792 = vrot.slane %v1670, 1
  %v1793 = vrot.slane %v1670, 2
  %v1794 = vrot.slane %v1670, 3
  %v1795 = vrot.slane %v1670, 4
  %v1796 = vrot.slane %v1670, 5
  %v1797 = vrot.slane %v1670, 6
  %v1798 = vrot.slane %v1670, 7
  %v1911 = vperm.slane %v1655, 0
  %v1912 = vperm.slane %v1687, 0
  %v1913 = vperm.slane %v1688, 0
  %v1914 = vperm.slane %v1689, 0
  %v1915 = vperm.slane %v1690, 0
  %v1916 = vperm.slane %v1691, 0
  %v1917 = vperm.slane %v1692, 0
  %v1918 = vperm.slane %v1693, 0
  %v1919 = vperm.slane %v1656, 0
  %v1920 = vperm.slane %v1694, 0
  %v1921 = vperm.slane %v1695, 0
  %v1922 = vperm.slane %v1696, 0
  %v1923 = vperm.slane %v1697, 0
  %v1924 = vperm.slane %v1698, 0
  %v1925 = vperm.slane %v1699, 0
  %v1926 = vperm.slane %v1700, 0
  %v1927 = vperm.slane %v1657, 0
  %v1928 = vperm.slane %v1701, 0
  %v1929 = vperm.slane %v1702, 0
  %v1930 = vperm.slane %v1703, 0
  %v1931 = vperm.slane %v1704, 0
  %v1932 = vperm.slane %v1705, 0
  %v1933 = vperm.slane %v1706, 0
  %v1934 = vperm.slane %v1707, 0
  %v1935 = vperm.slane %v1658, 0
  %v1936 = vperm.slane %v1708, 0
  %v1937 = vperm.slane %v1709, 0
  %v1938 = vperm.slane %v1710, 0
  %v1939 = vperm.slane %v1711, 0
  %v1940 = vperm.slane %v1712, 0
  %v1941 = vperm.slane %v1713, 0
  %v1942 = vperm.slane %v1714, 0
  %v1943 = vperm.slane %v1659, 0
  %v1944 = vperm.slane %v1715, 0
  %v1945 = vperm.slane %v1716, 0
  %v1946 = vperm.slane %v1717, 0
  %v1947 = vperm.slane %v1718, 0
  %v1948 = vperm.slane %v1719, 0
  %v1949 = vperm.slane %v1720, 0
  %v1950 = vperm.slane %v1721, 0
  %v1951 = vperm.slane %v1660, 0
  %v1952 = vperm.slane %v1722, 0
  %v1953 = vperm.slane %v1723, 0
  %v1954 = vperm.slane %v1724, 0
  %v1955 = vperm.slane %v1725, 0
  %v1956 = vperm.slane %v1726, 0
  %v1957 = vperm.slane %v1727, 0
  %v1958 = vperm.slane %v1728, 0
  %v1959 = vperm.slane %v1661, 0
  %v1960 = vperm.slane %v1729, 0
  %v1961 = vperm.slane %v1730, 0
  %v1962 = vperm.slane %v1731, 0
  %v1963 = vperm.slane %v1732, 0
  %v1964 = vperm.slane %v1733, 0
  %v1965 = vperm.slane %v1734, 0
  %v1966 = vperm.slane %v1735, 0
  %v1967 = vperm.slane %v1662, 0
  %v1968 = vperm.slane %v1736, 0
  %v1969 = vperm.slane %v1737, 0
  %v1970 = vperm.slane %v1738, 0
  %v1971 = vperm.slane %v1739, 0
  %v1972 = vperm.slane %v1740, 0
  %v1973 = vperm.slane %v1741, 0
  %v1974 = vperm.slane %v1742, 0
  %v1975 = vperm.slane %v1663, 0
  %v1976 = vperm.slane %v1743, 0
  %v1977 = vperm.slane %v1744, 0
  %v1978 = vperm.slane %v1745, 0
  %v1979 = vperm.slane %v1746, 0
  %v1980 = vperm.slane %v1747, 0
  %v1981 = vperm.slane %v1748, 0
  %v1982 = vperm.slane %v1749, 0
  %v1983 = vperm.slane %v1664, 0
  %v1984 = vperm.slane %v1750, 0
  %v1985 = vperm.slane %v1751, 0
  %v1986 = vperm.slane %v1752, 0
  %v1987 = vperm.slane %v1753, 0
  %v1988 = vperm.slane %v1754, 0
  %v1989 = vperm.slane %v1755, 0
  %v1990 = vperm.slane %v1756, 0
  %v1991 = vperm.slane %v1665, 0
  %v1992 = vperm.slane %v1757, 0
  %v1993 = vperm.slane %v1758, 0
  %v1994 = vperm.slane %v1759, 0
  %v1995 = vperm.slane %v1760, 0
  %v1996 = vperm.slane %v1761, 0
  %v1997 = vperm.slane %v1762, 0
  %v1998 = vperm.slane %v1763, 0
  %v1999 = vperm.slane %v1666, 0
  %v2000 = vperm.slane %v1764, 0
  %v2001 = vperm.slane %v1765, 0
  %v2002 = vperm.slane %v1766, 0
  %v2003 = vperm.slane %v1767, 0
  %v2004 = vperm.slane %v1768, 0
  %v2005 = vperm.slane %v1769, 0
  %v2006 = vperm.slane %v1770, 0
  %v2007 = vperm.slane %v1667, 0
  %v2008 = vperm.slane %v1771, 0
  %v2009 = vperm.slane %v1772, 0
  %v2010 = vperm.slane %v1773, 0
  %v2011 = vperm.slane %v1774, 0
  %v2012 = vperm.slane %v1775, 0
  %v2013 = vperm.slane %v1776, 0
  %v2014 = vperm.slane %v1777, 0
  %v2015 = vperm.slane %v1668, 0
  %v2016 = vperm.slane %v1778, 0
  %v2017 = vperm.slane %v1779, 0
  %v2018 = vperm.slane %v1780, 0
  %v2019 = vperm.slane %v1781, 0
  %v2020 = vperm.slane %v1782, 0
  %v2021 = vperm.slane %v1783, 0
  %v2022 = vperm.slane %v1784, 0
  %v2023 = vperm.slane %v1669, 0
  %v2024 = vperm.slane %v1785, 0
  %v2025 = vperm.slane %v1786, 0
  %v2026 = vperm.slane %v1787, 0
  %v2027 = vperm.slane %v1788, 0
  %v2028 = vperm.slane %v1789, 0
  %v2029 = vperm.slane %v1790, 0
  %v2030 = vperm.slane %v1791, 0
  %v2031 = vperm.slane %v1670, 0
  %v2032 = vperm.slane %v1792, 0
  %v2033 = vperm.slane %v1793, 0
  %v2034 = vperm.slane %v1794, 0
  %v2035 = vperm.slane %v1795, 0
  %v2036 = vperm.slane %v1796, 0
  %v2037 = vperm.slane %v1797, 0
  %v2038 = vperm.slane %v1798, 0
  %v2167 = vsel %vm249, %v1655, %v1911
  %v2168 = vsel %vm249, %v1687, %v1912
  %v2169 = vsel %vm249, %v1688, %v1913
  %v2170 = vsel %vm249, %v1689, %v1914
  %v2171 = vsel %vm249, %v1690, %v1915
  %v2172 = vsel %vm249, %v1691, %v1916
  %v2173 = vsel %vm249, %v1692, %v1917
  %v2174 = vsel %vm249, %v1693, %v1918
  %v2175 = vsel %vm249, %v1656, %v1919
  %v2176 = vsel %vm249, %v1694, %v1920
  %v2177 = vsel %vm249, %v1695, %v1921
  %v2178 = vsel %vm249, %v1696, %v1922
  %v2179 = vsel %vm249, %v1697, %v1923
  %v2180 = vsel %vm249, %v1698, %v1924
  %v2181 = vsel %vm249, %v1699, %v1925
  %v2182 = vsel %vm249, %v1700, %v1926
  %v2183 = vsel %vm249, %v1657, %v1927
  %v2184 = vsel %vm249, %v1701, %v1928
  %v2185 = vsel %vm249, %v1702, %v1929
  %v2186 = vsel %vm249, %v1703, %v1930
  %v2187 = vsel %vm249, %v1704, %v1931
  %v2188 = vsel %vm249, %v1705, %v1932
  %v2189 = vsel %vm249, %v1706, %v1933
  %v2190 = vsel %vm249, %v1707, %v1934
  %v2191 = vsel %vm249, %v1658, %v1935
  %v2192 = vsel %vm249, %v1708, %v1936
  %v2193 = vsel %vm249, %v1709, %v1937
  %v2194 = vsel %vm249, %v1710, %v1938
  %v2195 = vsel %vm249, %v1711, %v1939
  %v2196 = vsel %vm249, %v1712, %v1940
  %v2197 = vsel %vm249, %v1713, %v1941
  %v2198 = vsel %vm249, %v1714, %v1942
  %v2199 = vsel %vm249, %v1659, %v1943
  %v2200 = vsel %vm249, %v1715, %v1944
  %v2201 = vsel %vm249, %v1716, %v1945
  %v2202 = vsel %vm249, %v1717, %v1946
  %v2203 = vsel %vm249, %v1718, %v1947
  %v2204 = vsel %vm249, %v1719, %v1948
  %v2205 = vsel %vm249, %v1720, %v1949
  %v2206 = vsel %vm249, %v1721, %v1950
  %v2207 = vsel %vm249, %v1660, %v1951
  %v2208 = vsel %vm249, %v1722, %v1952
  %v2209 = vsel %vm249, %v1723, %v1953
  %v2210 = vsel %vm249, %v1724, %v1954
  %v2211 = vsel %vm249, %v1725, %v1955
  %v2212 = vsel %vm249, %v1726, %v1956
  %v2213 = vsel %vm249, %v1727, %v1957
  %v2214 = vsel %vm249, %v1728, %v1958
  %v2215 = vsel %vm249, %v1661, %v1959
  %v2216 = vsel %vm249, %v1729, %v1960
  %v2217 = vsel %vm249, %v1730, %v1961
  %v2218 = vsel %vm249, %v1731, %v1962
  %v2219 = vsel %vm249, %v1732, %v1963
  %v2220 = vsel %vm249, %v1733, %v1964
  %v2221 = vsel %vm249, %v1734, %v1965
  %v2222 = vsel %vm249, %v1735, %v1966
  %v2223 = vsel %vm249, %v1662, %v1967
  %v2224 = vsel %vm249, %v1736, %v1968
  %v2225 = vsel %vm249, %v1737, %v1969
  %v2226 = vsel %vm249, %v1738, %v1970
  %v2227 = vsel %vm249, %v1739, %v1971
  %v2228 = vsel %vm249, %v1740, %v1972
  %v2229 = vsel %vm249, %v1741, %v1973
  %v2230 = vsel %vm249, %v1742, %v1974
  %v2231 = vsel %vm249, %v1663, %v1975
  %v2232 = vsel %vm249, %v1743, %v1976
  %v2233 = vsel %vm249, %v1744, %v1977
  %v2234 = vsel %vm249, %v1745, %v1978
  %v2235 = vsel %vm249, %v1746, %v1979
  %v2236 = vsel %vm249, %v1747, %v1980
  %v2237 = vsel %vm249, %v1748, %v1981
  %v2238 = vsel %vm249, %v1749, %v1982
  %v2239 = vsel %vm249, %v1664, %v1983
  %v2240 = vsel %vm249, %v1750, %v1984
  %v2241 = vsel %vm249, %v1751, %v1985
  %v2242 = vsel %vm249, %v1752, %v1986
  %v2243 = vsel %vm249, %v1753, %v1987
  %v2244 = vsel %vm249, %v1754, %v1988
  %v2245 = vsel %vm249, %v1755, %v1989
  %v2246 = vsel %vm249, %v1756, %v1990
  %v2247 = vsel %vm249, %v1665, %v1991
  %v2248 = vsel %vm249, %v1757, %v1992
  %v2249 = vsel %vm249, %v1758, %v1993
  %v2250 = vsel %vm249, %v1759, %v1994
  %v2251 = vsel %vm249, %v1760, %v1995
  %v2252 = vsel %vm249, %v1761, %v1996
  %v2253 = vsel %vm249, %v1762, %v1997
  %v2254 = vsel %vm249, %v1763, %v1998
  %v2255 = vsel %vm249, %v1666, %v1999
  %v2256 = vsel %vm249, %v1764, %v2000
  %v2257 = vsel %vm249, %v1765, %v2001
  %v2258 = vsel %vm249, %v1766, %v2002
  %v2259 = vsel %vm249, %v1767, %v2003
  %v2260 = vsel %vm249, %v1768, %v2004
  %v2261 = vsel %vm249, %v1769, %v2005
  %v2262 = vsel %vm249, %v1770, %v2006
  %v2263 = vsel %vm249, %v1667, %v2007
  %v2264 = vsel %vm249, %v1771, %v2008
  %v2265 = vsel %vm249, %v1772, %v2009
  %v2266 = vsel %vm249, %v1773, %v2010
  %v2267 = vsel %vm249, %v1774, %v2011
  %v2268 = vsel %vm249, %v1775, %v2012
  %v2269 = vsel %vm249, %v1776, %v2013
  %v2270 = vsel %vm249, %v1777, %v2014
  %v2271 = vsel %vm249, %v1668, %v2015
  %v2272 = vsel %vm249, %v1778, %v2016
  %v2273 = vsel %vm249, %v1779, %v2017
  %v2274 = vsel %vm249, %v1780, %v2018
  %v2275 = vsel %vm249, %v1781, %v2019
  %v2276 = vsel %vm249, %v1782, %v2020
  %v2277 = vsel %vm249, %v1783, %v2021
  %v2278 = vsel %vm249, %v1784, %v2022
  %v2279 = vsel %vm249, %v1669, %v2023
  %v2280 = vsel %vm249, %v1785, %v2024
  %v2281 = vsel %vm249, %v1786, %v2025
  %v2282 = vsel %vm249, %v1787, %v2026
  %v2283 = vsel %vm249, %v1788, %v2027
  %v2284 = vsel %vm249, %v1789, %v2028
  %v2285 = vsel %vm249, %v1790, %v2029
  %v2286 = vsel %vm249, %v1791, %v2030
  %v2287 = vsel %vm249, %v1670, %v2031
  %v2288 = vsel %vm249, %v1792, %v2032
  %v2289 = vsel %vm249, %v1793, %v2033
  %v2290 = vsel %vm249, %v1794, %v2034
  %v2291 = vsel %vm249, %v1795, %v2035
  %v2292 = vsel %vm249, %v1796, %v2036
  %v2293 = vsel %vm249, %v1797, %v2037
  %v2294 = vsel %vm249, %v1798, %v2038
  %v2295 = vld [vmem:[%s8] sm:$0xff]
  %v2296 = vld [vmem:[%s8 + $0x8] sm:$0xff]
  %v2297 = vld [vmem:[%s8 + $0x10] sm:$0xff]
  %v2298 = vld [vmem:[%s8 + $0x18] sm:$0xff]
  %v2299 = vld [vmem:[%s8 + $0x20] sm:$0xff]
  %v2300 = vld [vmem:[%s8 + $0x28] sm:$0xff]
  %v2301 = vld [vmem:[%s8 + $0x30] sm:$0xff]
  %v2302 = vld [vmem:[%s8 + $0x38] sm:$0xff]
  %v2303 = vld [vmem:[%s8 + $0x40] sm:$0xff]
  %v2304 = vld [vmem:[%s8 + $0x48] sm:$0xff]
  %v2305 = vld [vmem:[%s8 + $0x50] sm:$0xff]
  %v2306 = vld [vmem:[%s8 + $0x58] sm:$0xff]
  %v2307 = vld [vmem:[%s8 + $0x60] sm:$0xff]
  %v2308 = vld [vmem:[%s8 + $0x68] sm:$0xff]
  %v2309 = vld [vmem:[%s8 + $0x70] sm:$0xff]
  %v2310 = vld [vmem:[%s8 + $0x78] sm:$0xff]
  %v2311 = vld [vmem:[%s8 + $0x80] sm:$0xff]
  %v2312 = vld [vmem:[%s8 + $0x88] sm:$0xff]
  %v2313 = vld [vmem:[%s8 + $0x90] sm:$0xff]
  %v2314 = vld [vmem:[%s8 + $0x98] sm:$0xff]
  %v2315 = vld [vmem:[%s8 + $0xa0] sm:$0xff]
  %v2316 = vld [vmem:[%s8 + $0xa8] sm:$0xff]
  %v2317 = vld [vmem:[%s8 + $0xb0] sm:$0xff]
  %v2318 = vld [vmem:[%s8 + $0xb8] sm:$0xff]
  %v2319 = vld [vmem:[%s8 + $0xc0] sm:$0xff]
  %v2320 = vld [vmem:[%s8 + $0xc8] sm:$0xff]
  %v2321 = vld [vmem:[%s8 + $0xd0] sm:$0xff]
  %v2322 = vld [vmem:[%s8 + $0xd8] sm:$0xff]
  %v2323 = vld [vmem:[%s8 + $0xe0] sm:$0xff]
  %v2324 = vld [vmem:[%s8 + $0xe8] sm:$0xff]
  %v2325 = vld [vmem:[%s8 + $0xf0] sm:$0xff]
  %v2326 = vld [vmem:[%s8 + $0xf8] sm:$0xff]
  %v2327 = vld [vmem:[%s8 + $0x100] sm:$0xff]
  %v2328 = vld [vmem:[%s8 + $0x108] sm:$0xff]
  %v2329 = vld [vmem:[%s8 + $0x110] sm:$0xff]
  %v2330 = vld [vmem:[%s8 + $0x118] sm:$0xff]
  %2459 = vst [vmem:[#allocation1] ss:$4 sm:$0xff] %v2167
  %s2460 = scalar_lea.vmem [#allocation1], 1
  %2461 = vst [vmem:[%s2460] ss:$4 sm:$0xff] %v2168
  %s2462 = scalar_lea.vmem [#allocation1], 2
  %2463 = vst [vmem:[%s2462] ss:$4 sm:$0xff] %v2169
  %s2464 = scalar_lea.vmem [#allocation1], 3
  %2465 = vst [vmem:[%s2464] ss:$4 sm:$0xff] %v2170
  %s2466 = scalar_lea.vmem [#allocation1], 32
  %2467 = vst [vmem:[%s2466] ss:$4 sm:$0xff] %v2171
  %s2468 = scalar_lea.vmem [#allocation1], 33
  %2469 = vst [vmem:[%s2468] ss:$4 sm:$0xff] %v2172
  %s2470 = scalar_lea.vmem [#allocation1], 34
  %2471 = vst [vmem:[%s2470] ss:$4 sm:$0xff] %v2173
  %s2472 = scalar_lea.vmem [#allocation1], 35
  %2473 = vst [vmem:[%s2472] ss:$4 sm:$0xff] %v2174
  %v2474 = vld.sshfl [vmem:[#allocation1] sm:$0xff pattern:$0x73625140]
  %v2475 = vld.sshfl [vmem:[#allocation1 + $0x20] sm:$0xff pattern:$0x73625140]
  %2476 = vst [vmem:[#allocation1] ss:$4 sm:$0xff] %v2167
  %2477 = vst [vmem:[%s2460] ss:$4 sm:$0xff] %v2168
  %2478 = vst [vmem:[%s2462] ss:$4 sm:$0xff] %v2169
  %2479 = vst [vmem:[%s2464] ss:$4 sm:$0xff] %v2170
  %2480 = vst [vmem:[%s2466] ss:$4 sm:$0xff] %v2171
  %2481 = vst [vmem:[%s2468] ss:$4 sm:$0xff] %v2172
  %2482 = vst [vmem:[%s2470] ss:$4 sm:$0xff] %v2173
  %2483 = vst [vmem:[%s2472] ss:$4 sm:$0xff] %v2174
  %v2484 = vld.sshfl [vmem:[#allocation1] sm:$0xff pattern:$0x73625140]
  %v2485 = vld.sshfl [vmem:[#allocation1 + $0x20] sm:$0xff pattern:$0x73625140]
  %2486 = vst [vmem:[#allocation1] ss:$4 sm:$0xff] %v2175
  %2487 = vst [vmem:[%s2460] ss:$4 sm:$0xff] %v2176
  %2488 = vst [vmem:[%s2462] ss:$4 sm:$0xff] %v2177
  %2489 = vst [vmem:[%s2464] ss:$4 sm:$0xff] %v2178
  %2490 = vst [vmem:[%s2466] ss:$4 sm:$0xff] %v2179
  %2491 = vst [vmem:[%s2468] ss:$4 sm:$0xff] %v2180
  %2492 = vst [vmem:[%s2470] ss:$4 sm:$0xff] %v2181
  %2493 = vst [vmem:[%s2472] ss:$4 sm:$0xff] %v2182
  %v2494 = vld.sshfl [vmem:[#allocation1] sm:$0xff pattern:$0x73625140]
  %v2495 = vld.sshfl [vmem:[#allocation1 + $0x20] sm:$0xff pattern:$0x73625140]
  %2496 = vst [vmem:[#allocation1] ss:$4 sm:$0xff] %v2175
  %2497 = vst [vmem:[%s2460] ss:$4 sm:$0xff] %v2176
  %2498 = vst [vmem:[%s2462] ss:$4 sm:$0xff] %v2177
  %2499 = vst [vmem:[%s2464] ss:$4 sm:$0xff] %v2178
  %2500 = vst [vmem:[%s2466] ss:$4 sm:$0xff] %v2179
  %2501 = vst [vmem:[%s2468] ss:$4 sm:$0xff] %v2180
  %2502 = vst [vmem:[%s2470] ss:$4 sm:$0xff] %v2181
  %2503 = vst [vmem:[%s2472] ss:$4 sm:$0xff] %v2182
  %v2504 = vld.sshfl [vmem:[#allocation1] sm:$0xff pattern:$0x73625140]
  %v2505 = vld.sshfl [vmem:[#allocation1 + $0x20] sm:$0xff pattern:$0x73625140]
  %2506 = vst [vmem:[#allocation1] ss:$4 sm:$0xff] %v2183
  %2507 = vst [vmem:[%s2460] ss:$4 sm:$0xff] %v2184
  %2508 = vst [vmem:[%s2462] ss:$4 sm:$0xff] %v2185
  %2509 = vst [vmem:[%s2464] ss:$4 sm:$0xff] %v2186
  %2510 = vst [vmem:[%s2466] ss:$4 sm:$0xff] %v2187
  %2511 = vst [vmem:[%s2468] ss:$4 sm:$0xff] %v2188
  %2512 = vst [vmem:[%s2470] ss:$4 sm:$0xff] %v2189
  %2513 = vst [vmem:[%s2472] ss:$4 sm:$0xff] %v2190
  %v2514 = vld.sshfl [vmem:[#allocation1] sm:$0xff pattern:$0x73625140]
  %v2515 = vld.sshfl [vmem:[#allocation1 + $0x20] sm:$0xff pattern:$0x73625140]
  %2516 = vst [vmem:[#allocation1] ss:$4 sm:$0xff] %v2183
  %2517 = vst [vmem:[%s2460] ss:$4 sm:$0xff] %v2184
  %2518 = vst [vmem:[%s2462] ss:$4 sm:$0xff] %v2185
  %2519 = vst [vmem:[%s2464] ss:$4 sm:$0xff] %v2186
  %2520 = vst [vmem:[%s2466] ss:$4 sm:$0xff] %v2187
  %2521 = vst [vmem:[%s2468] ss:$4 sm:$0xff] %v2188
  %2522 = vst [vmem:[%s2470] ss:$4 sm:$0xff] %v2189
  %2523 = vst [vmem:[%s2472] ss:$4 sm:$0xff] %v2190
  %v2524 = vld.sshfl [vmem:[#allocation1] sm:$0xff pattern:$0x73625140]
  %v2525 = vld.sshfl [vmem:[#allocation1 + $0x20] sm:$0xff pattern:$0x73625140]
  %2526 = vst [vmem:[#allocation1] ss:$4 sm:$0xff] %v2191
  %2527 = vst [vmem:[%s2460] ss:$4 sm:$0xff] %v2192
  %2528 = vst [vmem:[%s2462] ss:$4 sm:$0xff] %v2193
  %2529 = vst [vmem:[%s2464] ss:$4 sm:$0xff] %v2194
  %2530 = vst [vmem:[%s2466] ss:$4 sm:$0xff] %v2195
  %2531 = vst [vmem:[%s2468] ss:$4 sm:$0xff] %v2196
  %2532 = vst [vmem:[%s2470] ss:$4 sm:$0xff] %v2197
  %2533 = vst [vmem:[%s2472] ss:$4 sm:$0xff] %v2198
  %v2534 = vld.sshfl [vmem:[#allocation1] sm:$0xff pattern:$0x73625140]
  %v2535 = vld.sshfl [vmem:[#allocation1 + $0x20] sm:$0xff pattern:$0x73625140]
  %2536 = vst [vmem:[#allocation1] ss:$4 sm:$0xff] %v2191
  %2537 = vst [vmem:[%s2460] ss:$4 sm:$0xff] %v2192
  %2538 = vst [vmem:[%s2462] ss:$4 sm:$0xff] %v2193
  %2539 = vst [vmem:[%s2464] ss:$4 sm:$0xff] %v2194
  %2540 = vst [vmem:[%s2466] ss:$4 sm:$0xff] %v2195
  %2541 = vst [vmem:[%s2468] ss:$4 sm:$0xff] %v2196
  %2542 = vst [vmem:[%s2470] ss:$4 sm:$0xff] %v2197
  %2543 = vst [vmem:[%s2472] ss:$4 sm:$0xff] %v2198
  %v2544 = vld.sshfl [vmem:[#allocation1] sm:$0xff pattern:$0x73625140]
  %v2545 = vld.sshfl [vmem:[#allocation1 + $0x20] sm:$0xff pattern:$0x73625140]
  %2546 = vst [vmem:[#allocation1] ss:$4 sm:$0xff] %v2199
  %2547 = vst [vmem:[%s2460] ss:$4 sm:$0xff] %v2200
  %2548 = vst [vmem:[%s2462] ss:$4 sm:$0xff] %v2201
  %2549 = vst [vmem:[%s2464] ss:$4 sm:$0xff] %v2202
  %2550 = vst [vmem:[%s2466] ss:$4 sm:$0xff] %v2203
  %2551 = vst [vmem:[%s2468] ss:$4 sm:$0xff] %v2204
  %2552 = vst [vmem:[%s2470] ss:$4 sm:$0xff] %v2205
  %2553 = vst [vmem:[%s2472] ss:$4 sm:$0xff] %v2206
  %v2554 = vld.sshfl [vmem:[#allocation1] sm:$0xff pattern:$0x73625140]
  %v2555 = vld.sshfl [vmem:[#allocation1 + $0x20] sm:$0xff pattern:$0x73625140]
  %2556 = vst [vmem:[#allocation1] ss:$4 sm:$0xff] %v2199
  %2557 = vst [vmem:[%s2460] ss:$4 sm:$0xff] %v2200
  %2558 = vst [vmem:[%s2462] ss:$4 sm:$0xff] %v2201
  %2559 = vst [vmem:[%s2464] ss:$4 sm:$0xff] %v2202
  %2560 = vst [vmem:[%s2466] ss:$4 sm:$0xff] %v2203
  %2561 = vst [vmem:[%s2468] ss:$4 sm:$0xff] %v2204
  %2562 = vst [vmem:[%s2470] ss:$4 sm:$0xff] %v2205
  %2563 = vst [vmem:[%s2472] ss:$4 sm:$0xff] %v2206
  %v2564 = vld.sshfl [vmem:[#allocation1] sm:$0xff pattern:$0x73625140]
  %v2565 = vld.sshfl [vmem:[#allocation1 + $0x20] sm:$0xff pattern:$0x73625140]
  %2566 = vst [vmem:[#allocation1] ss:$4 sm:$0xff] %v2207
  %2567 = vst [vmem:[%s2460] ss:$4 sm:$0xff] %v2208
  %2568 = vst [vmem:[%s2462] ss:$4 sm:$0xff] %v2209
  %2569 = vst [vmem:[%s2464] ss:$4 sm:$0xff] %v2210
  %2570 = vst [vmem:[%s2466] ss:$4 sm:$0xff] %v2211
  %2571 = vst [vmem:[%s2468] ss:$4 sm:$0xff] %v2212
  %2572 = vst [vmem:[%s2470] ss:$4 sm:$0xff] %v2213
  %2573 = vst [vmem:[%s2472] ss:$4 sm:$0xff] %v2214
  %v2574 = vld.sshfl [vmem:[#allocation1] sm:$0xff pattern:$0x73625140]
  %v2575 = vld.sshfl [vmem:[#allocation1 + $0x20] sm:$0xff pattern:$0x73625140]
  %2576 = vst [vmem:[#allocation1] ss:$4 sm:$0xff] %v2207
  %2577 = vst [vmem:[%s2460] ss:$4 sm:$0xff] %v2208
  %2578 = vst [vmem:[%s2462] ss:$4 sm:$0xff] %v2209
  %2579 = vst [vmem:[%s2464] ss:$4 sm:$0xff] %v2210
  %2580 = vst [vmem:[%s2466] ss:$4 sm:$0xff] %v2211
  %2581 = vst [vmem:[%s2468] ss:$4 sm:$0xff] %v2212
  %2582 = vst [vmem:[%s2470] ss:$4 sm:$0xff] %v2213
  %2583 = vst [vmem:[%s2472] ss:$4 sm:$0xff] %v2214
  %v2584 = vld.sshfl [vmem:[#allocation1] sm:$0xff pattern:$0x73625140]
  %v2585 = vld.sshfl [vmem:[#allocation1 + $0x20] sm:$0xff pattern:$0x73625140]
  %2586 = vst [vmem:[#allocation1] ss:$4 sm:$0xff] %v2215
  %2587 = vst [vmem:[%s2460] ss:$4 sm:$0xff] %v2216
  %2588 = vst [vmem:[%s2462] ss:$4 sm:$0xff] %v2217
  %2589 = vst [vmem:[%s2464] ss:$4 sm:$0xff] %v2218
  %2590 = vst [vmem:[%s2466] ss:$4 sm:$0xff] %v2219
  %2591 = vst [vmem:[%s2468] ss:$4 sm:$0xff] %v2220
  %2592 = vst [vmem:[%s2470] ss:$4 sm:$0xff] %v2221
  %2593 = vst [vmem:[%s2472] ss:$4 sm:$0xff] %v2222
  %v2594 = vld.sshfl [vmem:[#allocation1] sm:$0xff pattern:$0x73625140]
  %v2595 = vld.sshfl [vmem:[#allocation1 + $0x20] sm:$0xff pattern:$0x73625140]
  %2596 = vst [vmem:[#allocation1] ss:$4 sm:$0xff] %v2215
  %2597 = vst [vmem:[%s2460] ss:$4 sm:$0xff] %v2216
  %2598 = vst [vmem:[%s2462] ss:$4 sm:$0xff] %v2217
  %2599 = vst [vmem:[%s2464] ss:$4 sm:$0xff] %v2218
  %2600 = vst [vmem:[%s2466] ss:$4 sm:$0xff] %v2219
  %2601 = vst [vmem:[%s2468] ss:$4 sm:$0xff] %v2220
  %2602 = vst [vmem:[%s2470] ss:$4 sm:$0xff] %v2221
  %2603 = vst [vmem:[%s2472] ss:$4 sm:$0xff] %v2222
  %v2604 = vld.sshfl [vmem:[#allocation1] sm:$0xff pattern:$0x73625140]
  %v2605 = vld.sshfl [vmem:[#allocation1 + $0x20] sm:$0xff pattern:$0x73625140]
  %2606 = vst [vmem:[#allocation1] ss:$4 sm:$0xff] %v2223
  %2607 = vst [vmem:[%s2460] ss:$4 sm:$0xff] %v2224
  %2608 = vst [vmem:[%s2462] ss:$4 sm:$0xff] %v2225
  %2609 = vst [vmem:[%s2464] ss:$4 sm:$0xff] %v2226
  %2610 = vst [vmem:[%s2466] ss:$4 sm:$0xff] %v2227
  %2611 = vst [vmem:[%s2468] ss:$4 sm:$0xff] %v2228
  %2612 = vst [vmem:[%s2470] ss:$4 sm:$0xff] %v2229
  %2613 = vst [vmem:[%s2472] ss:$4 sm:$0xff] %v2230
  %v2614 = vld.sshfl [vmem:[#allocation1] sm:$0xff pattern:$0x73625140]
  %v2615 = vld.sshfl [vmem:[#allocation1 + $0x20] sm:$0xff pattern:$0x73625140]
  %2616 = vst [vmem:[#allocation1] ss:$4 sm:$0xff] %v2223
  %2617 = vst [vmem:[%s2460] ss:$4 sm:$0xff] %v2224
  %2618 = vst [vmem:[%s2462] ss:$4 sm:$0xff] %v2225
  %2619 = vst [vmem:[%s2464] ss:$4 sm:$0xff] %v2226
  %2620 = vst [vmem:[%s2466] ss:$4 sm:$0xff] %v2227
  %2621 = vst [vmem:[%s2468] ss:$4 sm:$0xff] %v2228
  %2622 = vst [vmem:[%s2470] ss:$4 sm:$0xff] %v2229
  %2623 = vst [vmem:[%s2472] ss:$4 sm:$0xff] %v2230
  %v2624 = vld.sshfl [vmem:[#allocation1] sm:$0xff pattern:$0x73625140]
  %v2625 = vld.sshfl [vmem:[#allocation1 + $0x20] sm:$0xff pattern:$0x73625140]
  %2626 = vst [vmem:[#allocation1] ss:$4 sm:$0xff] %v2231
  %2627 = vst [vmem:[%s2460] ss:$4 sm:$0xff] %v2232
  %2628 = vst [vmem:[%s2462] ss:$4 sm:$0xff] %v2233
  %2629 = vst [vmem:[%s2464] ss:$4 sm:$0xff] %v2234
  %2630 = vst [vmem:[%s2466] ss:$4 sm:$0xff] %v2235
  %2631 = vst [vmem:[%s2468] ss:$4 sm:$0xff] %v2236
  %2632 = vst [vmem:[%s2470] ss:$4 sm:$0xff] %v2237
  %2633 = vst [vmem:[%s2472] ss:$4 sm:$0xff] %v2238
  %v2634 = vld.sshfl [vmem:[#allocation1] sm:$0xff pattern:$0x73625140]
  %v2635 = vld.sshfl [vmem:[#allocation1 + $0x20] sm:$0xff pattern:$0x73625140]
  %2636 = vst [vmem:[#allocation1] ss:$4 sm:$0xff] %v2231
  %2637 = vst [vmem:[%s2460] ss:$4 sm:$0xff] %v2232
  %2638 = vst [vmem:[%s2462] ss:$4 sm:$0xff] %v2233
  %2639 = vst [vmem:[%s2464] ss:$4 sm:$0xff] %v2234
  %2640 = vst [vmem:[%s2466] ss:$4 sm:$0xff] %v2235
  %2641 = vst [vmem:[%s2468] ss:$4 sm:$0xff] %v2236
  %2642 = vst [vmem:[%s2470] ss:$4 sm:$0xff] %v2237
  %2643 = vst [vmem:[%s2472] ss:$4 sm:$0xff] %v2238
  %v2644 = vld.sshfl [vmem:[#allocation1] sm:$0xff pattern:$0x73625140]
  %v2645 = vld.sshfl [vmem:[#allocation1 + $0x20] sm:$0xff pattern:$0x73625140]
  %2646 = vst [vmem:[#allocation1] ss:$4 sm:$0xff] %v2239
  %2647 = vst [vmem:[%s2460] ss:$4 sm:$0xff] %v2240
  %2648 = vst [vmem:[%s2462] ss:$4 sm:$0xff] %v2241
  %2649 = vst [vmem:[%s2464] ss:$4 sm:$0xff] %v2242
  %2650 = vst [vmem:[%s2466] ss:$4 sm:$0xff] %v2243
  %2651 = vst [vmem:[%s2468] ss:$4 sm:$0xff] %v2244
  %2652 = vst [vmem:[%s2470] ss:$4 sm:$0xff] %v2245
  %2653 = vst [vmem:[%s2472] ss:$4 sm:$0xff] %v2246
  %v2654 = vld.sshfl [vmem:[#allocation1] sm:$0xff pattern:$0x73625140]
  %v2655 = vld.sshfl [vmem:[#allocation1 + $0x20] sm:$0xff pattern:$0x73625140]
  %2656 = vst [vmem:[#allocation1] ss:$4 sm:$0xff] %v2239
  %2657 = vst [vmem:[%s2460] ss:$4 sm:$0xff] %v2240
  %2658 = vst [vmem:[%s2462] ss:$4 sm:$0xff] %v2241
  %2659 = vst [vmem:[%s2464] ss:$4 sm:$0xff] %v2242
  %2660 = vst [vmem:[%s2466] ss:$4 sm:$0xff] %v2243
  %2661 = vst [vmem:[%s2468] ss:$4 sm:$0xff] %v2244
  %2662 = vst [vmem:[%s2470] ss:$4 sm:$0xff] %v2245
  %2663 = vst [vmem:[%s2472] ss:$4 sm:$0xff] %v2246
  %v2664 = vld.sshfl [vmem:[#allocation1] sm:$0xff pattern:$0x73625140]
  %v2665 = vld.sshfl [vmem:[#allocation1 + $0x20] sm:$0xff pattern:$0x73625140]
  %2666 = vst [vmem:[#allocation1] ss:$4 sm:$0xff] %v2247
  %2667 = vst [vmem:[%s2460] ss:$4 sm:$0xff] %v2248
  %2668 = vst [vmem:[%s2462] ss:$4 sm:$0xff] %v2249
  %2669 = vst [vmem:[%s2464] ss:$4 sm:$0xff] %v2250
  %2670 = vst [vmem:[%s2466] ss:$4 sm:$0xff] %v2251
  %2671 = vst [vmem:[%s2468] ss:$4 sm:$0xff] %v2252
  %2672 = vst [vmem:[%s2470] ss:$4 sm:$0xff] %v2253
  %2673 = vst [vmem:[%s2472] ss:$4 sm:$0xff] %v2254
  %v2674 = vld.sshfl [vmem:[#allocation1] sm:$0xff pattern:$0x73625140]
  %v2675 = vld.sshfl [vmem:[#allocation1 + $0x20] sm:$0xff pattern:$0x73625140]
  %2676 = vst [vmem:[#allocation1] ss:$4 sm:$0xff] %v2247
  %2677 = vst [vmem:[%s2460] ss:$4 sm:$0xff] %v2248
  %2678 = vst [vmem:[%s2462] ss:$4 sm:$0xff] %v2249
  %2679 = vst [vmem:[%s2464] ss:$4 sm:$0xff] %v2250
  %2680 = vst [vmem:[%s2466] ss:$4 sm:$0xff] %v2251
  %2681 = vst [vmem:[%s2468] ss:$4 sm:$0xff] %v2252
  %2682 = vst [vmem:[%s2470] ss:$4 sm:$0xff] %v2253
  %2683 = vst [vmem:[%s2472] ss:$4 sm:$0xff] %v2254
  %v2684 = vld.sshfl [vmem:[#allocation1] sm:$0xff pattern:$0x73625140]
  %v2685 = vld.sshfl [vmem:[#allocation1 + $0x20] sm:$0xff pattern:$0x73625140]
  %2686 = vst [vmem:[#allocation1] ss:$4 sm:$0xff] %v2255
  %2687 = vst [vmem:[%s2460] ss:$4 sm:$0xff] %v2256
  %2688 = vst [vmem:[%s2462] ss:$4 sm:$0xff] %v2257
  %2689 = vst [vmem:[%s2464] ss:$4 sm:$0xff] %v2258
  %2690 = vst [vmem:[%s2466] ss:$4 sm:$0xff] %v2259
  %2691 = vst [vmem:[%s2468] ss:$4 sm:$0xff] %v2260
  %2692 = vst [vmem:[%s2470] ss:$4 sm:$0xff] %v2261
  %2693 = vst [vmem:[%s2472] ss:$4 sm:$0xff] %v2262
  %v2694 = vld.sshfl [vmem:[#allocation1] sm:$0xff pattern:$0x73625140]
  %v2695 = vld.sshfl [vmem:[#allocation1 + $0x20] sm:$0xff pattern:$0x73625140]
  %2696 = vst [vmem:[#allocation1] ss:$4 sm:$0xff] %v2255
  %2697 = vst [vmem:[%s2460] ss:$4 sm:$0xff] %v2256
  %2698 = vst [vmem:[%s2462] ss:$4 sm:$0xff] %v2257
  %2699 = vst [vmem:[%s2464] ss:$4 sm:$0xff] %v2258
  %2700 = vst [vmem:[%s2466] ss:$4 sm:$0xff] %v2259
  %2701 = vst [vmem:[%s2468] ss:$4 sm:$0xff] %v2260
  %2702 = vst [vmem:[%s2470] ss:$4 sm:$0xff] %v2261
  %2703 = vst [vmem:[%s2472] ss:$4 sm:$0xff] %v2262
  %v2704 = vld.sshfl [vmem:[#allocation1] sm:$0xff pattern:$0x73625140]
  %v2705 = vld.sshfl [vmem:[#allocation1 + $0x20] sm:$0xff pattern:$0x73625140]
  %2706 = vst [vmem:[#allocation1] ss:$4 sm:$0xff] %v2263
  %2707 = vst [vmem:[%s2460] ss:$4 sm:$0xff] %v2264
  %2708 = vst [vmem:[%s2462] ss:$4 sm:$0xff] %v2265
  %2709 = vst [vmem:[%s2464] ss:$4 sm:$0xff] %v2266
  %2710 = vst [vmem:[%s2466] ss:$4 sm:$0xff] %v2267
  %2711 = vst [vmem:[%s2468] ss:$4 sm:$0xff] %v2268
  %2712 = vst [vmem:[%s2470] ss:$4 sm:$0xff] %v2269
  %2713 = vst [vmem:[%s2472] ss:$4 sm:$0xff] %v2270
  %v2714 = vld.sshfl [vmem:[#allocation1] sm:$0xff pattern:$0x73625140]
  %v2715 = vld.sshfl [vmem:[#allocation1 + $0x20] sm:$0xff pattern:$0x73625140]
  %2716 = vst [vmem:[#allocation1] ss:$4 sm:$0xff] %v2263
  %2717 = vst [vmem:[%s2460] ss:$4 sm:$0xff] %v2264
  %2718 = vst [vmem:[%s2462] ss:$4 sm:$0xff] %v2265
  %2719 = vst [vmem:[%s2464] ss:$4 sm:$0xff] %v2266
  %2720 = vst [vmem:[%s2466] ss:$4 sm:$0xff] %v2267
  %2721 = vst [vmem:[%s2468] ss:$4 sm:$0xff] %v2268
  %2722 = vst [vmem:[%s2470] ss:$4 sm:$0xff] %v2269
  %2723 = vst [vmem:[%s2472] ss:$4 sm:$0xff] %v2270
  %v2724 = vld.sshfl [vmem:[#allocation1] sm:$0xff pattern:$0x73625140]
  %v2725 = vld.sshfl [vmem:[#allocation1 + $0x20] sm:$0xff pattern:$0x73625140]
  %2726 = vst [vmem:[#allocation1] ss:$4 sm:$0xff] %v2271
  %2727 = vst [vmem:[%s2460] ss:$4 sm:$0xff] %v2272
  %2728 = vst [vmem:[%s2462] ss:$4 sm:$0xff] %v2273
  %2729 = vst [vmem:[%s2464] ss:$4 sm:$0xff] %v2274
  %2730 = vst [vmem:[%s2466] ss:$4 sm:$0xff] %v2275
  %2731 = vst [vmem:[%s2468] ss:$4 sm:$0xff] %v2276
  %2732 = vst [vmem:[%s2470] ss:$4 sm:$0xff] %v2277
  %2733 = vst [vmem:[%s2472] ss:$4 sm:$0xff] %v2278
  %v2734 = vld.sshfl [vmem:[#allocation1] sm:$0xff pattern:$0x73625140]
  %v2735 = vld.sshfl [vmem:[#allocation1 + $0x20] sm:$0xff pattern:$0x73625140]
  %2736 = vst [vmem:[#allocation1] ss:$4 sm:$0xff] %v2271
  %2737 = vst [vmem:[%s2460] ss:$4 sm:$0xff] %v2272
  %2738 = vst [vmem:[%s2462] ss:$4 sm:$0xff] %v2273
  %2739 = vst [vmem:[%s2464] ss:$4 sm:$0xff] %v2274
  %2740 = vst [vmem:[%s2466] ss:$4 sm:$0xff] %v2275
  %2741 = vst [vmem:[%s2468] ss:$4 sm:$0xff] %v2276
  %2742 = vst [vmem:[%s2470] ss:$4 sm:$0xff] %v2277
  %2743 = vst [vmem:[%s2472] ss:$4 sm:$0xff] %v2278
  %v2744 = vld.sshfl [vmem:[#allocation1] sm:$0xff pattern:$0x73625140]
  %v2745 = vld.sshfl [vmem:[#allocation1 + $0x20] sm:$0xff pattern:$0x73625140]
  %2746 = vst [vmem:[#allocation1] ss:$4 sm:$0xff] %v2279
  %2747 = vst [vmem:[%s2460] ss:$4 sm:$0xff] %v2280
  %2748 = vst [vmem:[%s2462] ss:$4 sm:$0xff] %v2281
  %2749 = vst [vmem:[%s2464] ss:$4 sm:$0xff] %v2282
  %2750 = vst [vmem:[%s2466] ss:$4 sm:$0xff] %v2283
  %2751 = vst [vmem:[%s2468] ss:$4 sm:$0xff] %v2284
  %2752 = vst [vmem:[%s2470] ss:$4 sm:$0xff] %v2285
  %2753 = vst [vmem:[%s2472] ss:$4 sm:$0xff] %v2286
  %v2754 = vld.sshfl [vmem:[#allocation1] sm:$0xff pattern:$0x73625140]
  %v2755 = vld.sshfl [vmem:[#allocation1 + $0x20] sm:$0xff pattern:$0x73625140]
  %2756 = vst [vmem:[#allocation1] ss:$4 sm:$0xff] %v2279
  %2757 = vst [vmem:[%s2460] ss:$4 sm:$0xff] %v2280
  %2758 = vst [vmem:[%s2462] ss:$4 sm:$0xff] %v2281
  %2759 = vst [vmem:[%s2464] ss:$4 sm:$0xff] %v2282
  %2760 = vst [vmem:[%s2466] ss:$4 sm:$0xff] %v2283
  %2761 = vst [vmem:[%s2468] ss:$4 sm:$0xff] %v2284
  %2762 = vst [vmem:[%s2470] ss:$4 sm:$0xff] %v2285
  %2763 = vst [vmem:[%s2472] ss:$4 sm:$0xff] %v2286
  %v2764 = vld.sshfl [vmem:[#allocation1] sm:$0xff pattern:$0x73625140]
  %v2765 = vld.sshfl [vmem:[#allocation1 + $0x20] sm:$0xff pattern:$0x73625140]
  %2766 = vst [vmem:[#allocation1] ss:$4 sm:$0xff] %v2287
  %2767 = vst [vmem:[%s2460] ss:$4 sm:$0xff] %v2288
  %2768 = vst [vmem:[%s2462] ss:$4 sm:$0xff] %v2289
  %2769 = vst [vmem:[%s2464] ss:$4 sm:$0xff] %v2290
  %2770 = vst [vmem:[%s2466] ss:$4 sm:$0xff] %v2291
  %2771 = vst [vmem:[%s2468] ss:$4 sm:$0xff] %v2292
  %2772 = vst [vmem:[%s2470] ss:$4 sm:$0xff] %v2293
  %2773 = vst [vmem:[%s2472] ss:$4 sm:$0xff] %v2294
  %v2774 = vld.sshfl [vmem:[#allocation1] sm:$0xff pattern:$0x73625140]
  %v2775 = vld.sshfl [vmem:[#allocation1 + $0x20] sm:$0xff pattern:$0x73625140]
  %2776 = vst [vmem:[#allocation1] ss:$4 sm:$0xff] %v2287
  %2777 = vst [vmem:[%s2460] ss:$4 sm:$0xff] %v2288
  %2778 = vst [vmem:[%s2462] ss:$4 sm:$0xff] %v2289
  %2779 = vst [vmem:[%s2464] ss:$4 sm:$0xff] %v2290
  %2780 = vst [vmem:[%s2466] ss:$4 sm:$0xff] %v2291
  %2781 = vst [vmem:[%s2468] ss:$4 sm:$0xff] %v2292
  %2782 = vst [vmem:[%s2470] ss:$4 sm:$0xff] %v2293
  %2783 = vst [vmem:[%s2472] ss:$4 sm:$0xff] %v2294
  %v2784 = vld.sshfl [vmem:[#allocation1] sm:$0xff pattern:$0x73625140]
  %v2785 = vld.sshfl [vmem:[#allocation1 + $0x20] sm:$0xff pattern:$0x73625140]
  %v2786 = vsel %vm249, %v661, %v661
  %v2787 = vrot.slane %v2474, 7
  %v2788 = vrot.slane %v2475, 7
  %v2789 = vsel %vm249, %v2787, %v2788
  %v2790 = vrot.slane %v2484, 7
  %v2791 = vrot.slane %v2485, 7
  %v2792 = vsel %vm249, %v2790, %v2791
  %v2793 = vrot.slane %v2494, 7
  %v2794 = vrot.slane %v2495, 7
  %v2795 = vsel %vm249, %v2793, %v2794
  %v2796 = vrot.slane %v2504, 7
  %v2797 = vrot.slane %v2505, 7
  %v2798 = vsel %vm249, %v2796, %v2797
  %v2799 = vrot.slane %v2514, 7
  %v2800 = vrot.slane %v2515, 7
  %v2801 = vsel %vm249, %v2799, %v2800
  %v2802 = vrot.slane %v2524, 7
  %v2803 = vrot.slane %v2525, 7
  %v2804 = vsel %vm249, %v2802, %v2803
  %v2805 = vrot.slane %v2534, 7
  %v2806 = vrot.slane %v2535, 7
  %v2807 = vsel %vm249, %v2805, %v2806
  %v2808 = vrot.slane %v2544, 7
  %v2809 = vrot.slane %v2545, 7
  %v2810 = vsel %vm249, %v2808, %v2809
  %v2811 = vrot.slane %v2554, 7
  %v2812 = vrot.slane %v2555, 7
  %v2813 = vsel %vm249, %v2811, %v2812
  %v2814 = vrot.slane %v2564, 7
  %v2815 = vrot.slane %v2565, 7
  %v2816 = vsel %vm249, %v2814, %v2815
  %v2817 = vrot.slane %v2574, 7
  %v2818 = vrot.slane %v2575, 7
  %v2819 = vsel %vm249, %v2817, %v2818
  %v2820 = vrot.slane %v2584, 7
  %v2821 = vrot.slane %v2585, 7
  %v2822 = vsel %vm249, %v2820, %v2821
  %v2823 = vrot.slane %v2594, 7
  %v2824 = vrot.slane %v2595, 7
  %v2825 = vsel %vm249, %v2823, %v2824
  %v2826 = vrot.slane %v2604, 7
  %v2827 = vrot.slane %v2605, 7
  %v2828 = vsel %vm249, %v2826, %v2827
  %v2829 = vrot.slane %v2614, 7
  %v2830 = vrot.slane %v2615, 7
  %v2831 = vsel %vm249, %v2829, %v2830
  %v2832 = vrot.slane %v2624, 7
  %v2833 = vrot.slane %v2625, 7
  %v2834 = vsel %vm249, %v2832, %v2833
  %v2835 = vrot.slane %v2634, 7
  %v2836 = vrot.slane %v2635, 7
  %v2837 = vsel %vm249, %v2835, %v2836
  %v2838 = vrot.slane %v2644, 7
  %v2839 = vrot.slane %v2645, 7
  %v2840 = vsel %vm249, %v2838, %v2839
  %v2841 = vrot.slane %v2654, 7
  %v2842 = vrot.slane %v2655, 7
  %v2843 = vsel %vm249, %v2841, %v2842
  %v2844 = vrot.slane %v2664, 7
  %v2845 = vrot.slane %v2665, 7
  %v2846 = vsel %vm249, %v2844, %v2845
  %v2847 = vrot.slane %v2674, 7
  %v2848 = vrot.slane %v2675, 7
  %v2849 = vsel %vm249, %v2847, %v2848
  %v2850 = vrot.slane %v2684, 7
  %v2851 = vrot.slane %v2685, 7
  %v2852 = vsel %vm249, %v2850, %v2851
  %v2853 = vrot.slane %v2694, 7
  %v2854 = vrot.slane %v2695, 7
  %v2855 = vsel %vm249, %v2853, %v2854
  %v2856 = vrot.slane %v2704, 7
  %v2857 = vrot.slane %v2705, 7
  %v2858 = vsel %vm249, %v2856, %v2857
  %v2859 = vrot.slane %v2714, 7
  %v2860 = vrot.slane %v2715, 7
  %v2861 = vsel %vm249, %v2859, %v2860
  %v2862 = vrot.slane %v2724, 7
  %v2863 = vrot.slane %v2725, 7
  %v2864 = vsel %vm249, %v2862, %v2863
  %v2865 = vrot.slane %v2734, 7
  %v2866 = vrot.slane %v2735, 7
  %v2867 = vsel %vm249, %v2865, %v2866
  %v2868 = vrot.slane %v2744, 7
  %v2869 = vrot.slane %v2745, 7
  %v2870 = vsel %vm249, %v2868, %v2869
  %v2871 = vrot.slane %v2754, 7
  %v2872 = vrot.slane %v2755, 7
  %v2873 = vsel %vm249, %v2871, %v2872
  %v2874 = vrot.slane %v2764, 7
  %v2875 = vrot.slane %v2765, 7
  %v2876 = vsel %vm249, %v2874, %v2875
  %v2877 = vrot.slane %v2774, 7
  %v2878 = vrot.slane %v2775, 7
  %v2879 = vsel %vm249, %v2877, %v2878
  %v2880 = vrot.slane %v2784, 7
  %v2881 = vrot.slane %v2785, 7
  %v2882 = vsel %vm249, %v2880, %v2881
  %v2978 = vsel %vm249, 0.0, %v2787
  %v2979 = vsel %vm249, 0.0, %v2790
  %v2980 = vsel %vm249, 0.0, %v2793
  %v2981 = vsel %vm249, 0.0, %v2796
  %v2982 = vsel %vm249, 0.0, %v2799
  %v2983 = vsel %vm249, 0.0, %v2802
  %v2984 = vsel %vm249, 0.0, %v2805
  %v2985 = vsel %vm249, 0.0, %v2808
  %v2986 = vsel %vm249, 0.0, %v2811
  %v2987 = vsel %vm249, 0.0, %v2814
  %v2988 = vsel %vm249, 0.0, %v2817
  %v2989 = vsel %vm249, 0.0, %v2820
  %v2990 = vsel %vm249, 0.0, %v2823
  %v2991 = vsel %vm249, 0.0, %v2826
  %v2992 = vsel %vm249, 0.0, %v2829
  %v2993 = vsel %vm249, 0.0, %v2832
  %v2994 = vsel %vm249, 0.0, %v2835
  %v2995 = vsel %vm249, 0.0, %v2838
  %v2996 = vsel %vm249, 0.0, %v2841
  %v2997 = vsel %vm249, 0.0, %v2844
  %v2998 = vsel %vm249, 0.0, %v2847
  %v2999 = vsel %vm249, 0.0, %v2850
  %v3000 = vsel %vm249, 0.0, %v2853
  %v3001 = vsel %vm249, 0.0, %v2856
  %v3002 = vsel %vm249, 0.0, %v2859
  %v3003 = vsel %vm249, 0.0, %v2862
  %v3004 = vsel %vm249, 0.0, %v2865
  %v3005 = vsel %vm249, 0.0, %v2868
  %v3006 = vsel %vm249, 0.0, %v2871
  %v3007 = vsel %vm249, 0.0, %v2874
  %v3008 = vsel %vm249, 0.0, %v2877
  %v3009 = vsel %vm249, 0.0, %v2880
  %v3010 = vsel %vm249, %v2788, 0.0
  %v3011 = vsel %vm249, %v2791, 0.0
  %v3012 = vsel %vm249, %v2794, 0.0
  %v3013 = vsel %vm249, %v2797, 0.0
  %v3014 = vsel %vm249, %v2800, 0.0
  %v3015 = vsel %vm249, %v2803, 0.0
  %v3016 = vsel %vm249, %v2806, 0.0
  %v3017 = vsel %vm249, %v2809, 0.0
  %v3018 = vsel %vm249, %v2812, 0.0
  %v3019 = vsel %vm249, %v2815, 0.0
  %v3020 = vsel %vm249, %v2818, 0.0
  %v3021 = vsel %vm249, %v2821, 0.0
  %v3022 = vsel %vm249, %v2824, 0.0
  %v3023 = vsel %vm249, %v2827, 0.0
  %v3024 = vsel %vm249, %v2830, 0.0
  %v3025 = vsel %vm249, %v2833, 0.0
  %v3026 = vsel %vm249, %v2836, 0.0
  %v3027 = vsel %vm249, %v2839, 0.0
  %v3028 = vsel %vm249, %v2842, 0.0
  %v3029 = vsel %vm249, %v2845, 0.0
  %v3030 = vsel %vm249, %v2848, 0.0
  %v3031 = vsel %vm249, %v2851, 0.0
  %v3032 = vsel %vm249, %v2854, 0.0
  %v3033 = vsel %vm249, %v2857, 0.0
  %v3034 = vsel %vm249, %v2860, 0.0
  %v3035 = vsel %vm249, %v2863, 0.0
  %v3036 = vsel %vm249, %v2866, 0.0
  %v3037 = vsel %vm249, %v2869, 0.0
  %v3038 = vsel %vm249, %v2872, 0.0
  %v3039 = vsel %vm249, %v2875, 0.0
  %v3040 = vsel %vm249, %v2878, 0.0
  %v3041 = vsel %vm249, %v2881, 0.0
  %v3102 = vrot.slane %v2786, 1
  %v3103 = vsel %vm267, %v759, %v3102
  %v3104 = vsel %vm267, %v3102, %v760
  %v3105 = vrot.slane %v2978, 1
  %v3106 = vrot.slane %v2789, 1
  %v3107 = vsel %vm267, %v3105, %v3106
  %v3108 = vrot.slane %v3010, 1
  %v3109 = vsel %vm267, %v3106, %v3108
  %v3110 = vrot.slane %v2979, 1
  %v3111 = vrot.slane %v2792, 1
  %v3112 = vsel %vm267, %v3110, %v3111
  %v3113 = vrot.slane %v3011, 1
  %v3114 = vsel %vm267, %v3111, %v3113
  %v3115 = vrot.slane %v2980, 1
  %v3116 = vrot.slane %v2795, 1
  %v3117 = vsel %vm267, %v3115, %v3116
  %v3118 = vrot.slane %v3012, 1
  %v3119 = vsel %vm267, %v3116, %v3118
  %v3120 = vrot.slane %v2981, 1
  %v3121 = vrot.slane %v2798, 1
  %v3122 = vsel %vm267, %v3120, %v3121
  %v3123 = vrot.slane %v3013, 1
  %v3124 = vsel %vm267, %v3121, %v3123
  %v3125 = vrot.slane %v2982, 1
  %v3126 = vrot.slane %v2801, 1
  %v3127 = vsel %vm267, %v3125, %v3126
  %v3128 = vrot.slane %v3014, 1
  %v3129 = vsel %vm267, %v3126, %v3128
  %v3130 = vrot.slane %v2983, 1
  %v3131 = vrot.slane %v2804, 1
  %v3132 = vsel %vm267, %v3130, %v3131
  %v3133 = vrot.slane %v3015, 1
  %v3134 = vsel %vm267, %v3131, %v3133
  %v3135 = vrot.slane %v2984, 1
  %v3136 = vrot.slane %v2807, 1
  %v3137 = vsel %vm267, %v3135, %v3136
  %v3138 = vrot.slane %v3016, 1
  %v3139 = vsel %vm267, %v3136, %v3138
  %v3140 = vrot.slane %v2985, 1
  %v3141 = vrot.slane %v2810, 1
  %v3142 = vsel %vm267, %v3140, %v3141
  %v3143 = vrot.slane %v3017, 1
  %v3144 = vsel %vm267, %v3141, %v3143
  %v3145 = vrot.slane %v2986, 1
  %v3146 = vrot.slane %v2813, 1
  %v3147 = vsel %vm267, %v3145, %v3146
  %v3148 = vrot.slane %v3018, 1
  %v3149 = vsel %vm267, %v3146, %v3148
  %v3150 = vrot.slane %v2987, 1
  %v3151 = vrot.slane %v2816, 1
  %v3152 = vsel %vm267, %v3150, %v3151
  %v3153 = vrot.slane %v3019, 1
  %v3154 = vsel %vm267, %v3151, %v3153
  %v3155 = vrot.slane %v2988, 1
  %v3156 = vrot.slane %v2819, 1
  %v3157 = vsel %vm267, %v3155, %v3156
  %v3158 = vrot.slane %v3020, 1
  %v3159 = vsel %vm267, %v3156, %v3158
  %v3160 = vrot.slane %v2989, 1
  %v3161 = vrot.slane %v2822, 1
  %v3162 = vsel %vm267, %v3160, %v3161
  %v3163 = vrot.slane %v3021, 1
  %v3164 = vsel %vm267, %v3161, %v3163
  %v3165 = vrot.slane %v2990, 1
  %v3166 = vrot.slane %v2825, 1
  %v3167 = vsel %vm267, %v3165, %v3166
  %v3168 = vrot.slane %v3022, 1
  %v3169 = vsel %vm267, %v3166, %v3168
  %v3170 = vrot.slane %v2991, 1
  %v3171 = vrot.slane %v2828, 1
  %v3172 = vsel %vm267, %v3170, %v3171
  %v3173 = vrot.slane %v3023, 1
  %v3174 = vsel %vm267, %v3171, %v3173
  %v3175 = vrot.slane %v2992, 1
  %v3176 = vrot.slane %v2831, 1
  %v3177 = vsel %vm267, %v3175, %v3176
  %v3178 = vrot.slane %v3024, 1
  %v3179 = vsel %vm267, %v3176, %v3178
  %v3180 = vrot.slane %v2994, 1
  %v3181 = vrot.slane %v2837, 1
  %v3182 = vsel %vm267, %v3180, %v3181
  %v3183 = vrot.slane %v3026, 1
  %v3184 = vsel %vm267, %v3181, %v3183
  %v3185 = vrot.slane %v2995, 1
  %v3186 = vrot.slane %v2840, 1
  %v3187 = vsel %vm267, %v3185, %v3186
  %v3188 = vrot.slane %v3027, 1
  %v3189 = vsel %vm267, %v3186, %v3188
  %v3190 = vrot.slane %v2996, 1
  %v3191 = vrot.slane %v2843, 1
  %v3192 = vsel %vm267, %v3190, %v3191
  %v3193 = vrot.slane %v3028, 1
  %v3194 = vsel %vm267, %v3191, %v3193
  %v3195 = vrot.slane %v2997, 1
  %v3196 = vrot.slane %v2846, 1
  %v3197 = vsel %vm267, %v3195, %v3196
  %v3198 = vrot.slane %v3029, 1
  %v3199 = vsel %vm267, %v3196, %v3198
  %v3200 = vrot.slane %v2998, 1
  %v3201 = vrot.slane %v2849, 1
  %v3202 = vsel %vm267, %v3200, %v3201
  %v3203 = vrot.slane %v3030, 1
  %v3204 = vsel %vm267, %v3201, %v3203
  %v3205 = vrot.slane %v2999, 1
  %v3206 = vrot.slane %v2852, 1
  %v3207 = vsel %vm267, %v3205, %v3206
  %v3208 = vrot.slane %v3031, 1
  %v3209 = vsel %vm267, %v3206, %v3208
  %v3210 = vrot.slane %v3000, 1
  %v3211 = vrot.slane %v2855, 1
  %v3212 = vsel %vm267, %v3210, %v3211
  %v3213 = vrot.slane %v3032, 1
  %v3214 = vsel %vm267, %v3211, %v3213
  %v3215 = vrot.slane %v3001, 1
  %v3216 = vrot.slane %v2858, 1
  %v3217 = vsel %vm267, %v3215, %v3216
  %v3218 = vrot.slane %v3033, 1
  %v3219 = vsel %vm267, %v3216, %v3218
  %v3220 = vrot.slane %v3002, 1
  %v3221 = vrot.slane %v2861, 1
  %v3222 = vsel %vm267, %v3220, %v3221
  %v3223 = vrot.slane %v3034, 1
  %v3224 = vsel %vm267, %v3221, %v3223
  %v3225 = vrot.slane %v3003, 1
  %v3226 = vrot.slane %v2864, 1
  %v3227 = vsel %vm267, %v3225, %v3226
  %v3228 = vrot.slane %v3035, 1
  %v3229 = vsel %vm267, %v3226, %v3228
  %v3230 = vrot.slane %v3004, 1
  %v3231 = vrot.slane %v2867, 1
  %v3232 = vsel %vm267, %v3230, %v3231
  %v3233 = vrot.slane %v3036, 1
  %v3234 = vsel %vm267, %v3231, %v3233
  %v3235 = vrot.slane %v3005, 1
  %v3236 = vrot.slane %v2870, 1
  %v3237 = vsel %vm267, %v3235, %v3236
  %v3238 = vrot.slane %v3037, 1
  %v3239 = vsel %vm267, %v3236, %v3238
  %v3240 = vrot.slane %v3006, 1
  %v3241 = vrot.slane %v2873, 1
  %v3242 = vsel %vm267, %v3240, %v3241
  %v3243 = vrot.slane %v3038, 1
  %v3244 = vsel %vm267, %v3241, %v3243
  %v3245 = vrot.slane %v3007, 1
  %v3246 = vrot.slane %v2876, 1
  %v3247 = vsel %vm267, %v3245, %v3246
  %v3248 = vrot.slane %v3039, 1
  %v3249 = vsel %vm267, %v3246, %v3248
  %v3250 = vrot.slane %v3008, 1
  %v3251 = vrot.slane %v2879, 1
  %v3252 = vsel %vm267, %v3250, %v3251
  %v3253 = vrot.slane %v3040, 1
  %v3254 = vsel %vm267, %v3251, %v3253
  %3255 = vrot.lane.b32.xlu0 %v3103, 32
  %v3256 = vpop.permute.xlu0 %3255
  %3257 = vrot.lane.b32.xlu0 %v3104, 32
  %v3258 = vpop.permute.xlu0 %3257
  %3259 = vrot.lane.b32.xlu0 %v3107, 32
  %v3260 = vpop.permute.xlu0 %3259
  %3261 = vrot.lane.b32.xlu0 %v3109, 32
  %v3262 = vpop.permute.xlu0 %3261
  %3263 = vrot.lane.b32.xlu0 %v3112, 32
  %v3264 = vpop.permute.xlu0 %3263
  %3265 = vrot.lane.b32.xlu0 %v3114, 32
  %v3266 = vpop.permute.xlu0 %3265
  %3267 = vrot.lane.b32.xlu0 %v3117, 32
  %v3268 = vpop.permute.xlu0 %3267
  %3269 = vrot.lane.b32.xlu0 %v3119, 32
  %v3270 = vpop.permute.xlu0 %3269
  %3271 = vrot.lane.b32.xlu0 %v3122, 32
  %v3272 = vpop.permute.xlu0 %3271
  %3273 = vrot.lane.b32.xlu0 %v3124, 32
  %v3274 = vpop.permute.xlu0 %3273
  %3275 = vrot.lane.b32.xlu0 %v3127, 32
  %v3276 = vpop.permute.xlu0 %3275
  %3277 = vrot.lane.b32.xlu0 %v3129, 32
  %v3278 = vpop.permute.xlu0 %3277
  %3279 = vrot.lane.b32.xlu0 %v3132, 32
  %v3280 = vpop.permute.xlu0 %3279
  %3281 = vrot.lane.b32.xlu0 %v3134, 32
  %v3282 = vpop.permute.xlu0 %3281
  %3283 = vrot.lane.b32.xlu0 %v3137, 32
  %v3284 = vpop.permute.xlu0 %3283
  %3285 = vrot.lane.b32.xlu0 %v3139, 32
  %v3286 = vpop.permute.xlu0 %3285
  %3287 = vrot.lane.b32.xlu0 %v3142, 32
  %v3288 = vpop.permute.xlu0 %3287
  %3289 = vrot.lane.b32.xlu0 %v3144, 32
  %v3290 = vpop.permute.xlu0 %3289
  %3291 = vrot.lane.b32.xlu0 %v3147, 32
  %v3292 = vpop.permute.xlu0 %3291
  %3293 = vrot.lane.b32.xlu0 %v3149, 32
  %v3294 = vpop.permute.xlu0 %3293
  %3295 = vrot.lane.b32.xlu0 %v3152, 32
  %v3296 = vpop.permute.xlu0 %3295
  %3297 = vrot.lane.b32.xlu0 %v3154, 32
  %v3298 = vpop.permute.xlu0 %3297
  %3299 = vrot.lane.b32.xlu0 %v3157, 32
  %v3300 = vpop.permute.xlu0 %3299
  %3301 = vrot.lane.b32.xlu0 %v3159, 32
  %v3302 = vpop.permute.xlu0 %3301
  %3303 = vrot.lane.b32.xlu0 %v3162, 32
  %v3304 = vpop.permute.xlu0 %3303
  %3305 = vrot.lane.b32.xlu0 %v3164, 32
  %v3306 = vpop.permute.xlu0 %3305
  %3307 = vrot.lane.b32.xlu0 %v3167, 32
  %v3308 = vpop.permute.xlu0 %3307
  %3309 = vrot.lane.b32.xlu0 %v3169, 32
  %v3310 = vpop.permute.xlu0 %3309
  %3311 = vrot.lane.b32.xlu0 %v3172, 32
  %v3312 = vpop.permute.xlu0 %3311
  %3313 = vrot.lane.b32.xlu0 %v3174, 32
  %v3314 = vpop.permute.xlu0 %3313
  %3315 = vrot.lane.b32.xlu0 %v3177, 32
  %v3316 = vpop.permute.xlu0 %3315
  %3317 = vrot.lane.b32.xlu0 %v3179, 32
  %v3318 = vpop.permute.xlu0 %3317
  %3319 = vrot.lane.b32.xlu0 %v3182, 32
  %v3320 = vpop.permute.xlu0 %3319
  %3321 = vrot.lane.b32.xlu0 %v3184, 32
  %v3322 = vpop.permute.xlu0 %3321
  %3323 = vrot.lane.b32.xlu0 %v3187, 32
  %v3324 = vpop.permute.xlu0 %3323
  %3325 = vrot.lane.b32.xlu0 %v3189, 32
  %v3326 = vpop.permute.xlu0 %3325
  %3327 = vrot.lane.b32.xlu0 %v3192, 32
  %v3328 = vpop.permute.xlu0 %3327
  %3329 = vrot.lane.b32.xlu0 %v3194, 32
  %v3330 = vpop.permute.xlu0 %3329
  %3331 = vrot.lane.b32.xlu0 %v3197, 32
  %v3332 = vpop.permute.xlu0 %3331
  %3333 = vrot.lane.b32.xlu0 %v3199, 32
  %v3334 = vpop.permute.xlu0 %3333
  %3335 = vrot.lane.b32.xlu0 %v3202, 32
  %v3336 = vpop.permute.xlu0 %3335
  %3337 = vrot.lane.b32.xlu0 %v3204, 32
  %v3338 = vpop.permute.xlu0 %3337
  %3339 = vrot.lane.b32.xlu0 %v3207, 32
  %v3340 = vpop.permute.xlu0 %3339
  %3341 = vrot.lane.b32.xlu0 %v3209, 32
  %v3342 = vpop.permute.xlu0 %3341
  %3343 = vrot.lane.b32.xlu0 %v3212, 32
  %v3344 = vpop.permute.xlu0 %3343
  %3345 = vrot.lane.b32.xlu0 %v3214, 32
  %v3346 = vpop.permute.xlu0 %3345
  %3347 = vrot.lane.b32.xlu0 %v3217, 32
  %v3348 = vpop.permute.xlu0 %3347
  %3349 = vrot.lane.b32.xlu0 %v3219, 32
  %v3350 = vpop.permute.xlu0 %3349
  %3351 = vrot.lane.b32.xlu0 %v3222, 32
  %v3352 = vpop.permute.xlu0 %3351
  %3353 = vrot.lane.b32.xlu0 %v3224, 32
  %v3354 = vpop.permute.xlu0 %3353
  %3355 = vrot.lane.b32.xlu0 %v3227, 32
  %v3356 = vpop.permute.xlu0 %3355
  %3357 = vrot.lane.b32.xlu0 %v3229, 32
  %v3358 = vpop.permute.xlu0 %3357
  %3359 = vrot.lane.b32.xlu0 %v3232, 32
  %v3360 = vpop.permute.xlu0 %3359
  %3361 = vrot.lane.b32.xlu0 %v3234, 32
  %v3362 = vpop.permute.xlu0 %3361
  %3363 = vrot.lane.b32.xlu0 %v3237, 32
  %v3364 = vpop.permute.xlu0 %3363
  %3365 = vrot.lane.b32.xlu0 %v3239, 32
  %v3366 = vpop.permute.xlu0 %3365
  %3367 = vrot.lane.b32.xlu0 %v3242, 32
  %v3368 = vpop.permute.xlu0 %3367
  %3369 = vrot.lane.b32.xlu0 %v3244, 32
  %v3370 = vpop.permute.xlu0 %3369
  %3371 = vrot.lane.b32.xlu0 %v3247, 32
  %v3372 = vpop.permute.xlu0 %3371
  %3373 = vrot.lane.b32.xlu0 %v3249, 32
  %v3374 = vpop.permute.xlu0 %3373
  %3375 = vrot.lane.b32.xlu0 %v3252, 32
  %v3376 = vpop.permute.xlu0 %3375
  %3377 = vrot.lane.b32.xlu0 %v3254, 32
  %v3378 = vpop.permute.xlu0 %3377
  %v3441 = vrot.slane %v2786, 2
  %v3442 = vsel %vm264, %v849, %v3441
  %v3443 = vsel %vm264, %v3441, %v850
  %v3444 = vrot.slane %v2978, 2
  %v3445 = vrot.slane %v2789, 2
  %v3446 = vsel %vm264, %v3444, %v3445
  %v3447 = vrot.slane %v3010, 2
  %v3448 = vsel %vm264, %v3445, %v3447
  %v3449 = vrot.slane %v2979, 2
  %v3450 = vrot.slane %v2792, 2
  %v3451 = vsel %vm264, %v3449, %v3450
  %v3452 = vrot.slane %v3011, 2
  %v3453 = vsel %vm264, %v3450, %v3452
  %v3454 = vrot.slane %v2980, 2
  %v3455 = vrot.slane %v2795, 2
  %v3456 = vsel %vm264, %v3454, %v3455
  %v3457 = vrot.slane %v3012, 2
  %v3458 = vsel %vm264, %v3455, %v3457
  %v3459 = vrot.slane %v2981, 2
  %v3460 = vrot.slane %v2798, 2
  %v3461 = vsel %vm264, %v3459, %v3460
  %v3462 = vrot.slane %v3013, 2
  %v3463 = vsel %vm264, %v3460, %v3462
  %v3464 = vrot.slane %v2982, 2
  %v3465 = vrot.slane %v2801, 2
  %v3466 = vsel %vm264, %v3464, %v3465
  %v3467 = vrot.slane %v3014, 2
  %v3468 = vsel %vm264, %v3465, %v3467
  %v3469 = vrot.slane %v2983, 2
  %v3470 = vrot.slane %v2804, 2
  %v3471 = vsel %vm264, %v3469, %v3470
  %v3472 = vrot.slane %v3015, 2
  %v3473 = vsel %vm264, %v3470, %v3472
  %v3474 = vrot.slane %v2984, 2
  %v3475 = vrot.slane %v2807, 2
  %v3476 = vsel %vm264, %v3474, %v3475
  %v3477 = vrot.slane %v3016, 2
  %v3478 = vsel %vm264, %v3475, %v3477
  %v3479 = vrot.slane %v2985, 2
  %v3480 = vrot.slane %v2810, 2
  %v3481 = vsel %vm264, %v3479, %v3480
  %v3482 = vrot.slane %v3017, 2
  %v3483 = vsel %vm264, %v3480, %v3482
  %v3484 = vrot.slane %v2986, 2
  %v3485 = vrot.slane %v2813, 2
  %v3486 = vsel %vm264, %v3484, %v3485
  %v3487 = vrot.slane %v3018, 2
  %v3488 = vsel %vm264, %v3485, %v3487
  %v3489 = vrot.slane %v2987, 2
  %v3490 = vrot.slane %v2816, 2
  %v3491 = vsel %vm264, %v3489, %v3490
  %v3492 = vrot.slane %v3019, 2
  %v3493 = vsel %vm264, %v3490, %v3492
  %v3494 = vrot.slane %v2988, 2
  %v3495 = vrot.slane %v2819, 2
  %v3496 = vsel %vm264, %v3494, %v3495
  %v3497 = vrot.slane %v3020, 2
  %v3498 = vsel %vm264, %v3495, %v3497
  %v3499 = vrot.slane %v2989, 2
  %v3500 = vrot.slane %v2822, 2
  %v3501 = vsel %vm264, %v3499, %v3500
  %v3502 = vrot.slane %v3021, 2
  %v3503 = vsel %vm264, %v3500, %v3502
  %v3504 = vrot.slane %v2990, 2
  %v3505 = vrot.slane %v2825, 2
  %v3506 = vsel %vm264, %v3504, %v3505
  %v3507 = vrot.slane %v3022, 2
  %v3508 = vsel %vm264, %v3505, %v3507
  %v3509 = vrot.slane %v2991, 2
  %v3510 = vrot.slane %v2828, 2
  %v3511 = vsel %vm264, %v3509, %v3510
  %v3512 = vrot.slane %v3023, 2
  %v3513 = vsel %vm264, %v3510, %v3512
  %v3514 = vrot.slane %v2992, 2
  %v3515 = vrot.slane %v2831, 2
  %v3516 = vsel %vm264, %v3514, %v3515
  %v3517 = vrot.slane %v3024, 2
  %v3518 = vsel %vm264, %v3515, %v3517
  %v3519 = vrot.slane %v2994, 2
  %v3520 = vrot.slane %v2837, 2
  %v3521 = vsel %vm264, %v3519, %v3520
  %v3522 = vrot.slane %v3026, 2
  %v3523 = vsel %vm264, %v3520, %v3522
  %v3524 = vrot.slane %v2995, 2
  %v3525 = vrot.slane %v2840, 2
  %v3526 = vsel %vm264, %v3524, %v3525
  %v3527 = vrot.slane %v3027, 2
  %v3528 = vsel %vm264, %v3525, %v3527
  %v3529 = vrot.slane %v2996, 2
  %v3530 = vrot.slane %v2843, 2
  %v3531 = vsel %vm264, %v3529, %v3530
  %v3532 = vrot.slane %v3028, 2
  %v3533 = vsel %vm264, %v3530, %v3532
  %v3534 = vrot.slane %v2997, 2
  %v3535 = vrot.slane %v2846, 2
  %v3536 = vsel %vm264, %v3534, %v3535
  %v3537 = vrot.slane %v3029, 2
  %v3538 = vsel %vm264, %v3535, %v3537
  %v3539 = vrot.slane %v2998, 2
  %v3540 = vrot.slane %v2849, 2
  %v3541 = vsel %vm264, %v3539, %v3540
  %v3542 = vrot.slane %v3030, 2
  %v3543 = vsel %vm264, %v3540, %v3542
  %v3544 = vrot.slane %v2999, 2
  %v3545 = vrot.slane %v2852, 2
  %v3546 = vsel %vm264, %v3544, %v3545
  %v3547 = vrot.slane %v3031, 2
  %v3548 = vsel %vm264, %v3545, %v3547
  %v3549 = vrot.slane %v3000, 2
  %v3550 = vrot.slane %v2855, 2
  %v3551 = vsel %vm264, %v3549, %v3550
  %v3552 = vrot.slane %v3032, 2
  %v3553 = vsel %vm264, %v3550, %v3552
  %v3554 = vrot.slane %v3001, 2
  %v3555 = vrot.slane %v2858, 2
  %v3556 = vsel %vm264, %v3554, %v3555
  %v3557 = vrot.slane %v3033, 2
  %v3558 = vsel %vm264, %v3555, %v3557
  %v3559 = vrot.slane %v3002, 2
  %v3560 = vrot.slane %v2861, 2
  %v3561 = vsel %vm264, %v3559, %v3560
  %v3562 = vrot.slane %v3034, 2
  %v3563 = vsel %vm264, %v3560, %v3562
  %v3564 = vrot.slane %v3003, 2
  %v3565 = vrot.slane %v2864, 2
  %v3566 = vsel %vm264, %v3564, %v3565
  %v3567 = vrot.slane %v3035, 2
  %v3568 = vsel %vm264, %v3565, %v3567
  %v3569 = vrot.slane %v3004, 2
  %v3570 = vrot.slane %v2867, 2
  %v3571 = vsel %vm264, %v3569, %v3570
  %v3572 = vrot.slane %v3036, 2
  %v3573 = vsel %vm264, %v3570, %v3572
  %v3574 = vrot.slane %v3005, 2
  %v3575 = vrot.slane %v2870, 2
  %v3576 = vsel %vm264, %v3574, %v3575
  %v3577 = vrot.slane %v3037, 2
  %v3578 = vsel %vm264, %v3575, %v3577
  %v3579 = vrot.slane %v3006, 2
  %v3580 = vrot.slane %v2873, 2
  %v3581 = vsel %vm264, %v3579, %v3580
  %v3582 = vrot.slane %v3038, 2
  %v3583 = vsel %vm264, %v3580, %v3582
  %v3584 = vrot.slane %v3007, 2
  %v3585 = vrot.slane %v2876, 2
  %v3586 = vsel %vm264, %v3584, %v3585
  %v3587 = vrot.slane %v3039, 2
  %v3588 = vsel %vm264, %v3585, %v3587
  %v3589 = vrot.slane %v3008, 2
  %v3590 = vrot.slane %v2879, 2
  %v3591 = vsel %vm264, %v3589, %v3590
  %v3592 = vrot.slane %v3040, 2
  %v3593 = vsel %vm264, %v3590, %v3592
  %3594 = vrot.lane.b32.xlu0 %v3442, 64
  %v3595 = vpop.permute.xlu0 %3594
  %3596 = vrot.lane.b32.xlu0 %v3443, 64
  %v3597 = vpop.permute.xlu0 %3596
  %3598 = vrot.lane.b32.xlu0 %v3446, 64
  %v3599 = vpop.permute.xlu0 %3598
  %3600 = vrot.lane.b32.xlu0 %v3448, 64
  %v3601 = vpop.permute.xlu0 %3600
  %3602 = vrot.lane.b32.xlu0 %v3451, 64
  %v3603 = vpop.permute.xlu0 %3602
  %3604 = vrot.lane.b32.xlu0 %v3453, 64
  %v3605 = vpop.permute.xlu0 %3604
  %3606 = vrot.lane.b32.xlu0 %v3456, 64
  %v3607 = vpop.permute.xlu0 %3606
  %3608 = vrot.lane.b32.xlu0 %v3458, 64
  %v3609 = vpop.permute.xlu0 %3608
  %3610 = vrot.lane.b32.xlu0 %v3461, 64
  %v3611 = vpop.permute.xlu0 %3610
  %3612 = vrot.lane.b32.xlu0 %v3463, 64
  %v3613 = vpop.permute.xlu0 %3612
  %3614 = vrot.lane.b32.xlu0 %v3466, 64
  %v3615 = vpop.permute.xlu0 %3614
  %3616 = vrot.lane.b32.xlu0 %v3468, 64
  %v3617 = vpop.permute.xlu0 %3616
  %3618 = vrot.lane.b32.xlu0 %v3471, 64
  %v3619 = vpop.permute.xlu0 %3618
  %3620 = vrot.lane.b32.xlu0 %v3473, 64
  %v3621 = vpop.permute.xlu0 %3620
  %3622 = vrot.lane.b32.xlu0 %v3476, 64
  %v3623 = vpop.permute.xlu0 %3622
  %3624 = vrot.lane.b32.xlu0 %v3478, 64
  %v3625 = vpop.permute.xlu0 %3624
  %3626 = vrot.lane.b32.xlu0 %v3481, 64
  %v3627 = vpop.permute.xlu0 %3626
  %3628 = vrot.lane.b32.xlu0 %v3483, 64
  %v3629 = vpop.permute.xlu0 %3628
  %3630 = vrot.lane.b32.xlu0 %v3486, 64
  %v3631 = vpop.permute.xlu0 %3630
  %3632 = vrot.lane.b32.xlu0 %v3488, 64
  %v3633 = vpop.permute.xlu0 %3632
  %3634 = vrot.lane.b32.xlu0 %v3491, 64
  %v3635 = vpop.permute.xlu0 %3634
  %3636 = vrot.lane.b32.xlu0 %v3493, 64
  %v3637 = vpop.permute.xlu0 %3636
  %3638 = vrot.lane.b32.xlu0 %v3496, 64
  %v3639 = vpop.permute.xlu0 %3638
  %3640 = vrot.lane.b32.xlu0 %v3498, 64
  %v3641 = vpop.permute.xlu0 %3640
  %3642 = vrot.lane.b32.xlu0 %v3501, 64
  %v3643 = vpop.permute.xlu0 %3642
  %3644 = vrot.lane.b32.xlu0 %v3503, 64
  %v3645 = vpop.permute.xlu0 %3644
  %3646 = vrot.lane.b32.xlu0 %v3506, 64
  %v3647 = vpop.permute.xlu0 %3646
  %3648 = vrot.lane.b32.xlu0 %v3508, 64
  %v3649 = vpop.permute.xlu0 %3648
  %3650 = vrot.lane.b32.xlu0 %v3511, 64
  %v3651 = vpop.permute.xlu0 %3650
  %3652 = vrot.lane.b32.xlu0 %v3513, 64
  %v3653 = vpop.permute.xlu0 %3652
  %3654 = vrot.lane.b32.xlu0 %v3516, 64
  %v3655 = vpop.permute.xlu0 %3654
  %3656 = vrot.lane.b32.xlu0 %v3518, 64
  %v3657 = vpop.permute.xlu0 %3656
  %3658 = vrot.lane.b32.xlu0 %v3521, 64
  %v3659 = vpop.permute.xlu0 %3658
  %3660 = vrot.lane.b32.xlu0 %v3523, 64
  %v3661 = vpop.permute.xlu0 %3660
  %3662 = vrot.lane.b32.xlu0 %v3526, 64
  %v3663 = vpop.permute.xlu0 %3662
  %3664 = vrot.lane.b32.xlu0 %v3528, 64
  %v3665 = vpop.permute.xlu0 %3664
  %3666 = vrot.lane.b32.xlu0 %v3531, 64
  %v3667 = vpop.permute.xlu0 %3666
  %3668 = vrot.lane.b32.xlu0 %v3533, 64
  %v3669 = vpop.permute.xlu0 %3668
  %3670 = vrot.lane.b32.xlu0 %v3536, 64
  %v3671 = vpop.permute.xlu0 %3670
  %3672 = vrot.lane.b32.xlu0 %v3538, 64
  %v3673 = vpop.permute.xlu0 %3672
  %3674 = vrot.lane.b32.xlu0 %v3541, 64
  %v3675 = vpop.permute.xlu0 %3674
  %3676 = vrot.lane.b32.xlu0 %v3543, 64
  %v3677 = vpop.permute.xlu0 %3676
  %3678 = vrot.lane.b32.xlu0 %v3546, 64
  %v3679 = vpop.permute.xlu0 %3678
  %3680 = vrot.lane.b32.xlu0 %v3548, 64
  %v3681 = vpop.permute.xlu0 %3680
  %3682 = vrot.lane.b32.xlu0 %v3551, 64
  %v3683 = vpop.permute.xlu0 %3682
  %3684 = vrot.lane.b32.xlu0 %v3553, 64
  %v3685 = vpop.permute.xlu0 %3684
  %3686 = vrot.lane.b32.xlu0 %v3556, 64
  %v3687 = vpop.permute.xlu0 %3686
  %3688 = vrot.lane.b32.xlu0 %v3558, 64
  %v3689 = vpop.permute.xlu0 %3688
  %3690 = vrot.lane.b32.xlu0 %v3561, 64
  %v3691 = vpop.permute.xlu0 %3690
  %3692 = vrot.lane.b32.xlu0 %v3563, 64
  %v3693 = vpop.permute.xlu0 %3692
  %3694 = vrot.lane.b32.xlu0 %v3566, 64
  %v3695 = vpop.permute.xlu0 %3694
  %3696 = vrot.lane.b32.xlu0 %v3568, 64
  %v3697 = vpop.permute.xlu0 %3696
  %3698 = vrot.lane.b32.xlu0 %v3571, 64
  %v3699 = vpop.permute.xlu0 %3698
  %3700 = vrot.lane.b32.xlu0 %v3573, 64
  %v3701 = vpop.permute.xlu0 %3700
  %3702 = vrot.lane.b32.xlu0 %v3576, 64
  %v3703 = vpop.permute.xlu0 %3702
  %3704 = vrot.lane.b32.xlu0 %v3578, 64
  %v3705 = vpop.permute.xlu0 %3704
  %3706 = vrot.lane.b32.xlu0 %v3581, 64
  %v3707 = vpop.permute.xlu0 %3706
  %3708 = vrot.lane.b32.xlu0 %v3583, 64
  %v3709 = vpop.permute.xlu0 %3708
  %3710 = vrot.lane.b32.xlu0 %v3586, 64
  %v3711 = vpop.permute.xlu0 %3710
  %3712 = vrot.lane.b32.xlu0 %v3588, 64
  %v3713 = vpop.permute.xlu0 %3712
  %3714 = vrot.lane.b32.xlu0 %v3591, 64
  %v3715 = vpop.permute.xlu0 %3714
  %3716 = vrot.lane.b32.xlu0 %v3593, 64
  %v3717 = vpop.permute.xlu0 %3716
  %3782 = vrot.lane.b32.xlu0 %v2978, 96
  %v3783 = vpop.permute.xlu0 %3782
  %3784 = vrot.lane.b32.xlu0 %v2789, 96
  %v3785 = vpop.permute.xlu0 %3784
  %3786 = vrot.lane.b32.xlu0 %v2979, 96
  %v3787 = vpop.permute.xlu0 %3786
  %3788 = vrot.lane.b32.xlu0 %v2792, 96
  %v3789 = vpop.permute.xlu0 %3788
  %3790 = vrot.lane.b32.xlu0 %v2980, 96
  %v3791 = vpop.permute.xlu0 %3790
  %3792 = vrot.lane.b32.xlu0 %v2795, 96
  %v3793 = vpop.permute.xlu0 %3792
  %3794 = vrot.lane.b32.xlu0 %v2981, 96
  %v3795 = vpop.permute.xlu0 %3794
  %3796 = vrot.lane.b32.xlu0 %v2798, 96
  %v3797 = vpop.permute.xlu0 %3796
  %3798 = vrot.lane.b32.xlu0 %v2982, 96
  %v3799 = vpop.permute.xlu0 %3798
  %3800 = vrot.lane.b32.xlu0 %v2801, 96
  %v3801 = vpop.permute.xlu0 %3800
  %3802 = vrot.lane.b32.xlu0 %v2983, 96
  %v3803 = vpop.permute.xlu0 %3802
  %3804 = vrot.lane.b32.xlu0 %v2804, 96
  %v3805 = vpop.permute.xlu0 %3804
  %3806 = vrot.lane.b32.xlu0 %v2984, 96
  %v3807 = vpop.permute.xlu0 %3806
  %3808 = vrot.lane.b32.xlu0 %v2807, 96
  %v3809 = vpop.permute.xlu0 %3808
  %3810 = vrot.lane.b32.xlu0 %v2985, 96
  %v3811 = vpop.permute.xlu0 %3810
  %3812 = vrot.lane.b32.xlu0 %v2810, 96
  %v3813 = vpop.permute.xlu0 %3812
  %3814 = vrot.lane.b32.xlu0 %v2986, 96
  %v3815 = vpop.permute.xlu0 %3814
  %3816 = vrot.lane.b32.xlu0 %v2813, 96
  %v3817 = vpop.permute.xlu0 %3816
  %3818 = vrot.lane.b32.xlu0 %v2987, 96
  %v3819 = vpop.permute.xlu0 %3818
  %3820 = vrot.lane.b32.xlu0 %v2816, 96
  %v3821 = vpop.permute.xlu0 %3820
  %3822 = vrot.lane.b32.xlu0 %v2988, 96
  %v3823 = vpop.permute.xlu0 %3822
  %3824 = vrot.lane.b32.xlu0 %v2819, 96
  %v3825 = vpop.permute.xlu0 %3824
  %3826 = vrot.lane.b32.xlu0 %v2989, 96
  %v3827 = vpop.permute.xlu0 %3826
  %3828 = vrot.lane.b32.xlu0 %v2822, 96
  %v3829 = vpop.permute.xlu0 %3828
  %3830 = vrot.lane.b32.xlu0 %v2990, 96
  %v3831 = vpop.permute.xlu0 %3830
  %3832 = vrot.lane.b32.xlu0 %v2825, 96
  %v3833 = vpop.permute.xlu0 %3832
  %3834 = vrot.lane.b32.xlu0 %v2991, 96
  %v3835 = vpop.permute.xlu0 %3834
  %3836 = vrot.lane.b32.xlu0 %v2828, 96
  %v3837 = vpop.permute.xlu0 %3836
  %3838 = vrot.lane.b32.xlu0 %v2992, 96
  %v3839 = vpop.permute.xlu0 %3838
  %3840 = vrot.lane.b32.xlu0 %v2831, 96
  %v3841 = vpop.permute.xlu0 %3840
  %3842 = vrot.lane.b32.xlu0 %v2993, 96
  %v3843 = vpop.permute.xlu0 %3842
  %3844 = vrot.lane.b32.xlu0 %v2834, 96
  %v3845 = vpop.permute.xlu0 %3844
  %3846 = vrot.lane.b32.xlu0 %v2994, 96
  %v3847 = vpop.permute.xlu0 %3846
  %3848 = vrot.lane.b32.xlu0 %v2837, 96
  %v3849 = vpop.permute.xlu0 %3848
  %3850 = vrot.lane.b32.xlu0 %v2995, 96
  %v3851 = vpop.permute.xlu0 %3850
  %3852 = vrot.lane.b32.xlu0 %v2840, 96
  %v3853 = vpop.permute.xlu0 %3852
  %3854 = vrot.lane.b32.xlu0 %v2996, 96
  %v3855 = vpop.permute.xlu0 %3854
  %3856 = vrot.lane.b32.xlu0 %v2843, 96
  %v3857 = vpop.permute.xlu0 %3856
  %3858 = vrot.lane.b32.xlu0 %v2997, 96
  %v3859 = vpop.permute.xlu0 %3858
  %3860 = vrot.lane.b32.xlu0 %v2846, 96
  %v3861 = vpop.permute.xlu0 %3860
  %3862 = vrot.lane.b32.xlu0 %v2998, 96
  %v3863 = vpop.permute.xlu0 %3862
  %3864 = vrot.lane.b32.xlu0 %v2849, 96
  %v3865 = vpop.permute.xlu0 %3864
  %3866 = vrot.lane.b32.xlu0 %v2999, 96
  %v3867 = vpop.permute.xlu0 %3866
  %3868 = vrot.lane.b32.xlu0 %v2852, 96
  %v3869 = vpop.permute.xlu0 %3868
  %3870 = vrot.lane.b32.xlu0 %v3000, 96
  %v3871 = vpop.permute.xlu0 %3870
  %3872 = vrot.lane.b32.xlu0 %v2855, 96
  %v3873 = vpop.permute.xlu0 %3872
  %3874 = vrot.lane.b32.xlu0 %v3001, 96
  %v3875 = vpop.permute.xlu0 %3874
  %3876 = vrot.lane.b32.xlu0 %v2858, 96
  %v3877 = vpop.permute.xlu0 %3876
  %3878 = vrot.lane.b32.xlu0 %v3002, 96
  %v3879 = vpop.permute.xlu0 %3878
  %3880 = vrot.lane.b32.xlu0 %v2861, 96
  %v3881 = vpop.permute.xlu0 %3880
  %3882 = vrot.lane.b32.xlu0 %v3003, 96
  %v3883 = vpop.permute.xlu0 %3882
  %3884 = vrot.lane.b32.xlu0 %v2864, 96
  %v3885 = vpop.permute.xlu0 %3884
  %3886 = vrot.lane.b32.xlu0 %v3004, 96
  %v3887 = vpop.permute.xlu0 %3886
  %3888 = vrot.lane.b32.xlu0 %v2867, 96
  %v3889 = vpop.permute.xlu0 %3888
  %3890 = vrot.lane.b32.xlu0 %v3005, 96
  %v3891 = vpop.permute.xlu0 %3890
  %3892 = vrot.lane.b32.xlu0 %v2870, 96
  %v3893 = vpop.permute.xlu0 %3892
  %3894 = vrot.lane.b32.xlu0 %v3006, 96
  %v3895 = vpop.permute.xlu0 %3894
  %3896 = vrot.lane.b32.xlu0 %v2873, 96
  %v3897 = vpop.permute.xlu0 %3896
  %3898 = vrot.lane.b32.xlu0 %v3007, 96
  %v3899 = vpop.permute.xlu0 %3898
  %3900 = vrot.lane.b32.xlu0 %v2876, 96
  %v3901 = vpop.permute.xlu0 %3900
  %3902 = vrot.lane.b32.xlu0 %v3008, 96
  %v3903 = vpop.permute.xlu0 %3902
  %3904 = vrot.lane.b32.xlu0 %v2879, 96
  %v3905 = vpop.permute.xlu0 %3904
  %3906 = vrot.lane.b32.xlu0 %v3009, 96
  %v3907 = vpop.permute.xlu0 %3906
  %3908 = vrot.lane.b32.xlu0 %v2882, 96
  %v3909 = vpop.permute.xlu0 %3908
  %v3976 = vrot.slane %v2993, 1
  %v3977 = vrot.slane %v2834, 1
  %v3978 = vsel %vm267, %v3976, %v3977
  %v3979 = vrot.slane %v3025, 1
  %v3980 = vsel %vm267, %v3977, %v3979
  %v3981 = vrot.slane %v3009, 1
  %v3982 = vrot.slane %v2882, 1
  %v3983 = vsel %vm267, %v3981, %v3982
  %v3984 = vrot.slane %v3041, 1
  %v3985 = vsel %vm267, %v3982, %v3984
  %v4050 = vrot.slane %v2993, 2
  %v4051 = vrot.slane %v2834, 2
  %v4052 = vsel %vm264, %v4050, %v4051
  %v4053 = vrot.slane %v3025, 2
  %v4054 = vsel %vm264, %v4051, %v4053
  %v4055 = vrot.slane %v3009, 2
  %v4056 = vrot.slane %v2882, 2
  %v4057 = vsel %vm264, %v4055, %v4056
  %v4058 = vrot.slane %v3041, 2
  %v4059 = vsel %vm264, %v4056, %v4058
  %4060 = vrot.lane.b32.xlu0 %v3446, 32
  %v4061 = vpop.permute.xlu0 %4060
  %4062 = vrot.lane.b32.xlu0 %v3448, 32
  %v4063 = vpop.permute.xlu0 %4062
  %4064 = vrot.lane.b32.xlu0 %v3451, 32
  %v4065 = vpop.permute.xlu0 %4064
  %4066 = vrot.lane.b32.xlu0 %v3453, 32
  %v4067 = vpop.permute.xlu0 %4066
  %4068 = vrot.lane.b32.xlu0 %v3456, 32
  %v4069 = vpop.permute.xlu0 %4068
  %4070 = vrot.lane.b32.xlu0 %v3458, 32
  %v4071 = vpop.permute.xlu0 %4070
  %4072 = vrot.lane.b32.xlu0 %v3461, 32
  %v4073 = vpop.permute.xlu0 %4072
  %4074 = vrot.lane.b32.xlu0 %v3463, 32
  %v4075 = vpop.permute.xlu0 %4074
  %4076 = vrot.lane.b32.xlu0 %v3466, 32
  %v4077 = vpop.permute.xlu0 %4076
  %4078 = vrot.lane.b32.xlu0 %v3468, 32
  %v4079 = vpop.permute.xlu0 %4078
  %4080 = vrot.lane.b32.xlu0 %v3471, 32
  %v4081 = vpop.permute.xlu0 %4080
  %4082 = vrot.lane.b32.xlu0 %v3473, 32
  %v4083 = vpop.permute.xlu0 %4082
  %4084 = vrot.lane.b32.xlu0 %v3476, 32
  %v4085 = vpop.permute.xlu0 %4084
  %4086 = vrot.lane.b32.xlu0 %v3478, 32
  %v4087 = vpop.permute.xlu0 %4086
  %4088 = vrot.lane.b32.xlu0 %v3481, 32
  %v4089 = vpop.permute.xlu0 %4088
  %4090 = vrot.lane.b32.xlu0 %v3483, 32
  %v4091 = vpop.permute.xlu0 %4090
  %4092 = vrot.lane.b32.xlu0 %v3486, 32
  %v4093 = vpop.permute.xlu0 %4092
  %4094 = vrot.lane.b32.xlu0 %v3488, 32
  %v4095 = vpop.permute.xlu0 %4094
  %4096 = vrot.lane.b32.xlu0 %v3491, 32
  %v4097 = vpop.permute.xlu0 %4096
  %4098 = vrot.lane.b32.xlu0 %v3493, 32
  %v4099 = vpop.permute.xlu0 %4098
  %4100 = vrot.lane.b32.xlu0 %v3496, 32
  %v4101 = vpop.permute.xlu0 %4100
  %4102 = vrot.lane.b32.xlu0 %v3498, 32
  %v4103 = vpop.permute.xlu0 %4102
  %4104 = vrot.lane.b32.xlu0 %v3501, 32
  %v4105 = vpop.permute.xlu0 %4104
  %4106 = vrot.lane.b32.xlu0 %v3503, 32
  %v4107 = vpop.permute.xlu0 %4106
  %4108 = vrot.lane.b32.xlu0 %v3506, 32
  %v4109 = vpop.permute.xlu0 %4108
  %4110 = vrot.lane.b32.xlu0 %v3508, 32
  %v4111 = vpop.permute.xlu0 %4110
  %4112 = vrot.lane.b32.xlu0 %v3511, 32
  %v4113 = vpop.permute.xlu0 %4112
  %4114 = vrot.lane.b32.xlu0 %v3513, 32
  %v4115 = vpop.permute.xlu0 %4114
  %4116 = vrot.lane.b32.xlu0 %v3516, 32
  %v4117 = vpop.permute.xlu0 %4116
  %4118 = vrot.lane.b32.xlu0 %v3518, 32
  %v4119 = vpop.permute.xlu0 %4118
  %4120 = vrot.lane.b32.xlu0 %v4052, 32
  %v4121 = vpop.permute.xlu0 %4120
  %4122 = vrot.lane.b32.xlu0 %v4054, 32
  %v4123 = vpop.permute.xlu0 %4122
  %4124 = vrot.lane.b32.xlu0 %v3521, 32
  %v4125 = vpop.permute.xlu0 %4124
  %4126 = vrot.lane.b32.xlu0 %v3523, 32
  %v4127 = vpop.permute.xlu0 %4126
  %4128 = vrot.lane.b32.xlu0 %v3526, 32
  %v4129 = vpop.permute.xlu0 %4128
  %4130 = vrot.lane.b32.xlu0 %v3528, 32
  %v4131 = vpop.permute.xlu0 %4130
  %4132 = vrot.lane.b32.xlu0 %v3531, 32
  %v4133 = vpop.permute.xlu0 %4132
  %4134 = vrot.lane.b32.xlu0 %v3533, 32
  %v4135 = vpop.permute.xlu0 %4134
  %4136 = vrot.lane.b32.xlu0 %v3536, 32
  %v4137 = vpop.permute.xlu0 %4136
  %4138 = vrot.lane.b32.xlu0 %v3538, 32
  %v4139 = vpop.permute.xlu0 %4138
  %4140 = vrot.lane.b32.xlu0 %v3541, 32
  %v4141 = vpop.permute.xlu0 %4140
  %4142 = vrot.lane.b32.xlu0 %v3543, 32
  %v4143 = vpop.permute.xlu0 %4142
  %4144 = vrot.lane.b32.xlu0 %v3546, 32
  %v4145 = vpop.permute.xlu0 %4144
  %4146 = vrot.lane.b32.xlu0 %v3548, 32
  %v4147 = vpop.permute.xlu0 %4146
  %4148 = vrot.lane.b32.xlu0 %v3551, 32
  %v4149 = vpop.permute.xlu0 %4148
  %4150 = vrot.lane.b32.xlu0 %v3553, 32
  %v4151 = vpop.permute.xlu0 %4150
  %4152 = vrot.lane.b32.xlu0 %v3556, 32
  %v4153 = vpop.permute.xlu0 %4152
  %4154 = vrot.lane.b32.xlu0 %v3558, 32
  %v4155 = vpop.permute.xlu0 %4154
  %4156 = vrot.lane.b32.xlu0 %v3561, 32
  %v4157 = vpop.permute.xlu0 %4156
  %4158 = vrot.lane.b32.xlu0 %v3563, 32
  %v4159 = vpop.permute.xlu0 %4158
  %4160 = vrot.lane.b32.xlu0 %v3566, 32
  %v4161 = vpop.permute.xlu0 %4160
  %4162 = vrot.lane.b32.xlu0 %v3568, 32
  %v4163 = vpop.permute.xlu0 %4162
  %4164 = vrot.lane.b32.xlu0 %v3571, 32
  %v4165 = vpop.permute.xlu0 %4164
  %4166 = vrot.lane.b32.xlu0 %v3573, 32
  %v4167 = vpop.permute.xlu0 %4166
  %4168 = vrot.lane.b32.xlu0 %v3576, 32
  %v4169 = vpop.permute.xlu0 %4168
  %4170 = vrot.lane.b32.xlu0 %v3578, 32
  %v4171 = vpop.permute.xlu0 %4170
  %4172 = vrot.lane.b32.xlu0 %v3581, 32
  %v4173 = vpop.permute.xlu0 %4172
  %4174 = vrot.lane.b32.xlu0 %v3583, 32
  %v4175 = vpop.permute.xlu0 %4174
  %4176 = vrot.lane.b32.xlu0 %v3586, 32
  %v4177 = vpop.permute.xlu0 %4176
  %4178 = vrot.lane.b32.xlu0 %v3588, 32
  %v4179 = vpop.permute.xlu0 %4178
  %4180 = vrot.lane.b32.xlu0 %v3591, 32
  %v4181 = vpop.permute.xlu0 %4180
  %4182 = vrot.lane.b32.xlu0 %v3593, 32
  %v4183 = vpop.permute.xlu0 %4182
  %4184 = vrot.lane.b32.xlu0 %v4057, 32
  %v4185 = vpop.permute.xlu0 %4184
  %4186 = vrot.lane.b32.xlu0 %v4059, 32
  %v4187 = vpop.permute.xlu0 %4186
  %4252 = vrot.lane.b32.xlu0 %v2979, 64
  %v4253 = vpop.permute.xlu0 %4252
  %4254 = vrot.lane.b32.xlu0 %v2792, 64
  %v4255 = vpop.permute.xlu0 %4254
  %4256 = vrot.lane.b32.xlu0 %v2980, 64
  %v4257 = vpop.permute.xlu0 %4256
  %4258 = vrot.lane.b32.xlu0 %v2795, 64
  %v4259 = vpop.permute.xlu0 %4258
  %4260 = vrot.lane.b32.xlu0 %v2981, 64
  %v4261 = vpop.permute.xlu0 %4260
  %4262 = vrot.lane.b32.xlu0 %v2798, 64
  %v4263 = vpop.permute.xlu0 %4262
  %4264 = vrot.lane.b32.xlu0 %v2982, 64
  %v4265 = vpop.permute.xlu0 %4264
  %4266 = vrot.lane.b32.xlu0 %v2801, 64
  %v4267 = vpop.permute.xlu0 %4266
  %4268 = vrot.lane.b32.xlu0 %v2983, 64
  %v4269 = vpop.permute.xlu0 %4268
  %4270 = vrot.lane.b32.xlu0 %v2804, 64
  %v4271 = vpop.permute.xlu0 %4270
  %4272 = vrot.lane.b32.xlu0 %v2984, 64
  %v4273 = vpop.permute.xlu0 %4272
  %4274 = vrot.lane.b32.xlu0 %v2807, 64
  %v4275 = vpop.permute.xlu0 %4274
  %4276 = vrot.lane.b32.xlu0 %v2985, 64
  %v4277 = vpop.permute.xlu0 %4276
  %4278 = vrot.lane.b32.xlu0 %v2810, 64
  %v4279 = vpop.permute.xlu0 %4278
  %4280 = vrot.lane.b32.xlu0 %v2986, 64
  %v4281 = vpop.permute.xlu0 %4280
  %4282 = vrot.lane.b32.xlu0 %v2813, 64
  %v4283 = vpop.permute.xlu0 %4282
  %4284 = vrot.lane.b32.xlu0 %v2987, 64
  %v4285 = vpop.permute.xlu0 %4284
  %4286 = vrot.lane.b32.xlu0 %v2816, 64
  %v4287 = vpop.permute.xlu0 %4286
  %4288 = vrot.lane.b32.xlu0 %v2988, 64
  %v4289 = vpop.permute.xlu0 %4288
  %4290 = vrot.lane.b32.xlu0 %v2819, 64
  %v4291 = vpop.permute.xlu0 %4290
  %4292 = vrot.lane.b32.xlu0 %v2989, 64
  %v4293 = vpop.permute.xlu0 %4292
  %4294 = vrot.lane.b32.xlu0 %v2822, 64
  %v4295 = vpop.permute.xlu0 %4294
  %4296 = vrot.lane.b32.xlu0 %v2990, 64
  %v4297 = vpop.permute.xlu0 %4296
  %4298 = vrot.lane.b32.xlu0 %v2825, 64
  %v4299 = vpop.permute.xlu0 %4298
  %4300 = vrot.lane.b32.xlu0 %v2991, 64
  %v4301 = vpop.permute.xlu0 %4300
  %4302 = vrot.lane.b32.xlu0 %v2828, 64
  %v4303 = vpop.permute.xlu0 %4302
  %4304 = vrot.lane.b32.xlu0 %v2992, 64
  %v4305 = vpop.permute.xlu0 %4304
  %4306 = vrot.lane.b32.xlu0 %v2831, 64
  %v4307 = vpop.permute.xlu0 %4306
  %4308 = vrot.lane.b32.xlu0 %v2993, 64
  %v4309 = vpop.permute.xlu0 %4308
  %4310 = vrot.lane.b32.xlu0 %v2834, 64
  %v4311 = vpop.permute.xlu0 %4310
  %4312 = vrot.lane.b32.xlu0 %v2786, 64
  %v4313 = vpop.permute.xlu0 %4312
  %4314 = vrot.lane.b32.xlu0 %v2995, 64
  %v4315 = vpop.permute.xlu0 %4314
  %4316 = vrot.lane.b32.xlu0 %v2840, 64
  %v4317 = vpop.permute.xlu0 %4316
  %4318 = vrot.lane.b32.xlu0 %v2996, 64
  %v4319 = vpop.permute.xlu0 %4318
  %4320 = vrot.lane.b32.xlu0 %v2843, 64
  %v4321 = vpop.permute.xlu0 %4320
  %4322 = vrot.lane.b32.xlu0 %v2997, 64
  %v4323 = vpop.permute.xlu0 %4322
  %4324 = vrot.lane.b32.xlu0 %v2846, 64
  %v4325 = vpop.permute.xlu0 %4324
  %4326 = vrot.lane.b32.xlu0 %v2998, 64
  %v4327 = vpop.permute.xlu0 %4326
  %4328 = vrot.lane.b32.xlu0 %v2849, 64
  %v4329 = vpop.permute.xlu0 %4328
  %4330 = vrot.lane.b32.xlu0 %v2999, 64
  %v4331 = vpop.permute.xlu0 %4330
  %4332 = vrot.lane.b32.xlu0 %v2852, 64
  %v4333 = vpop.permute.xlu0 %4332
  %4334 = vrot.lane.b32.xlu0 %v3000, 64
  %v4335 = vpop.permute.xlu0 %4334
  %4336 = vrot.lane.b32.xlu0 %v2855, 64
  %v4337 = vpop.permute.xlu0 %4336
  %4338 = vrot.lane.b32.xlu0 %v3001, 64
  %v4339 = vpop.permute.xlu0 %4338
  %4340 = vrot.lane.b32.xlu0 %v2858, 64
  %v4341 = vpop.permute.xlu0 %4340
  %4342 = vrot.lane.b32.xlu0 %v3002, 64
  %v4343 = vpop.permute.xlu0 %4342
  %4344 = vrot.lane.b32.xlu0 %v2861, 64
  %v4345 = vpop.permute.xlu0 %4344
  %4346 = vrot.lane.b32.xlu0 %v3003, 64
  %v4347 = vpop.permute.xlu0 %4346
  %4348 = vrot.lane.b32.xlu0 %v2864, 64
  %v4349 = vpop.permute.xlu0 %4348
  %4350 = vrot.lane.b32.xlu0 %v3004, 64
  %v4351 = vpop.permute.xlu0 %4350
  %4352 = vrot.lane.b32.xlu0 %v2867, 64
  %v4353 = vpop.permute.xlu0 %4352
  %4354 = vrot.lane.b32.xlu0 %v3005, 64
  %v4355 = vpop.permute.xlu0 %4354
  %4356 = vrot.lane.b32.xlu0 %v2870, 64
  %v4357 = vpop.permute.xlu0 %4356
  %4358 = vrot.lane.b32.xlu0 %v3006, 64
  %v4359 = vpop.permute.xlu0 %4358
  %4360 = vrot.lane.b32.xlu0 %v2873, 64
  %v4361 = vpop.permute.xlu0 %4360
  %4362 = vrot.lane.b32.xlu0 %v3007, 64
  %v4363 = vpop.permute.xlu0 %4362
  %4364 = vrot.lane.b32.xlu0 %v2876, 64
  %v4365 = vpop.permute.xlu0 %4364
  %4366 = vrot.lane.b32.xlu0 %v3008, 64
  %v4367 = vpop.permute.xlu0 %4366
  %4368 = vrot.lane.b32.xlu0 %v2879, 64
  %v4369 = vpop.permute.xlu0 %4368
  %4370 = vrot.lane.b32.xlu0 %v3009, 64
  %v4371 = vpop.permute.xlu0 %4370
  %4372 = vrot.lane.b32.xlu0 %v2882, 64
  %v4373 = vpop.permute.xlu0 %4372
  %4435 = vrot.lane.b32.xlu0 %v3112, 96
  %v4436 = vpop.permute.xlu0 %4435
  %4437 = vrot.lane.b32.xlu0 %v3114, 96
  %v4438 = vpop.permute.xlu0 %4437
  %4439 = vrot.lane.b32.xlu0 %v3117, 96
  %v4440 = vpop.permute.xlu0 %4439
  %4441 = vrot.lane.b32.xlu0 %v3119, 96
  %v4442 = vpop.permute.xlu0 %4441
  %4443 = vrot.lane.b32.xlu0 %v3122, 96
  %v4444 = vpop.permute.xlu0 %4443
  %4445 = vrot.lane.b32.xlu0 %v3124, 96
  %v4446 = vpop.permute.xlu0 %4445
  %4447 = vrot.lane.b32.xlu0 %v3127, 96
  %v4448 = vpop.permute.xlu0 %4447
  %4449 = vrot.lane.b32.xlu0 %v3129, 96
  %v4450 = vpop.permute.xlu0 %4449
  %4451 = vrot.lane.b32.xlu0 %v3132, 96
  %v4452 = vpop.permute.xlu0 %4451
  %4453 = vrot.lane.b32.xlu0 %v3134, 96
  %v4454 = vpop.permute.xlu0 %4453
  %4455 = vrot.lane.b32.xlu0 %v3137, 96
  %v4456 = vpop.permute.xlu0 %4455
  %4457 = vrot.lane.b32.xlu0 %v3139, 96
  %v4458 = vpop.permute.xlu0 %4457
  %4459 = vrot.lane.b32.xlu0 %v3142, 96
  %v4460 = vpop.permute.xlu0 %4459
  %4461 = vrot.lane.b32.xlu0 %v3144, 96
  %v4462 = vpop.permute.xlu0 %4461
  %4463 = vrot.lane.b32.xlu0 %v3147, 96
  %v4464 = vpop.permute.xlu0 %4463
  %4465 = vrot.lane.b32.xlu0 %v3149, 96
  %v4466 = vpop.permute.xlu0 %4465
  %4467 = vrot.lane.b32.xlu0 %v3152, 96
  %v4468 = vpop.permute.xlu0 %4467
  %4469 = vrot.lane.b32.xlu0 %v3154, 96
  %v4470 = vpop.permute.xlu0 %4469
  %4471 = vrot.lane.b32.xlu0 %v3157, 96
  %v4472 = vpop.permute.xlu0 %4471
  %4473 = vrot.lane.b32.xlu0 %v3159, 96
  %v4474 = vpop.permute.xlu0 %4473
  %4475 = vrot.lane.b32.xlu0 %v3162, 96
  %v4476 = vpop.permute.xlu0 %4475
  %4477 = vrot.lane.b32.xlu0 %v3164, 96
  %v4478 = vpop.permute.xlu0 %4477
  %4479 = vrot.lane.b32.xlu0 %v3167, 96
  %v4480 = vpop.permute.xlu0 %4479
  %4481 = vrot.lane.b32.xlu0 %v3169, 96
  %v4482 = vpop.permute.xlu0 %4481
  %4483 = vrot.lane.b32.xlu0 %v3172, 96
  %v4484 = vpop.permute.xlu0 %4483
  %4485 = vrot.lane.b32.xlu0 %v3174, 96
  %v4486 = vpop.permute.xlu0 %4485
  %4487 = vrot.lane.b32.xlu0 %v3177, 96
  %v4488 = vpop.permute.xlu0 %4487
  %4489 = vrot.lane.b32.xlu0 %v3179, 96
  %v4490 = vpop.permute.xlu0 %4489
  %4491 = vrot.lane.b32.xlu0 %v3978, 96
  %v4492 = vpop.permute.xlu0 %4491
  %4493 = vrot.lane.b32.xlu0 %v3980, 96
  %v4494 = vpop.permute.xlu0 %4493
  %4495 = vrot.lane.b32.xlu0 %v3103, 96
  %v4496 = vpop.permute.xlu0 %4495
  %4497 = vrot.lane.b32.xlu0 %v3104, 96
  %v4498 = vpop.permute.xlu0 %4497
  %4499 = vrot.lane.b32.xlu0 %v3187, 96
  %v4500 = vpop.permute.xlu0 %4499
  %4501 = vrot.lane.b32.xlu0 %v3189, 96
  %v4502 = vpop.permute.xlu0 %4501
  %4503 = vrot.lane.b32.xlu0 %v3192, 96
  %v4504 = vpop.permute.xlu0 %4503
  %4505 = vrot.lane.b32.xlu0 %v3194, 96
  %v4506 = vpop.permute.xlu0 %4505
  %4507 = vrot.lane.b32.xlu0 %v3197, 96
  %v4508 = vpop.permute.xlu0 %4507
  %4509 = vrot.lane.b32.xlu0 %v3199, 96
  %v4510 = vpop.permute.xlu0 %4509
  %4511 = vrot.lane.b32.xlu0 %v3202, 96
  %v4512 = vpop.permute.xlu0 %4511
  %4513 = vrot.lane.b32.xlu0 %v3204, 96
  %v4514 = vpop.permute.xlu0 %4513
  %4515 = vrot.lane.b32.xlu0 %v3207, 96
  %v4516 = vpop.permute.xlu0 %4515
  %4517 = vrot.lane.b32.xlu0 %v3209, 96
  %v4518 = vpop.permute.xlu0 %4517
  %4519 = vrot.lane.b32.xlu0 %v3212, 96
  %v4520 = vpop.permute.xlu0 %4519
  %4521 = vrot.lane.b32.xlu0 %v3214, 96
  %v4522 = vpop.permute.xlu0 %4521
  %4523 = vrot.lane.b32.xlu0 %v3217, 96
  %v4524 = vpop.permute.xlu0 %4523
  %4525 = vrot.lane.b32.xlu0 %v3219, 96
  %v4526 = vpop.permute.xlu0 %4525
  %4527 = vrot.lane.b32.xlu0 %v3222, 96
  %v4528 = vpop.permute.xlu0 %4527
  %4529 = vrot.lane.b32.xlu0 %v3224, 96
  %v4530 = vpop.permute.xlu0 %4529
  %4531 = vrot.lane.b32.xlu0 %v3227, 96
  %v4532 = vpop.permute.xlu0 %4531
  %4533 = vrot.lane.b32.xlu0 %v3229, 96
  %v4534 = vpop.permute.xlu0 %4533
  %4535 = vrot.lane.b32.xlu0 %v3232, 96
  %v4536 = vpop.permute.xlu0 %4535
  %4537 = vrot.lane.b32.xlu0 %v3234, 96
  %v4538 = vpop.permute.xlu0 %4537
  %4539 = vrot.lane.b32.xlu0 %v3237, 96
  %v4540 = vpop.permute.xlu0 %4539
  %4541 = vrot.lane.b32.xlu0 %v3239, 96
  %v4542 = vpop.permute.xlu0 %4541
  %4543 = vrot.lane.b32.xlu0 %v3242, 96
  %v4544 = vpop.permute.xlu0 %4543
  %4545 = vrot.lane.b32.xlu0 %v3244, 96
  %v4546 = vpop.permute.xlu0 %4545
  %4547 = vrot.lane.b32.xlu0 %v3247, 96
  %v4548 = vpop.permute.xlu0 %4547
  %4549 = vrot.lane.b32.xlu0 %v3249, 96
  %v4550 = vpop.permute.xlu0 %4549
  %4551 = vrot.lane.b32.xlu0 %v3252, 96
  %v4552 = vpop.permute.xlu0 %4551
  %4553 = vrot.lane.b32.xlu0 %v3254, 96
  %v4554 = vpop.permute.xlu0 %4553
  %4555 = vrot.lane.b32.xlu0 %v3983, 96
  %v4556 = vpop.permute.xlu0 %4555
  %4557 = vrot.lane.b32.xlu0 %v3985, 96
  %v4558 = vpop.permute.xlu0 %4557
  %v4621 = vsel %vm71, %v695, %v3256
  %v4622 = vsel %vm71, %v2786, %v3258
  %v4623 = vsel %vm71, %v2978, %v3260
  %v4624 = vsel %vm71, %v2789, %v3262
  %v4625 = vsel %vm71, %v2979, %v3264
  %v4626 = vsel %vm71, %v2792, %v3266
  %v4627 = vsel %vm71, %v2980, %v3268
  %v4628 = vsel %vm71, %v2795, %v3270
  %v4629 = vsel %vm71, %v2981, %v3272
  %v4630 = vsel %vm71, %v2798, %v3274
  %v4631 = vsel %vm71, %v2982, %v3276
  %v4632 = vsel %vm71, %v2801, %v3278
  %v4633 = vsel %vm71, %v2983, %v3280
  %v4634 = vsel %vm71, %v2804, %v3282
  %v4635 = vsel %vm71, %v2984, %v3284
  %v4636 = vsel %vm71, %v2807, %v3286
  %v4637 = vsel %vm71, %v2985, %v3288
  %v4638 = vsel %vm71, %v2810, %v3290
  %v4639 = vsel %vm71, %v2986, %v3292
  %v4640 = vsel %vm71, %v2813, %v3294
  %v4641 = vsel %vm71, %v2987, %v3296
  %v4642 = vsel %vm71, %v2816, %v3298
  %v4643 = vsel %vm71, %v2988, %v3300
  %v4644 = vsel %vm71, %v2819, %v3302
  %v4645 = vsel %vm71, %v2989, %v3304
  %v4646 = vsel %vm71, %v2822, %v3306
  %v4647 = vsel %vm71, %v2990, %v3308
  %v4648 = vsel %vm71, %v2825, %v3310
  %v4649 = vsel %vm71, %v2991, %v3312
  %v4650 = vsel %vm71, %v2828, %v3314
  %v4651 = vsel %vm71, %v2992, %v3316
  %v4652 = vsel %vm71, %v2831, %v3318
  %v4653 = vsel %vm71, %v2994, %v3320
  %v4654 = vsel %vm71, %v2837, %v3322
  %v4655 = vsel %vm71, %v2995, %v3324
  %v4656 = vsel %vm71, %v2840, %v3326
  %v4657 = vsel %vm71, %v2996, %v3328
  %v4658 = vsel %vm71, %v2843, %v3330
  %v4659 = vsel %vm71, %v2997, %v3332
  %v4660 = vsel %vm71, %v2846, %v3334
  %v4661 = vsel %vm71, %v2998, %v3336
  %v4662 = vsel %vm71, %v2849, %v3338
  %v4663 = vsel %vm71, %v2999, %v3340
  %v4664 = vsel %vm71, %v2852, %v3342
  %v4665 = vsel %vm71, %v3000, %v3344
  %v4666 = vsel %vm71, %v2855, %v3346
  %v4667 = vsel %vm71, %v3001, %v3348
  %v4668 = vsel %vm71, %v2858, %v3350
  %v4669 = vsel %vm71, %v3002, %v3352
  %v4670 = vsel %vm71, %v2861, %v3354
  %v4671 = vsel %vm71, %v3003, %v3356
  %v4672 = vsel %vm71, %v2864, %v3358
  %v4673 = vsel %vm71, %v3004, %v3360
  %v4674 = vsel %vm71, %v2867, %v3362
  %v4675 = vsel %vm71, %v3005, %v3364
  %v4676 = vsel %vm71, %v2870, %v3366
  %v4677 = vsel %vm71, %v3006, %v3368
  %v4678 = vsel %vm71, %v2873, %v3370
  %v4679 = vsel %vm71, %v3007, %v3372
  %v4680 = vsel %vm71, %v2876, %v3374
  %v4681 = vsel %vm71, %v3008, %v3376
  %v4682 = vsel %vm71, %v2879, %v3378
  %v4683 = vsel %vm1172, %v4621, %v3595
  %v4684 = vsel %vm1172, %v4622, %v3597
  %v4685 = vsel %vm1172, %v4623, %v3599
  %v4686 = vsel %vm1172, %v4624, %v3601
  %v4687 = vsel %vm1172, %v4625, %v3603
  %v4688 = vsel %vm1172, %v4626, %v3605
  %v4689 = vsel %vm1172, %v4627, %v3607
  %v4690 = vsel %vm1172, %v4628, %v3609
  %v4691 = vsel %vm1172, %v4629, %v3611
  %v4692 = vsel %vm1172, %v4630, %v3613
  %v4693 = vsel %vm1172, %v4631, %v3615
  %v4694 = vsel %vm1172, %v4632, %v3617
  %v4695 = vsel %vm1172, %v4633, %v3619
  %v4696 = vsel %vm1172, %v4634, %v3621
  %v4697 = vsel %vm1172, %v4635, %v3623
  %v4698 = vsel %vm1172, %v4636, %v3625
  %v4699 = vsel %vm1172, %v4637, %v3627
  %v4700 = vsel %vm1172, %v4638, %v3629
  %v4701 = vsel %vm1172, %v4639, %v3631
  %v4702 = vsel %vm1172, %v4640, %v3633
  %v4703 = vsel %vm1172, %v4641, %v3635
  %v4704 = vsel %vm1172, %v4642, %v3637
  %v4705 = vsel %vm1172, %v4643, %v3639
  %v4706 = vsel %vm1172, %v4644, %v3641
  %v4707 = vsel %vm1172, %v4645, %v3643
  %v4708 = vsel %vm1172, %v4646, %v3645
  %v4709 = vsel %vm1172, %v4647, %v3647
  %v4710 = vsel %vm1172, %v4648, %v3649
  %v4711 = vsel %vm1172, %v4649, %v3651
  %v4712 = vsel %vm1172, %v4650, %v3653
  %v4713 = vsel %vm1172, %v4651, %v3655
  %v4714 = vsel %vm1172, %v4652, %v3657
  %v4715 = vsel %vm1172, %v4653, %v3659
  %v4716 = vsel %vm1172, %v4654, %v3661
  %v4717 = vsel %vm1172, %v4655, %v3663
  %v4718 = vsel %vm1172, %v4656, %v3665
  %v4719 = vsel %vm1172, %v4657, %v3667
  %v4720 = vsel %vm1172, %v4658, %v3669
  %v4721 = vsel %vm1172, %v4659, %v3671
  %v4722 = vsel %vm1172, %v4660, %v3673
  %v4723 = vsel %vm1172, %v4661, %v3675
  %v4724 = vsel %vm1172, %v4662, %v3677
  %v4725 = vsel %vm1172, %v4663, %v3679
  %v4726 = vsel %vm1172, %v4664, %v3681
  %v4727 = vsel %vm1172, %v4665, %v3683
  %v4728 = vsel %vm1172, %v4666, %v3685
  %v4729 = vsel %vm1172, %v4667, %v3687
  %v4730 = vsel %vm1172, %v4668, %v3689
  %v4731 = vsel %vm1172, %v4669, %v3691
  %v4732 = vsel %vm1172, %v4670, %v3693
  %v4733 = vsel %vm1172, %v4671, %v3695
  %v4734 = vsel %vm1172, %v4672, %v3697
  %v4735 = vsel %vm1172, %v4673, %v3699
  %v4736 = vsel %vm1172, %v4674, %v3701
  %v4737 = vsel %vm1172, %v4675, %v3703
  %v4738 = vsel %vm1172, %v4676, %v3705
  %v4739 = vsel %vm1172, %v4677, %v3707
  %v4740 = vsel %vm1172, %v4678, %v3709
  %v4741 = vsel %vm1172, %v4679, %v3711
  %v4742 = vsel %vm1172, %v4680, %v3713
  %v4743 = vsel %vm1172, %v4681, %v3715
  %v4744 = vsel %vm1172, %v4682, %v3717
  %v4745 = vsel %vm1188, %v4683, %v3783
  %v4746 = vsel %vm1188, %v4684, %v3785
  %v4747 = vsel %vm1188, %v4685, %v3787
  %v4748 = vsel %vm1188, %v4686, %v3789
  %v4749 = vsel %vm1188, %v4687, %v3791
  %v4750 = vsel %vm1188, %v4688, %v3793
  %v4751 = vsel %vm1188, %v4689, %v3795
  %v4752 = vsel %vm1188, %v4690, %v3797
  %v4753 = vsel %vm1188, %v4691, %v3799
  %v4754 = vsel %vm1188, %v4692, %v3801
  %v4755 = vsel %vm1188, %v4693, %v3803
  %v4756 = vsel %vm1188, %v4694, %v3805
  %v4757 = vsel %vm1188, %v4695, %v3807
  %v4758 = vsel %vm1188, %v4696, %v3809
  %v4759 = vsel %vm1188, %v4697, %v3811
  %v4760 = vsel %vm1188, %v4698, %v3813
  %v4761 = vsel %vm1188, %v4699, %v3815
  %v4762 = vsel %vm1188, %v4700, %v3817
  %v4763 = vsel %vm1188, %v4701, %v3819
  %v4764 = vsel %vm1188, %v4702, %v3821
  %v4765 = vsel %vm1188, %v4703, %v3823
  %v4766 = vsel %vm1188, %v4704, %v3825
  %v4767 = vsel %vm1188, %v4705, %v3827
  %v4768 = vsel %vm1188, %v4706, %v3829
  %v4769 = vsel %vm1188, %v4707, %v3831
  %v4770 = vsel %vm1188, %v4708, %v3833
  %v4771 = vsel %vm1188, %v4709, %v3835
  %v4772 = vsel %vm1188, %v4710, %v3837
  %v4773 = vsel %vm1188, %v4711, %v3839
  %v4774 = vsel %vm1188, %v4712, %v3841
  %v4775 = vsel %vm1188, %v4713, %v3843
  %v4776 = vsel %vm1188, %v4714, %v3845
  %v4777 = vsel %vm1188, %v4683, %v3847
  %v4778 = vsel %vm1188, %v4684, %v3849
  %v4779 = vsel %vm1188, %v4715, %v3851
  %v4780 = vsel %vm1188, %v4716, %v3853
  %v4781 = vsel %vm1188, %v4717, %v3855
  %v4782 = vsel %vm1188, %v4718, %v3857
  %v4783 = vsel %vm1188, %v4719, %v3859
  %v4784 = vsel %vm1188, %v4720, %v3861
  %v4785 = vsel %vm1188, %v4721, %v3863
  %v4786 = vsel %vm1188, %v4722, %v3865
  %v4787 = vsel %vm1188, %v4723, %v3867
  %v4788 = vsel %vm1188, %v4724, %v3869
  %v4789 = vsel %vm1188, %v4725, %v3871
  %v4790 = vsel %vm1188, %v4726, %v3873
  %v4791 = vsel %vm1188, %v4727, %v3875
  %v4792 = vsel %vm1188, %v4728, %v3877
  %v4793 = vsel %vm1188, %v4729, %v3879
  %v4794 = vsel %vm1188, %v4730, %v3881
  %v4795 = vsel %vm1188, %v4731, %v3883
  %v4796 = vsel %vm1188, %v4732, %v3885
  %v4797 = vsel %vm1188, %v4733, %v3887
  %v4798 = vsel %vm1188, %v4734, %v3889
  %v4799 = vsel %vm1188, %v4735, %v3891
  %v4800 = vsel %vm1188, %v4736, %v3893
  %v4801 = vsel %vm1188, %v4737, %v3895
  %v4802 = vsel %vm1188, %v4738, %v3897
  %v4803 = vsel %vm1188, %v4739, %v3899
  %v4804 = vsel %vm1188, %v4740, %v3901
  %v4805 = vsel %vm1188, %v4741, %v3903
  %v4806 = vsel %vm1188, %v4742, %v3905
  %v4807 = vsel %vm1188, %v4743, %v3907
  %v4808 = vsel %vm1188, %v4744, %v3909
  %v4809 = vsel %vm71, %v3107, %v4061
  %v4810 = vsel %vm71, %v3109, %v4063
  %v4811 = vsel %vm71, %v3112, %v4065
  %v4812 = vsel %vm71, %v3114, %v4067
  %v4813 = vsel %vm71, %v3117, %v4069
  %v4814 = vsel %vm71, %v3119, %v4071
  %v4815 = vsel %vm71, %v3122, %v4073
  %v4816 = vsel %vm71, %v3124, %v4075
  %v4817 = vsel %vm71, %v3127, %v4077
  %v4818 = vsel %vm71, %v3129, %v4079
  %v4819 = vsel %vm71, %v3132, %v4081
  %v4820 = vsel %vm71, %v3134, %v4083
  %v4821 = vsel %vm71, %v3137, %v4085
  %v4822 = vsel %vm71, %v3139, %v4087
  %v4823 = vsel %vm71, %v3142, %v4089
  %v4824 = vsel %vm71, %v3144, %v4091
  %v4825 = vsel %vm71, %v3147, %v4093
  %v4826 = vsel %vm71, %v3149, %v4095
  %v4827 = vsel %vm71, %v3152, %v4097
  %v4828 = vsel %vm71, %v3154, %v4099
  %v4829 = vsel %vm71, %v3157, %v4101
  %v4830 = vsel %vm71, %v3159, %v4103
  %v4831 = vsel %vm71, %v3162, %v4105
  %v4832 = vsel %vm71, %v3164, %v4107
  %v4833 = vsel %vm71, %v3167, %v4109
  %v4834 = vsel %vm71, %v3169, %v4111
  %v4835 = vsel %vm71, %v3172, %v4113
  %v4836 = vsel %vm71, %v3174, %v4115
  %v4837 = vsel %vm71, %v3177, %v4117
  %v4838 = vsel %vm71, %v3179, %v4119
  %v4839 = vsel %vm71, %v3978, %v4121
  %v4840 = vsel %vm71, %v3980, %v4123
  %v4841 = vsel %vm71, %v3182, %v4125
  %v4842 = vsel %vm71, %v3184, %v4127
  %v4843 = vsel %vm71, %v3187, %v4129
  %v4844 = vsel %vm71, %v3189, %v4131
  %v4845 = vsel %vm71, %v3192, %v4133
  %v4846 = vsel %vm71, %v3194, %v4135
  %v4847 = vsel %vm71, %v3197, %v4137
  %v4848 = vsel %vm71, %v3199, %v4139
  %v4849 = vsel %vm71, %v3202, %v4141
  %v4850 = vsel %vm71, %v3204, %v4143
  %v4851 = vsel %vm71, %v3207, %v4145
  %v4852 = vsel %vm71, %v3209, %v4147
  %v4853 = vsel %vm71, %v3212, %v4149
  %v4854 = vsel %vm71, %v3214, %v4151
  %v4855 = vsel %vm71, %v3217, %v4153
  %v4856 = vsel %vm71, %v3219, %v4155
  %v4857 = vsel %vm71, %v3222, %v4157
  %v4858 = vsel %vm71, %v3224, %v4159
  %v4859 = vsel %vm71, %v3227, %v4161
  %v4860 = vsel %vm71, %v3229, %v4163
  %v4861 = vsel %vm71, %v3232, %v4165
  %v4862 = vsel %vm71, %v3234, %v4167
  %v4863 = vsel %vm71, %v3237, %v4169
  %v4864 = vsel %vm71, %v3239, %v4171
  %v4865 = vsel %vm71, %v3242, %v4173
  %v4866 = vsel %vm71, %v3244, %v4175
  %v4867 = vsel %vm71, %v3247, %v4177
  %v4868 = vsel %vm71, %v3249, %v4179
  %v4869 = vsel %vm71, %v3252, %v4181
  %v4870 = vsel %vm71, %v3254, %v4183
  %v4871 = vsel %vm71, %v3983, %v4185
  %v4872 = vsel %vm71, %v3985, %v4187
  %v4873 = vsel %vm1172, %v4809, %v4253
  %v4874 = vsel %vm1172, %v4810, %v4255
  %v4875 = vsel %vm1172, %v4811, %v4257
  %v4876 = vsel %vm1172, %v4812, %v4259
  %v4877 = vsel %vm1172, %v4813, %v4261
  %v4878 = vsel %vm1172, %v4814, %v4263
  %v4879 = vsel %vm1172, %v4815, %v4265
  %v4880 = vsel %vm1172, %v4816, %v4267
  %v4881 = vsel %vm1172, %v4817, %v4269
  %v4882 = vsel %vm1172, %v4818, %v4271
  %v4883 = vsel %vm1172, %v4819, %v4273
  %v4884 = vsel %vm1172, %v4820, %v4275
  %v4885 = vsel %vm1172, %v4821, %v4277
  %v4886 = vsel %vm1172, %v4822, %v4279
  %v4887 = vsel %vm1172, %v4823, %v4281
  %v4888 = vsel %vm1172, %v4824, %v4283
  %v4889 = vsel %vm1172, %v4825, %v4285
  %v4890 = vsel %vm1172, %v4826, %v4287
  %v4891 = vsel %vm1172, %v4827, %v4289
  %v4892 = vsel %vm1172, %v4828, %v4291
  %v4893 = vsel %vm1172, %v4829, %v4293
  %v4894 = vsel %vm1172, %v4830, %v4295
  %v4895 = vsel %vm1172, %v4831, %v4297
  %v4896 = vsel %vm1172, %v4832, %v4299
  %v4897 = vsel %vm1172, %v4833, %v4301
  %v4898 = vsel %vm1172, %v4834, %v4303
  %v4899 = vsel %vm1172, %v4835, %v4305
  %v4900 = vsel %vm1172, %v4836, %v4307
  %v4901 = vsel %vm1172, %v4837, %v4309
  %v4902 = vsel %vm1172, %v4838, %v4311
  %v4903 = vsel %vm1172, %v4839, %v1082
  %v4904 = vsel %vm1172, %v4840, %v4313
  %v4905 = vsel %vm1172, %v4841, %v4315
  %v4906 = vsel %vm1172, %v4842, %v4317
  %v4907 = vsel %vm1172, %v4843, %v4319
  %v4908 = vsel %vm1172, %v4844, %v4321
  %v4909 = vsel %vm1172, %v4845, %v4323
  %v4910 = vsel %vm1172, %v4846, %v4325
  %v4911 = vsel %vm1172, %v4847, %v4327
  %v4912 = vsel %vm1172, %v4848, %v4329
  %v4913 = vsel %vm1172, %v4849, %v4331
  %v4914 = vsel %vm1172, %v4850, %v4333
  %v4915 = vsel %vm1172, %v4851, %v4335
  %v4916 = vsel %vm1172, %v4852, %v4337
  %v4917 = vsel %vm1172, %v4853, %v4339
  %v4918 = vsel %vm1172, %v4854, %v4341
  %v4919 = vsel %vm1172, %v4855, %v4343
  %v4920 = vsel %vm1172, %v4856, %v4345
  %v4921 = vsel %vm1172, %v4857, %v4347
  %v4922 = vsel %vm1172, %v4858, %v4349
  %v4923 = vsel %vm1172, %v4859, %v4351
  %v4924 = vsel %vm1172, %v4860, %v4353
  %v4925 = vsel %vm1172, %v4861, %v4355
  %v4926 = vsel %vm1172, %v4862, %v4357
  %v4927 = vsel %vm1172, %v4863, %v4359
  %v4928 = vsel %vm1172, %v4864, %v4361
  %v4929 = vsel %vm1172, %v4865, %v4363
  %v4930 = vsel %vm1172, %v4866, %v4365
  %v4931 = vsel %vm1172, %v4867, %v4367
  %v4932 = vsel %vm1172, %v4868, %v4369
  %v4933 = vsel %vm1172, %v4869, %v4371
  %v4934 = vsel %vm1172, %v4870, %v4373
  %v4935 = vsel %vm1172, %v4871, %v1082
  %v4936 = vsel %vm1172, %v4872, %v4313
  %v4937 = vsel %vm1188, %v4873, %v4436
  %v4938 = vsel %vm1188, %v4874, %v4438
  %v4939 = vsel %vm1188, %v4875, %v4440
  %v4940 = vsel %vm1188, %v4876, %v4442
  %v4941 = vsel %vm1188, %v4877, %v4444
  %v4942 = vsel %vm1188, %v4878, %v4446
  %v4943 = vsel %vm1188, %v4879, %v4448
  %v4944 = vsel %vm1188, %v4880, %v4450
  %v4945 = vsel %vm1188, %v4881, %v4452
  %v4946 = vsel %vm1188, %v4882, %v4454
  %v4947 = vsel %vm1188, %v4883, %v4456
  %v4948 = vsel %vm1188, %v4884, %v4458
  %v4949 = vsel %vm1188, %v4885, %v4460
  %v4950 = vsel %vm1188, %v4886, %v4462
  %v4951 = vsel %vm1188, %v4887, %v4464
  %v4952 = vsel %vm1188, %v4888, %v4466
  %v4953 = vsel %vm1188, %v4889, %v4468
  %v4954 = vsel %vm1188, %v4890, %v4470
  %v4955 = vsel %vm1188, %v4891, %v4472
  %v4956 = vsel %vm1188, %v4892, %v4474
  %v4957 = vsel %vm1188, %v4893, %v4476
  %v4958 = vsel %vm1188, %v4894, %v4478
  %v4959 = vsel %vm1188, %v4895, %v4480
  %v4960 = vsel %vm1188, %v4896, %v4482
  %v4961 = vsel %vm1188, %v4897, %v4484
  %v4962 = vsel %vm1188, %v4898, %v4486
  %v4963 = vsel %vm1188, %v4899, %v4488
  %v4964 = vsel %vm1188, %v4900, %v4490
  %v4965 = vsel %vm1188, %v4901, %v4492
  %v4966 = vsel %vm1188, %v4902, %v4494
  %v4967 = vsel %vm1188, %v4903, %v4496
  %v4968 = vsel %vm1188, %v4904, %v4498
  %v4969 = vsel %vm1188, %v4905, %v4500
  %v4970 = vsel %vm1188, %v4906, %v4502
  %v4971 = vsel %vm1188, %v4907, %v4504
  %v4972 = vsel %vm1188, %v4908, %v4506
  %v4973 = vsel %vm1188, %v4909, %v4508
  %v4974 = vsel %vm1188, %v4910, %v4510
  %v4975 = vsel %vm1188, %v4911, %v4512
  %v4976 = vsel %vm1188, %v4912, %v4514
  %v4977 = vsel %vm1188, %v4913, %v4516
  %v4978 = vsel %vm1188, %v4914, %v4518
  %v4979 = vsel %vm1188, %v4915, %v4520
  %v4980 = vsel %vm1188, %v4916, %v4522
  %v4981 = vsel %vm1188, %v4917, %v4524
  %v4982 = vsel %vm1188, %v4918, %v4526
  %v4983 = vsel %vm1188, %v4919, %v4528
  %v4984 = vsel %vm1188, %v4920, %v4530
  %v4985 = vsel %vm1188, %v4921, %v4532
  %v4986 = vsel %vm1188, %v4922, %v4534
  %v4987 = vsel %vm1188, %v4923, %v4536
  %v4988 = vsel %vm1188, %v4924, %v4538
  %v4989 = vsel %vm1188, %v4925, %v4540
  %v4990 = vsel %vm1188, %v4926, %v4542
  %v4991 = vsel %vm1188, %v4927, %v4544
  %v4992 = vsel %vm1188, %v4928, %v4546
  %v4993 = vsel %vm1188, %v4929, %v4548
  %v4994 = vsel %vm1188, %v4930, %v4550
  %v4995 = vsel %vm1188, %v4931, %v4552
  %v4996 = vsel %vm1188, %v4932, %v4554
  %v4997 = vsel %vm1188, %v4933, %v4556
  %v4998 = vsel %vm1188, %v4934, %v4558
  %v4999 = vsel %vm1188, %v4935, %v4496
  %v5000 = vsel %vm1188, %v4936, %v4498
  %v5001 = vsel %vm71, %v3451, 0
  %v5003 = vsel %vm71, %v3453, 0
  %v5005 = vsel %vm71, %v3456, 0
  %v5007 = vsel %vm71, %v3458, 0
  %v5009 = vsel %vm71, %v3461, 0
  %v5011 = vsel %vm71, %v3463, 0
  %v5013 = vsel %vm71, %v3466, 0
  %v5015 = vsel %vm71, %v3468, 0
  %v5017 = vsel %vm71, %v3471, 0
  %v5019 = vsel %vm71, %v3473, 0
  %v5021 = vsel %vm71, %v3476, 0
  %v5023 = vsel %vm71, %v3478, 0
  %v5025 = vsel %vm71, %v3481, 0
  %v5027 = vsel %vm71, %v3483, 0
  %v5029 = vsel %vm71, %v3486, 0
  %v5031 = vsel %vm71, %v3488, 0
  %v5033 = vsel %vm71, %v3491, 0
  %v5035 = vsel %vm71, %v3493, 0
  %v5037 = vsel %vm71, %v3496, 0
  %v5039 = vsel %vm71, %v3498, 0
  %v5041 = vsel %vm71, %v3501, 0
  %v5043 = vsel %vm71, %v3503, 0
  %v5045 = vsel %vm71, %v3506, 0
  %v5047 = vsel %vm71, %v3508, 0
  %v5049 = vsel %vm71, %v3511, 0
  %v5051 = vsel %vm71, %v3513, 0
  %v5053 = vsel %vm71, %v3516, 0
  %v5055 = vsel %vm71, %v3518, 0
  %v5057 = vsel %vm71, %v4052, 0
  %v5059 = vsel %vm71, %v4054, 0
  %v5061 = vsel %vm71, %v3442, 0
  %v5063 = vsel %vm71, %v3443, 0
  %v5065 = vsel %vm71, %v3526, 0
  %v5067 = vsel %vm71, %v3528, 0
  %v5069 = vsel %vm71, %v3531, 0
  %v5071 = vsel %vm71, %v3533, 0
  %v5073 = vsel %vm71, %v3536, 0
  %v5075 = vsel %vm71, %v3538, 0
  %v5077 = vsel %vm71, %v3541, 0
  %v5079 = vsel %vm71, %v3543, 0
  %v5081 = vsel %vm71, %v3546, 0
  %v5083 = vsel %vm71, %v3548, 0
  %v5085 = vsel %vm71, %v3551, 0
  %v5087 = vsel %vm71, %v3553, 0
  %v5089 = vsel %vm71, %v3556, 0
  %v5091 = vsel %vm71, %v3558, 0
  %v5093 = vsel %vm71, %v3561, 0
  %v5095 = vsel %vm71, %v3563, 0
  %v5097 = vsel %vm71, %v3566, 0
  %v5099 = vsel %vm71, %v3568, 0
  %v5101 = vsel %vm71, %v3571, 0
  %v5103 = vsel %vm71, %v3573, 0
  %v5105 = vsel %vm71, %v3576, 0
  %v5107 = vsel %vm71, %v3578, 0
  %v5109 = vsel %vm71, %v3581, 0
  %v5111 = vsel %vm71, %v3583, 0
  %v5113 = vsel %vm71, %v3586, 0
  %v5115 = vsel %vm71, %v3588, 0
  %v5117 = vsel %vm71, %v3591, 0
  %v5119 = vsel %vm71, %v3593, 0
  %v5121 = vsel %vm71, %v4057, 0
  %v5123 = vsel %vm71, %v4059, 0
  %5125 = vmatpush.msra.mxu0 %v2310
  %5126 = vmatpush.msra.mxu0 %v2309
  %5127 = vmatpush.msra.mxu0 %v2308
  %5128 = vmatpush.msra.mxu0 %v2307
  %5129 = vmatpush.msra.mxu0 %v2306
  %5130 = vmatpush.msra.mxu0 %v2305
  %5131 = vmatpush.msra.mxu0 %v2304
  %5132 = vmatpush.msra.mxu0 %v2303
  %5133 = vmatpush.msra.mxu0 %v2302
  %5134 = vmatpush.msra.mxu0 %v2301
  %5135 = vmatpush.msra.mxu0 %v2300
  %5136 = vmatpush.msra.mxu0 %v2299
  %5137 = vmatpush.msra.mxu0 %v2298
  %5138 = vmatpush.msra.mxu0 %v2297
  %5139 = vmatpush.msra.mxu0 %v2296
  %5140 = vmatpush.msra.mxu0 %v2295
  %5141 = vmatmul.f32.gmra.mxu0 %v4745
  %v5142 = vpop.f32.mrf.mxu0
  %v5143 = vadd.f32 0.0, %v5142
  %5144 = vmatmul.f32.gmra.mxu0 %v4746
  %v5145 = vpop.f32.mrf.mxu0
  %v5146 = vadd.f32 0.0, %v5145
  %5147 = vmatmul.f32.gmra.mxu0 %v4747
  %v5148 = vpop.f32.mrf.mxu0
  %v5149 = vadd.f32 0.0, %v5148
  %5150 = vmatmul.f32.gmra.mxu0 %v4748
  %v5151 = vpop.f32.mrf.mxu0
  %v5152 = vadd.f32 0.0, %v5151
  %5153 = vmatmul.f32.gmra.mxu0 %v4749
  %v5154 = vpop.f32.mrf.mxu0
  %v5155 = vadd.f32 0.0, %v5154
  %5156 = vmatmul.f32.gmra.mxu0 %v4750
  %v5157 = vpop.f32.mrf.mxu0
  %v5158 = vadd.f32 0.0, %v5157
  %5159 = vmatmul.f32.gmra.mxu0 %v4751
  %v5160 = vpop.f32.mrf.mxu0
  %v5161 = vadd.f32 0.0, %v5160
  %5162 = vmatmul.f32.gmra.mxu0 %v4752
  %v5163 = vpop.f32.mrf.mxu0
  %v5164 = vadd.f32 0.0, %v5163
  %5165 = vmatmul.f32.gmra.mxu0 %v4753
  %v5166 = vpop.f32.mrf.mxu0
  %v5167 = vadd.f32 0.0, %v5166
  %5168 = vmatmul.f32.gmra.mxu0 %v4754
  %v5169 = vpop.f32.mrf.mxu0
  %v5170 = vadd.f32 0.0, %v5169
  %5171 = vmatmul.f32.gmra.mxu0 %v4755
  %v5172 = vpop.f32.mrf.mxu0
  %v5173 = vadd.f32 0.0, %v5172
  %5174 = vmatmul.f32.gmra.mxu0 %v4756
  %v5175 = vpop.f32.mrf.mxu0
  %v5176 = vadd.f32 0.0, %v5175
  %5177 = vmatmul.f32.gmra.mxu0 %v4757
  %v5178 = vpop.f32.mrf.mxu0
  %v5179 = vadd.f32 0.0, %v5178
  %5180 = vmatmul.f32.gmra.mxu0 %v4758
  %v5181 = vpop.f32.mrf.mxu0
  %v5182 = vadd.f32 0.0, %v5181
  %5183 = vmatmul.f32.gmra.mxu0 %v4759
  %v5184 = vpop.f32.mrf.mxu0
  %v5185 = vadd.f32 0.0, %v5184
  %5186 = vmatmul.f32.gmra.mxu0 %v4760
  %v5187 = vpop.f32.mrf.mxu0
  %v5188 = vadd.f32 0.0, %v5187
  %5189 = vmatmul.f32.gmra.mxu0 %v4761
  %v5190 = vpop.f32.mrf.mxu0
  %v5191 = vadd.f32 0.0, %v5190
  %5192 = vmatmul.f32.gmra.mxu0 %v4762
  %v5193 = vpop.f32.mrf.mxu0
  %v5194 = vadd.f32 0.0, %v5193
  %5195 = vmatmul.f32.gmra.mxu0 %v4763
  %v5196 = vpop.f32.mrf.mxu0
  %v5197 = vadd.f32 0.0, %v5196
  %5198 = vmatmul.f32.gmra.mxu0 %v4764
  %v5199 = vpop.f32.mrf.mxu0
  %v5200 = vadd.f32 0.0, %v5199
  %5201 = vmatmul.f32.gmra.mxu0 %v4765
  %v5202 = vpop.f32.mrf.mxu0
  %v5203 = vadd.f32 0.0, %v5202
  %5204 = vmatmul.f32.gmra.mxu0 %v4766
  %v5205 = vpop.f32.mrf.mxu0
  %v5206 = vadd.f32 0.0, %v5205
  %5207 = vmatmul.f32.gmra.mxu0 %v4767
  %v5208 = vpop.f32.mrf.mxu0
  %v5209 = vadd.f32 0.0, %v5208
  %5210 = vmatmul.f32.gmra.mxu0 %v4768
  %v5211 = vpop.f32.mrf.mxu0
  %v5212 = vadd.f32 0.0, %v5211
  %5213 = vmatmul.f32.gmra.mxu0 %v4769
  %v5214 = vpop.f32.mrf.mxu0
  %v5215 = vadd.f32 0.0, %v5214
  %5216 = vmatmul.f32.gmra.mxu0 %v4770
  %v5217 = vpop.f32.mrf.mxu0
  %v5218 = vadd.f32 0.0, %v5217
  %5219 = vmatmul.f32.gmra.mxu0 %v4771
  %v5220 = vpop.f32.mrf.mxu0
  %v5221 = vadd.f32 0.0, %v5220
  %5222 = vmatmul.f32.gmra.mxu0 %v4772
  %v5223 = vpop.f32.mrf.mxu0
  %v5224 = vadd.f32 0.0, %v5223
  %5225 = vmatmul.f32.gmra.mxu0 %v4773
  %v5226 = vpop.f32.mrf.mxu0
  %v5227 = vadd.f32 0.0, %v5226
  %5228 = vmatmul.f32.gmra.mxu0 %v4774
  %v5229 = vpop.f32.mrf.mxu0
  %v5230 = vadd.f32 0.0, %v5229
  %5231 = vmatmul.f32.gmra.mxu0 %v4775
  %v5232 = vpop.f32.mrf.mxu0
  %v5233 = vadd.f32 0.0, %v5232
  %5234 = vmatmul.f32.gmra.mxu0 %v4776
  %v5235 = vpop.f32.mrf.mxu0
  %v5236 = vadd.f32 0.0, %v5235
  %5237 = vmatmul.f32.gmra.mxu0 %v4777
  %v5238 = vpop.f32.mrf.mxu0
  %v5239 = vadd.f32 0.0, %v5238
  %5240 = vmatmul.f32.gmra.mxu0 %v4778
  %v5241 = vpop.f32.mrf.mxu0
  %v5242 = vadd.f32 0.0, %v5241
  %5243 = vmatmul.f32.gmra.mxu0 %v4779
  %v5244 = vpop.f32.mrf.mxu0
  %v5245 = vadd.f32 0.0, %v5244
  %5246 = vmatmul.f32.gmra.mxu0 %v4780
  %v5247 = vpop.f32.mrf.mxu0
  %v5248 = vadd.f32 0.0, %v5247
  %5249 = vmatmul.f32.gmra.mxu0 %v4781
  %v5250 = vpop.f32.mrf.mxu0
  %v5251 = vadd.f32 0.0, %v5250
  %5252 = vmatmul.f32.gmra.mxu0 %v4782
  %v5253 = vpop.f32.mrf.mxu0
  %v5254 = vadd.f32 0.0, %v5253
  %5255 = vmatmul.f32.gmra.mxu0 %v4783
  %v5256 = vpop.f32.mrf.mxu0
  %v5257 = vadd.f32 0.0, %v5256
  %5258 = vmatmul.f32.gmra.mxu0 %v4784
  %v5259 = vpop.f32.mrf.mxu0
  %v5260 = vadd.f32 0.0, %v5259
  %5261 = vmatmul.f32.gmra.mxu0 %v4785
  %v5262 = vpop.f32.mrf.mxu0
  %v5263 = vadd.f32 0.0, %v5262
  %5264 = vmatmul.f32.gmra.mxu0 %v4786
  %v5265 = vpop.f32.mrf.mxu0
  %v5266 = vadd.f32 0.0, %v5265
  %5267 = vmatmul.f32.gmra.mxu0 %v4787
  %v5268 = vpop.f32.mrf.mxu0
  %v5269 = vadd.f32 0.0, %v5268
  %5270 = vmatmul.f32.gmra.mxu0 %v4788
  %v5271 = vpop.f32.mrf.mxu0
  %v5272 = vadd.f32 0.0, %v5271
  %5273 = vmatmul.f32.gmra.mxu0 %v4789
  %v5274 = vpop.f32.mrf.mxu0
  %v5275 = vadd.f32 0.0, %v5274
  %5276 = vmatmul.f32.gmra.mxu0 %v4790
  %v5277 = vpop.f32.mrf.mxu0
  %v5278 = vadd.f32 0.0, %v5277
  %5279 = vmatmul.f32.gmra.mxu0 %v4791
  %v5280 = vpop.f32.mrf.mxu0
  %v5281 = vadd.f32 0.0, %v5280
  %5282 = vmatmul.f32.gmra.mxu0 %v4792
  %v5283 = vpop.f32.mrf.mxu0
  %v5284 = vadd.f32 0.0, %v5283
  %5285 = vmatmul.f32.gmra.mxu0 %v4793
  %v5286 = vpop.f32.mrf.mxu0
  %v5287 = vadd.f32 0.0, %v5286
  %5288 = vmatmul.f32.gmra.mxu0 %v4794
  %v5289 = vpop.f32.mrf.mxu0
  %v5290 = vadd.f32 0.0, %v5289
  %5291 = vmatmul.f32.gmra.mxu0 %v4795
  %v5292 = vpop.f32.mrf.mxu0
  %v5293 = vadd.f32 0.0, %v5292
  %5294 = vmatmul.f32.gmra.mxu0 %v4796
  %v5295 = vpop.f32.mrf.mxu0
  %v5296 = vadd.f32 0.0, %v5295
  %5297 = vmatmul.f32.gmra.mxu0 %v4797
  %v5298 = vpop.f32.mrf.mxu0
  %v5299 = vadd.f32 0.0, %v5298
  %5300 = vmatmul.f32.gmra.mxu0 %v4798
  %v5301 = vpop.f32.mrf.mxu0
  %v5302 = vadd.f32 0.0, %v5301
  %5303 = vmatmul.f32.gmra.mxu0 %v4799
  %v5304 = vpop.f32.mrf.mxu0
  %v5305 = vadd.f32 0.0, %v5304
  %5306 = vmatmul.f32.gmra.mxu0 %v4800
  %v5307 = vpop.f32.mrf.mxu0
  %v5308 = vadd.f32 0.0, %v5307
  %5309 = vmatmul.f32.gmra.mxu0 %v4801
  %v5310 = vpop.f32.mrf.mxu0
  %v5311 = vadd.f32 0.0, %v5310
  %5312 = vmatmul.f32.gmra.mxu0 %v4802
  %v5313 = vpop.f32.mrf.mxu0
  %v5314 = vadd.f32 0.0, %v5313
  %5315 = vmatmul.f32.gmra.mxu0 %v4803
  %v5316 = vpop.f32.mrf.mxu0
  %v5317 = vadd.f32 0.0, %v5316
  %5318 = vmatmul.f32.gmra.mxu0 %v4804
  %v5319 = vpop.f32.mrf.mxu0
  %v5320 = vadd.f32 0.0, %v5319
  %5321 = vmatmul.f32.gmra.mxu0 %v4805
  %v5322 = vpop.f32.mrf.mxu0
  %v5323 = vadd.f32 0.0, %v5322
  %5324 = vmatmul.f32.gmra.mxu0 %v4806
  %v5325 = vpop.f32.mrf.mxu0
  %v5326 = vadd.f32 0.0, %v5325
  %5327 = vmatmul.f32.gmra.mxu0 %v4807
  %v5328 = vpop.f32.mrf.mxu0
  %v5329 = vadd.f32 0.0, %v5328
  %5330 = vmatmul.f32.gmra.mxu0 %v4808
  %v5331 = vpop.f32.mrf.mxu0
  %v5332 = vadd.f32 0.0, %v5331
  %5333 = vdwg.mxu0
  %5334 = vmatpush.msra.mxu0 %v2326
  %5335 = vmatpush.msra.mxu0 %v2325
  %5336 = vmatpush.msra.mxu0 %v2324
  %5337 = vmatpush.msra.mxu0 %v2323
  %5338 = vmatpush.msra.mxu0 %v2322
  %5339 = vmatpush.msra.mxu0 %v2321
  %5340 = vmatpush.msra.mxu0 %v2320
  %5341 = vmatpush.msra.mxu0 %v2319
  %5342 = vmatpush.msra.mxu0 %v2318
  %5343 = vmatpush.msra.mxu0 %v2317
  %5344 = vmatpush.msra.mxu0 %v2316
  %5345 = vmatpush.msra.mxu0 %v2315
  %5346 = vmatpush.msra.mxu0 %v2314
  %5347 = vmatpush.msra.mxu0 %v2313
  %5348 = vmatpush.msra.mxu0 %v2312
  %5349 = vmatpush.msra.mxu0 %v2311
  %5350 = vmatmul.f32.gmra.mxu0 %v4937
  %v5351 = vpop.f32.mrf.mxu0
  %v5352 = vadd.f32 %v5143, %v5351
  %5353 = vmatmul.f32.gmra.mxu0 %v4938
  %v5354 = vpop.f32.mrf.mxu0
  %v5355 = vadd.f32 %v5146, %v5354
  %5356 = vmatmul.f32.gmra.mxu0 %v4939
  %v5357 = vpop.f32.mrf.mxu0
  %v5358 = vadd.f32 %v5149, %v5357
  %5359 = vmatmul.f32.gmra.mxu0 %v4940
  %v5360 = vpop.f32.mrf.mxu0
  %v5361 = vadd.f32 %v5152, %v5360
  %5362 = vmatmul.f32.gmra.mxu0 %v4941
  %v5363 = vpop.f32.mrf.mxu0
  %v5364 = vadd.f32 %v5155, %v5363
  %5365 = vmatmul.f32.gmra.mxu0 %v4942
  %v5366 = vpop.f32.mrf.mxu0
  %v5367 = vadd.f32 %v5158, %v5366
  %5368 = vmatmul.f32.gmra.mxu0 %v4943
  %v5369 = vpop.f32.mrf.mxu0
  %v5370 = vadd.f32 %v5161, %v5369
  %5371 = vmatmul.f32.gmra.mxu0 %v4944
  %v5372 = vpop.f32.mrf.mxu0
  %v5373 = vadd.f32 %v5164, %v5372
  %5374 = vmatmul.f32.gmra.mxu0 %v4945
  %v5375 = vpop.f32.mrf.mxu0
  %v5376 = vadd.f32 %v5167, %v5375
  %5377 = vmatmul.f32.gmra.mxu0 %v4946
  %v5378 = vpop.f32.mrf.mxu0
  %v5379 = vadd.f32 %v5170, %v5378
  %5380 = vmatmul.f32.gmra.mxu0 %v4947
  %v5381 = vpop.f32.mrf.mxu0
  %v5382 = vadd.f32 %v5173, %v5381
  %5383 = vmatmul.f32.gmra.mxu0 %v4948
  %v5384 = vpop.f32.mrf.mxu0
  %v5385 = vadd.f32 %v5176, %v5384
  %5386 = vmatmul.f32.gmra.mxu0 %v4949
  %v5387 = vpop.f32.mrf.mxu0
  %v5388 = vadd.f32 %v5179, %v5387
  %5389 = vmatmul.f32.gmra.mxu0 %v4950
  %v5390 = vpop.f32.mrf.mxu0
  %v5391 = vadd.f32 %v5182, %v5390
  %5392 = vmatmul.f32.gmra.mxu0 %v4951
  %v5393 = vpop.f32.mrf.mxu0
  %v5394 = vadd.f32 %v5185, %v5393
  %5395 = vmatmul.f32.gmra.mxu0 %v4952
  %v5396 = vpop.f32.mrf.mxu0
  %v5397 = vadd.f32 %v5188, %v5396
  %5398 = vmatmul.f32.gmra.mxu0 %v4953
  %v5399 = vpop.f32.mrf.mxu0
  %v5400 = vadd.f32 %v5191, %v5399
  %5401 = vmatmul.f32.gmra.mxu0 %v4954
  %v5402 = vpop.f32.mrf.mxu0
  %v5403 = vadd.f32 %v5194, %v5402
  %5404 = vmatmul.f32.gmra.mxu0 %v4955
  %v5405 = vpop.f32.mrf.mxu0
  %v5406 = vadd.f32 %v5197, %v5405
  %5407 = vmatmul.f32.gmra.mxu0 %v4956
  %v5408 = vpop.f32.mrf.mxu0
  %v5409 = vadd.f32 %v5200, %v5408
  %5410 = vmatmul.f32.gmra.mxu0 %v4957
  %v5411 = vpop.f32.mrf.mxu0
  %v5412 = vadd.f32 %v5203, %v5411
  %5413 = vmatmul.f32.gmra.mxu0 %v4958
  %v5414 = vpop.f32.mrf.mxu0
  %v5415 = vadd.f32 %v5206, %v5414
  %5416 = vmatmul.f32.gmra.mxu0 %v4959
  %v5417 = vpop.f32.mrf.mxu0
  %v5418 = vadd.f32 %v5209, %v5417
  %5419 = vmatmul.f32.gmra.mxu0 %v4960
  %v5420 = vpop.f32.mrf.mxu0
  %v5421 = vadd.f32 %v5212, %v5420
  %5422 = vmatmul.f32.gmra.mxu0 %v4961
  %v5423 = vpop.f32.mrf.mxu0
  %v5424 = vadd.f32 %v5215, %v5423
  %5425 = vmatmul.f32.gmra.mxu0 %v4962
  %v5426 = vpop.f32.mrf.mxu0
  %v5427 = vadd.f32 %v5218, %v5426
  %5428 = vmatmul.f32.gmra.mxu0 %v4963
  %v5429 = vpop.f32.mrf.mxu0
  %v5430 = vadd.f32 %v5221, %v5429
  %5431 = vmatmul.f32.gmra.mxu0 %v4964
  %v5432 = vpop.f32.mrf.mxu0
  %v5433 = vadd.f32 %v5224, %v5432
  %5434 = vmatmul.f32.gmra.mxu0 %v4965
  %v5435 = vpop.f32.mrf.mxu0
  %v5436 = vadd.f32 %v5227, %v5435
  %5437 = vmatmul.f32.gmra.mxu0 %v4966
  %v5438 = vpop.f32.mrf.mxu0
  %v5439 = vadd.f32 %v5230, %v5438
  %5440 = vmatmul.f32.gmra.mxu0 %v4967
  %v5441 = vpop.f32.mrf.mxu0
  %v5442 = vadd.f32 %v5233, %v5441
  %5443 = vmatmul.f32.gmra.mxu0 %v4968
  %v5444 = vpop.f32.mrf.mxu0
  %v5445 = vadd.f32 %v5236, %v5444
  %5446 = vmatmul.f32.gmra.mxu0 %v4969
  %v5447 = vpop.f32.mrf.mxu0
  %v5448 = vadd.f32 %v5239, %v5447
  %5449 = vmatmul.f32.gmra.mxu0 %v4970
  %v5450 = vpop.f32.mrf.mxu0
  %v5451 = vadd.f32 %v5242, %v5450
  %5452 = vmatmul.f32.gmra.mxu0 %v4971
  %v5453 = vpop.f32.mrf.mxu0
  %v5454 = vadd.f32 %v5245, %v5453
  %5455 = vmatmul.f32.gmra.mxu0 %v4972
  %v5456 = vpop.f32.mrf.mxu0
  %v5457 = vadd.f32 %v5248, %v5456
  %5458 = vmatmul.f32.gmra.mxu0 %v4973
  %v5459 = vpop.f32.mrf.mxu0
  %v5460 = vadd.f32 %v5251, %v5459
  %5461 = vmatmul.f32.gmra.mxu0 %v4974
  %v5462 = vpop.f32.mrf.mxu0
  %v5463 = vadd.f32 %v5254, %v5462
  %5464 = vmatmul.f32.gmra.mxu0 %v4975
  %v5465 = vpop.f32.mrf.mxu0
  %v5466 = vadd.f32 %v5257, %v5465
  %5467 = vmatmul.f32.gmra.mxu0 %v4976
  %v5468 = vpop.f32.mrf.mxu0
  %v5469 = vadd.f32 %v5260, %v5468
  %5470 = vmatmul.f32.gmra.mxu0 %v4977
  %v5471 = vpop.f32.mrf.mxu0
  %v5472 = vadd.f32 %v5263, %v5471
  %5473 = vmatmul.f32.gmra.mxu0 %v4978
  %v5474 = vpop.f32.mrf.mxu0
  %v5475 = vadd.f32 %v5266, %v5474
  %5476 = vmatmul.f32.gmra.mxu0 %v4979
  %v5477 = vpop.f32.mrf.mxu0
  %v5478 = vadd.f32 %v5269, %v5477
  %5479 = vmatmul.f32.gmra.mxu0 %v4980
  %v5480 = vpop.f32.mrf.mxu0
  %v5481 = vadd.f32 %v5272, %v5480
  %5482 = vmatmul.f32.gmra.mxu0 %v4981
  %v5483 = vpop.f32.mrf.mxu0
  %v5484 = vadd.f32 %v5275, %v5483
  %5485 = vmatmul.f32.gmra.mxu0 %v4982
  %v5486 = vpop.f32.mrf.mxu0
  %v5487 = vadd.f32 %v5278, %v5486
  %5488 = vmatmul.f32.gmra.mxu0 %v4983
  %v5489 = vpop.f32.mrf.mxu0
  %v5490 = vadd.f32 %v5281, %v5489
  %5491 = vmatmul.f32.gmra.mxu0 %v4984
  %v5492 = vpop.f32.mrf.mxu0
  %v5493 = vadd.f32 %v5284, %v5492
  %5494 = vmatmul.f32.gmra.mxu0 %v4985
  %v5495 = vpop.f32.mrf.mxu0
  %v5496 = vadd.f32 %v5287, %v5495
  %5497 = vmatmul.f32.gmra.mxu0 %v4986
  %v5498 = vpop.f32.mrf.mxu0
  %v5499 = vadd.f32 %v5290, %v5498
  %5500 = vmatmul.f32.gmra.mxu0 %v4987
  %v5501 = vpop.f32.mrf.mxu0
  %v5502 = vadd.f32 %v5293, %v5501
  %5503 = vmatmul.f32.gmra.mxu0 %v4988
  %v5504 = vpop.f32.mrf.mxu0
  %v5505 = vadd.f32 %v5296, %v5504
  %5506 = vmatmul.f32.gmra.mxu0 %v4989
  %v5507 = vpop.f32.mrf.mxu0
  %v5508 = vadd.f32 %v5299, %v5507
  %5509 = vmatmul.f32.gmra.mxu0 %v4990
  %v5510 = vpop.f32.mrf.mxu0
  %v5511 = vadd.f32 %v5302, %v5510
  %5512 = vmatmul.f32.gmra.mxu0 %v4991
  %v5513 = vpop.f32.mrf.mxu0
  %v5514 = vadd.f32 %v5305, %v5513
  %5515 = vmatmul.f32.gmra.mxu0 %v4992
  %v5516 = vpop.f32.mrf.mxu0
  %v5517 = vadd.f32 %v5308, %v5516
  %5518 = vmatmul.f32.gmra.mxu0 %v4993
  %v5519 = vpop.f32.mrf.mxu0
  %v5520 = vadd.f32 %v5311, %v5519
  %5521 = vmatmul.f32.gmra.mxu0 %v4994
  %v5522 = vpop.f32.mrf.mxu0
  %v5523 = vadd.f32 %v5314, %v5522
  %5524 = vmatmul.f32.gmra.mxu0 %v4995
  %v5525 = vpop.f32.mrf.mxu0
  %v5526 = vadd.f32 %v5317, %v5525
  %5527 = vmatmul.f32.gmra.mxu0 %v4996
  %v5528 = vpop.f32.mrf.mxu0
  %v5529 = vadd.f32 %v5320, %v5528
  %5530 = vmatmul.f32.gmra.mxu0 %v4997
  %v5531 = vpop.f32.mrf.mxu0
  %v5532 = vadd.f32 %v5323, %v5531
  %5533 = vmatmul.f32.gmra.mxu0 %v4998
  %v5534 = vpop.f32.mrf.mxu0
  %v5535 = vadd.f32 %v5326, %v5534
  %5536 = vmatmul.f32.gmra.mxu0 %v4999
  %v5537 = vpop.f32.mrf.mxu0
  %v5538 = vadd.f32 %v5329, %v5537
  %5539 = vmatmul.f32.gmra.mxu0 %v5000
  %v5540 = vpop.f32.mrf.mxu0
  %v5541 = vadd.f32 %v5332, %v5540
  %5542 = vdwg.mxu0
  %5543 = vmatpush.msra.mxu0 0.0
  %5544 = vmatpush.msra.mxu0 0.0
  %5545 = vmatpush.msra.mxu0 0.0
  %5546 = vmatpush.msra.mxu0 0.0
  %5547 = vmatpush.msra.mxu0 0.0
  %5548 = vmatpush.msra.mxu0 0.0
  %5549 = vmatpush.msra.mxu0 0.0
  %5550 = vmatpush.msra.mxu0 0.0
  %5551 = vmatpush.msra.mxu0 0.0
  %5552 = vmatpush.msra.mxu0 0.0
  %5553 = vmatpush.msra.mxu0 0.0
  %5554 = vmatpush.msra.mxu0 0.0
  %5555 = vmatpush.msra.mxu0 %v2330
  %5556 = vmatpush.msra.mxu0 %v2329
  %5557 = vmatpush.msra.mxu0 %v2328
  %5558 = vmatpush.msra.mxu0 %v2327
  %5559 = vmatmul.f32.gmra.mxu0 %v5001
  %v5560 = vpop.f32.mrf.mxu0
  %v5561 = vadd.f32 %v5352, %v5560
  %5562 = vmatmul.f32.gmra.mxu0 %v5003
  %v5563 = vpop.f32.mrf.mxu0
  %v5564 = vadd.f32 %v5355, %v5563
  %5565 = vmatmul.f32.gmra.mxu0 %v5005
  %v5566 = vpop.f32.mrf.mxu0
  %v5567 = vadd.f32 %v5358, %v5566
  %5568 = vmatmul.f32.gmra.mxu0 %v5007
  %v5569 = vpop.f32.mrf.mxu0
  %v5570 = vadd.f32 %v5361, %v5569
  %5571 = vmatmul.f32.gmra.mxu0 %v5009
  %v5572 = vpop.f32.mrf.mxu0
  %v5573 = vadd.f32 %v5364, %v5572
  %5574 = vmatmul.f32.gmra.mxu0 %v5011
  %v5575 = vpop.f32.mrf.mxu0
  %v5576 = vadd.f32 %v5367, %v5575
  %5577 = vmatmul.f32.gmra.mxu0 %v5013
  %v5578 = vpop.f32.mrf.mxu0
  %v5579 = vadd.f32 %v5370, %v5578
  %5580 = vmatmul.f32.gmra.mxu0 %v5015
  %v5581 = vpop.f32.mrf.mxu0
  %v5582 = vadd.f32 %v5373, %v5581
  %5583 = vmatmul.f32.gmra.mxu0 %v5017
  %v5584 = vpop.f32.mrf.mxu0
  %v5585 = vadd.f32 %v5376, %v5584
  %5586 = vmatmul.f32.gmra.mxu0 %v5019
  %v5587 = vpop.f32.mrf.mxu0
  %v5588 = vadd.f32 %v5379, %v5587
  %5589 = vmatmul.f32.gmra.mxu0 %v5021
  %v5590 = vpop.f32.mrf.mxu0
  %v5591 = vadd.f32 %v5382, %v5590
  %5592 = vmatmul.f32.gmra.mxu0 %v5023
  %v5593 = vpop.f32.mrf.mxu0
  %v5594 = vadd.f32 %v5385, %v5593
  %5595 = vmatmul.f32.gmra.mxu0 %v5025
  %v5596 = vpop.f32.mrf.mxu0
  %v5597 = vadd.f32 %v5388, %v5596
  %5598 = vmatmul.f32.gmra.mxu0 %v5027
  %v5599 = vpop.f32.mrf.mxu0
  %v5600 = vadd.f32 %v5391, %v5599
  %5601 = vmatmul.f32.gmra.mxu0 %v5029
  %v5602 = vpop.f32.mrf.mxu0
  %v5603 = vadd.f32 %v5394, %v5602
  %5604 = vmatmul.f32.gmra.mxu0 %v5031
  %v5605 = vpop.f32.mrf.mxu0
  %v5606 = vadd.f32 %v5397, %v5605
  %5607 = vmatmul.f32.gmra.mxu0 %v5033
  %v5608 = vpop.f32.mrf.mxu0
  %v5609 = vadd.f32 %v5400, %v5608
  %5610 = vmatmul.f32.gmra.mxu0 %v5035
  %v5611 = vpop.f32.mrf.mxu0
  %v5612 = vadd.f32 %v5403, %v5611
  %5613 = vmatmul.f32.gmra.mxu0 %v5037
  %v5614 = vpop.f32.mrf.mxu0
  %v5615 = vadd.f32 %v5406, %v5614
  %5616 = vmatmul.f32.gmra.mxu0 %v5039
  %v5617 = vpop.f32.mrf.mxu0
  %v5618 = vadd.f32 %v5409, %v5617
  %5619 = vmatmul.f32.gmra.mxu0 %v5041
  %v5620 = vpop.f32.mrf.mxu0
  %v5621 = vadd.f32 %v5412, %v5620
  %5622 = vmatmul.f32.gmra.mxu0 %v5043
  %v5623 = vpop.f32.mrf.mxu0
  %v5624 = vadd.f32 %v5415, %v5623
  %5625 = vmatmul.f32.gmra.mxu0 %v5045
  %v5626 = vpop.f32.mrf.mxu0
  %v5627 = vadd.f32 %v5418, %v5626
  %5628 = vmatmul.f32.gmra.mxu0 %v5047
  %v5629 = vpop.f32.mrf.mxu0
  %v5630 = vadd.f32 %v5421, %v5629
  %5631 = vmatmul.f32.gmra.mxu0 %v5049
  %v5632 = vpop.f32.mrf.mxu0
  %v5633 = vadd.f32 %v5424, %v5632
  %5634 = vmatmul.f32.gmra.mxu0 %v5051
  %v5635 = vpop.f32.mrf.mxu0
  %v5636 = vadd.f32 %v5427, %v5635
  %5637 = vmatmul.f32.gmra.mxu0 %v5053
  %v5638 = vpop.f32.mrf.mxu0
  %v5639 = vadd.f32 %v5430, %v5638
  %5640 = vmatmul.f32.gmra.mxu0 %v5055
  %v5641 = vpop.f32.mrf.mxu0
  %v5642 = vadd.f32 %v5433, %v5641
  %5643 = vmatmul.f32.gmra.mxu0 %v5057
  %v5644 = vpop.f32.mrf.mxu0
  %v5645 = vadd.f32 %v5436, %v5644
  %5646 = vmatmul.f32.gmra.mxu0 %v5059
  %v5647 = vpop.f32.mrf.mxu0
  %v5648 = vadd.f32 %v5439, %v5647
  %5649 = vmatmul.f32.gmra.mxu0 %v5061
  %v5650 = vpop.f32.mrf.mxu0
  %v5651 = vadd.f32 %v5442, %v5650
  %5652 = vmatmul.f32.gmra.mxu0 %v5063
  %v5653 = vpop.f32.mrf.mxu0
  %v5654 = vadd.f32 %v5445, %v5653
  %5655 = vmatmul.f32.gmra.mxu0 %v5065
  %v5656 = vpop.f32.mrf.mxu0
  %v5657 = vadd.f32 %v5448, %v5656
  %5658 = vmatmul.f32.gmra.mxu0 %v5067
  %v5659 = vpop.f32.mrf.mxu0
  %v5660 = vadd.f32 %v5451, %v5659
  %5661 = vmatmul.f32.gmra.mxu0 %v5069
  %v5662 = vpop.f32.mrf.mxu0
  %v5663 = vadd.f32 %v5454, %v5662
  %5664 = vmatmul.f32.gmra.mxu0 %v5071
  %v5665 = vpop.f32.mrf.mxu0
  %v5666 = vadd.f32 %v5457, %v5665
  %5667 = vmatmul.f32.gmra.mxu0 %v5073
  %v5668 = vpop.f32.mrf.mxu0
  %v5669 = vadd.f32 %v5460, %v5668
  %5670 = vmatmul.f32.gmra.mxu0 %v5075
  %v5671 = vpop.f32.mrf.mxu0
  %v5672 = vadd.f32 %v5463, %v5671
  %5673 = vmatmul.f32.gmra.mxu0 %v5077
  %v5674 = vpop.f32.mrf.mxu0
  %v5675 = vadd.f32 %v5466, %v5674
  %5676 = vmatmul.f32.gmra.mxu0 %v5079
  %v5677 = vpop.f32.mrf.mxu0
  %v5678 = vadd.f32 %v5469, %v5677
  %5679 = vmatmul.f32.gmra.mxu0 %v5081
  %v5680 = vpop.f32.mrf.mxu0
  %v5681 = vadd.f32 %v5472, %v5680
  %5682 = vmatmul.f32.gmra.mxu0 %v5083
  %v5683 = vpop.f32.mrf.mxu0
  %v5684 = vadd.f32 %v5475, %v5683
  %5685 = vmatmul.f32.gmra.mxu0 %v5085
  %v5686 = vpop.f32.mrf.mxu0
  %v5687 = vadd.f32 %v5478, %v5686
  %5688 = vmatmul.f32.gmra.mxu0 %v5087
  %v5689 = vpop.f32.mrf.mxu0
  %v5690 = vadd.f32 %v5481, %v5689
  %5691 = vmatmul.f32.gmra.mxu0 %v5089
  %v5692 = vpop.f32.mrf.mxu0
  %v5693 = vadd.f32 %v5484, %v5692
  %5694 = vmatmul.f32.gmra.mxu0 %v5091
  %v5695 = vpop.f32.mrf.mxu0
  %v5696 = vadd.f32 %v5487, %v5695
  %5697 = vmatmul.f32.gmra.mxu0 %v5093
  %v5698 = vpop.f32.mrf.mxu0
  %v5699 = vadd.f32 %v5490, %v5698
  %5700 = vmatmul.f32.gmra.mxu0 %v5095
  %v5701 = vpop.f32.mrf.mxu0
  %v5702 = vadd.f32 %v5493, %v5701
  %5703 = vmatmul.f32.gmra.mxu0 %v5097
  %v5704 = vpop.f32.mrf.mxu0
  %v5705 = vadd.f32 %v5496, %v5704
  %5706 = vmatmul.f32.gmra.mxu0 %v5099
  %v5707 = vpop.f32.mrf.mxu0
  %v5708 = vadd.f32 %v5499, %v5707
  %5709 = vmatmul.f32.gmra.mxu0 %v5101
  %v5710 = vpop.f32.mrf.mxu0
  %v5711 = vadd.f32 %v5502, %v5710
  %5712 = vmatmul.f32.gmra.mxu0 %v5103
  %v5713 = vpop.f32.mrf.mxu0
  %v5714 = vadd.f32 %v5505, %v5713
  %5715 = vmatmul.f32.gmra.mxu0 %v5105
  %v5716 = vpop.f32.mrf.mxu0
  %v5717 = vadd.f32 %v5508, %v5716
  %5718 = vmatmul.f32.gmra.mxu0 %v5107
  %v5719 = vpop.f32.mrf.mxu0
  %v5720 = vadd.f32 %v5511, %v5719
  %5721 = vmatmul.f32.gmra.mxu0 %v5109
  %v5722 = vpop.f32.mrf.mxu0
  %v5723 = vadd.f32 %v5514, %v5722
  %5724 = vmatmul.f32.gmra.mxu0 %v5111
  %v5725 = vpop.f32.mrf.mxu0
  %v5726 = vadd.f32 %v5517, %v5725
  %5727 = vmatmul.f32.gmra.mxu0 %v5113
  %v5728 = vpop.f32.mrf.mxu0
  %v5729 = vadd.f32 %v5520, %v5728
  %5730 = vmatmul.f32.gmra.mxu0 %v5115
  %v5731 = vpop.f32.mrf.mxu0
  %v5732 = vadd.f32 %v5523, %v5731
  %5733 = vmatmul.f32.gmra.mxu0 %v5117
  %v5734 = vpop.f32.mrf.mxu0
  %v5735 = vadd.f32 %v5526, %v5734
  %5736 = vmatmul.f32.gmra.mxu0 %v5119
  %v5737 = vpop.f32.mrf.mxu0
  %v5738 = vadd.f32 %v5529, %v5737
  %5739 = vmatmul.f32.gmra.mxu0 %v5121
  %v5740 = vpop.f32.mrf.mxu0
  %v5741 = vadd.f32 %v5532, %v5740
  %5742 = vmatmul.f32.gmra.mxu0 %v5123
  %v5743 = vpop.f32.mrf.mxu0
  %v5744 = vadd.f32 %v5535, %v5743
  %5745 = vmatmul.f32.gmra.mxu0 %v5061
  %v5746 = vpop.f32.mrf.mxu0
  %v5747 = vadd.f32 %v5538, %v5746
  %5748 = vmatmul.f32.gmra.mxu0 %v5063
  %v5749 = vpop.f32.mrf.mxu0
  %v5750 = vadd.f32 %v5541, %v5749
  %5751 = vdwg.mxu0
  %v5752 = vld [vmem:[%s9] sm:$0x1]
  %v5753 = vld [vmem:[%s10] sm:$0x1]
  %vm5754 = vcmask 130048
  %v5755 = vsel %vm5754, %v5561, 0.0
  %v5756 = vsel %vm5754, %v5564, 0.0
  %v5757 = vadd.f32 %v5755, %v5756
  %v5758 = vsel %vm5754, %v5567, 0.0
  %v5759 = vadd.f32 %v5757, %v5758
  %v5760 = vsel %vm5754, %v5570, 0.0
  %v5761 = vadd.f32 %v5759, %v5760
  %v5762 = vsel %vm5754, %v5573, 0.0
  %v5763 = vadd.f32 %v5761, %v5762
  %v5764 = vsel %vm5754, %v5576, 0.0
  %v5765 = vadd.f32 %v5763, %v5764
  %v5766 = vsel %vm5754, %v5579, 0.0
  %v5767 = vadd.f32 %v5765, %v5766
  %v5768 = vsel %vm5754, %v5582, 0.0
  %v5769 = vadd.f32 %v5767, %v5768
  %v5770 = vsel %vm5754, %v5585, 0.0
  %v5771 = vadd.f32 %v5769, %v5770
  %v5772 = vsel %vm5754, %v5588, 0.0
  %v5773 = vadd.f32 %v5771, %v5772
  %v5774 = vsel %vm5754, %v5591, 0.0
  %v5775 = vadd.f32 %v5773, %v5774
  %v5776 = vsel %vm5754, %v5594, 0.0
  %v5777 = vadd.f32 %v5775, %v5776
  %v5778 = vsel %vm5754, %v5597, 0.0
  %v5779 = vadd.f32 %v5777, %v5778
  %v5780 = vsel %vm5754, %v5600, 0.0
  %v5781 = vadd.f32 %v5779, %v5780
  %v5782 = vsel %vm5754, %v5603, 0.0
  %v5783 = vadd.f32 %v5781, %v5782
  %v5784 = vsel %vm5754, %v5606, 0.0
  %v5785 = vadd.f32 %v5783, %v5784
  %v5786 = vsel %vm5754, %v5609, 0.0
  %v5787 = vadd.f32 %v5785, %v5786
  %v5788 = vsel %vm5754, %v5612, 0.0
  %v5789 = vadd.f32 %v5787, %v5788
  %v5790 = vsel %vm5754, %v5615, 0.0
  %v5791 = vadd.f32 %v5789, %v5790
  %v5792 = vsel %vm5754, %v5618, 0.0
  %v5793 = vadd.f32 %v5791, %v5792
  %v5794 = vsel %vm5754, %v5621, 0.0
  %v5795 = vadd.f32 %v5793, %v5794
  %v5796 = vsel %vm5754, %v5624, 0.0
  %v5797 = vadd.f32 %v5795, %v5796
  %v5798 = vsel %vm5754, %v5627, 0.0
  %v5799 = vadd.f32 %v5797, %v5798
  %v5800 = vsel %vm5754, %v5630, 0.0
  %v5801 = vadd.f32 %v5799, %v5800
  %v5802 = vsel %vm5754, %v5633, 0.0
  %v5803 = vadd.f32 %v5801, %v5802
  %v5804 = vsel %vm5754, %v5636, 0.0
  %v5805 = vadd.f32 %v5803, %v5804
  %v5806 = vsel %vm5754, %v5639, 0.0
  %v5807 = vadd.f32 %v5805, %v5806
  %v5808 = vsel %vm5754, %v5642, 0.0
  %v5809 = vadd.f32 %v5807, %v5808
  %v5810 = vsel %vm5754, %v5645, 0.0
  %v5811 = vadd.f32 %v5809, %v5810
  %v5812 = vsel %vm5754, %v5648, 0.0
  %v5813 = vadd.f32 %v5811, %v5812
  %v5814 = vsel %vm5754, %v5651, 0.0
  %v5815 = vadd.f32 %v5813, %v5814
  %v5816 = vsel %vm5754, %v5654, 0.0
  %v5817 = vadd.f32 %v5815, %v5816
  %v5818 = vsel %vm5754, %v5657, 0.0
  %v5819 = vadd.f32 %v5817, %v5818
  %v5820 = vsel %vm5754, %v5660, 0.0
  %v5821 = vadd.f32 %v5819, %v5820
  %v5822 = vsel %vm5754, %v5663, 0.0
  %v5823 = vadd.f32 %v5821, %v5822
  %v5824 = vsel %vm5754, %v5666, 0.0
  %v5825 = vadd.f32 %v5823, %v5824
  %v5826 = vsel %vm5754, %v5669, 0.0
  %v5827 = vadd.f32 %v5825, %v5826
  %v5828 = vsel %vm5754, %v5672, 0.0
  %v5829 = vadd.f32 %v5827, %v5828
  %v5830 = vsel %vm5754, %v5675, 0.0
  %v5831 = vadd.f32 %v5829, %v5830
  %v5832 = vsel %vm5754, %v5678, 0.0
  %v5833 = vadd.f32 %v5831, %v5832
  %v5834 = vsel %vm5754, %v5681, 0.0
  %v5835 = vadd.f32 %v5833, %v5834
  %v5836 = vsel %vm5754, %v5684, 0.0
  %v5837 = vadd.f32 %v5835, %v5836
  %v5838 = vsel %vm5754, %v5687, 0.0
  %v5839 = vadd.f32 %v5837, %v5838
  %v5840 = vsel %vm5754, %v5690, 0.0
  %v5841 = vadd.f32 %v5839, %v5840
  %v5842 = vsel %vm5754, %v5693, 0.0
  %v5843 = vadd.f32 %v5841, %v5842
  %v5844 = vsel %vm5754, %v5696, 0.0
  %v5845 = vadd.f32 %v5843, %v5844
  %v5846 = vsel %vm5754, %v5699, 0.0
  %v5847 = vadd.f32 %v5845, %v5846
  %v5848 = vsel %vm5754, %v5702, 0.0
  %v5849 = vadd.f32 %v5847, %v5848
  %v5850 = vsel %vm5754, %v5705, 0.0
  %v5851 = vadd.f32 %v5849, %v5850
  %v5852 = vsel %vm5754, %v5708, 0.0
  %v5853 = vadd.f32 %v5851, %v5852
  %v5854 = vsel %vm5754, %v5711, 0.0
  %v5855 = vadd.f32 %v5853, %v5854
  %v5856 = vsel %vm5754, %v5714, 0.0
  %v5857 = vadd.f32 %v5855, %v5856
  %v5858 = vsel %vm5754, %v5717, 0.0
  %v5859 = vadd.f32 %v5857, %v5858
  %v5860 = vsel %vm5754, %v5720, 0.0
  %v5861 = vadd.f32 %v5859, %v5860
  %v5862 = vsel %vm5754, %v5723, 0.0
  %v5863 = vadd.f32 %v5861, %v5862
  %v5864 = vsel %vm5754, %v5726, 0.0
  %v5865 = vadd.f32 %v5863, %v5864
  %v5866 = vsel %vm5754, %v5729, 0.0
  %v5867 = vadd.f32 %v5865, %v5866
  %v5868 = vsel %vm5754, %v5732, 0.0
  %v5869 = vadd.f32 %v5867, %v5868
  %v5870 = vsel %vm5754, %v5735, 0.0
  %v5871 = vadd.f32 %v5869, %v5870
  %v5872 = vsel %vm5754, %v5738, 0.0
  %v5873 = vadd.f32 %v5871, %v5872
  %v5874 = vsel %vm5754, %v5741, 0.0
  %v5875 = vadd.f32 %v5873, %v5874
  %v5876 = vsel %vm5754, %v5744, 0.0
  %v5877 = vadd.f32 %v5875, %v5876
  %v5878 = vsel %vm5754, %v5747, 0.0
  %v5879 = vadd.f32 %v5877, %v5878
  %v5880 = vsel %vm5754, %v5750, 0.0
  %v5881 = vadd.f32 %v5879, %v5880
  %v5882 = vrot.slane %v5881, 4
  %v5883 = vadd.f32 %v5881, %v5882
  %v5884 = vrot.slane %v5883, 2
  %v5885 = vadd.f32 %v5883, %v5884
  %v5886 = vrot.slane %v5885, 1
  %v5887 = vadd.f32 %v5885, %v5886
  %v5888 = vmul.f32 %v5887, 0.001953125
  %v5889 = vmul.f32 %v5561, %v5561
  %v5890 = vmul.f32 %v5564, %v5564
  %v5891 = vmul.f32 %v5567, %v5567
  %v5892 = vmul.f32 %v5570, %v5570
  %v5893 = vmul.f32 %v5573, %v5573
  %v5894 = vmul.f32 %v5576, %v5576
  %v5895 = vmul.f32 %v5579, %v5579
  %v5896 = vmul.f32 %v5582, %v5582
  %v5897 = vmul.f32 %v5585, %v5585
  %v5898 = vmul.f32 %v5588, %v5588
  %v5899 = vmul.f32 %v5591, %v5591
  %v5900 = vmul.f32 %v5594, %v5594
  %v5901 = vmul.f32 %v5597, %v5597
  %v5902 = vmul.f32 %v5600, %v5600
  %v5903 = vmul.f32 %v5603, %v5603
  %v5904 = vmul.f32 %v5606, %v5606
  %v5905 = vmul.f32 %v5609, %v5609
  %v5906 = vmul.f32 %v5612, %v5612
  %v5907 = vmul.f32 %v5615, %v5615
  %v5908 = vmul.f32 %v5618, %v5618
  %v5909 = vmul.f32 %v5621, %v5621
  %v5910 = vmul.f32 %v5624, %v5624
  %v5911 = vmul.f32 %v5627, %v5627
  %v5912 = vmul.f32 %v5630, %v5630
  %v5913 = vmul.f32 %v5633, %v5633
  %v5914 = vmul.f32 %v5636, %v5636
  %v5915 = vmul.f32 %v5639, %v5639
  %v5916 = vmul.f32 %v5642, %v5642
  %v5917 = vmul.f32 %v5645, %v5645
  %v5918 = vmul.f32 %v5648, %v5648
  %v5919 = vmul.f32 %v5651, %v5651
  %v5920 = vmul.f32 %v5654, %v5654
  %v5921 = vmul.f32 %v5657, %v5657
  %v5922 = vmul.f32 %v5660, %v5660
  %v5923 = vmul.f32 %v5663, %v5663
  %v5924 = vmul.f32 %v5666, %v5666
  %v5925 = vmul.f32 %v5669, %v5669
  %v5926 = vmul.f32 %v5672, %v5672
  %v5927 = vmul.f32 %v5675, %v5675
  %v5928 = vmul.f32 %v5678, %v5678
  %v5929 = vmul.f32 %v5681, %v5681
  %v5930 = vmul.f32 %v5684, %v5684
  %v5931 = vmul.f32 %v5687, %v5687
  %v5932 = vmul.f32 %v5690, %v5690
  %v5933 = vmul.f32 %v5693, %v5693
  %v5934 = vmul.f32 %v5696, %v5696
  %v5935 = vmul.f32 %v5699, %v5699
  %v5936 = vmul.f32 %v5702, %v5702
  %v5937 = vmul.f32 %v5705, %v5705
  %v5938 = vmul.f32 %v5708, %v5708
  %v5939 = vmul.f32 %v5711, %v5711
  %v5940 = vmul.f32 %v5714, %v5714
  %v5941 = vmul.f32 %v5717, %v5717
  %v5942 = vmul.f32 %v5720, %v5720
  %v5943 = vmul.f32 %v5723, %v5723
  %v5944 = vmul.f32 %v5726, %v5726
  %v5945 = vmul.f32 %v5729, %v5729
  %v5946 = vmul.f32 %v5732, %v5732
  %v5947 = vmul.f32 %v5735, %v5735
  %v5948 = vmul.f32 %v5738, %v5738
  %v5949 = vmul.f32 %v5741, %v5741
  %v5950 = vmul.f32 %v5744, %v5744
  %v5951 = vmul.f32 %v5747, %v5747
  %v5952 = vmul.f32 %v5750, %v5750
  %v5953 = vsel %vm5754, %v5889, 0.0
  %v5954 = vsel %vm5754, %v5890, 0.0
  %v5955 = vadd.f32 %v5953, %v5954
  %v5956 = vsel %vm5754, %v5891, 0.0
  %v5957 = vadd.f32 %v5955, %v5956
  %v5958 = vsel %vm5754, %v5892, 0.0
  %v5959 = vadd.f32 %v5957, %v5958
  %v5960 = vsel %vm5754, %v5893, 0.0
  %v5961 = vadd.f32 %v5959, %v5960
  %v5962 = vsel %vm5754, %v5894, 0.0
  %v5963 = vadd.f32 %v5961, %v5962
  %v5964 = vsel %vm5754, %v5895, 0.0
  %v5965 = vadd.f32 %v5963, %v5964
  %v5966 = vsel %vm5754, %v5896, 0.0
  %v5967 = vadd.f32 %v5965, %v5966
  %v5968 = vsel %vm5754, %v5897, 0.0
  %v5969 = vadd.f32 %v5967, %v5968
  %v5970 = vsel %vm5754, %v5898, 0.0
  %v5971 = vadd.f32 %v5969, %v5970
  %v5972 = vsel %vm5754, %v5899, 0.0
  %v5973 = vadd.f32 %v5971, %v5972
  %v5974 = vsel %vm5754, %v5900, 0.0
  %v5975 = vadd.f32 %v5973, %v5974
  %v5976 = vsel %vm5754, %v5901, 0.0
  %v5977 = vadd.f32 %v5975, %v5976
  %v5978 = vsel %vm5754, %v5902, 0.0
  %v5979 = vadd.f32 %v5977, %v5978
  %v5980 = vsel %vm5754, %v5903, 0.0
  %v5981 = vadd.f32 %v5979, %v5980
  %v5982 = vsel %vm5754, %v5904, 0.0
  %v5983 = vadd.f32 %v5981, %v5982
  %v5984 = vsel %vm5754, %v5905, 0.0
  %v5985 = vadd.f32 %v5983, %v5984
  %v5986 = vsel %vm5754, %v5906, 0.0
  %v5987 = vadd.f32 %v5985, %v5986
  %v5988 = vsel %vm5754, %v5907, 0.0
  %v5989 = vadd.f32 %v5987, %v5988
  %v5990 = vsel %vm5754, %v5908, 0.0
  %v5991 = vadd.f32 %v5989, %v5990
  %v5992 = vsel %vm5754, %v5909, 0.0
  %v5993 = vadd.f32 %v5991, %v5992
  %v5994 = vsel %vm5754, %v5910, 0.0
  %v5995 = vadd.f32 %v5993, %v5994
  %v5996 = vsel %vm5754, %v5911, 0.0
  %v5997 = vadd.f32 %v5995, %v5996
  %v5998 = vsel %vm5754, %v5912, 0.0
  %v5999 = vadd.f32 %v5997, %v5998
  %v6000 = vsel %vm5754, %v5913, 0.0
  %v6001 = vadd.f32 %v5999, %v6000
  %v6002 = vsel %vm5754, %v5914, 0.0
  %v6003 = vadd.f32 %v6001, %v6002
  %v6004 = vsel %vm5754, %v5915, 0.0
  %v6005 = vadd.f32 %v6003, %v6004
  %v6006 = vsel %vm5754, %v5916, 0.0
  %v6007 = vadd.f32 %v6005, %v6006
  %v6008 = vsel %vm5754, %v5917, 0.0
  %v6009 = vadd.f32 %v6007, %v6008
  %v6010 = vsel %vm5754, %v5918, 0.0
  %v6011 = vadd.f32 %v6009, %v6010
  %v6012 = vsel %vm5754, %v5919, 0.0
  %v6013 = vadd.f32 %v6011, %v6012
  %v6014 = vsel %vm5754, %v5920, 0.0
  %v6015 = vadd.f32 %v6013, %v6014
  %v6016 = vsel %vm5754, %v5921, 0.0
  %v6017 = vadd.f32 %v6015, %v6016
  %v6018 = vsel %vm5754, %v5922, 0.0
  %v6019 = vadd.f32 %v6017, %v6018
  %v6020 = vsel %vm5754, %v5923, 0.0
  %v6021 = vadd.f32 %v6019, %v6020
  %v6022 = vsel %vm5754, %v5924, 0.0
  %v6023 = vadd.f32 %v6021, %v6022
  %v6024 = vsel %vm5754, %v5925, 0.0
  %v6025 = vadd.f32 %v6023, %v6024
  %v6026 = vsel %vm5754, %v5926, 0.0
  %v6027 = vadd.f32 %v6025, %v6026
  %v6028 = vsel %vm5754, %v5927, 0.0
  %v6029 = vadd.f32 %v6027, %v6028
  %v6030 = vsel %vm5754, %v5928, 0.0
  %v6031 = vadd.f32 %v6029, %v6030
  %v6032 = vsel %vm5754, %v5929, 0.0
  %v6033 = vadd.f32 %v6031, %v6032
  %v6034 = vsel %vm5754, %v5930, 0.0
  %v6035 = vadd.f32 %v6033, %v6034
  %v6036 = vsel %vm5754, %v5931, 0.0
  %v6037 = vadd.f32 %v6035, %v6036
  %v6038 = vsel %vm5754, %v5932, 0.0
  %v6039 = vadd.f32 %v6037, %v6038
  %v6040 = vsel %vm5754, %v5933, 0.0
  %v6041 = vadd.f32 %v6039, %v6040
  %v6042 = vsel %vm5754, %v5934, 0.0
  %v6043 = vadd.f32 %v6041, %v6042
  %v6044 = vsel %vm5754, %v5935, 0.0
  %v6045 = vadd.f32 %v6043, %v6044
  %v6046 = vsel %vm5754, %v5936, 0.0
  %v6047 = vadd.f32 %v6045, %v6046
  %v6048 = vsel %vm5754, %v5937, 0.0
  %v6049 = vadd.f32 %v6047, %v6048
  %v6050 = vsel %vm5754, %v5938, 0.0
  %v6051 = vadd.f32 %v6049, %v6050
  %v6052 = vsel %vm5754, %v5939, 0.0
  %v6053 = vadd.f32 %v6051, %v6052
  %v6054 = vsel %vm5754, %v5940, 0.0
  %v6055 = vadd.f32 %v6053, %v6054
  %v6056 = vsel %vm5754, %v5941, 0.0
  %v6057 = vadd.f32 %v6055, %v6056
  %v6058 = vsel %vm5754, %v5942, 0.0
  %v6059 = vadd.f32 %v6057, %v6058
  %v6060 = vsel %vm5754, %v5943, 0.0
  %v6061 = vadd.f32 %v6059, %v6060
  %v6062 = vsel %vm5754, %v5944, 0.0
  %v6063 = vadd.f32 %v6061, %v6062
  %v6064 = vsel %vm5754, %v5945, 0.0
  %v6065 = vadd.f32 %v6063, %v6064
  %v6066 = vsel %vm5754, %v5946, 0.0
  %v6067 = vadd.f32 %v6065, %v6066
  %v6068 = vsel %vm5754, %v5947, 0.0
  %v6069 = vadd.f32 %v6067, %v6068
  %v6070 = vsel %vm5754, %v5948, 0.0
  %v6071 = vadd.f32 %v6069, %v6070
  %v6072 = vsel %vm5754, %v5949, 0.0
  %v6073 = vadd.f32 %v6071, %v6072
  %v6074 = vsel %vm5754, %v5950, 0.0
  %v6075 = vadd.f32 %v6073, %v6074
  %v6076 = vsel %vm5754, %v5951, 0.0
  %v6077 = vadd.f32 %v6075, %v6076
  %v6078 = vsel %vm5754, %v5952, 0.0
  %v6079 = vadd.f32 %v6077, %v6078
  %v6080 = vrot.slane %v6079, 4
  %v6081 = vadd.f32 %v6079, %v6080
  %v6082 = vrot.slane %v6081, 2
  %v6083 = vadd.f32 %v6081, %v6082
  %v6084 = vrot.slane %v6083, 1
  %v6085 = vadd.f32 %v6083, %v6084
  %v6086 = vmul.f32 %v6085, 0.001953125
  %v6087 = vmul.f32 %v5888, %v5888
  %v6088 = vsub.f32 %v6086, %v6087
  %v6089 = vmax.f32 %v6088, 0.0
  %v6090 = vadd.f32 %v6089, 1e-05
  %v6091 = vrsqrt.pop %v6090
  %v6092 = vmul.f32 %v6091, %v6090
  %v6093 = vmul.f32 %v6092, %v6091
  %v6094 = vmul.f32 0.5, %v6093
  %v6095 = vsub.f32 1.5, %v6094
  %v6096 = vmul.f32 %v6091, %v6095
  %vm6097 = vweird.f32 %v6090
  %vm6098 = vweird.f32 %v6091
  %vm6099 = vmor %vm6097, %vm6098
  %v6100 = vsel %vm6099, %v6091, %v6096
  %v6101 = vmul.f32 %v6100, %v5752
  %v6102 = vsub.f32 %v5561, %v5888
  %v6103 = vsub.f32 %v5564, %v5888
  %v6104 = vsub.f32 %v5567, %v5888
  %v6105 = vsub.f32 %v5570, %v5888
  %v6106 = vsub.f32 %v5573, %v5888
  %v6107 = vsub.f32 %v5576, %v5888
  %v6108 = vsub.f32 %v5579, %v5888
  %v6109 = vsub.f32 %v5582, %v5888
  %v6110 = vsub.f32 %v5585, %v5888
  %v6111 = vsub.f32 %v5588, %v5888
  %v6112 = vsub.f32 %v5591, %v5888
  %v6113 = vsub.f32 %v5594, %v5888
  %v6114 = vsub.f32 %v5597, %v5888
  %v6115 = vsub.f32 %v5600, %v5888
  %v6116 = vsub.f32 %v5603, %v5888
  %v6117 = vsub.f32 %v5606, %v5888
  %v6118 = vsub.f32 %v5609, %v5888
  %v6119 = vsub.f32 %v5612, %v5888
  %v6120 = vsub.f32 %v5615, %v5888
  %v6121 = vsub.f32 %v5618, %v5888
  %v6122 = vsub.f32 %v5621, %v5888
  %v6123 = vsub.f32 %v5624, %v5888
  %v6124 = vsub.f32 %v5627, %v5888
  %v6125 = vsub.f32 %v5630, %v5888
  %v6126 = vsub.f32 %v5633, %v5888
  %v6127 = vsub.f32 %v5636, %v5888
  %v6128 = vsub.f32 %v5639, %v5888
  %v6129 = vsub.f32 %v5642, %v5888
  %v6130 = vsub.f32 %v5645, %v5888
  %v6131 = vsub.f32 %v5648, %v5888
  %v6132 = vsub.f32 %v5651, %v5888
  %v6133 = vsub.f32 %v5654, %v5888
  %v6134 = vsub.f32 %v5657, %v5888
  %v6135 = vsub.f32 %v5660, %v5888
  %v6136 = vsub.f32 %v5663, %v5888
  %v6137 = vsub.f32 %v5666, %v5888
  %v6138 = vsub.f32 %v5669, %v5888
  %v6139 = vsub.f32 %v5672, %v5888
  %v6140 = vsub.f32 %v5675, %v5888
  %v6141 = vsub.f32 %v5678, %v5888
  %v6142 = vsub.f32 %v5681, %v5888
  %v6143 = vsub.f32 %v5684, %v5888
  %v6144 = vsub.f32 %v5687, %v5888
  %v6145 = vsub.f32 %v5690, %v5888
  %v6146 = vsub.f32 %v5693, %v5888
  %v6147 = vsub.f32 %v5696, %v5888
  %v6148 = vsub.f32 %v5699, %v5888
  %v6149 = vsub.f32 %v5702, %v5888
  %v6150 = vsub.f32 %v5705, %v5888
  %v6151 = vsub.f32 %v5708, %v5888
  %v6152 = vsub.f32 %v5711, %v5888
  %v6153 = vsub.f32 %v5714, %v5888
  %v6154 = vsub.f32 %v5717, %v5888
  %v6155 = vsub.f32 %v5720, %v5888
  %v6156 = vsub.f32 %v5723, %v5888
  %v6157 = vsub.f32 %v5726, %v5888
  %v6158 = vsub.f32 %v5729, %v5888
  %v6159 = vsub.f32 %v5732, %v5888
  %v6160 = vsub.f32 %v5735, %v5888
  %v6161 = vsub.f32 %v5738, %v5888
  %v6162 = vsub.f32 %v5741, %v5888
  %v6163 = vsub.f32 %v5744, %v5888
  %v6164 = vsub.f32 %v5747, %v5888
  %v6165 = vsub.f32 %v5750, %v5888
  %v6166 = vperm.slane %v6101, 0
  %v6167 = vmul.f32 %v6102, %v6166
  %v6168 = vmul.f32 %v6103, %v6166
  %v6169 = vmul.f32 %v6104, %v6166
  %v6170 = vmul.f32 %v6105, %v6166
  %v6171 = vmul.f32 %v6106, %v6166
  %v6172 = vmul.f32 %v6107, %v6166
  %v6173 = vmul.f32 %v6108, %v6166
  %v6174 = vmul.f32 %v6109, %v6166
  %v6175 = vmul.f32 %v6110, %v6166
  %v6176 = vmul.f32 %v6111, %v6166
  %v6177 = vmul.f32 %v6112, %v6166
  %v6178 = vmul.f32 %v6113, %v6166
  %v6179 = vmul.f32 %v6114, %v6166
  %v6180 = vmul.f32 %v6115, %v6166
  %v6181 = vmul.f32 %v6116, %v6166
  %v6182 = vmul.f32 %v6117, %v6166
  %v6183 = vmul.f32 %v6118, %v6166
  %v6184 = vmul.f32 %v6119, %v6166
  %v6185 = vmul.f32 %v6120, %v6166
  %v6186 = vmul.f32 %v6121, %v6166
  %v6187 = vmul.f32 %v6122, %v6166
  %v6188 = vmul.f32 %v6123, %v6166
  %v6189 = vmul.f32 %v6124, %v6166
  %v6190 = vmul.f32 %v6125, %v6166
  %v6191 = vmul.f32 %v6126, %v6166
  %v6192 = vmul.f32 %v6127, %v6166
  %v6193 = vmul.f32 %v6128, %v6166
  %v6194 = vmul.f32 %v6129, %v6166
  %v6195 = vmul.f32 %v6130, %v6166
  %v6196 = vmul.f32 %v6131, %v6166
  %v6197 = vmul.f32 %v6132, %v6166
  %v6198 = vmul.f32 %v6133, %v6166
  %v6199 = vmul.f32 %v6134, %v6166
  %v6200 = vmul.f32 %v6135, %v6166
  %v6201 = vmul.f32 %v6136, %v6166
  %v6202 = vmul.f32 %v6137, %v6166
  %v6203 = vmul.f32 %v6138, %v6166
  %v6204 = vmul.f32 %v6139, %v6166
  %v6205 = vmul.f32 %v6140, %v6166
  %v6206 = vmul.f32 %v6141, %v6166
  %v6207 = vmul.f32 %v6142, %v6166
  %v6208 = vmul.f32 %v6143, %v6166
  %v6209 = vmul.f32 %v6144, %v6166
  %v6210 = vmul.f32 %v6145, %v6166
  %v6211 = vmul.f32 %v6146, %v6166
  %v6212 = vmul.f32 %v6147, %v6166
  %v6213 = vmul.f32 %v6148, %v6166
  %v6214 = vmul.f32 %v6149, %v6166
  %v6215 = vmul.f32 %v6150, %v6166
  %v6216 = vmul.f32 %v6151, %v6166
  %v6217 = vmul.f32 %v6152, %v6166
  %v6218 = vmul.f32 %v6153, %v6166
  %v6219 = vmul.f32 %v6154, %v6166
  %v6220 = vmul.f32 %v6155, %v6166
  %v6221 = vmul.f32 %v6156, %v6166
  %v6222 = vmul.f32 %v6157, %v6166
  %v6223 = vmul.f32 %v6158, %v6166
  %v6224 = vmul.f32 %v6159, %v6166
  %v6225 = vmul.f32 %v6160, %v6166
  %v6226 = vmul.f32 %v6161, %v6166
  %v6227 = vmul.f32 %v6162, %v6166
  %v6228 = vmul.f32 %v6163, %v6166
  %v6229 = vmul.f32 %v6164, %v6166
  %v6230 = vmul.f32 %v6165, %v6166
  %v6232 = vperm.slane %v5753, 0
  %v6234 = vadd.f32 %v6167, %v6232
  %v6235 = vadd.f32 %v6168, %v6232
  %v6236 = vadd.f32 %v6169, %v6232
  %v6237 = vadd.f32 %v6170, %v6232
  %v6238 = vadd.f32 %v6171, %v6232
  %v6239 = vadd.f32 %v6172, %v6232
  %v6240 = vadd.f32 %v6173, %v6232
  %v6241 = vadd.f32 %v6174, %v6232
  %v6242 = vadd.f32 %v6175, %v6232
  %v6243 = vadd.f32 %v6176, %v6232
  %v6244 = vadd.f32 %v6177, %v6232
  %v6245 = vadd.f32 %v6178, %v6232
  %v6246 = vadd.f32 %v6179, %v6232
  %v6247 = vadd.f32 %v6180, %v6232
  %v6248 = vadd.f32 %v6181, %v6232
  %v6249 = vadd.f32 %v6182, %v6232
  %v6250 = vadd.f32 %v6183, %v6232
  %v6251 = vadd.f32 %v6184, %v6232
  %v6252 = vadd.f32 %v6185, %v6232
  %v6253 = vadd.f32 %v6186, %v6232
  %v6254 = vadd.f32 %v6187, %v6232
  %v6255 = vadd.f32 %v6188, %v6232
  %v6256 = vadd.f32 %v6189, %v6232
  %v6257 = vadd.f32 %v6190, %v6232
  %v6258 = vadd.f32 %v6191, %v6232
  %v6259 = vadd.f32 %v6192, %v6232
  %v6260 = vadd.f32 %v6193, %v6232
  %v6261 = vadd.f32 %v6194, %v6232
  %v6262 = vadd.f32 %v6195, %v6232
  %v6263 = vadd.f32 %v6196, %v6232
  %v6264 = vadd.f32 %v6197, %v6232
  %v6265 = vadd.f32 %v6198, %v6232
  %v6266 = vadd.f32 %v6199, %v6232
  %v6267 = vadd.f32 %v6200, %v6232
  %v6268 = vadd.f32 %v6201, %v6232
  %v6269 = vadd.f32 %v6202, %v6232
  %v6270 = vadd.f32 %v6203, %v6232
  %v6271 = vadd.f32 %v6204, %v6232
  %v6272 = vadd.f32 %v6205, %v6232
  %v6273 = vadd.f32 %v6206, %v6232
  %v6274 = vadd.f32 %v6207, %v6232
  %v6275 = vadd.f32 %v6208, %v6232
  %v6276 = vadd.f32 %v6209, %v6232
  %v6277 = vadd.f32 %v6210, %v6232
  %v6278 = vadd.f32 %v6211, %v6232
  %v6279 = vadd.f32 %v6212, %v6232
  %v6280 = vadd.f32 %v6213, %v6232
  %v6281 = vadd.f32 %v6214, %v6232
  %v6282 = vadd.f32 %v6215, %v6232
  %v6283 = vadd.f32 %v6216, %v6232
  %v6284 = vadd.f32 %v6217, %v6232
  %v6285 = vadd.f32 %v6218, %v6232
  %v6286 = vadd.f32 %v6219, %v6232
  %v6287 = vadd.f32 %v6220, %v6232
  %v6288 = vadd.f32 %v6221, %v6232
  %v6289 = vadd.f32 %v6222, %v6232
  %v6290 = vadd.f32 %v6223, %v6232
  %v6291 = vadd.f32 %v6224, %v6232
  %v6292 = vadd.f32 %v6225, %v6232
  %v6293 = vadd.f32 %v6226, %v6232
  %v6294 = vadd.f32 %v6227, %v6232
  %v6295 = vadd.f32 %v6228, %v6232
  %v6296 = vadd.f32 %v6229, %v6232
  %v6297 = vadd.f32 %v6230, %v6232
  %v6298 = vmul.f32 %v6234, 0.2
  %v6299 = vmul.f32 %v6235, 0.2
  %v6300 = vmul.f32 %v6236, 0.2
  %v6301 = vmul.f32 %v6237, 0.2
  %v6302 = vmul.f32 %v6238, 0.2
  %v6303 = vmul.f32 %v6239, 0.2
  %v6304 = vmul.f32 %v6240, 0.2
  %v6305 = vmul.f32 %v6241, 0.2
  %v6306 = vmul.f32 %v6242, 0.2
  %v6307 = vmul.f32 %v6243, 0.2
  %v6308 = vmul.f32 %v6244, 0.2
  %v6309 = vmul.f32 %v6245, 0.2
  %v6310 = vmul.f32 %v6246, 0.2
  %v6311 = vmul.f32 %v6247, 0.2
  %v6312 = vmul.f32 %v6248, 0.2
  %v6313 = vmul.f32 %v6249, 0.2
  %v6314 = vmul.f32 %v6250, 0.2
  %v6315 = vmul.f32 %v6251, 0.2
  %v6316 = vmul.f32 %v6252, 0.2
  %v6317 = vmul.f32 %v6253, 0.2
  %v6318 = vmul.f32 %v6254, 0.2
  %v6319 = vmul.f32 %v6255, 0.2
  %v6320 = vmul.f32 %v6256, 0.2
  %v6321 = vmul.f32 %v6257, 0.2
  %v6322 = vmul.f32 %v6258, 0.2
  %v6323 = vmul.f32 %v6259, 0.2
  %v6324 = vmul.f32 %v6260, 0.2
  %v6325 = vmul.f32 %v6261, 0.2
  %v6326 = vmul.f32 %v6262, 0.2
  %v6327 = vmul.f32 %v6263, 0.2
  %v6328 = vmul.f32 %v6264, 0.2
  %v6329 = vmul.f32 %v6265, 0.2
  %v6330 = vmul.f32 %v6266, 0.2
  %v6331 = vmul.f32 %v6267, 0.2
  %v6332 = vmul.f32 %v6268, 0.2
  %v6333 = vmul.f32 %v6269, 0.2
  %v6334 = vmul.f32 %v6270, 0.2
  %v6335 = vmul.f32 %v6271, 0.2
  %v6336 = vmul.f32 %v6272, 0.2
  %v6337 = vmul.f32 %v6273, 0.2
  %v6338 = vmul.f32 %v6274, 0.2
  %v6339 = vmul.f32 %v6275, 0.2
  %v6340 = vmul.f32 %v6276, 0.2
  %v6341 = vmul.f32 %v6277, 0.2
  %v6342 = vmul.f32 %v6278, 0.2
  %v6343 = vmul.f32 %v6279, 0.2
  %v6344 = vmul.f32 %v6280, 0.2
  %v6345 = vmul.f32 %v6281, 0.2
  %v6346 = vmul.f32 %v6282, 0.2
  %v6347 = vmul.f32 %v6283, 0.2
  %v6348 = vmul.f32 %v6284, 0.2
  %v6349 = vmul.f32 %v6285, 0.2
  %v6350 = vmul.f32 %v6286, 0.2
  %v6351 = vmul.f32 %v6287, 0.2
  %v6352 = vmul.f32 %v6288, 0.2
  %v6353 = vmul.f32 %v6289, 0.2
  %v6354 = vmul.f32 %v6290, 0.2
  %v6355 = vmul.f32 %v6291, 0.2
  %v6356 = vmul.f32 %v6292, 0.2
  %v6357 = vmul.f32 %v6293, 0.2
  %v6358 = vmul.f32 %v6294, 0.2
  %v6359 = vmul.f32 %v6295, 0.2
  %v6360 = vmul.f32 %v6296, 0.2
  %v6361 = vmul.f32 %v6297, 0.2
  %v6362 = vmax.f32 %v6234, %v6298
  %v6363 = vmax.f32 %v6235, %v6299
  %v6364 = vmax.f32 %v6236, %v6300
  %v6365 = vmax.f32 %v6237, %v6301
  %v6366 = vmax.f32 %v6238, %v6302
  %v6367 = vmax.f32 %v6239, %v6303
  %v6368 = vmax.f32 %v6240, %v6304
  %v6369 = vmax.f32 %v6241, %v6305
  %v6370 = vmax.f32 %v6242, %v6306
  %v6371 = vmax.f32 %v6243, %v6307
  %v6372 = vmax.f32 %v6244, %v6308
  %v6373 = vmax.f32 %v6245, %v6309
  %v6374 = vmax.f32 %v6246, %v6310
  %v6375 = vmax.f32 %v6247, %v6311
  %v6376 = vmax.f32 %v6248, %v6312
  %v6377 = vmax.f32 %v6249, %v6313
  %v6378 = vmax.f32 %v6250, %v6314
  %v6379 = vmax.f32 %v6251, %v6315
  %v6380 = vmax.f32 %v6252, %v6316
  %v6381 = vmax.f32 %v6253, %v6317
  %v6382 = vmax.f32 %v6254, %v6318
  %v6383 = vmax.f32 %v6255, %v6319
  %v6384 = vmax.f32 %v6256, %v6320
  %v6385 = vmax.f32 %v6257, %v6321
  %v6386 = vmax.f32 %v6258, %v6322
  %v6387 = vmax.f32 %v6259, %v6323
  %v6388 = vmax.f32 %v6260, %v6324
  %v6389 = vmax.f32 %v6261, %v6325
  %v6390 = vmax.f32 %v6262, %v6326
  %v6391 = vmax.f32 %v6263, %v6327
  %v6392 = vmax.f32 %v6264, %v6328
  %v6393 = vmax.f32 %v6265, %v6329
  %v6394 = vmax.f32 %v6266, %v6330
  %v6395 = vmax.f32 %v6267, %v6331
  %v6396 = vmax.f32 %v6268, %v6332
  %v6397 = vmax.f32 %v6269, %v6333
  %v6398 = vmax.f32 %v6270, %v6334
  %v6399 = vmax.f32 %v6271, %v6335
  %v6400 = vmax.f32 %v6272, %v6336
  %v6401 = vmax.f32 %v6273, %v6337
  %v6402 = vmax.f32 %v6274, %v6338
  %v6403 = vmax.f32 %v6275, %v6339
  %v6404 = vmax.f32 %v6276, %v6340
  %v6405 = vmax.f32 %v6277, %v6341
  %v6406 = vmax.f32 %v6278, %v6342
  %v6407 = vmax.f32 %v6279, %v6343
  %v6408 = vmax.f32 %v6280, %v6344
  %v6409 = vmax.f32 %v6281, %v6345
  %v6410 = vmax.f32 %v6282, %v6346
  %v6411 = vmax.f32 %v6283, %v6347
  %v6412 = vmax.f32 %v6284, %v6348
  %v6413 = vmax.f32 %v6285, %v6349
  %v6414 = vmax.f32 %v6286, %v6350
  %v6415 = vmax.f32 %v6287, %v6351
  %v6416 = vmax.f32 %v6288, %v6352
  %v6417 = vmax.f32 %v6289, %v6353
  %v6418 = vmax.f32 %v6290, %v6354
  %v6419 = vmax.f32 %v6291, %v6355
  %v6420 = vmax.f32 %v6292, %v6356
  %v6421 = vmax.f32 %v6293, %v6357
  %v6422 = vmax.f32 %v6294, %v6358
  %v6423 = vmax.f32 %v6295, %v6359
  %v6424 = vmax.f32 %v6296, %v6360
  %v6425 = vmax.f32 %v6297, %v6361
  %v6426 = vld [vmem:[%s11] sm:$0xff]
  %v6427 = vld [vmem:[%s11 + $0x8] sm:$0xff]
  %v6428 = vld [vmem:[%s11 + $0x10] sm:$0xff]
  %v6429 = vld [vmem:[%s11 + $0x18] sm:$0xff]
  %v6430 = vld [vmem:[%s11 + $0x20] sm:$0xff]
  %v6431 = vld [vmem:[%s11 + $0x28] sm:$0xff]
  %v6432 = vld [vmem:[%s11 + $0x30] sm:$0xff]
  %v6433 = vld [vmem:[%s11 + $0x38] sm:$0xff]
  %v6434 = vld [vmem:[%s11 + $0x40] sm:$0xff]
  %v6435 = vld [vmem:[%s11 + $0x48] sm:$0xff]
  %v6436 = vld [vmem:[%s11 + $0x50] sm:$0xff]
  %v6437 = vld [vmem:[%s11 + $0x58] sm:$0xff]
  %v6438 = vld [vmem:[%s11 + $0x60] sm:$0xff]
  %v6439 = vld [vmem:[%s11 + $0x68] sm:$0xff]
  %v6440 = vld [vmem:[%s11 + $0x70] sm:$0xff]
  %v6441 = vld [vmem:[%s11 + $0x78] sm:$0xff]
  %v6442 = vld [vmem:[%s11 + $0x80] sm:$0xff]
  %v6443 = vld [vmem:[%s11 + $0x88] sm:$0xff]
  %v6508 = vrot.slane %v6362, 7
  %v6509 = vrot.slane %v6363, 7
  %v6510 = vsel %vm249, %v6508, %v6509
  %v6511 = vrot.slane %v6364, 7
  %v6512 = vrot.slane %v6365, 7
  %v6513 = vsel %vm249, %v6511, %v6512
  %v6514 = vrot.slane %v6366, 7
  %v6515 = vrot.slane %v6367, 7
  %v6516 = vsel %vm249, %v6514, %v6515
  %v6517 = vrot.slane %v6368, 7
  %v6518 = vrot.slane %v6369, 7
  %v6519 = vsel %vm249, %v6517, %v6518
  %v6520 = vrot.slane %v6370, 7
  %v6521 = vrot.slane %v6371, 7
  %v6522 = vsel %vm249, %v6520, %v6521
  %v6523 = vrot.slane %v6372, 7
  %v6524 = vrot.slane %v6373, 7
  %v6525 = vsel %vm249, %v6523, %v6524
  %v6526 = vrot.slane %v6374, 7
  %v6527 = vrot.slane %v6375, 7
  %v6528 = vsel %vm249, %v6526, %v6527
  %v6529 = vrot.slane %v6376, 7
  %v6530 = vrot.slane %v6377, 7
  %v6531 = vsel %vm249, %v6529, %v6530
  %v6532 = vrot.slane %v6378, 7
  %v6533 = vrot.slane %v6379, 7
  %v6534 = vsel %vm249, %v6532, %v6533
  %v6535 = vrot.slane %v6380, 7
  %v6536 = vrot.slane %v6381, 7
  %v6537 = vsel %vm249, %v6535, %v6536
  %v6538 = vrot.slane %v6382, 7
  %v6539 = vrot.slane %v6383, 7
  %v6540 = vsel %vm249, %v6538, %v6539
  %v6541 = vrot.slane %v6384, 7
  %v6542 = vrot.slane %v6385, 7
  %v6543 = vsel %vm249, %v6541, %v6542
  %v6544 = vrot.slane %v6386, 7
  %v6545 = vrot.slane %v6387, 7
  %v6546 = vsel %vm249, %v6544, %v6545
  %v6547 = vrot.slane %v6388, 7
  %v6548 = vrot.slane %v6389, 7
  %v6549 = vsel %vm249, %v6547, %v6548
  %v6550 = vrot.slane %v6390, 7
  %v6551 = vrot.slane %v6391, 7
  %v6552 = vsel %vm249, %v6550, %v6551
  %v6553 = vrot.slane %v6392, 7
  %v6554 = vrot.slane %v6393, 7
  %v6555 = vsel %vm249, %v6553, %v6554
  %v6556 = vrot.slane %v6394, 7
  %v6557 = vrot.slane %v6395, 7
  %v6558 = vsel %vm249, %v6556, %v6557
  %v6559 = vrot.slane %v6396, 7
  %v6560 = vrot.slane %v6397, 7
  %v6561 = vsel %vm249, %v6559, %v6560
  %v6562 = vrot.slane %v6398, 7
  %v6563 = vrot.slane %v6399, 7
  %v6564 = vsel %vm249, %v6562, %v6563
  %v6565 = vrot.slane %v6400, 7
  %v6566 = vrot.slane %v6401, 7
  %v6567 = vsel %vm249, %v6565, %v6566
  %v6568 = vrot.slane %v6402, 7
  %v6569 = vrot.slane %v6403, 7
  %v6570 = vsel %vm249, %v6568, %v6569
  %v6571 = vrot.slane %v6404, 7
  %v6572 = vrot.slane %v6405, 7
  %v6573 = vsel %vm249, %v6571, %v6572
  %v6574 = vrot.slane %v6406, 7
  %v6575 = vrot.slane %v6407, 7
  %v6576 = vsel %vm249, %v6574, %v6575
  %v6577 = vrot.slane %v6408, 7
  %v6578 = vrot.slane %v6409, 7
  %v6579 = vsel %vm249, %v6577, %v6578
  %v6580 = vrot.slane %v6410, 7
  %v6581 = vrot.slane %v6411, 7
  %v6582 = vsel %vm249, %v6580, %v6581
  %v6583 = vrot.slane %v6412, 7
  %v6584 = vrot.slane %v6413, 7
  %v6585 = vsel %vm249, %v6583, %v6584
  %v6586 = vrot.slane %v6414, 7
  %v6587 = vrot.slane %v6415, 7
  %v6588 = vsel %vm249, %v6586, %v6587
  %v6589 = vrot.slane %v6416, 7
  %v6590 = vrot.slane %v6417, 7
  %v6591 = vsel %vm249, %v6589, %v6590
  %v6592 = vrot.slane %v6418, 7
  %v6593 = vrot.slane %v6419, 7
  %v6594 = vsel %vm249, %v6592, %v6593
  %v6595 = vrot.slane %v6420, 7
  %v6596 = vrot.slane %v6421, 7
  %v6597 = vsel %vm249, %v6595, %v6596
  %v6598 = vrot.slane %v6422, 7
  %v6599 = vrot.slane %v6423, 7
  %v6600 = vsel %vm249, %v6598, %v6599
  %v6601 = vrot.slane %v6424, 7
  %v6602 = vrot.slane %v6425, 7
  %v6603 = vsel %vm249, %v6601, %v6602
  %v6698 = vsel %vm249, 0.0, %v6508
  %v6699 = vsel %vm249, 0.0, %v6511
  %v6700 = vsel %vm249, 0.0, %v6514
  %v6701 = vsel %vm249, 0.0, %v6517
  %v6702 = vsel %vm249, 0.0, %v6520
  %v6703 = vsel %vm249, 0.0, %v6523
  %v6704 = vsel %vm249, 0.0, %v6526
  %v6705 = vsel %vm249, 0.0, %v6529
  %v6706 = vsel %vm249, 0.0, %v6532
  %v6707 = vsel %vm249, 0.0, %v6535
  %v6708 = vsel %vm249, 0.0, %v6538
  %v6709 = vsel %vm249, 0.0, %v6541
  %v6710 = vsel %vm249, 0.0, %v6544
  %v6711 = vsel %vm249, 0.0, %v6547
  %v6712 = vsel %vm249, 0.0, %v6550
  %v6713 = vsel %vm249, 0.0, %v6553
  %v6714 = vsel %vm249, 0.0, %v6556
  %v6715 = vsel %vm249, 0.0, %v6559
  %v6716 = vsel %vm249, 0.0, %v6562
  %v6717 = vsel %vm249, 0.0, %v6565
  %v6718 = vsel %vm249, 0.0, %v6568
  %v6719 = vsel %vm249, 0.0, %v6571
  %v6720 = vsel %vm249, 0.0, %v6574
  %v6721 = vsel %vm249, 0.0, %v6577
  %v6722 = vsel %vm249, 0.0, %v6580
  %v6723 = vsel %vm249, 0.0, %v6583
  %v6724 = vsel %vm249, 0.0, %v6586
  %v6725 = vsel %vm249, 0.0, %v6589
  %v6726 = vsel %vm249, 0.0, %v6592
  %v6727 = vsel %vm249, 0.0, %v6595
  %v6728 = vsel %vm249, 0.0, %v6598
  %v6729 = vsel %vm249, 0.0, %v6601
  %v6730 = vsel %vm249, %v6509, 0.0
  %v6731 = vsel %vm249, %v6512, 0.0
  %v6732 = vsel %vm249, %v6515, 0.0
  %v6733 = vsel %vm249, %v6518, 0.0
  %v6734 = vsel %vm249, %v6521, 0.0
  %v6735 = vsel %vm249, %v6524, 0.0
  %v6736 = vsel %vm249, %v6527, 0.0
  %v6737 = vsel %vm249, %v6530, 0.0
  %v6738 = vsel %vm249, %v6533, 0.0
  %v6739 = vsel %vm249, %v6536, 0.0
  %v6740 = vsel %vm249, %v6539, 0.0
  %v6741 = vsel %vm249, %v6542, 0.0
  %v6742 = vsel %vm249, %v6545, 0.0
  %v6743 = vsel %vm249, %v6548, 0.0
  %v6744 = vsel %vm249, %v6551, 0.0
  %v6745 = vsel %vm249, %v6554, 0.0
  %v6746 = vsel %vm249, %v6557, 0.0
  %v6747 = vsel %vm249, %v6560, 0.0
  %v6748 = vsel %vm249, %v6563, 0.0
  %v6749 = vsel %vm249, %v6566, 0.0
  %v6750 = vsel %vm249, %v6569, 0.0
  %v6751 = vsel %vm249, %v6572, 0.0
  %v6752 = vsel %vm249, %v6575, 0.0
  %v6753 = vsel %vm249, %v6578, 0.0
  %v6754 = vsel %vm249, %v6581, 0.0
  %v6755 = vsel %vm249, %v6584, 0.0
  %v6756 = vsel %vm249, %v6587, 0.0
  %v6757 = vsel %vm249, %v6590, 0.0
  %v6758 = vsel %vm249, %v6593, 0.0
  %v6759 = vsel %vm249, %v6596, 0.0
  %v6760 = vsel %vm249, %v6599, 0.0
  %v6761 = vsel %vm249, %v6602, 0.0
  %v6822 = vrot.slane %v6698, 1
  %v6823 = vrot.slane %v6510, 1
  %v6824 = vsel %vm267, %v6822, %v6823
  %v6825 = vrot.slane %v6730, 1
  %v6826 = vsel %vm267, %v6823, %v6825
  %v6827 = vrot.slane %v6699, 1
  %v6828 = vrot.slane %v6513, 1
  %v6829 = vsel %vm267, %v6827, %v6828
  %v6830 = vrot.slane %v6731, 1
  %v6831 = vsel %vm267, %v6828, %v6830
  %v6832 = vrot.slane %v6700, 1
  %v6833 = vrot.slane %v6516, 1
  %v6834 = vsel %vm267, %v6832, %v6833
  %v6835 = vrot.slane %v6732, 1
  %v6836 = vsel %vm267, %v6833, %v6835
  %v6837 = vrot.slane %v6701, 1
  %v6838 = vrot.slane %v6519, 1
  %v6839 = vsel %vm267, %v6837, %v6838
  %v6840 = vrot.slane %v6733, 1
  %v6841 = vsel %vm267, %v6838, %v6840
  %v6842 = vrot.slane %v6702, 1
  %v6843 = vrot.slane %v6522, 1
  %v6844 = vsel %vm267, %v6842, %v6843
  %v6845 = vrot.slane %v6734, 1
  %v6846 = vsel %vm267, %v6843, %v6845
  %v6847 = vrot.slane %v6703, 1
  %v6848 = vrot.slane %v6525, 1
  %v6849 = vsel %vm267, %v6847, %v6848
  %v6850 = vrot.slane %v6735, 1
  %v6851 = vsel %vm267, %v6848, %v6850
  %v6852 = vrot.slane %v6704, 1
  %v6853 = vrot.slane %v6528, 1
  %v6854 = vsel %vm267, %v6852, %v6853
  %v6855 = vrot.slane %v6736, 1
  %v6856 = vsel %vm267, %v6853, %v6855
  %v6857 = vrot.slane %v6705, 1
  %v6858 = vrot.slane %v6531, 1
  %v6859 = vsel %vm267, %v6857, %v6858
  %v6860 = vrot.slane %v6737, 1
  %v6861 = vsel %vm267, %v6858, %v6860
  %v6862 = vrot.slane %v6706, 1
  %v6863 = vrot.slane %v6534, 1
  %v6864 = vsel %vm267, %v6862, %v6863
  %v6865 = vrot.slane %v6738, 1
  %v6866 = vsel %vm267, %v6863, %v6865
  %v6867 = vrot.slane %v6707, 1
  %v6868 = vrot.slane %v6537, 1
  %v6869 = vsel %vm267, %v6867, %v6868
  %v6870 = vrot.slane %v6739, 1
  %v6871 = vsel %vm267, %v6868, %v6870
  %v6872 = vrot.slane %v6708, 1
  %v6873 = vrot.slane %v6540, 1
  %v6874 = vsel %vm267, %v6872, %v6873
  %v6875 = vrot.slane %v6740, 1
  %v6876 = vsel %vm267, %v6873, %v6875
  %v6877 = vrot.slane %v6709, 1
  %v6878 = vrot.slane %v6543, 1
  %v6879 = vsel %vm267, %v6877, %v6878
  %v6880 = vrot.slane %v6741, 1
  %v6881 = vsel %vm267, %v6878, %v6880
  %v6882 = vrot.slane %v6710, 1
  %v6883 = vrot.slane %v6546, 1
  %v6884 = vsel %vm267, %v6882, %v6883
  %v6885 = vrot.slane %v6742, 1
  %v6886 = vsel %vm267, %v6883, %v6885
  %v6887 = vrot.slane %v6711, 1
  %v6888 = vrot.slane %v6549, 1
  %v6889 = vsel %vm267, %v6887, %v6888
  %v6890 = vrot.slane %v6743, 1
  %v6891 = vsel %vm267, %v6888, %v6890
  %v6892 = vrot.slane %v6712, 1
  %v6893 = vrot.slane %v6552, 1
  %v6894 = vsel %vm267, %v6892, %v6893
  %v6895 = vrot.slane %v6744, 1
  %v6896 = vsel %vm267, %v6893, %v6895
  %v6897 = vrot.slane %v6714, 1
  %v6898 = vrot.slane %v6558, 1
  %v6899 = vsel %vm267, %v6897, %v6898
  %v6900 = vrot.slane %v6746, 1
  %v6901 = vsel %vm267, %v6898, %v6900
  %v6902 = vrot.slane %v6715, 1
  %v6903 = vrot.slane %v6561, 1
  %v6904 = vsel %vm267, %v6902, %v6903
  %v6905 = vrot.slane %v6747, 1
  %v6906 = vsel %vm267, %v6903, %v6905
  %v6907 = vrot.slane %v6716, 1
  %v6908 = vrot.slane %v6564, 1
  %v6909 = vsel %vm267, %v6907, %v6908
  %v6910 = vrot.slane %v6748, 1
  %v6911 = vsel %vm267, %v6908, %v6910
  %v6912 = vrot.slane %v6717, 1
  %v6913 = vrot.slane %v6567, 1
  %v6914 = vsel %vm267, %v6912, %v6913
  %v6915 = vrot.slane %v6749, 1
  %v6916 = vsel %vm267, %v6913, %v6915
  %v6917 = vrot.slane %v6718, 1
  %v6918 = vrot.slane %v6570, 1
  %v6919 = vsel %vm267, %v6917, %v6918
  %v6920 = vrot.slane %v6750, 1
  %v6921 = vsel %vm267, %v6918, %v6920
  %v6922 = vrot.slane %v6719, 1
  %v6923 = vrot.slane %v6573, 1
  %v6924 = vsel %vm267, %v6922, %v6923
  %v6925 = vrot.slane %v6751, 1
  %v6926 = vsel %vm267, %v6923, %v6925
  %v6927 = vrot.slane %v6720, 1
  %v6928 = vrot.slane %v6576, 1
  %v6929 = vsel %vm267, %v6927, %v6928
  %v6930 = vrot.slane %v6752, 1
  %v6931 = vsel %vm267, %v6928, %v6930
  %v6932 = vrot.slane %v6721, 1
  %v6933 = vrot.slane %v6579, 1
  %v6934 = vsel %vm267, %v6932, %v6933
  %v6935 = vrot.slane %v6753, 1
  %v6936 = vsel %vm267, %v6933, %v6935
  %v6937 = vrot.slane %v6722, 1
  %v6938 = vrot.slane %v6582, 1
  %v6939 = vsel %vm267, %v6937, %v6938
  %v6940 = vrot.slane %v6754, 1
  %v6941 = vsel %vm267, %v6938, %v6940
  %v6942 = vrot.slane %v6723, 1
  %v6943 = vrot.slane %v6585, 1
  %v6944 = vsel %vm267, %v6942, %v6943
  %v6945 = vrot.slane %v6755, 1
  %v6946 = vsel %vm267, %v6943, %v6945
  %v6947 = vrot.slane %v6724, 1
  %v6948 = vrot.slane %v6588, 1
  %v6949 = vsel %vm267, %v6947, %v6948
  %v6950 = vrot.slane %v6756, 1
  %v6951 = vsel %vm267, %v6948, %v6950
  %v6952 = vrot.slane %v6725, 1
  %v6953 = vrot.slane %v6591, 1
  %v6954 = vsel %vm267, %v6952, %v6953
  %v6955 = vrot.slane %v6757, 1
  %v6956 = vsel %vm267, %v6953, %v6955
  %v6957 = vrot.slane %v6726, 1
  %v6958 = vrot.slane %v6594, 1
  %v6959 = vsel %vm267, %v6957, %v6958
  %v6960 = vrot.slane %v6758, 1
  %v6961 = vsel %vm267, %v6958, %v6960
  %v6962 = vrot.slane %v6727, 1
  %v6963 = vrot.slane %v6597, 1
  %v6964 = vsel %vm267, %v6962, %v6963
  %v6965 = vrot.slane %v6759, 1
  %v6966 = vsel %vm267, %v6963, %v6965
  %v6967 = vrot.slane %v6728, 1
  %v6968 = vrot.slane %v6600, 1
  %v6969 = vsel %vm267, %v6967, %v6968
  %v6970 = vrot.slane %v6760, 1
  %v6971 = vsel %vm267, %v6968, %v6970
  %6972 = vrot.lane.b32.xlu0 %v3103, 16
  %v6973 = vpop.permute.xlu0 %6972
  %6974 = vrot.lane.b32.xlu0 %v3104, 16
  %v6975 = vpop.permute.xlu0 %6974
  %6976 = vrot.lane.b32.xlu0 %v6824, 16
  %v6977 = vpop.permute.xlu0 %6976
  %6978 = vrot.lane.b32.xlu0 %v6826, 16
  %v6979 = vpop.permute.xlu0 %6978
  %6980 = vrot.lane.b32.xlu0 %v6829, 16
  %v6981 = vpop.permute.xlu0 %6980
  %6982 = vrot.lane.b32.xlu0 %v6831, 16
  %v6983 = vpop.permute.xlu0 %6982
  %6984 = vrot.lane.b32.xlu0 %v6834, 16
  %v6985 = vpop.permute.xlu0 %6984
  %6986 = vrot.lane.b32.xlu0 %v6836, 16
  %v6987 = vpop.permute.xlu0 %6986
  %6988 = vrot.lane.b32.xlu0 %v6839, 16
  %v6989 = vpop.permute.xlu0 %6988
  %6990 = vrot.lane.b32.xlu0 %v6841, 16
  %v6991 = vpop.permute.xlu0 %6990
  %6992 = vrot.lane.b32.xlu0 %v6844, 16
  %v6993 = vpop.permute.xlu0 %6992
  %6994 = vrot.lane.b32.xlu0 %v6846, 16
  %v6995 = vpop.permute.xlu0 %6994
  %6996 = vrot.lane.b32.xlu0 %v6849, 16
  %v6997 = vpop.permute.xlu0 %6996
  %6998 = vrot.lane.b32.xlu0 %v6851, 16
  %v6999 = vpop.permute.xlu0 %6998
  %7000 = vrot.lane.b32.xlu0 %v6854, 16
  %v7001 = vpop.permute.xlu0 %7000
  %7002 = vrot.lane.b32.xlu0 %v6856, 16
  %v7003 = vpop.permute.xlu0 %7002
  %7004 = vrot.lane.b32.xlu0 %v6859, 16
  %v7005 = vpop.permute.xlu0 %7004
  %7006 = vrot.lane.b32.xlu0 %v6861, 16
  %v7007 = vpop.permute.xlu0 %7006
  %7008 = vrot.lane.b32.xlu0 %v6864, 16
  %v7009 = vpop.permute.xlu0 %7008
  %7010 = vrot.lane.b32.xlu0 %v6866, 16
  %v7011 = vpop.permute.xlu0 %7010
  %7012 = vrot.lane.b32.xlu0 %v6869, 16
  %v7013 = vpop.permute.xlu0 %7012
  %7014 = vrot.lane.b32.xlu0 %v6871, 16
  %v7015 = vpop.permute.xlu0 %7014
  %7016 = vrot.lane.b32.xlu0 %v6874, 16
  %v7017 = vpop.permute.xlu0 %7016
  %7018 = vrot.lane.b32.xlu0 %v6876, 16
  %v7019 = vpop.permute.xlu0 %7018
  %7020 = vrot.lane.b32.xlu0 %v6879, 16
  %v7021 = vpop.permute.xlu0 %7020
  %7022 = vrot.lane.b32.xlu0 %v6881, 16
  %v7023 = vpop.permute.xlu0 %7022
  %7024 = vrot.lane.b32.xlu0 %v6884, 16
  %v7025 = vpop.permute.xlu0 %7024
  %7026 = vrot.lane.b32.xlu0 %v6886, 16
  %v7027 = vpop.permute.xlu0 %7026
  %7028 = vrot.lane.b32.xlu0 %v6889, 16
  %v7029 = vpop.permute.xlu0 %7028
  %7030 = vrot.lane.b32.xlu0 %v6891, 16
  %v7031 = vpop.permute.xlu0 %7030
  %7032 = vrot.lane.b32.xlu0 %v6894, 16
  %v7033 = vpop.permute.xlu0 %7032
  %7034 = vrot.lane.b32.xlu0 %v6896, 16
  %v7035 = vpop.permute.xlu0 %7034
  %7036 = vrot.lane.b32.xlu0 %v6899, 16
  %v7037 = vpop.permute.xlu0 %7036
  %7038 = vrot.lane.b32.xlu0 %v6901, 16
  %v7039 = vpop.permute.xlu0 %7038
  %7040 = vrot.lane.b32.xlu0 %v6904, 16
  %v7041 = vpop.permute.xlu0 %7040
  %7042 = vrot.lane.b32.xlu0 %v6906, 16
  %v7043 = vpop.permute.xlu0 %7042
  %7044 = vrot.lane.b32.xlu0 %v6909, 16
  %v7045 = vpop.permute.xlu0 %7044
  %7046 = vrot.lane.b32.xlu0 %v6911, 16
  %v7047 = vpop.permute.xlu0 %7046
  %7048 = vrot.lane.b32.xlu0 %v6914, 16
  %v7049 = vpop.permute.xlu0 %7048
  %7050 = vrot.lane.b32.xlu0 %v6916, 16
  %v7051 = vpop.permute.xlu0 %7050
  %7052 = vrot.lane.b32.xlu0 %v6919, 16
  %v7053 = vpop.permute.xlu0 %7052
  %7054 = vrot.lane.b32.xlu0 %v6921, 16
  %v7055 = vpop.permute.xlu0 %7054
  %7056 = vrot.lane.b32.xlu0 %v6924, 16
  %v7057 = vpop.permute.xlu0 %7056
  %7058 = vrot.lane.b32.xlu0 %v6926, 16
  %v7059 = vpop.permute.xlu0 %7058
  %7060 = vrot.lane.b32.xlu0 %v6929, 16
  %v7061 = vpop.permute.xlu0 %7060
  %7062 = vrot.lane.b32.xlu0 %v6931, 16
  %v7063 = vpop.permute.xlu0 %7062
  %7064 = vrot.lane.b32.xlu0 %v6934, 16
  %v7065 = vpop.permute.xlu0 %7064
  %7066 = vrot.lane.b32.xlu0 %v6936, 16
  %v7067 = vpop.permute.xlu0 %7066
  %7068 = vrot.lane.b32.xlu0 %v6939, 16
  %v7069 = vpop.permute.xlu0 %7068
  %7070 = vrot.lane.b32.xlu0 %v6941, 16
  %v7071 = vpop.permute.xlu0 %7070
  %7072 = vrot.lane.b32.xlu0 %v6944, 16
  %v7073 = vpop.permute.xlu0 %7072
  %7074 = vrot.lane.b32.xlu0 %v6946, 16
  %v7075 = vpop.permute.xlu0 %7074
  %7076 = vrot.lane.b32.xlu0 %v6949, 16
  %v7077 = vpop.permute.xlu0 %7076
  %7078 = vrot.lane.b32.xlu0 %v6951, 16
  %v7079 = vpop.permute.xlu0 %7078
  %7080 = vrot.lane.b32.xlu0 %v6954, 16
  %v7081 = vpop.permute.xlu0 %7080
  %7082 = vrot.lane.b32.xlu0 %v6956, 16
  %v7083 = vpop.permute.xlu0 %7082
  %7084 = vrot.lane.b32.xlu0 %v6959, 16
  %v7085 = vpop.permute.xlu0 %7084
  %7086 = vrot.lane.b32.xlu0 %v6961, 16
  %v7087 = vpop.permute.xlu0 %7086
  %7088 = vrot.lane.b32.xlu0 %v6964, 16
  %v7089 = vpop.permute.xlu0 %7088
  %7090 = vrot.lane.b32.xlu0 %v6966, 16
  %v7091 = vpop.permute.xlu0 %7090
  %7092 = vrot.lane.b32.xlu0 %v6969, 16
  %v7093 = vpop.permute.xlu0 %7092
  %7094 = vrot.lane.b32.xlu0 %v6971, 16
  %v7095 = vpop.permute.xlu0 %7094
  %v7158 = vrot.slane %v6698, 2
  %v7159 = vrot.slane %v6510, 2
  %v7160 = vsel %vm264, %v7158, %v7159
  %v7161 = vrot.slane %v6730, 2
  %v7162 = vsel %vm264, %v7159, %v7161
  %v7163 = vrot.slane %v6699, 2
  %v7164 = vrot.slane %v6513, 2
  %v7165 = vsel %vm264, %v7163, %v7164
  %v7166 = vrot.slane %v6731, 2
  %v7167 = vsel %vm264, %v7164, %v7166
  %v7168 = vrot.slane %v6700, 2
  %v7169 = vrot.slane %v6516, 2
  %v7170 = vsel %vm264, %v7168, %v7169
  %v7171 = vrot.slane %v6732, 2
  %v7172 = vsel %vm264, %v7169, %v7171
  %v7173 = vrot.slane %v6701, 2
  %v7174 = vrot.slane %v6519, 2
  %v7175 = vsel %vm264, %v7173, %v7174
  %v7176 = vrot.slane %v6733, 2
  %v7177 = vsel %vm264, %v7174, %v7176
  %v7178 = vrot.slane %v6702, 2
  %v7179 = vrot.slane %v6522, 2
  %v7180 = vsel %vm264, %v7178, %v7179
  %v7181 = vrot.slane %v6734, 2
  %v7182 = vsel %vm264, %v7179, %v7181
  %v7183 = vrot.slane %v6703, 2
  %v7184 = vrot.slane %v6525, 2
  %v7185 = vsel %vm264, %v7183, %v7184
  %v7186 = vrot.slane %v6735, 2
  %v7187 = vsel %vm264, %v7184, %v7186
  %v7188 = vrot.slane %v6704, 2
  %v7189 = vrot.slane %v6528, 2
  %v7190 = vsel %vm264, %v7188, %v7189
  %v7191 = vrot.slane %v6736, 2
  %v7192 = vsel %vm264, %v7189, %v7191
  %v7193 = vrot.slane %v6705, 2
  %v7194 = vrot.slane %v6531, 2
  %v7195 = vsel %vm264, %v7193, %v7194
  %v7196 = vrot.slane %v6737, 2
  %v7197 = vsel %vm264, %v7194, %v7196
  %v7198 = vrot.slane %v6706, 2
  %v7199 = vrot.slane %v6534, 2
  %v7200 = vsel %vm264, %v7198, %v7199
  %v7201 = vrot.slane %v6738, 2
  %v7202 = vsel %vm264, %v7199, %v7201
  %v7203 = vrot.slane %v6707, 2
  %v7204 = vrot.slane %v6537, 2
  %v7205 = vsel %vm264, %v7203, %v7204
  %v7206 = vrot.slane %v6739, 2
  %v7207 = vsel %vm264, %v7204, %v7206
  %v7208 = vrot.slane %v6708, 2
  %v7209 = vrot.slane %v6540, 2
  %v7210 = vsel %vm264, %v7208, %v7209
  %v7211 = vrot.slane %v6740, 2
  %v7212 = vsel %vm264, %v7209, %v7211
  %v7213 = vrot.slane %v6709, 2
  %v7214 = vrot.slane %v6543, 2
  %v7215 = vsel %vm264, %v7213, %v7214
  %v7216 = vrot.slane %v6741, 2
  %v7217 = vsel %vm264, %v7214, %v7216
  %v7218 = vrot.slane %v6710, 2
  %v7219 = vrot.slane %v6546, 2
  %v7220 = vsel %vm264, %v7218, %v7219
  %v7221 = vrot.slane %v6742, 2
  %v7222 = vsel %vm264, %v7219, %v7221
  %v7223 = vrot.slane %v6711, 2
  %v7224 = vrot.slane %v6549, 2
  %v7225 = vsel %vm264, %v7223, %v7224
  %v7226 = vrot.slane %v6743, 2
  %v7227 = vsel %vm264, %v7224, %v7226
  %v7228 = vrot.slane %v6712, 2
  %v7229 = vrot.slane %v6552, 2
  %v7230 = vsel %vm264, %v7228, %v7229
  %v7231 = vrot.slane %v6744, 2
  %v7232 = vsel %vm264, %v7229, %v7231
  %v7233 = vrot.slane %v6714, 2
  %v7234 = vrot.slane %v6558, 2
  %v7235 = vsel %vm264, %v7233, %v7234
  %v7236 = vrot.slane %v6746, 2
  %v7237 = vsel %vm264, %v7234, %v7236
  %v7238 = vrot.slane %v6715, 2
  %v7239 = vrot.slane %v6561, 2
  %v7240 = vsel %vm264, %v7238, %v7239
  %v7241 = vrot.slane %v6747, 2
  %v7242 = vsel %vm264, %v7239, %v7241
  %v7243 = vrot.slane %v6716, 2
  %v7244 = vrot.slane %v6564, 2
  %v7245 = vsel %vm264, %v7243, %v7244
  %v7246 = vrot.slane %v6748, 2
  %v7247 = vsel %vm264, %v7244, %v7246
  %v7248 = vrot.slane %v6717, 2
  %v7249 = vrot.slane %v6567, 2
  %v7250 = vsel %vm264, %v7248, %v7249
  %v7251 = vrot.slane %v6749, 2
  %v7252 = vsel %vm264, %v7249, %v7251
  %v7253 = vrot.slane %v6718, 2
  %v7254 = vrot.slane %v6570, 2
  %v7255 = vsel %vm264, %v7253, %v7254
  %v7256 = vrot.slane %v6750, 2
  %v7257 = vsel %vm264, %v7254, %v7256
  %v7258 = vrot.slane %v6719, 2
  %v7259 = vrot.slane %v6573, 2
  %v7260 = vsel %vm264, %v7258, %v7259
  %v7261 = vrot.slane %v6751, 2
  %v7262 = vsel %vm264, %v7259, %v7261
  %v7263 = vrot.slane %v6720, 2
  %v7264 = vrot.slane %v6576, 2
  %v7265 = vsel %vm264, %v7263, %v7264
  %v7266 = vrot.slane %v6752, 2
  %v7267 = vsel %vm264, %v7264, %v7266
  %v7268 = vrot.slane %v6721, 2
  %v7269 = vrot.slane %v6579, 2
  %v7270 = vsel %vm264, %v7268, %v7269
  %v7271 = vrot.slane %v6753, 2
  %v7272 = vsel %vm264, %v7269, %v7271
  %v7273 = vrot.slane %v6722, 2
  %v7274 = vrot.slane %v6582, 2
  %v7275 = vsel %vm264, %v7273, %v7274
  %v7276 = vrot.slane %v6754, 2
  %v7277 = vsel %vm264, %v7274, %v7276
  %v7278 = vrot.slane %v6723, 2
  %v7279 = vrot.slane %v6585, 2
  %v7280 = vsel %vm264, %v7278, %v7279
  %v7281 = vrot.slane %v6755, 2
  %v7282 = vsel %vm264, %v7279, %v7281
  %v7283 = vrot.slane %v6724, 2
  %v7284 = vrot.slane %v6588, 2
  %v7285 = vsel %vm264, %v7283, %v7284
  %v7286 = vrot.slane %v6756, 2
  %v7287 = vsel %vm264, %v7284, %v7286
  %v7288 = vrot.slane %v6725, 2
  %v7289 = vrot.slane %v6591, 2
  %v7290 = vsel %vm264, %v7288, %v7289
  %v7291 = vrot.slane %v6757, 2
  %v7292 = vsel %vm264, %v7289, %v7291
  %v7293 = vrot.slane %v6726, 2
  %v7294 = vrot.slane %v6594, 2
  %v7295 = vsel %vm264, %v7293, %v7294
  %v7296 = vrot.slane %v6758, 2
  %v7297 = vsel %vm264, %v7294, %v7296
  %v7298 = vrot.slane %v6727, 2
  %v7299 = vrot.slane %v6597, 2
  %v7300 = vsel %vm264, %v7298, %v7299
  %v7301 = vrot.slane %v6759, 2
  %v7302 = vsel %vm264, %v7299, %v7301
  %v7303 = vrot.slane %v6728, 2
  %v7304 = vrot.slane %v6600, 2
  %v7305 = vsel %vm264, %v7303, %v7304
  %v7306 = vrot.slane %v6760, 2
  %v7307 = vsel %vm264, %v7304, %v7306
  %7308 = vrot.lane.b32.xlu0 %v3442, 32
  %v7309 = vpop.permute.xlu0 %7308
  %7310 = vrot.lane.b32.xlu0 %v3443, 32
  %v7311 = vpop.permute.xlu0 %7310
  %7312 = vrot.lane.b32.xlu0 %v7160, 32
  %v7313 = vpop.permute.xlu0 %7312
  %7314 = vrot.lane.b32.xlu0 %v7162, 32
  %v7315 = vpop.permute.xlu0 %7314
  %7316 = vrot.lane.b32.xlu0 %v7165, 32
  %v7317 = vpop.permute.xlu0 %7316
  %7318 = vrot.lane.b32.xlu0 %v7167, 32
  %v7319 = vpop.permute.xlu0 %7318
  %7320 = vrot.lane.b32.xlu0 %v7170, 32
  %v7321 = vpop.permute.xlu0 %7320
  %7322 = vrot.lane.b32.xlu0 %v7172, 32
  %v7323 = vpop.permute.xlu0 %7322
  %7324 = vrot.lane.b32.xlu0 %v7175, 32
  %v7325 = vpop.permute.xlu0 %7324
  %7326 = vrot.lane.b32.xlu0 %v7177, 32
  %v7327 = vpop.permute.xlu0 %7326
  %7328 = vrot.lane.b32.xlu0 %v7180, 32
  %v7329 = vpop.permute.xlu0 %7328
  %7330 = vrot.lane.b32.xlu0 %v7182, 32
  %v7331 = vpop.permute.xlu0 %7330
  %7332 = vrot.lane.b32.xlu0 %v7185, 32
  %v7333 = vpop.permute.xlu0 %7332
  %7334 = vrot.lane.b32.xlu0 %v7187, 32
  %v7335 = vpop.permute.xlu0 %7334
  %7336 = vrot.lane.b32.xlu0 %v7190, 32
  %v7337 = vpop.permute.xlu0 %7336
  %7338 = vrot.lane.b32.xlu0 %v7192, 32
  %v7339 = vpop.permute.xlu0 %7338
  %7340 = vrot.lane.b32.xlu0 %v7195, 32
  %v7341 = vpop.permute.xlu0 %7340
  %7342 = vrot.lane.b32.xlu0 %v7197, 32
  %v7343 = vpop.permute.xlu0 %7342
  %7344 = vrot.lane.b32.xlu0 %v7200, 32
  %v7345 = vpop.permute.xlu0 %7344
  %7346 = vrot.lane.b32.xlu0 %v7202, 32
  %v7347 = vpop.permute.xlu0 %7346
  %7348 = vrot.lane.b32.xlu0 %v7205, 32
  %v7349 = vpop.permute.xlu0 %7348
  %7350 = vrot.lane.b32.xlu0 %v7207, 32
  %v7351 = vpop.permute.xlu0 %7350
  %7352 = vrot.lane.b32.xlu0 %v7210, 32
  %v7353 = vpop.permute.xlu0 %7352
  %7354 = vrot.lane.b32.xlu0 %v7212, 32
  %v7355 = vpop.permute.xlu0 %7354
  %7356 = vrot.lane.b32.xlu0 %v7215, 32
  %v7357 = vpop.permute.xlu0 %7356
  %7358 = vrot.lane.b32.xlu0 %v7217, 32
  %v7359 = vpop.permute.xlu0 %7358
  %7360 = vrot.lane.b32.xlu0 %v7220, 32
  %v7361 = vpop.permute.xlu0 %7360
  %7362 = vrot.lane.b32.xlu0 %v7222, 32
  %v7363 = vpop.permute.xlu0 %7362
  %7364 = vrot.lane.b32.xlu0 %v7225, 32
  %v7365 = vpop.permute.xlu0 %7364
  %7366 = vrot.lane.b32.xlu0 %v7227, 32
  %v7367 = vpop.permute.xlu0 %7366
  %7368 = vrot.lane.b32.xlu0 %v7230, 32
  %v7369 = vpop.permute.xlu0 %7368
  %7370 = vrot.lane.b32.xlu0 %v7232, 32
  %v7371 = vpop.permute.xlu0 %7370
  %7372 = vrot.lane.b32.xlu0 %v7235, 32
  %v7373 = vpop.permute.xlu0 %7372
  %7374 = vrot.lane.b32.xlu0 %v7237, 32
  %v7375 = vpop.permute.xlu0 %7374
  %7376 = vrot.lane.b32.xlu0 %v7240, 32
  %v7377 = vpop.permute.xlu0 %7376
  %7378 = vrot.lane.b32.xlu0 %v7242, 32
  %v7379 = vpop.permute.xlu0 %7378
  %7380 = vrot.lane.b32.xlu0 %v7245, 32
  %v7381 = vpop.permute.xlu0 %7380
  %7382 = vrot.lane.b32.xlu0 %v7247, 32
  %v7383 = vpop.permute.xlu0 %7382
  %7384 = vrot.lane.b32.xlu0 %v7250, 32
  %v7385 = vpop.permute.xlu0 %7384
  %7386 = vrot.lane.b32.xlu0 %v7252, 32
  %v7387 = vpop.permute.xlu0 %7386
  %7388 = vrot.lane.b32.xlu0 %v7255, 32
  %v7389 = vpop.permute.xlu0 %7388
  %7390 = vrot.lane.b32.xlu0 %v7257, 32
  %v7391 = vpop.permute.xlu0 %7390
  %7392 = vrot.lane.b32.xlu0 %v7260, 32
  %v7393 = vpop.permute.xlu0 %7392
  %7394 = vrot.lane.b32.xlu0 %v7262, 32
  %v7395 = vpop.permute.xlu0 %7394
  %7396 = vrot.lane.b32.xlu0 %v7265, 32
  %v7397 = vpop.permute.xlu0 %7396
  %7398 = vrot.lane.b32.xlu0 %v7267, 32
  %v7399 = vpop.permute.xlu0 %7398
  %7400 = vrot.lane.b32.xlu0 %v7270, 32
  %v7401 = vpop.permute.xlu0 %7400
  %7402 = vrot.lane.b32.xlu0 %v7272, 32
  %v7403 = vpop.permute.xlu0 %7402
  %7404 = vrot.lane.b32.xlu0 %v7275, 32
  %v7405 = vpop.permute.xlu0 %7404
  %7406 = vrot.lane.b32.xlu0 %v7277, 32
  %v7407 = vpop.permute.xlu0 %7406
  %7408 = vrot.lane.b32.xlu0 %v7280, 32
  %v7409 = vpop.permute.xlu0 %7408
  %7410 = vrot.lane.b32.xlu0 %v7282, 32
  %v7411 = vpop.permute.xlu0 %7410
  %7412 = vrot.lane.b32.xlu0 %v7285, 32
  %v7413 = vpop.permute.xlu0 %7412
  %7414 = vrot.lane.b32.xlu0 %v7287, 32
  %v7415 = vpop.permute.xlu0 %7414
  %7416 = vrot.lane.b32.xlu0 %v7290, 32
  %v7417 = vpop.permute.xlu0 %7416
  %7418 = vrot.lane.b32.xlu0 %v7292, 32
  %v7419 = vpop.permute.xlu0 %7418
  %7420 = vrot.lane.b32.xlu0 %v7295, 32
  %v7421 = vpop.permute.xlu0 %7420
  %7422 = vrot.lane.b32.xlu0 %v7297, 32
  %v7423 = vpop.permute.xlu0 %7422
  %7424 = vrot.lane.b32.xlu0 %v7300, 32
  %v7425 = vpop.permute.xlu0 %7424
  %7426 = vrot.lane.b32.xlu0 %v7302, 32
  %v7427 = vpop.permute.xlu0 %7426
  %7428 = vrot.lane.b32.xlu0 %v7305, 32
  %v7429 = vpop.permute.xlu0 %7428
  %7430 = vrot.lane.b32.xlu0 %v7307, 32
  %v7431 = vpop.permute.xlu0 %7430
  %7496 = vrot.lane.b32.xlu0 %v6698, 48
  %v7497 = vpop.permute.xlu0 %7496
  %7498 = vrot.lane.b32.xlu0 %v6510, 48
  %v7499 = vpop.permute.xlu0 %7498
  %7500 = vrot.lane.b32.xlu0 %v6699, 48
  %v7501 = vpop.permute.xlu0 %7500
  %7502 = vrot.lane.b32.xlu0 %v6513, 48
  %v7503 = vpop.permute.xlu0 %7502
  %7504 = vrot.lane.b32.xlu0 %v6700, 48
  %v7505 = vpop.permute.xlu0 %7504
  %7506 = vrot.lane.b32.xlu0 %v6516, 48
  %v7507 = vpop.permute.xlu0 %7506
  %7508 = vrot.lane.b32.xlu0 %v6701, 48
  %v7509 = vpop.permute.xlu0 %7508
  %7510 = vrot.lane.b32.xlu0 %v6519, 48
  %v7511 = vpop.permute.xlu0 %7510
  %7512 = vrot.lane.b32.xlu0 %v6702, 48
  %v7513 = vpop.permute.xlu0 %7512
  %7514 = vrot.lane.b32.xlu0 %v6522, 48
  %v7515 = vpop.permute.xlu0 %7514
  %7516 = vrot.lane.b32.xlu0 %v6703, 48
  %v7517 = vpop.permute.xlu0 %7516
  %7518 = vrot.lane.b32.xlu0 %v6525, 48
  %v7519 = vpop.permute.xlu0 %7518
  %7520 = vrot.lane.b32.xlu0 %v6704, 48
  %v7521 = vpop.permute.xlu0 %7520
  %7522 = vrot.lane.b32.xlu0 %v6528, 48
  %v7523 = vpop.permute.xlu0 %7522
  %7524 = vrot.lane.b32.xlu0 %v6705, 48
  %v7525 = vpop.permute.xlu0 %7524
  %7526 = vrot.lane.b32.xlu0 %v6531, 48
  %v7527 = vpop.permute.xlu0 %7526
  %7528 = vrot.lane.b32.xlu0 %v6706, 48
  %v7529 = vpop.permute.xlu0 %7528
  %7530 = vrot.lane.b32.xlu0 %v6534, 48
  %v7531 = vpop.permute.xlu0 %7530
  %7532 = vrot.lane.b32.xlu0 %v6707, 48
  %v7533 = vpop.permute.xlu0 %7532
  %7534 = vrot.lane.b32.xlu0 %v6537, 48
  %v7535 = vpop.permute.xlu0 %7534
  %7536 = vrot.lane.b32.xlu0 %v6708, 48
  %v7537 = vpop.permute.xlu0 %7536
  %7538 = vrot.lane.b32.xlu0 %v6540, 48
  %v7539 = vpop.permute.xlu0 %7538
  %7540 = vrot.lane.b32.xlu0 %v6709, 48
  %v7541 = vpop.permute.xlu0 %7540
  %7542 = vrot.lane.b32.xlu0 %v6543, 48
  %v7543 = vpop.permute.xlu0 %7542
  %7544 = vrot.lane.b32.xlu0 %v6710, 48
  %v7545 = vpop.permute.xlu0 %7544
  %7546 = vrot.lane.b32.xlu0 %v6546, 48
  %v7547 = vpop.permute.xlu0 %7546
  %7548 = vrot.lane.b32.xlu0 %v6711, 48
  %v7549 = vpop.permute.xlu0 %7548
  %7550 = vrot.lane.b32.xlu0 %v6549, 48
  %v7551 = vpop.permute.xlu0 %7550
  %7552 = vrot.lane.b32.xlu0 %v6712, 48
  %v7553 = vpop.permute.xlu0 %7552
  %7554 = vrot.lane.b32.xlu0 %v6552, 48
  %v7555 = vpop.permute.xlu0 %7554
  %7556 = vrot.lane.b32.xlu0 %v6713, 48
  %v7557 = vpop.permute.xlu0 %7556
  %7558 = vrot.lane.b32.xlu0 %v6555, 48
  %v7559 = vpop.permute.xlu0 %7558
  %7560 = vrot.lane.b32.xlu0 %v6714, 48
  %v7561 = vpop.permute.xlu0 %7560
  %7562 = vrot.lane.b32.xlu0 %v6558, 48
  %v7563 = vpop.permute.xlu0 %7562
  %7564 = vrot.lane.b32.xlu0 %v6715, 48
  %v7565 = vpop.permute.xlu0 %7564
  %7566 = vrot.lane.b32.xlu0 %v6561, 48
  %v7567 = vpop.permute.xlu0 %7566
  %7568 = vrot.lane.b32.xlu0 %v6716, 48
  %v7569 = vpop.permute.xlu0 %7568
  %7570 = vrot.lane.b32.xlu0 %v6564, 48
  %v7571 = vpop.permute.xlu0 %7570
  %7572 = vrot.lane.b32.xlu0 %v6717, 48
  %v7573 = vpop.permute.xlu0 %7572
  %7574 = vrot.lane.b32.xlu0 %v6567, 48
  %v7575 = vpop.permute.xlu0 %7574
  %7576 = vrot.lane.b32.xlu0 %v6718, 48
  %v7577 = vpop.permute.xlu0 %7576
  %7578 = vrot.lane.b32.xlu0 %v6570, 48
  %v7579 = vpop.permute.xlu0 %7578
  %7580 = vrot.lane.b32.xlu0 %v6719, 48
  %v7581 = vpop.permute.xlu0 %7580
  %7582 = vrot.lane.b32.xlu0 %v6573, 48
  %v7583 = vpop.permute.xlu0 %7582
  %7584 = vrot.lane.b32.xlu0 %v6720, 48
  %v7585 = vpop.permute.xlu0 %7584
  %7586 = vrot.lane.b32.xlu0 %v6576, 48
  %v7587 = vpop.permute.xlu0 %7586
  %7588 = vrot.lane.b32.xlu0 %v6721, 48
  %v7589 = vpop.permute.xlu0 %7588
  %7590 = vrot.lane.b32.xlu0 %v6579, 48
  %v7591 = vpop.permute.xlu0 %7590
  %7592 = vrot.lane.b32.xlu0 %v6722, 48
  %v7593 = vpop.permute.xlu0 %7592
  %7594 = vrot.lane.b32.xlu0 %v6582, 48
  %v7595 = vpop.permute.xlu0 %7594
  %7596 = vrot.lane.b32.xlu0 %v6723, 48
  %v7597 = vpop.permute.xlu0 %7596
  %7598 = vrot.lane.b32.xlu0 %v6585, 48
  %v7599 = vpop.permute.xlu0 %7598
  %7600 = vrot.lane.b32.xlu0 %v6724, 48
  %v7601 = vpop.permute.xlu0 %7600
  %7602 = vrot.lane.b32.xlu0 %v6588, 48
  %v7603 = vpop.permute.xlu0 %7602
  %7604 = vrot.lane.b32.xlu0 %v6725, 48
  %v7605 = vpop.permute.xlu0 %7604
  %7606 = vrot.lane.b32.xlu0 %v6591, 48
  %v7607 = vpop.permute.xlu0 %7606
  %7608 = vrot.lane.b32.xlu0 %v6726, 48
  %v7609 = vpop.permute.xlu0 %7608
  %7610 = vrot.lane.b32.xlu0 %v6594, 48
  %v7611 = vpop.permute.xlu0 %7610
  %7612 = vrot.lane.b32.xlu0 %v6727, 48
  %v7613 = vpop.permute.xlu0 %7612
  %7614 = vrot.lane.b32.xlu0 %v6597, 48
  %v7615 = vpop.permute.xlu0 %7614
  %7616 = vrot.lane.b32.xlu0 %v6728, 48
  %v7617 = vpop.permute.xlu0 %7616
  %7618 = vrot.lane.b32.xlu0 %v6600, 48
  %v7619 = vpop.permute.xlu0 %7618
  %7620 = vrot.lane.b32.xlu0 %v6729, 48
  %v7621 = vpop.permute.xlu0 %7620
  %7622 = vrot.lane.b32.xlu0 %v6603, 48
  %v7623 = vpop.permute.xlu0 %7622
  %v7690 = vrot.slane %v6713, 1
  %v7691 = vrot.slane %v6555, 1
  %v7692 = vsel %vm267, %v7690, %v7691
  %v7693 = vrot.slane %v6745, 1
  %v7694 = vsel %vm267, %v7691, %v7693
  %v7695 = vrot.slane %v6729, 1
  %v7696 = vrot.slane %v6603, 1
  %v7697 = vsel %vm267, %v7695, %v7696
  %v7698 = vrot.slane %v6761, 1
  %v7699 = vsel %vm267, %v7696, %v7698
  %7700 = vrot.lane.b32.xlu0 %v6824, 64
  %v7701 = vpop.permute.xlu0 %7700
  %7702 = vrot.lane.b32.xlu0 %v6826, 64
  %v7703 = vpop.permute.xlu0 %7702
  %7704 = vrot.lane.b32.xlu0 %v6829, 64
  %v7705 = vpop.permute.xlu0 %7704
  %7706 = vrot.lane.b32.xlu0 %v6831, 64
  %v7707 = vpop.permute.xlu0 %7706
  %7708 = vrot.lane.b32.xlu0 %v6834, 64
  %v7709 = vpop.permute.xlu0 %7708
  %7710 = vrot.lane.b32.xlu0 %v6836, 64
  %v7711 = vpop.permute.xlu0 %7710
  %7712 = vrot.lane.b32.xlu0 %v6839, 64
  %v7713 = vpop.permute.xlu0 %7712
  %7714 = vrot.lane.b32.xlu0 %v6841, 64
  %v7715 = vpop.permute.xlu0 %7714
  %7716 = vrot.lane.b32.xlu0 %v6844, 64
  %v7717 = vpop.permute.xlu0 %7716
  %7718 = vrot.lane.b32.xlu0 %v6846, 64
  %v7719 = vpop.permute.xlu0 %7718
  %7720 = vrot.lane.b32.xlu0 %v6849, 64
  %v7721 = vpop.permute.xlu0 %7720
  %7722 = vrot.lane.b32.xlu0 %v6851, 64
  %v7723 = vpop.permute.xlu0 %7722
  %7724 = vrot.lane.b32.xlu0 %v6854, 64
  %v7725 = vpop.permute.xlu0 %7724
  %7726 = vrot.lane.b32.xlu0 %v6856, 64
  %v7727 = vpop.permute.xlu0 %7726
  %7728 = vrot.lane.b32.xlu0 %v6859, 64
  %v7729 = vpop.permute.xlu0 %7728
  %7730 = vrot.lane.b32.xlu0 %v6861, 64
  %v7731 = vpop.permute.xlu0 %7730
  %7732 = vrot.lane.b32.xlu0 %v6864, 64
  %v7733 = vpop.permute.xlu0 %7732
  %7734 = vrot.lane.b32.xlu0 %v6866, 64
  %v7735 = vpop.permute.xlu0 %7734
  %7736 = vrot.lane.b32.xlu0 %v6869, 64
  %v7737 = vpop.permute.xlu0 %7736
  %7738 = vrot.lane.b32.xlu0 %v6871, 64
  %v7739 = vpop.permute.xlu0 %7738
  %7740 = vrot.lane.b32.xlu0 %v6874, 64
  %v7741 = vpop.permute.xlu0 %7740
  %7742 = vrot.lane.b32.xlu0 %v6876, 64
  %v7743 = vpop.permute.xlu0 %7742
  %7744 = vrot.lane.b32.xlu0 %v6879, 64
  %v7745 = vpop.permute.xlu0 %7744
  %7746 = vrot.lane.b32.xlu0 %v6881, 64
  %v7747 = vpop.permute.xlu0 %7746
  %7748 = vrot.lane.b32.xlu0 %v6884, 64
  %v7749 = vpop.permute.xlu0 %7748
  %7750 = vrot.lane.b32.xlu0 %v6886, 64
  %v7751 = vpop.permute.xlu0 %7750
  %7752 = vrot.lane.b32.xlu0 %v6889, 64
  %v7753 = vpop.permute.xlu0 %7752
  %7754 = vrot.lane.b32.xlu0 %v6891, 64
  %v7755 = vpop.permute.xlu0 %7754
  %7756 = vrot.lane.b32.xlu0 %v6894, 64
  %v7757 = vpop.permute.xlu0 %7756
  %7758 = vrot.lane.b32.xlu0 %v6896, 64
  %v7759 = vpop.permute.xlu0 %7758
  %7760 = vrot.lane.b32.xlu0 %v7692, 64
  %v7761 = vpop.permute.xlu0 %7760
  %7762 = vrot.lane.b32.xlu0 %v7694, 64
  %v7763 = vpop.permute.xlu0 %7762
  %7764 = vrot.lane.b32.xlu0 %v6899, 64
  %v7765 = vpop.permute.xlu0 %7764
  %7766 = vrot.lane.b32.xlu0 %v6901, 64
  %v7767 = vpop.permute.xlu0 %7766
  %7768 = vrot.lane.b32.xlu0 %v6904, 64
  %v7769 = vpop.permute.xlu0 %7768
  %7770 = vrot.lane.b32.xlu0 %v6906, 64
  %v7771 = vpop.permute.xlu0 %7770
  %7772 = vrot.lane.b32.xlu0 %v6909, 64
  %v7773 = vpop.permute.xlu0 %7772
  %7774 = vrot.lane.b32.xlu0 %v6911, 64
  %v7775 = vpop.permute.xlu0 %7774
  %7776 = vrot.lane.b32.xlu0 %v6914, 64
  %v7777 = vpop.permute.xlu0 %7776
  %7778 = vrot.lane.b32.xlu0 %v6916, 64
  %v7779 = vpop.permute.xlu0 %7778
  %7780 = vrot.lane.b32.xlu0 %v6919, 64
  %v7781 = vpop.permute.xlu0 %7780
  %7782 = vrot.lane.b32.xlu0 %v6921, 64
  %v7783 = vpop.permute.xlu0 %7782
  %7784 = vrot.lane.b32.xlu0 %v6924, 64
  %v7785 = vpop.permute.xlu0 %7784
  %7786 = vrot.lane.b32.xlu0 %v6926, 64
  %v7787 = vpop.permute.xlu0 %7786
  %7788 = vrot.lane.b32.xlu0 %v6929, 64
  %v7789 = vpop.permute.xlu0 %7788
  %7790 = vrot.lane.b32.xlu0 %v6931, 64
  %v7791 = vpop.permute.xlu0 %7790
  %7792 = vrot.lane.b32.xlu0 %v6934, 64
  %v7793 = vpop.permute.xlu0 %7792
  %7794 = vrot.lane.b32.xlu0 %v6936, 64
  %v7795 = vpop.permute.xlu0 %7794
  %7796 = vrot.lane.b32.xlu0 %v6939, 64
  %v7797 = vpop.permute.xlu0 %7796
  %7798 = vrot.lane.b32.xlu0 %v6941, 64
  %v7799 = vpop.permute.xlu0 %7798
  %7800 = vrot.lane.b32.xlu0 %v6944, 64
  %v7801 = vpop.permute.xlu0 %7800
  %7802 = vrot.lane.b32.xlu0 %v6946, 64
  %v7803 = vpop.permute.xlu0 %7802
  %7804 = vrot.lane.b32.xlu0 %v6949, 64
  %v7805 = vpop.permute.xlu0 %7804
  %7806 = vrot.lane.b32.xlu0 %v6951, 64
  %v7807 = vpop.permute.xlu0 %7806
  %7808 = vrot.lane.b32.xlu0 %v6954, 64
  %v7809 = vpop.permute.xlu0 %7808
  %7810 = vrot.lane.b32.xlu0 %v6956, 64
  %v7811 = vpop.permute.xlu0 %7810
  %7812 = vrot.lane.b32.xlu0 %v6959, 64
  %v7813 = vpop.permute.xlu0 %7812
  %7814 = vrot.lane.b32.xlu0 %v6961, 64
  %v7815 = vpop.permute.xlu0 %7814
  %7816 = vrot.lane.b32.xlu0 %v6964, 64
  %v7817 = vpop.permute.xlu0 %7816
  %7818 = vrot.lane.b32.xlu0 %v6966, 64
  %v7819 = vpop.permute.xlu0 %7818
  %7820 = vrot.lane.b32.xlu0 %v6969, 64
  %v7821 = vpop.permute.xlu0 %7820
  %7822 = vrot.lane.b32.xlu0 %v6971, 64
  %v7823 = vpop.permute.xlu0 %7822
  %7824 = vrot.lane.b32.xlu0 %v7697, 64
  %v7825 = vpop.permute.xlu0 %7824
  %7826 = vrot.lane.b32.xlu0 %v7699, 64
  %v7827 = vpop.permute.xlu0 %7826
  %v7892 = vrot.slane %v6713, 2
  %v7893 = vrot.slane %v6555, 2
  %v7894 = vsel %vm264, %v7892, %v7893
  %v7895 = vrot.slane %v6745, 2
  %v7896 = vsel %vm264, %v7893, %v7895
  %v7897 = vrot.slane %v6729, 2
  %v7898 = vrot.slane %v6603, 2
  %v7899 = vsel %vm264, %v7897, %v7898
  %v7900 = vrot.slane %v6761, 2
  %v7901 = vsel %vm264, %v7898, %v7900
  %7902 = vrot.lane.b32.xlu0 %v7160, 80
  %v7903 = vpop.permute.xlu0 %7902
  %7904 = vrot.lane.b32.xlu0 %v7162, 80
  %v7905 = vpop.permute.xlu0 %7904
  %7906 = vrot.lane.b32.xlu0 %v7165, 80
  %v7907 = vpop.permute.xlu0 %7906
  %7908 = vrot.lane.b32.xlu0 %v7167, 80
  %v7909 = vpop.permute.xlu0 %7908
  %7910 = vrot.lane.b32.xlu0 %v7170, 80
  %v7911 = vpop.permute.xlu0 %7910
  %7912 = vrot.lane.b32.xlu0 %v7172, 80
  %v7913 = vpop.permute.xlu0 %7912
  %7914 = vrot.lane.b32.xlu0 %v7175, 80
  %v7915 = vpop.permute.xlu0 %7914
  %7916 = vrot.lane.b32.xlu0 %v7177, 80
  %v7917 = vpop.permute.xlu0 %7916
  %7918 = vrot.lane.b32.xlu0 %v7180, 80
  %v7919 = vpop.permute.xlu0 %7918
  %7920 = vrot.lane.b32.xlu0 %v7182, 80
  %v7921 = vpop.permute.xlu0 %7920
  %7922 = vrot.lane.b32.xlu0 %v7185, 80
  %v7923 = vpop.permute.xlu0 %7922
  %7924 = vrot.lane.b32.xlu0 %v7187, 80
  %v7925 = vpop.permute.xlu0 %7924
  %7926 = vrot.lane.b32.xlu0 %v7190, 80
  %v7927 = vpop.permute.xlu0 %7926
  %7928 = vrot.lane.b32.xlu0 %v7192, 80
  %v7929 = vpop.permute.xlu0 %7928
  %7930 = vrot.lane.b32.xlu0 %v7195, 80
  %v7931 = vpop.permute.xlu0 %7930
  %7932 = vrot.lane.b32.xlu0 %v7197, 80
  %v7933 = vpop.permute.xlu0 %7932
  %7934 = vrot.lane.b32.xlu0 %v7200, 80
  %v7935 = vpop.permute.xlu0 %7934
  %7936 = vrot.lane.b32.xlu0 %v7202, 80
  %v7937 = vpop.permute.xlu0 %7936
  %7938 = vrot.lane.b32.xlu0 %v7205, 80
  %v7939 = vpop.permute.xlu0 %7938
  %7940 = vrot.lane.b32.xlu0 %v7207, 80
  %v7941 = vpop.permute.xlu0 %7940
  %7942 = vrot.lane.b32.xlu0 %v7210, 80
  %v7943 = vpop.permute.xlu0 %7942
  %7944 = vrot.lane.b32.xlu0 %v7212, 80
  %v7945 = vpop.permute.xlu0 %7944
  %7946 = vrot.lane.b32.xlu0 %v7215, 80
  %v7947 = vpop.permute.xlu0 %7946
  %7948 = vrot.lane.b32.xlu0 %v7217, 80
  %v7949 = vpop.permute.xlu0 %7948
  %7950 = vrot.lane.b32.xlu0 %v7220, 80
  %v7951 = vpop.permute.xlu0 %7950
  %7952 = vrot.lane.b32.xlu0 %v7222, 80
  %v7953 = vpop.permute.xlu0 %7952
  %7954 = vrot.lane.b32.xlu0 %v7225, 80
  %v7955 = vpop.permute.xlu0 %7954
  %7956 = vrot.lane.b32.xlu0 %v7227, 80
  %v7957 = vpop.permute.xlu0 %7956
  %7958 = vrot.lane.b32.xlu0 %v7230, 80
  %v7959 = vpop.permute.xlu0 %7958
  %7960 = vrot.lane.b32.xlu0 %v7232, 80
  %v7961 = vpop.permute.xlu0 %7960
  %7962 = vrot.lane.b32.xlu0 %v7894, 80
  %v7963 = vpop.permute.xlu0 %7962
  %7964 = vrot.lane.b32.xlu0 %v7896, 80
  %v7965 = vpop.permute.xlu0 %7964
  %7966 = vrot.lane.b32.xlu0 %v7235, 80
  %v7967 = vpop.permute.xlu0 %7966
  %7968 = vrot.lane.b32.xlu0 %v7237, 80
  %v7969 = vpop.permute.xlu0 %7968
  %7970 = vrot.lane.b32.xlu0 %v7240, 80
  %v7971 = vpop.permute.xlu0 %7970
  %7972 = vrot.lane.b32.xlu0 %v7242, 80
  %v7973 = vpop.permute.xlu0 %7972
  %7974 = vrot.lane.b32.xlu0 %v7245, 80
  %v7975 = vpop.permute.xlu0 %7974
  %7976 = vrot.lane.b32.xlu0 %v7247, 80
  %v7977 = vpop.permute.xlu0 %7976
  %7978 = vrot.lane.b32.xlu0 %v7250, 80
  %v7979 = vpop.permute.xlu0 %7978
  %7980 = vrot.lane.b32.xlu0 %v7252, 80
  %v7981 = vpop.permute.xlu0 %7980
  %7982 = vrot.lane.b32.xlu0 %v7255, 80
  %v7983 = vpop.permute.xlu0 %7982
  %7984 = vrot.lane.b32.xlu0 %v7257, 80
  %v7985 = vpop.permute.xlu0 %7984
  %7986 = vrot.lane.b32.xlu0 %v7260, 80
  %v7987 = vpop.permute.xlu0 %7986
  %7988 = vrot.lane.b32.xlu0 %v7262, 80
  %v7989 = vpop.permute.xlu0 %7988
  %7990 = vrot.lane.b32.xlu0 %v7265, 80
  %v7991 = vpop.permute.xlu0 %7990
  %7992 = vrot.lane.b32.xlu0 %v7267, 80
  %v7993 = vpop.permute.xlu0 %7992
  %7994 = vrot.lane.b32.xlu0 %v7270, 80
  %v7995 = vpop.permute.xlu0 %7994
  %7996 = vrot.lane.b32.xlu0 %v7272, 80
  %v7997 = vpop.permute.xlu0 %7996
  %7998 = vrot.lane.b32.xlu0 %v7275, 80
  %v7999 = vpop.permute.xlu0 %7998
  %8000 = vrot.lane.b32.xlu0 %v7277, 80
  %v8001 = vpop.permute.xlu0 %8000
  %8002 = vrot.lane.b32.xlu0 %v7280, 80
  %v8003 = vpop.permute.xlu0 %8002
  %8004 = vrot.lane.b32.xlu0 %v7282, 80
  %v8005 = vpop.permute.xlu0 %8004
  %8006 = vrot.lane.b32.xlu0 %v7285, 80
  %v8007 = vpop.permute.xlu0 %8006
  %8008 = vrot.lane.b32.xlu0 %v7287, 80
  %v8009 = vpop.permute.xlu0 %8008
  %8010 = vrot.lane.b32.xlu0 %v7290, 80
  %v8011 = vpop.permute.xlu0 %8010
  %8012 = vrot.lane.b32.xlu0 %v7292, 80
  %v8013 = vpop.permute.xlu0 %8012
  %8014 = vrot.lane.b32.xlu0 %v7295, 80
  %v8015 = vpop.permute.xlu0 %8014
  %8016 = vrot.lane.b32.xlu0 %v7297, 80
  %v8017 = vpop.permute.xlu0 %8016
  %8018 = vrot.lane.b32.xlu0 %v7300, 80
  %v8019 = vpop.permute.xlu0 %8018
  %8020 = vrot.lane.b32.xlu0 %v7302, 80
  %v8021 = vpop.permute.xlu0 %8020
  %8022 = vrot.lane.b32.xlu0 %v7305, 80
  %v8023 = vpop.permute.xlu0 %8022
  %8024 = vrot.lane.b32.xlu0 %v7307, 80
  %v8025 = vpop.permute.xlu0 %8024
  %8026 = vrot.lane.b32.xlu0 %v7899, 80
  %v8027 = vpop.permute.xlu0 %8026
  %8028 = vrot.lane.b32.xlu0 %v7901, 80
  %v8029 = vpop.permute.xlu0 %8028
  %8094 = vrot.lane.b32.xlu0 %v6699, 96
  %v8095 = vpop.permute.xlu0 %8094
  %8096 = vrot.lane.b32.xlu0 %v6513, 96
  %v8097 = vpop.permute.xlu0 %8096
  %8098 = vrot.lane.b32.xlu0 %v6700, 96
  %v8099 = vpop.permute.xlu0 %8098
  %8100 = vrot.lane.b32.xlu0 %v6516, 96
  %v8101 = vpop.permute.xlu0 %8100
  %8102 = vrot.lane.b32.xlu0 %v6701, 96
  %v8103 = vpop.permute.xlu0 %8102
  %8104 = vrot.lane.b32.xlu0 %v6519, 96
  %v8105 = vpop.permute.xlu0 %8104
  %8106 = vrot.lane.b32.xlu0 %v6702, 96
  %v8107 = vpop.permute.xlu0 %8106
  %8108 = vrot.lane.b32.xlu0 %v6522, 96
  %v8109 = vpop.permute.xlu0 %8108
  %8110 = vrot.lane.b32.xlu0 %v6703, 96
  %v8111 = vpop.permute.xlu0 %8110
  %8112 = vrot.lane.b32.xlu0 %v6525, 96
  %v8113 = vpop.permute.xlu0 %8112
  %8114 = vrot.lane.b32.xlu0 %v6704, 96
  %v8115 = vpop.permute.xlu0 %8114
  %8116 = vrot.lane.b32.xlu0 %v6528, 96
  %v8117 = vpop.permute.xlu0 %8116
  %8118 = vrot.lane.b32.xlu0 %v6705, 96
  %v8119 = vpop.permute.xlu0 %8118
  %8120 = vrot.lane.b32.xlu0 %v6531, 96
  %v8121 = vpop.permute.xlu0 %8120
  %8122 = vrot.lane.b32.xlu0 %v6706, 96
  %v8123 = vpop.permute.xlu0 %8122
  %8124 = vrot.lane.b32.xlu0 %v6534, 96
  %v8125 = vpop.permute.xlu0 %8124
  %8126 = vrot.lane.b32.xlu0 %v6707, 96
  %v8127 = vpop.permute.xlu0 %8126
  %8128 = vrot.lane.b32.xlu0 %v6537, 96
  %v8129 = vpop.permute.xlu0 %8128
  %8130 = vrot.lane.b32.xlu0 %v6708, 96
  %v8131 = vpop.permute.xlu0 %8130
  %8132 = vrot.lane.b32.xlu0 %v6540, 96
  %v8133 = vpop.permute.xlu0 %8132
  %8134 = vrot.lane.b32.xlu0 %v6709, 96
  %v8135 = vpop.permute.xlu0 %8134
  %8136 = vrot.lane.b32.xlu0 %v6543, 96
  %v8137 = vpop.permute.xlu0 %8136
  %8138 = vrot.lane.b32.xlu0 %v6710, 96
  %v8139 = vpop.permute.xlu0 %8138
  %8140 = vrot.lane.b32.xlu0 %v6546, 96
  %v8141 = vpop.permute.xlu0 %8140
  %8142 = vrot.lane.b32.xlu0 %v6711, 96
  %v8143 = vpop.permute.xlu0 %8142
  %8144 = vrot.lane.b32.xlu0 %v6549, 96
  %v8145 = vpop.permute.xlu0 %8144
  %8146 = vrot.lane.b32.xlu0 %v6712, 96
  %v8147 = vpop.permute.xlu0 %8146
  %8148 = vrot.lane.b32.xlu0 %v6552, 96
  %v8149 = vpop.permute.xlu0 %8148
  %8150 = vrot.lane.b32.xlu0 %v6713, 96
  %v8151 = vpop.permute.xlu0 %8150
  %8152 = vrot.lane.b32.xlu0 %v6555, 96
  %v8153 = vpop.permute.xlu0 %8152
  %8154 = vrot.lane.b32.xlu0 %v695, 96
  %v8155 = vpop.permute.xlu0 %8154
  %8156 = vrot.lane.b32.xlu0 %v2786, 96
  %v8157 = vpop.permute.xlu0 %8156
  %8158 = vrot.lane.b32.xlu0 %v6715, 96
  %v8159 = vpop.permute.xlu0 %8158
  %8160 = vrot.lane.b32.xlu0 %v6561, 96
  %v8161 = vpop.permute.xlu0 %8160
  %8162 = vrot.lane.b32.xlu0 %v6716, 96
  %v8163 = vpop.permute.xlu0 %8162
  %8164 = vrot.lane.b32.xlu0 %v6564, 96
  %v8165 = vpop.permute.xlu0 %8164
  %8166 = vrot.lane.b32.xlu0 %v6717, 96
  %v8167 = vpop.permute.xlu0 %8166
  %8168 = vrot.lane.b32.xlu0 %v6567, 96
  %v8169 = vpop.permute.xlu0 %8168
  %8170 = vrot.lane.b32.xlu0 %v6718, 96
  %v8171 = vpop.permute.xlu0 %8170
  %8172 = vrot.lane.b32.xlu0 %v6570, 96
  %v8173 = vpop.permute.xlu0 %8172
  %8174 = vrot.lane.b32.xlu0 %v6719, 96
  %v8175 = vpop.permute.xlu0 %8174
  %8176 = vrot.lane.b32.xlu0 %v6573, 96
  %v8177 = vpop.permute.xlu0 %8176
  %8178 = vrot.lane.b32.xlu0 %v6720, 96
  %v8179 = vpop.permute.xlu0 %8178
  %8180 = vrot.lane.b32.xlu0 %v6576, 96
  %v8181 = vpop.permute.xlu0 %8180
  %8182 = vrot.lane.b32.xlu0 %v6721, 96
  %v8183 = vpop.permute.xlu0 %8182
  %8184 = vrot.lane.b32.xlu0 %v6579, 96
  %v8185 = vpop.permute.xlu0 %8184
  %8186 = vrot.lane.b32.xlu0 %v6722, 96
  %v8187 = vpop.permute.xlu0 %8186
  %8188 = vrot.lane.b32.xlu0 %v6582, 96
  %v8189 = vpop.permute.xlu0 %8188
  %8190 = vrot.lane.b32.xlu0 %v6723, 96
  %v8191 = vpop.permute.xlu0 %8190
  %8192 = vrot.lane.b32.xlu0 %v6585, 96
  %v8193 = vpop.permute.xlu0 %8192
  %8194 = vrot.lane.b32.xlu0 %v6724, 96
  %v8195 = vpop.permute.xlu0 %8194
  %8196 = vrot.lane.b32.xlu0 %v6588, 96
  %v8197 = vpop.permute.xlu0 %8196
  %8198 = vrot.lane.b32.xlu0 %v6725, 96
  %v8199 = vpop.permute.xlu0 %8198
  %8200 = vrot.lane.b32.xlu0 %v6591, 96
  %v8201 = vpop.permute.xlu0 %8200
  %8202 = vrot.lane.b32.xlu0 %v6726, 96
  %v8203 = vpop.permute.xlu0 %8202
  %8204 = vrot.lane.b32.xlu0 %v6594, 96
  %v8205 = vpop.permute.xlu0 %8204
  %8206 = vrot.lane.b32.xlu0 %v6727, 96
  %v8207 = vpop.permute.xlu0 %8206
  %8208 = vrot.lane.b32.xlu0 %v6597, 96
  %v8209 = vpop.permute.xlu0 %8208
  %8210 = vrot.lane.b32.xlu0 %v6728, 96
  %v8211 = vpop.permute.xlu0 %8210
  %8212 = vrot.lane.b32.xlu0 %v6600, 96
  %v8213 = vpop.permute.xlu0 %8212
  %8214 = vrot.lane.b32.xlu0 %v6729, 96
  %v8215 = vpop.permute.xlu0 %8214
  %8216 = vrot.lane.b32.xlu0 %v6603, 96
  %v8217 = vpop.permute.xlu0 %8216
  %8280 = vrot.lane.b32.xlu0 %v6829, 112
  %v8281 = vpop.permute.xlu0 %8280
  %8282 = vrot.lane.b32.xlu0 %v6831, 112
  %v8283 = vpop.permute.xlu0 %8282
  %8284 = vrot.lane.b32.xlu0 %v6834, 112
  %v8285 = vpop.permute.xlu0 %8284
  %8286 = vrot.lane.b32.xlu0 %v6836, 112
  %v8287 = vpop.permute.xlu0 %8286
  %8288 = vrot.lane.b32.xlu0 %v6839, 112
  %v8289 = vpop.permute.xlu0 %8288
  %8290 = vrot.lane.b32.xlu0 %v6841, 112
  %v8291 = vpop.permute.xlu0 %8290
  %8292 = vrot.lane.b32.xlu0 %v6844, 112
  %v8293 = vpop.permute.xlu0 %8292
  %8294 = vrot.lane.b32.xlu0 %v6846, 112
  %v8295 = vpop.permute.xlu0 %8294
  %8296 = vrot.lane.b32.xlu0 %v6849, 112
  %v8297 = vpop.permute.xlu0 %8296
  %8298 = vrot.lane.b32.xlu0 %v6851, 112
  %v8299 = vpop.permute.xlu0 %8298
  %8300 = vrot.lane.b32.xlu0 %v6854, 112
  %v8301 = vpop.permute.xlu0 %8300
  %8302 = vrot.lane.b32.xlu0 %v6856, 112
  %v8303 = vpop.permute.xlu0 %8302
  %8304 = vrot.lane.b32.xlu0 %v6859, 112
  %v8305 = vpop.permute.xlu0 %8304
  %8306 = vrot.lane.b32.xlu0 %v6861, 112
  %v8307 = vpop.permute.xlu0 %8306
  %8308 = vrot.lane.b32.xlu0 %v6864, 112
  %v8309 = vpop.permute.xlu0 %8308
  %8310 = vrot.lane.b32.xlu0 %v6866, 112
  %v8311 = vpop.permute.xlu0 %8310
  %8312 = vrot.lane.b32.xlu0 %v6869, 112
  %v8313 = vpop.permute.xlu0 %8312
  %8314 = vrot.lane.b32.xlu0 %v6871, 112
  %v8315 = vpop.permute.xlu0 %8314
  %8316 = vrot.lane.b32.xlu0 %v6874, 112
  %v8317 = vpop.permute.xlu0 %8316
  %8318 = vrot.lane.b32.xlu0 %v6876, 112
  %v8319 = vpop.permute.xlu0 %8318
  %8320 = vrot.lane.b32.xlu0 %v6879, 112
  %v8321 = vpop.permute.xlu0 %8320
  %8322 = vrot.lane.b32.xlu0 %v6881, 112
  %v8323 = vpop.permute.xlu0 %8322
  %8324 = vrot.lane.b32.xlu0 %v6884, 112
  %v8325 = vpop.permute.xlu0 %8324
  %8326 = vrot.lane.b32.xlu0 %v6886, 112
  %v8327 = vpop.permute.xlu0 %8326
  %8328 = vrot.lane.b32.xlu0 %v6889, 112
  %v8329 = vpop.permute.xlu0 %8328
  %8330 = vrot.lane.b32.xlu0 %v6891, 112
  %v8331 = vpop.permute.xlu0 %8330
  %8332 = vrot.lane.b32.xlu0 %v6894, 112
  %v8333 = vpop.permute.xlu0 %8332
  %8334 = vrot.lane.b32.xlu0 %v6896, 112
  %v8335 = vpop.permute.xlu0 %8334
  %8336 = vrot.lane.b32.xlu0 %v7692, 112
  %v8337 = vpop.permute.xlu0 %8336
  %8338 = vrot.lane.b32.xlu0 %v7694, 112
  %v8339 = vpop.permute.xlu0 %8338
  %8340 = vrot.lane.b32.xlu0 %v3103, 112
  %v8341 = vpop.permute.xlu0 %8340
  %8342 = vrot.lane.b32.xlu0 %v3104, 112
  %v8343 = vpop.permute.xlu0 %8342
  %8344 = vrot.lane.b32.xlu0 %v6904, 112
  %v8345 = vpop.permute.xlu0 %8344
  %8346 = vrot.lane.b32.xlu0 %v6906, 112
  %v8347 = vpop.permute.xlu0 %8346
  %8348 = vrot.lane.b32.xlu0 %v6909, 112
  %v8349 = vpop.permute.xlu0 %8348
  %8350 = vrot.lane.b32.xlu0 %v6911, 112
  %v8351 = vpop.permute.xlu0 %8350
  %8352 = vrot.lane.b32.xlu0 %v6914, 112
  %v8353 = vpop.permute.xlu0 %8352
  %8354 = vrot.lane.b32.xlu0 %v6916, 112
  %v8355 = vpop.permute.xlu0 %8354
  %8356 = vrot.lane.b32.xlu0 %v6919, 112
  %v8357 = vpop.permute.xlu0 %8356
  %8358 = vrot.lane.b32.xlu0 %v6921, 112
  %v8359 = vpop.permute.xlu0 %8358
  %8360 = vrot.lane.b32.xlu0 %v6924, 112
  %v8361 = vpop.permute.xlu0 %8360
  %8362 = vrot.lane.b32.xlu0 %v6926, 112
  %v8363 = vpop.permute.xlu0 %8362
  %8364 = vrot.lane.b32.xlu0 %v6929, 112
  %v8365 = vpop.permute.xlu0 %8364
  %8366 = vrot.lane.b32.xlu0 %v6931, 112
  %v8367 = vpop.permute.xlu0 %8366
  %8368 = vrot.lane.b32.xlu0 %v6934, 112
  %v8369 = vpop.permute.xlu0 %8368
  %8370 = vrot.lane.b32.xlu0 %v6936, 112
  %v8371 = vpop.permute.xlu0 %8370
  %8372 = vrot.lane.b32.xlu0 %v6939, 112
  %v8373 = vpop.permute.xlu0 %8372
  %8374 = vrot.lane.b32.xlu0 %v6941, 112
  %v8375 = vpop.permute.xlu0 %8374
  %8376 = vrot.lane.b32.xlu0 %v6944, 112
  %v8377 = vpop.permute.xlu0 %8376
  %8378 = vrot.lane.b32.xlu0 %v6946, 112
  %v8379 = vpop.permute.xlu0 %8378
  %8380 = vrot.lane.b32.xlu0 %v6949, 112
  %v8381 = vpop.permute.xlu0 %8380
  %8382 = vrot.lane.b32.xlu0 %v6951, 112
  %v8383 = vpop.permute.xlu0 %8382
  %8384 = vrot.lane.b32.xlu0 %v6954, 112
  %v8385 = vpop.permute.xlu0 %8384
  %8386 = vrot.lane.b32.xlu0 %v6956, 112
  %v8387 = vpop.permute.xlu0 %8386
  %8388 = vrot.lane.b32.xlu0 %v6959, 112
  %v8389 = vpop.permute.xlu0 %8388
  %8390 = vrot.lane.b32.xlu0 %v6961, 112
  %v8391 = vpop.permute.xlu0 %8390
  %8392 = vrot.lane.b32.xlu0 %v6964, 112
  %v8393 = vpop.permute.xlu0 %8392
  %8394 = vrot.lane.b32.xlu0 %v6966, 112
  %v8395 = vpop.permute.xlu0 %8394
  %8396 = vrot.lane.b32.xlu0 %v6969, 112
  %v8397 = vpop.permute.xlu0 %8396
  %8398 = vrot.lane.b32.xlu0 %v6971, 112
  %v8399 = vpop.permute.xlu0 %8398
  %8400 = vrot.lane.b32.xlu0 %v7697, 112
  %v8401 = vpop.permute.xlu0 %8400
  %8402 = vrot.lane.b32.xlu0 %v7699, 112
  %v8403 = vpop.permute.xlu0 %8402
  %v8466 = vsel %vm5754, %v695, %v6973
  %v8467 = vsel %vm5754, %v2786, %v6975
  %v8468 = vsel %vm5754, %v6698, %v6977
  %v8469 = vsel %vm5754, %v6510, %v6979
  %v8470 = vsel %vm5754, %v6699, %v6981
  %v8471 = vsel %vm5754, %v6513, %v6983
  %v8472 = vsel %vm5754, %v6700, %v6985
  %v8473 = vsel %vm5754, %v6516, %v6987
  %v8474 = vsel %vm5754, %v6701, %v6989
  %v8475 = vsel %vm5754, %v6519, %v6991
  %v8476 = vsel %vm5754, %v6702, %v6993
  %v8477 = vsel %vm5754, %v6522, %v6995
  %v8478 = vsel %vm5754, %v6703, %v6997
  %v8479 = vsel %vm5754, %v6525, %v6999
  %v8480 = vsel %vm5754, %v6704, %v7001
  %v8481 = vsel %vm5754, %v6528, %v7003
  %v8482 = vsel %vm5754, %v6705, %v7005
  %v8483 = vsel %vm5754, %v6531, %v7007
  %v8484 = vsel %vm5754, %v6706, %v7009
  %v8485 = vsel %vm5754, %v6534, %v7011
  %v8486 = vsel %vm5754, %v6707, %v7013
  %v8487 = vsel %vm5754, %v6537, %v7015
  %v8488 = vsel %vm5754, %v6708, %v7017
  %v8489 = vsel %vm5754, %v6540, %v7019
  %v8490 = vsel %vm5754, %v6709, %v7021
  %v8491 = vsel %vm5754, %v6543, %v7023
  %v8492 = vsel %vm5754, %v6710, %v7025
  %v8493 = vsel %vm5754, %v6546, %v7027
  %v8494 = vsel %vm5754, %v6711, %v7029
  %v8495 = vsel %vm5754, %v6549, %v7031
  %v8496 = vsel %vm5754, %v6712, %v7033
  %v8497 = vsel %vm5754, %v6552, %v7035
  %v8498 = vsel %vm5754, %v6714, %v7037
  %v8499 = vsel %vm5754, %v6558, %v7039
  %v8500 = vsel %vm5754, %v6715, %v7041
  %v8501 = vsel %vm5754, %v6561, %v7043
  %v8502 = vsel %vm5754, %v6716, %v7045
  %v8503 = vsel %vm5754, %v6564, %v7047
  %v8504 = vsel %vm5754, %v6717, %v7049
  %v8505 = vsel %vm5754, %v6567, %v7051
  %v8506 = vsel %vm5754, %v6718, %v7053
  %v8507 = vsel %vm5754, %v6570, %v7055
  %v8508 = vsel %vm5754, %v6719, %v7057
  %v8509 = vsel %vm5754, %v6573, %v7059
  %v8510 = vsel %vm5754, %v6720, %v7061
  %v8511 = vsel %vm5754, %v6576, %v7063
  %v8512 = vsel %vm5754, %v6721, %v7065
  %v8513 = vsel %vm5754, %v6579, %v7067
  %v8514 = vsel %vm5754, %v6722, %v7069
  %v8515 = vsel %vm5754, %v6582, %v7071
  %v8516 = vsel %vm5754, %v6723, %v7073
  %v8517 = vsel %vm5754, %v6585, %v7075
  %v8518 = vsel %vm5754, %v6724, %v7077
  %v8519 = vsel %vm5754, %v6588, %v7079
  %v8520 = vsel %vm5754, %v6725, %v7081
  %v8521 = vsel %vm5754, %v6591, %v7083
  %v8522 = vsel %vm5754, %v6726, %v7085
  %v8523 = vsel %vm5754, %v6594, %v7087
  %v8524 = vsel %vm5754, %v6727, %v7089
  %v8525 = vsel %vm5754, %v6597, %v7091
  %v8526 = vsel %vm5754, %v6728, %v7093
  %v8527 = vsel %vm5754, %v6600, %v7095
  %v8528 = vsel %vm71, %v8466, %v7309
  %v8529 = vsel %vm71, %v8467, %v7311
  %v8530 = vsel %vm71, %v8468, %v7313
  %v8531 = vsel %vm71, %v8469, %v7315
  %v8532 = vsel %vm71, %v8470, %v7317
  %v8533 = vsel %vm71, %v8471, %v7319
  %v8534 = vsel %vm71, %v8472, %v7321
  %v8535 = vsel %vm71, %v8473, %v7323
  %v8536 = vsel %vm71, %v8474, %v7325
  %v8537 = vsel %vm71, %v8475, %v7327
  %v8538 = vsel %vm71, %v8476, %v7329
  %v8539 = vsel %vm71, %v8477, %v7331
  %v8540 = vsel %vm71, %v8478, %v7333
  %v8541 = vsel %vm71, %v8479, %v7335
  %v8542 = vsel %vm71, %v8480, %v7337
  %v8543 = vsel %vm71, %v8481, %v7339
  %v8544 = vsel %vm71, %v8482, %v7341
  %v8545 = vsel %vm71, %v8483, %v7343
  %v8546 = vsel %vm71, %v8484, %v7345
  %v8547 = vsel %vm71, %v8485, %v7347
  %v8548 = vsel %vm71, %v8486, %v7349
  %v8549 = vsel %vm71, %v8487, %v7351
  %v8550 = vsel %vm71, %v8488, %v7353
  %v8551 = vsel %vm71, %v8489, %v7355
  %v8552 = vsel %vm71, %v8490, %v7357
  %v8553 = vsel %vm71, %v8491, %v7359
  %v8554 = vsel %vm71, %v8492, %v7361
  %v8555 = vsel %vm71, %v8493, %v7363
  %v8556 = vsel %vm71, %v8494, %v7365
  %v8557 = vsel %vm71, %v8495, %v7367
  %v8558 = vsel %vm71, %v8496, %v7369
  %v8559 = vsel %vm71, %v8497, %v7371
  %v8560 = vsel %vm71, %v8498, %v7373
  %v8561 = vsel %vm71, %v8499, %v7375
  %v8562 = vsel %vm71, %v8500, %v7377
  %v8563 = vsel %vm71, %v8501, %v7379
  %v8564 = vsel %vm71, %v8502, %v7381
  %v8565 = vsel %vm71, %v8503, %v7383
  %v8566 = vsel %vm71, %v8504, %v7385
  %v8567 = vsel %vm71, %v8505, %v7387
  %v8568 = vsel %vm71, %v8506, %v7389
  %v8569 = vsel %vm71, %v8507, %v7391
  %v8570 = vsel %vm71, %v8508, %v7393
  %v8571 = vsel %vm71, %v8509, %v7395
  %v8572 = vsel %vm71, %v8510, %v7397
  %v8573 = vsel %vm71, %v8511, %v7399
  %v8574 = vsel %vm71, %v8512, %v7401
  %v8575 = vsel %vm71, %v8513, %v7403
  %v8576 = vsel %vm71, %v8514, %v7405
  %v8577 = vsel %vm71, %v8515, %v7407
  %v8578 = vsel %vm71, %v8516, %v7409
  %v8579 = vsel %vm71, %v8517, %v7411
  %v8580 = vsel %vm71, %v8518, %v7413
  %v8581 = vsel %vm71, %v8519, %v7415
  %v8582 = vsel %vm71, %v8520, %v7417
  %v8583 = vsel %vm71, %v8521, %v7419
  %v8584 = vsel %vm71, %v8522, %v7421
  %v8585 = vsel %vm71, %v8523, %v7423
  %v8586 = vsel %vm71, %v8524, %v7425
  %v8587 = vsel %vm71, %v8525, %v7427
  %v8588 = vsel %vm71, %v8526, %v7429
  %v8589 = vsel %vm71, %v8527, %v7431
  %vm8590 = vcmask 392192
  %v8591 = vsel %vm8590, %v8528, %v7497
  %v8592 = vsel %vm8590, %v8529, %v7499
  %v8593 = vsel %vm8590, %v8530, %v7501
  %v8594 = vsel %vm8590, %v8531, %v7503
  %v8595 = vsel %vm8590, %v8532, %v7505
  %v8596 = vsel %vm8590, %v8533, %v7507
  %v8597 = vsel %vm8590, %v8534, %v7509
  %v8598 = vsel %vm8590, %v8535, %v7511
  %v8599 = vsel %vm8590, %v8536, %v7513
  %v8600 = vsel %vm8590, %v8537, %v7515
  %v8601 = vsel %vm8590, %v8538, %v7517
  %v8602 = vsel %vm8590, %v8539, %v7519
  %v8603 = vsel %vm8590, %v8540, %v7521
  %v8604 = vsel %vm8590, %v8541, %v7523
  %v8605 = vsel %vm8590, %v8542, %v7525
  %v8606 = vsel %vm8590, %v8543, %v7527
  %v8607 = vsel %vm8590, %v8544, %v7529
  %v8608 = vsel %vm8590, %v8545, %v7531
  %v8609 = vsel %vm8590, %v8546, %v7533
  %v8610 = vsel %vm8590, %v8547, %v7535
  %v8611 = vsel %vm8590, %v8548, %v7537
  %v8612 = vsel %vm8590, %v8549, %v7539
  %v8613 = vsel %vm8590, %v8550, %v7541
  %v8614 = vsel %vm8590, %v8551, %v7543
  %v8615 = vsel %vm8590, %v8552, %v7545
  %v8616 = vsel %vm8590, %v8553, %v7547
  %v8617 = vsel %vm8590, %v8554, %v7549
  %v8618 = vsel %vm8590, %v8555, %v7551
  %v8619 = vsel %vm8590, %v8556, %v7553
  %v8620 = vsel %vm8590, %v8557, %v7555
  %v8621 = vsel %vm8590, %v8558, %v7557
  %v8622 = vsel %vm8590, %v8559, %v7559
  %v8623 = vsel %vm8590, %v8528, %v7561
  %v8624 = vsel %vm8590, %v8529, %v7563
  %v8625 = vsel %vm8590, %v8560, %v7565
  %v8626 = vsel %vm8590, %v8561, %v7567
  %v8627 = vsel %vm8590, %v8562, %v7569
  %v8628 = vsel %vm8590, %v8563, %v7571
  %v8629 = vsel %vm8590, %v8564, %v7573
  %v8630 = vsel %vm8590, %v8565, %v7575
  %v8631 = vsel %vm8590, %v8566, %v7577
  %v8632 = vsel %vm8590, %v8567, %v7579
  %v8633 = vsel %vm8590, %v8568, %v7581
  %v8634 = vsel %vm8590, %v8569, %v7583
  %v8635 = vsel %vm8590, %v8570, %v7585
  %v8636 = vsel %vm8590, %v8571, %v7587
  %v8637 = vsel %vm8590, %v8572, %v7589
  %v8638 = vsel %vm8590, %v8573, %v7591
  %v8639 = vsel %vm8590, %v8574, %v7593
  %v8640 = vsel %vm8590, %v8575, %v7595
  %v8641 = vsel %vm8590, %v8576, %v7597
  %v8642 = vsel %vm8590, %v8577, %v7599
  %v8643 = vsel %vm8590, %v8578, %v7601
  %v8644 = vsel %vm8590, %v8579, %v7603
  %v8645 = vsel %vm8590, %v8580, %v7605
  %v8646 = vsel %vm8590, %v8581, %v7607
  %v8647 = vsel %vm8590, %v8582, %v7609
  %v8648 = vsel %vm8590, %v8583, %v7611
  %v8649 = vsel %vm8590, %v8584, %v7613
  %v8650 = vsel %vm8590, %v8585, %v7615
  %v8651 = vsel %vm8590, %v8586, %v7617
  %v8652 = vsel %vm8590, %v8587, %v7619
  %v8653 = vsel %vm8590, %v8588, %v7621
  %v8654 = vsel %vm8590, %v8589, %v7623
  %v8655 = vsel %vm1172, %v8591, %v7701
  %v8656 = vsel %vm1172, %v8592, %v7703
  %v8657 = vsel %vm1172, %v8593, %v7705
  %v8658 = vsel %vm1172, %v8594, %v7707
  %v8659 = vsel %vm1172, %v8595, %v7709
  %v8660 = vsel %vm1172, %v8596, %v7711
  %v8661 = vsel %vm1172, %v8597, %v7713
  %v8662 = vsel %vm1172, %v8598, %v7715
  %v8663 = vsel %vm1172, %v8599, %v7717
  %v8664 = vsel %vm1172, %v8600, %v7719
  %v8665 = vsel %vm1172, %v8601, %v7721
  %v8666 = vsel %vm1172, %v8602, %v7723
  %v8667 = vsel %vm1172, %v8603, %v7725
  %v8668 = vsel %vm1172, %v8604, %v7727
  %v8669 = vsel %vm1172, %v8605, %v7729
  %v8670 = vsel %vm1172, %v8606, %v7731
  %v8671 = vsel %vm1172, %v8607, %v7733
  %v8672 = vsel %vm1172, %v8608, %v7735
  %v8673 = vsel %vm1172, %v8609, %v7737
  %v8674 = vsel %vm1172, %v8610, %v7739
  %v8675 = vsel %vm1172, %v8611, %v7741
  %v8676 = vsel %vm1172, %v8612, %v7743
  %v8677 = vsel %vm1172, %v8613, %v7745
  %v8678 = vsel %vm1172, %v8614, %v7747
  %v8679 = vsel %vm1172, %v8615, %v7749
  %v8680 = vsel %vm1172, %v8616, %v7751
  %v8681 = vsel %vm1172, %v8617, %v7753
  %v8682 = vsel %vm1172, %v8618, %v7755
  %v8683 = vsel %vm1172, %v8619, %v7757
  %v8684 = vsel %vm1172, %v8620, %v7759
  %v8685 = vsel %vm1172, %v8621, %v7761
  %v8686 = vsel %vm1172, %v8622, %v7763
  %v8687 = vsel %vm1172, %v8623, %v7765
  %v8688 = vsel %vm1172, %v8624, %v7767
  %v8689 = vsel %vm1172, %v8625, %v7769
  %v8690 = vsel %vm1172, %v8626, %v7771
  %v8691 = vsel %vm1172, %v8627, %v7773
  %v8692 = vsel %vm1172, %v8628, %v7775
  %v8693 = vsel %vm1172, %v8629, %v7777
  %v8694 = vsel %vm1172, %v8630, %v7779
  %v8695 = vsel %vm1172, %v8631, %v7781
  %v8696 = vsel %vm1172, %v8632, %v7783
  %v8697 = vsel %vm1172, %v8633, %v7785
  %v8698 = vsel %vm1172, %v8634, %v7787
  %v8699 = vsel %vm1172, %v8635, %v7789
  %v8700 = vsel %vm1172, %v8636, %v7791
  %v8701 = vsel %vm1172, %v8637, %v7793
  %v8702 = vsel %vm1172, %v8638, %v7795
  %v8703 = vsel %vm1172, %v8639, %v7797
  %v8704 = vsel %vm1172, %v8640, %v7799
  %v8705 = vsel %vm1172, %v8641, %v7801
  %v8706 = vsel %vm1172, %v8642, %v7803
  %v8707 = vsel %vm1172, %v8643, %v7805
  %v8708 = vsel %vm1172, %v8644, %v7807
  %v8709 = vsel %vm1172, %v8645, %v7809
  %v8710 = vsel %vm1172, %v8646, %v7811
  %v8711 = vsel %vm1172, %v8647, %v7813
  %v8712 = vsel %vm1172, %v8648, %v7815
  %v8713 = vsel %vm1172, %v8649, %v7817
  %v8714 = vsel %vm1172, %v8650, %v7819
  %v8715 = vsel %vm1172, %v8651, %v7821
  %v8716 = vsel %vm1172, %v8652, %v7823
  %v8717 = vsel %vm1172, %v8653, %v7825
  %v8718 = vsel %vm1172, %v8654, %v7827
  %vm8719 = vcmask 654336
  %v8720 = vsel %vm8719, %v8655, %v7903
  %v8721 = vsel %vm8719, %v8656, %v7905
  %v8722 = vsel %vm8719, %v8657, %v7907
  %v8723 = vsel %vm8719, %v8658, %v7909
  %v8724 = vsel %vm8719, %v8659, %v7911
  %v8725 = vsel %vm8719, %v8660, %v7913
  %v8726 = vsel %vm8719, %v8661, %v7915
  %v8727 = vsel %vm8719, %v8662, %v7917
  %v8728 = vsel %vm8719, %v8663, %v7919
  %v8729 = vsel %vm8719, %v8664, %v7921
  %v8730 = vsel %vm8719, %v8665, %v7923
  %v8731 = vsel %vm8719, %v8666, %v7925
  %v8732 = vsel %vm8719, %v8667, %v7927
  %v8733 = vsel %vm8719, %v8668, %v7929
  %v8734 = vsel %vm8719, %v8669, %v7931
  %v8735 = vsel %vm8719, %v8670, %v7933
  %v8736 = vsel %vm8719, %v8671, %v7935
  %v8737 = vsel %vm8719, %v8672, %v7937
  %v8738 = vsel %vm8719, %v8673, %v7939
  %v8739 = vsel %vm8719, %v8674, %v7941
  %v8740 = vsel %vm8719, %v8675, %v7943
  %v8741 = vsel %vm8719, %v8676, %v7945
  %v8742 = vsel %vm8719, %v8677, %v7947
  %v8743 = vsel %vm8719, %v8678, %v7949
  %v8744 = vsel %vm8719, %v8679, %v7951
  %v8745 = vsel %vm8719, %v8680, %v7953
  %v8746 = vsel %vm8719, %v8681, %v7955
  %v8747 = vsel %vm8719, %v8682, %v7957
  %v8748 = vsel %vm8719, %v8683, %v7959
  %v8749 = vsel %vm8719, %v8684, %v7961
  %v8750 = vsel %vm8719, %v8685, %v7963
  %v8751 = vsel %vm8719, %v8686, %v7965
  %v8752 = vsel %vm8719, %v8687, %v7967
  %v8753 = vsel %vm8719, %v8688, %v7969
  %v8754 = vsel %vm8719, %v8689, %v7971
  %v8755 = vsel %vm8719, %v8690, %v7973
  %v8756 = vsel %vm8719, %v8691, %v7975
  %v8757 = vsel %vm8719, %v8692, %v7977
  %v8758 = vsel %vm8719, %v8693, %v7979
  %v8759 = vsel %vm8719, %v8694, %v7981
  %v8760 = vsel %vm8719, %v8695, %v7983
  %v8761 = vsel %vm8719, %v8696, %v7985
  %v8762 = vsel %vm8719, %v8697, %v7987
  %v8763 = vsel %vm8719, %v8698, %v7989
  %v8764 = vsel %vm8719, %v8699, %v7991
  %v8765 = vsel %vm8719, %v8700, %v7993
  %v8766 = vsel %vm8719, %v8701, %v7995
  %v8767 = vsel %vm8719, %v8702, %v7997
  %v8768 = vsel %vm8719, %v8703, %v7999
  %v8769 = vsel %vm8719, %v8704, %v8001
  %v8770 = vsel %vm8719, %v8705, %v8003
  %v8771 = vsel %vm8719, %v8706, %v8005
  %v8772 = vsel %vm8719, %v8707, %v8007
  %v8773 = vsel %vm8719, %v8708, %v8009
  %v8774 = vsel %vm8719, %v8709, %v8011
  %v8775 = vsel %vm8719, %v8710, %v8013
  %v8776 = vsel %vm8719, %v8711, %v8015
  %v8777 = vsel %vm8719, %v8712, %v8017
  %v8778 = vsel %vm8719, %v8713, %v8019
  %v8779 = vsel %vm8719, %v8714, %v8021
  %v8780 = vsel %vm8719, %v8715, %v8023
  %v8781 = vsel %vm8719, %v8716, %v8025
  %v8782 = vsel %vm8719, %v8717, %v8027
  %v8783 = vsel %vm8719, %v8718, %v8029
  %v8784 = vsel %vm1188, %v8720, %v8095
  %v8785 = vsel %vm1188, %v8721, %v8097
  %v8786 = vsel %vm1188, %v8722, %v8099
  %v8787 = vsel %vm1188, %v8723, %v8101
  %v8788 = vsel %vm1188, %v8724, %v8103
  %v8789 = vsel %vm1188, %v8725, %v8105
  %v8790 = vsel %vm1188, %v8726, %v8107
  %v8791 = vsel %vm1188, %v8727, %v8109
  %v8792 = vsel %vm1188, %v8728, %v8111
  %v8793 = vsel %vm1188, %v8729, %v8113
  %v8794 = vsel %vm1188, %v8730, %v8115
  %v8795 = vsel %vm1188, %v8731, %v8117
  %v8796 = vsel %vm1188, %v8732, %v8119
  %v8797 = vsel %vm1188, %v8733, %v8121
  %v8798 = vsel %vm1188, %v8734, %v8123
  %v8799 = vsel %vm1188, %v8735, %v8125
  %v8800 = vsel %vm1188, %v8736, %v8127
  %v8801 = vsel %vm1188, %v8737, %v8129
  %v8802 = vsel %vm1188, %v8738, %v8131
  %v8803 = vsel %vm1188, %v8739, %v8133
  %v8804 = vsel %vm1188, %v8740, %v8135
  %v8805 = vsel %vm1188, %v8741, %v8137
  %v8806 = vsel %vm1188, %v8742, %v8139
  %v8807 = vsel %vm1188, %v8743, %v8141
  %v8808 = vsel %vm1188, %v8744, %v8143
  %v8809 = vsel %vm1188, %v8745, %v8145
  %v8810 = vsel %vm1188, %v8746, %v8147
  %v8811 = vsel %vm1188, %v8747, %v8149
  %v8812 = vsel %vm1188, %v8748, %v8151
  %v8813 = vsel %vm1188, %v8749, %v8153
  %v8814 = vsel %vm1188, %v8750, %v8155
  %v8815 = vsel %vm1188, %v8751, %v8157
  %v8816 = vsel %vm1188, %v8752, %v8159
  %v8817 = vsel %vm1188, %v8753, %v8161
  %v8818 = vsel %vm1188, %v8754, %v8163
  %v8819 = vsel %vm1188, %v8755, %v8165
  %v8820 = vsel %vm1188, %v8756, %v8167
  %v8821 = vsel %vm1188, %v8757, %v8169
  %v8822 = vsel %vm1188, %v8758, %v8171
  %v8823 = vsel %vm1188, %v8759, %v8173
  %v8824 = vsel %vm1188, %v8760, %v8175
  %v8825 = vsel %vm1188, %v8761, %v8177
  %v8826 = vsel %vm1188, %v8762, %v8179
  %v8827 = vsel %vm1188, %v8763, %v8181
  %v8828 = vsel %vm1188, %v8764, %v8183
  %v8829 = vsel %vm1188, %v8765, %v8185
  %v8830 = vsel %vm1188, %v8766, %v8187
  %v8831 = vsel %vm1188, %v8767, %v8189
  %v8832 = vsel %vm1188, %v8768, %v8191
  %v8833 = vsel %vm1188, %v8769, %v8193
  %v8834 = vsel %vm1188, %v8770, %v8195
  %v8835 = vsel %vm1188, %v8771, %v8197
  %v8836 = vsel %vm1188, %v8772, %v8199
  %v8837 = vsel %vm1188, %v8773, %v8201
  %v8838 = vsel %vm1188, %v8774, %v8203
  %v8839 = vsel %vm1188, %v8775, %v8205
  %v8840 = vsel %vm1188, %v8776, %v8207
  %v8841 = vsel %vm1188, %v8777, %v8209
  %v8842 = vsel %vm1188, %v8778, %v8211
  %v8843 = vsel %vm1188, %v8779, %v8213
  %v8844 = vsel %vm1188, %v8780, %v8215
  %v8845 = vsel %vm1188, %v8781, %v8217
  %v8846 = vsel %vm1188, %v8782, %v8155
  %v8847 = vsel %vm1188, %v8783, %v8157
  %vm8848 = vcmask 916480
  %v8849 = vsel %vm8848, %v8784, %v8281
  %v8850 = vsel %vm8848, %v8785, %v8283
  %v8851 = vsel %vm8848, %v8786, %v8285
  %v8852 = vsel %vm8848, %v8787, %v8287
  %v8853 = vsel %vm8848, %v8788, %v8289
  %v8854 = vsel %vm8848, %v8789, %v8291
  %v8855 = vsel %vm8848, %v8790, %v8293
  %v8856 = vsel %vm8848, %v8791, %v8295
  %v8857 = vsel %vm8848, %v8792, %v8297
  %v8858 = vsel %vm8848, %v8793, %v8299
  %v8859 = vsel %vm8848, %v8794, %v8301
  %v8860 = vsel %vm8848, %v8795, %v8303
  %v8861 = vsel %vm8848, %v8796, %v8305
  %v8862 = vsel %vm8848, %v8797, %v8307
  %v8863 = vsel %vm8848, %v8798, %v8309
  %v8864 = vsel %vm8848, %v8799, %v8311
  %v8865 = vsel %vm8848, %v8800, %v8313
  %v8866 = vsel %vm8848, %v8801, %v8315
  %v8867 = vsel %vm8848, %v8802, %v8317
  %v8868 = vsel %vm8848, %v8803, %v8319
  %v8869 = vsel %vm8848, %v8804, %v8321
  %v8870 = vsel %vm8848, %v8805, %v8323
  %v8871 = vsel %vm8848, %v8806, %v8325
  %v8872 = vsel %vm8848, %v8807, %v8327
  %v8873 = vsel %vm8848, %v8808, %v8329
  %v8874 = vsel %vm8848, %v8809, %v8331
  %v8875 = vsel %vm8848, %v8810, %v8333
  %v8876 = vsel %vm8848, %v8811, %v8335
  %v8877 = vsel %vm8848, %v8812, %v8337
  %v8878 = vsel %vm8848, %v8813, %v8339
  %v8879 = vsel %vm8848, %v8814, %v8341
  %v8880 = vsel %vm8848, %v8815, %v8343
  %v8881 = vsel %vm8848, %v8816, %v8345
  %v8882 = vsel %vm8848, %v8817, %v8347
  %v8883 = vsel %vm8848, %v8818, %v8349
  %v8884 = vsel %vm8848, %v8819, %v8351
  %v8885 = vsel %vm8848, %v8820, %v8353
  %v8886 = vsel %vm8848, %v8821, %v8355
  %v8887 = vsel %vm8848, %v8822, %v8357
  %v8888 = vsel %vm8848, %v8823, %v8359
  %v8889 = vsel %vm8848, %v8824, %v8361
  %v8890 = vsel %vm8848, %v8825, %v8363
  %v8891 = vsel %vm8848, %v8826, %v8365
  %v8892 = vsel %vm8848, %v8827, %v8367
  %v8893 = vsel %vm8848, %v8828, %v8369
  %v8894 = vsel %vm8848, %v8829, %v8371
  %v8895 = vsel %vm8848, %v8830, %v8373
  %v8896 = vsel %vm8848, %v8831, %v8375
  %v8897 = vsel %vm8848, %v8832, %v8377
  %v8898 = vsel %vm8848, %v8833, %v8379
  %v8899 = vsel %vm8848, %v8834, %v8381
  %v8900 = vsel %vm8848, %v8835, %v8383
  %v8901 = vsel %vm8848, %v8836, %v8385
  %v8902 = vsel %vm8848, %v8837, %v8387
  %v8903 = vsel %vm8848, %v8838, %v8389
  %v8904 = vsel %vm8848, %v8839, %v8391
  %v8905 = vsel %vm8848, %v8840, %v8393
  %v8906 = vsel %vm8848, %v8841, %v8395
  %v8907 = vsel %vm8848, %v8842, %v8397
  %v8908 = vsel %vm8848, %v8843, %v8399
  %v8909 = vsel %vm8848, %v8844, %v8401
  %v8910 = vsel %vm8848, %v8845, %v8403
  %v8911 = vsel %vm8848, %v8846, %v8341
  %v8912 = vsel %vm8848, %v8847, %v8343
  %v8913 = vld [vmem:[%s12] sm:$0x1]
  %v8915 = vperm.slane %v8913, 0
  %v8917 = vsel %vm5754, %v7165, 0
  %v8919 = vsel %vm5754, %v7167, 0
  %v8921 = vsel %vm5754, %v7170, 0
  %v8923 = vsel %vm5754, %v7172, 0
  %v8925 = vsel %vm5754, %v7175, 0
  %v8927 = vsel %vm5754, %v7177, 0
  %v8929 = vsel %vm5754, %v7180, 0
  %v8931 = vsel %vm5754, %v7182, 0
  %v8933 = vsel %vm5754, %v7185, 0
  %v8935 = vsel %vm5754, %v7187, 0
  %v8937 = vsel %vm5754, %v7190, 0
  %v8939 = vsel %vm5754, %v7192, 0
  %v8941 = vsel %vm5754, %v7195, 0
  %v8943 = vsel %vm5754, %v7197, 0
  %v8945 = vsel %vm5754, %v7200, 0
  %v8947 = vsel %vm5754, %v7202, 0
  %v8949 = vsel %vm5754, %v7205, 0
  %v8951 = vsel %vm5754, %v7207, 0
  %v8953 = vsel %vm5754, %v7210, 0
  %v8955 = vsel %vm5754, %v7212, 0
  %v8957 = vsel %vm5754, %v7215, 0
  %v8959 = vsel %vm5754, %v7217, 0
  %v8961 = vsel %vm5754, %v7220, 0
  %v8963 = vsel %vm5754, %v7222, 0
  %v8965 = vsel %vm5754, %v7225, 0
  %v8967 = vsel %vm5754, %v7227, 0
  %v8969 = vsel %vm5754, %v7230, 0
  %v8971 = vsel %vm5754, %v7232, 0
  %v8973 = vsel %vm5754, %v7894, 0
  %v8975 = vsel %vm5754, %v7896, 0
  %v8977 = vsel %vm5754, %v3442, 0
  %v8979 = vsel %vm5754, %v3443, 0
  %v8981 = vsel %vm5754, %v7240, 0
  %v8983 = vsel %vm5754, %v7242, 0
  %v8985 = vsel %vm5754, %v7245, 0
  %v8987 = vsel %vm5754, %v7247, 0
  %v8989 = vsel %vm5754, %v7250, 0
  %v8991 = vsel %vm5754, %v7252, 0
  %v8993 = vsel %vm5754, %v7255, 0
  %v8995 = vsel %vm5754, %v7257, 0
  %v8997 = vsel %vm5754, %v7260, 0
  %v8999 = vsel %vm5754, %v7262, 0
  %v9001 = vsel %vm5754, %v7265, 0
  %v9003 = vsel %vm5754, %v7267, 0
  %v9005 = vsel %vm5754, %v7270, 0
  %v9007 = vsel %vm5754, %v7272, 0
  %v9009 = vsel %vm5754, %v7275, 0
  %v9011 = vsel %vm5754, %v7277, 0
  %v9013 = vsel %vm5754, %v7280, 0
  %v9015 = vsel %vm5754, %v7282, 0
  %v9017 = vsel %vm5754, %v7285, 0
  %v9019 = vsel %vm5754, %v7287, 0
  %v9021 = vsel %vm5754, %v7290, 0
  %v9023 = vsel %vm5754, %v7292, 0
  %v9025 = vsel %vm5754, %v7295, 0
  %v9027 = vsel %vm5754, %v7297, 0
  %v9029 = vsel %vm5754, %v7300, 0
  %v9031 = vsel %vm5754, %v7302, 0
  %v9033 = vsel %vm5754, %v7305, 0
  %v9035 = vsel %vm5754, %v7307, 0
  %v9037 = vsel %vm5754, %v7899, 0
  %v9039 = vsel %vm5754, %v7901, 0
  %9041 = vmatpush.msra.mxu0 %v6441
  %9042 = vmatpush.msra.mxu0 %v6440
  %9043 = vmatpush.msra.mxu0 %v6439
  %9044 = vmatpush.msra.mxu0 %v6438
  %9045 = vmatpush.msra.mxu0 %v6437
  %9046 = vmatpush.msra.mxu0 %v6436
  %9047 = vmatpush.msra.mxu0 %v6435
  %9048 = vmatpush.msra.mxu0 %v6434
  %9049 = vmatpush.msra.mxu0 %v6433
  %9050 = vmatpush.msra.mxu0 %v6432
  %9051 = vmatpush.msra.mxu0 %v6431
  %9052 = vmatpush.msra.mxu0 %v6430
  %9053 = vmatpush.msra.mxu0 %v6429
  %9054 = vmatpush.msra.mxu0 %v6428
  %9055 = vmatpush.msra.mxu0 %v6427
  %9056 = vmatpush.msra.mxu0 %v6426
  %9057 = vmatmul.f32.gmra.mxu0 %v8849
  %v9058 = vpop.f32.mrf.mxu0
  %v9059 = vadd.f32 %v8915, %v9058
  %9060 = vmatmul.f32.gmra.mxu0 %v8850
  %v9061 = vpop.f32.mrf.mxu0
  %v9062 = vadd.f32 %v8915, %v9061
  %9063 = vmatmul.f32.gmra.mxu0 %v8851
  %v9064 = vpop.f32.mrf.mxu0
  %v9065 = vadd.f32 %v8915, %v9064
  %9066 = vmatmul.f32.gmra.mxu0 %v8852
  %v9067 = vpop.f32.mrf.mxu0
  %v9068 = vadd.f32 %v8915, %v9067
  %9069 = vmatmul.f32.gmra.mxu0 %v8853
  %v9070 = vpop.f32.mrf.mxu0
  %v9071 = vadd.f32 %v8915, %v9070
  %9072 = vmatmul.f32.gmra.mxu0 %v8854
  %v9073 = vpop.f32.mrf.mxu0
  %v9074 = vadd.f32 %v8915, %v9073
  %9075 = vmatmul.f32.gmra.mxu0 %v8855
  %v9076 = vpop.f32.mrf.mxu0
  %v9077 = vadd.f32 %v8915, %v9076
  %9078 = vmatmul.f32.gmra.mxu0 %v8856
  %v9079 = vpop.f32.mrf.mxu0
  %v9080 = vadd.f32 %v8915, %v9079
  %9081 = vmatmul.f32.gmra.mxu0 %v8857
  %v9082 = vpop.f32.mrf.mxu0
  %v9083 = vadd.f32 %v8915, %v9082
  %9084 = vmatmul.f32.gmra.mxu0 %v8858
  %v9085 = vpop.f32.mrf.mxu0
  %v9086 = vadd.f32 %v8915, %v9085
  %9087 = vmatmul.f32.gmra.mxu0 %v8859
  %v9088 = vpop.f32.mrf.mxu0
  %v9089 = vadd.f32 %v8915, %v9088
  %9090 = vmatmul.f32.gmra.mxu0 %v8860
  %v9091 = vpop.f32.mrf.mxu0
  %v9092 = vadd.f32 %v8915, %v9091
  %9093 = vmatmul.f32.gmra.mxu0 %v8861
  %v9094 = vpop.f32.mrf.mxu0
  %v9095 = vadd.f32 %v8915, %v9094
  %9096 = vmatmul.f32.gmra.mxu0 %v8862
  %v9097 = vpop.f32.mrf.mxu0
  %v9098 = vadd.f32 %v8915, %v9097
  %9099 = vmatmul.f32.gmra.mxu0 %v8863
  %v9100 = vpop.f32.mrf.mxu0
  %v9101 = vadd.f32 %v8915, %v9100
  %9102 = vmatmul.f32.gmra.mxu0 %v8864
  %v9103 = vpop.f32.mrf.mxu0
  %v9104 = vadd.f32 %v8915, %v9103
  %9105 = vmatmul.f32.gmra.mxu0 %v8865
  %v9106 = vpop.f32.mrf.mxu0
  %v9107 = vadd.f32 %v8915, %v9106
  %9108 = vmatmul.f32.gmra.mxu0 %v8866
  %v9109 = vpop.f32.mrf.mxu0
  %v9110 = vadd.f32 %v8915, %v9109
  %9111 = vmatmul.f32.gmra.mxu0 %v8867
  %v9112 = vpop.f32.mrf.mxu0
  %v9113 = vadd.f32 %v8915, %v9112
  %9114 = vmatmul.f32.gmra.mxu0 %v8868
  %v9115 = vpop.f32.mrf.mxu0
  %v9116 = vadd.f32 %v8915, %v9115
  %9117 = vmatmul.f32.gmra.mxu0 %v8869
  %v9118 = vpop.f32.mrf.mxu0
  %v9119 = vadd.f32 %v8915, %v9118
  %9120 = vmatmul.f32.gmra.mxu0 %v8870
  %v9121 = vpop.f32.mrf.mxu0
  %v9122 = vadd.f32 %v8915, %v9121
  %9123 = vmatmul.f32.gmra.mxu0 %v8871
  %v9124 = vpop.f32.mrf.mxu0
  %v9125 = vadd.f32 %v8915, %v9124
  %9126 = vmatmul.f32.gmra.mxu0 %v8872
  %v9127 = vpop.f32.mrf.mxu0
  %v9128 = vadd.f32 %v8915, %v9127
  %9129 = vmatmul.f32.gmra.mxu0 %v8873
  %v9130 = vpop.f32.mrf.mxu0
  %v9131 = vadd.f32 %v8915, %v9130
  %9132 = vmatmul.f32.gmra.mxu0 %v8874
  %v9133 = vpop.f32.mrf.mxu0
  %v9134 = vadd.f32 %v8915, %v9133
  %9135 = vmatmul.f32.gmra.mxu0 %v8875
  %v9136 = vpop.f32.mrf.mxu0
  %v9137 = vadd.f32 %v8915, %v9136
  %9138 = vmatmul.f32.gmra.mxu0 %v8876
  %v9139 = vpop.f32.mrf.mxu0
  %v9140 = vadd.f32 %v8915, %v9139
  %9141 = vmatmul.f32.gmra.mxu0 %v8877
  %v9142 = vpop.f32.mrf.mxu0
  %v9143 = vadd.f32 %v8915, %v9142
  %9144 = vmatmul.f32.gmra.mxu0 %v8878
  %v9145 = vpop.f32.mrf.mxu0
  %v9146 = vadd.f32 %v8915, %v9145
  %9147 = vmatmul.f32.gmra.mxu0 %v8879
  %v9148 = vpop.f32.mrf.mxu0
  %v9149 = vadd.f32 %v8915, %v9148
  %9150 = vmatmul.f32.gmra.mxu0 %v8880
  %v9151 = vpop.f32.mrf.mxu0
  %v9152 = vadd.f32 %v8915, %v9151
  %9153 = vmatmul.f32.gmra.mxu0 %v8881
  %v9154 = vpop.f32.mrf.mxu0
  %v9155 = vadd.f32 %v8915, %v9154
  %9156 = vmatmul.f32.gmra.mxu0 %v8882
  %v9157 = vpop.f32.mrf.mxu0
  %v9158 = vadd.f32 %v8915, %v9157
  %9159 = vmatmul.f32.gmra.mxu0 %v8883
  %v9160 = vpop.f32.mrf.mxu0
  %v9161 = vadd.f32 %v8915, %v9160
  %9162 = vmatmul.f32.gmra.mxu0 %v8884
  %v9163 = vpop.f32.mrf.mxu0
  %v9164 = vadd.f32 %v8915, %v9163
  %9165 = vmatmul.f32.gmra.mxu0 %v8885
  %v9166 = vpop.f32.mrf.mxu0
  %v9167 = vadd.f32 %v8915, %v9166
  %9168 = vmatmul.f32.gmra.mxu0 %v8886
  %v9169 = vpop.f32.mrf.mxu0
  %v9170 = vadd.f32 %v8915, %v9169
  %9171 = vmatmul.f32.gmra.mxu0 %v8887
  %v9172 = vpop.f32.mrf.mxu0
  %v9173 = vadd.f32 %v8915, %v9172
  %9174 = vmatmul.f32.gmra.mxu0 %v8888
  %v9175 = vpop.f32.mrf.mxu0
  %v9176 = vadd.f32 %v8915, %v9175
  %9177 = vmatmul.f32.gmra.mxu0 %v8889
  %v9178 = vpop.f32.mrf.mxu0
  %v9179 = vadd.f32 %v8915, %v9178
  %9180 = vmatmul.f32.gmra.mxu0 %v8890
  %v9181 = vpop.f32.mrf.mxu0
  %v9182 = vadd.f32 %v8915, %v9181
  %9183 = vmatmul.f32.gmra.mxu0 %v8891
  %v9184 = vpop.f32.mrf.mxu0
  %v9185 = vadd.f32 %v8915, %v9184
  %9186 = vmatmul.f32.gmra.mxu0 %v8892
  %v9187 = vpop.f32.mrf.mxu0
  %v9188 = vadd.f32 %v8915, %v9187
  %9189 = vmatmul.f32.gmra.mxu0 %v8893
  %v9190 = vpop.f32.mrf.mxu0
  %v9191 = vadd.f32 %v8915, %v9190
  %9192 = vmatmul.f32.gmra.mxu0 %v8894
  %v9193 = vpop.f32.mrf.mxu0
  %v9194 = vadd.f32 %v8915, %v9193
  %9195 = vmatmul.f32.gmra.mxu0 %v8895
  %v9196 = vpop.f32.mrf.mxu0
  %v9197 = vadd.f32 %v8915, %v9196
  %9198 = vmatmul.f32.gmra.mxu0 %v8896
  %v9199 = vpop.f32.mrf.mxu0
  %v9200 = vadd.f32 %v8915, %v9199
  %9201 = vmatmul.f32.gmra.mxu0 %v8897
  %v9202 = vpop.f32.mrf.mxu0
  %v9203 = vadd.f32 %v8915, %v9202
  %9204 = vmatmul.f32.gmra.mxu0 %v8898
  %v9205 = vpop.f32.mrf.mxu0
  %v9206 = vadd.f32 %v8915, %v9205
  %9207 = vmatmul.f32.gmra.mxu0 %v8899
  %v9208 = vpop.f32.mrf.mxu0
  %v9209 = vadd.f32 %v8915, %v9208
  %9210 = vmatmul.f32.gmra.mxu0 %v8900
  %v9211 = vpop.f32.mrf.mxu0
  %v9212 = vadd.f32 %v8915, %v9211
  %9213 = vmatmul.f32.gmra.mxu0 %v8901
  %v9214 = vpop.f32.mrf.mxu0
  %v9215 = vadd.f32 %v8915, %v9214
  %9216 = vmatmul.f32.gmra.mxu0 %v8902
  %v9217 = vpop.f32.mrf.mxu0
  %v9218 = vadd.f32 %v8915, %v9217
  %9219 = vmatmul.f32.gmra.mxu0 %v8903
  %v9220 = vpop.f32.mrf.mxu0
  %v9221 = vadd.f32 %v8915, %v9220
  %9222 = vmatmul.f32.gmra.mxu0 %v8904
  %v9223 = vpop.f32.mrf.mxu0
  %v9224 = vadd.f32 %v8915, %v9223
  %9225 = vmatmul.f32.gmra.mxu0 %v8905
  %v9226 = vpop.f32.mrf.mxu0
  %v9227 = vadd.f32 %v8915, %v9226
  %9228 = vmatmul.f32.gmra.mxu0 %v8906
  %v9229 = vpop.f32.mrf.mxu0
  %v9230 = vadd.f32 %v8915, %v9229
  %9231 = vmatmul.f32.gmra.mxu0 %v8907
  %v9232 = vpop.f32.mrf.mxu0
  %v9233 = vadd.f32 %v8915, %v9232
  %9234 = vmatmul.f32.gmra.mxu0 %v8908
  %v9235 = vpop.f32.mrf.mxu0
  %v9236 = vadd.f32 %v8915, %v9235
  %9237 = vmatmul.f32.gmra.mxu0 %v8909
  %v9238 = vpop.f32.mrf.mxu0
  %v9239 = vadd.f32 %v8915, %v9238
  %9240 = vmatmul.f32.gmra.mxu0 %v8910
  %v9241 = vpop.f32.mrf.mxu0
  %v9242 = vadd.f32 %v8915, %v9241
  %9243 = vmatmul.f32.gmra.mxu0 %v8911
  %v9244 = vpop.f32.mrf.mxu0
  %v9245 = vadd.f32 %v8915, %v9244
  %9246 = vmatmul.f32.gmra.mxu0 %v8912
  %v9247 = vpop.f32.mrf.mxu0
  %v9248 = vadd.f32 %v8915, %v9247
  %9249 = vdwg.mxu0
  %9250 = vmatpush.msra.mxu0 0.0
  %9251 = vmatpush.msra.mxu0 0.0
  %9252 = vmatpush.msra.mxu0 0.0
  %9253 = vmatpush.msra.mxu0 0.0
  %9254 = vmatpush.msra.mxu0 0.0
  %9255 = vmatpush.msra.mxu0 0.0
  %9256 = vmatpush.msra.mxu0 0.0
  %9257 = vmatpush.msra.mxu0 0.0
  %9258 = vmatpush.msra.mxu0 0.0
  %9259 = vmatpush.msra.mxu0 0.0
  %9260 = vmatpush.msra.mxu0 0.0
  %9261 = vmatpush.msra.mxu0 0.0
  %9262 = vmatpush.msra.mxu0 0.0
  %9263 = vmatpush.msra.mxu0 0.0
  %9264 = vmatpush.msra.mxu0 %v6443
  %9265 = vmatpush.msra.mxu0 %v6442
  %9266 = vmatmul.f32.gmra.mxu0 %v8917
  %v9267 = vpop.f32.mrf.mxu0
  %v9268 = vadd.f32 %v9059, %v9267
  %9269 = vmatmul.f32.gmra.mxu0 %v8919
  %v9270 = vpop.f32.mrf.mxu0
  %v9271 = vadd.f32 %v9062, %v9270
  %9272 = vmatmul.f32.gmra.mxu0 %v8921
  %v9273 = vpop.f32.mrf.mxu0
  %v9274 = vadd.f32 %v9065, %v9273
  %9275 = vmatmul.f32.gmra.mxu0 %v8923
  %v9276 = vpop.f32.mrf.mxu0
  %v9277 = vadd.f32 %v9068, %v9276
  %9278 = vmatmul.f32.gmra.mxu0 %v8925
  %v9279 = vpop.f32.mrf.mxu0
  %v9280 = vadd.f32 %v9071, %v9279
  %9281 = vmatmul.f32.gmra.mxu0 %v8927
  %v9282 = vpop.f32.mrf.mxu0
  %v9283 = vadd.f32 %v9074, %v9282
  %9284 = vmatmul.f32.gmra.mxu0 %v8929
  %v9285 = vpop.f32.mrf.mxu0
  %v9286 = vadd.f32 %v9077, %v9285
  %9287 = vmatmul.f32.gmra.mxu0 %v8931
  %v9288 = vpop.f32.mrf.mxu0
  %v9289 = vadd.f32 %v9080, %v9288
  %9290 = vmatmul.f32.gmra.mxu0 %v8933
  %v9291 = vpop.f32.mrf.mxu0
  %v9292 = vadd.f32 %v9083, %v9291
  %9293 = vmatmul.f32.gmra.mxu0 %v8935
  %v9294 = vpop.f32.mrf.mxu0
  %v9295 = vadd.f32 %v9086, %v9294
  %9296 = vmatmul.f32.gmra.mxu0 %v8937
  %v9297 = vpop.f32.mrf.mxu0
  %v9298 = vadd.f32 %v9089, %v9297
  %9299 = vmatmul.f32.gmra.mxu0 %v8939
  %v9300 = vpop.f32.mrf.mxu0
  %v9301 = vadd.f32 %v9092, %v9300
  %9302 = vmatmul.f32.gmra.mxu0 %v8941
  %v9303 = vpop.f32.mrf.mxu0
  %v9304 = vadd.f32 %v9095, %v9303
  %9305 = vmatmul.f32.gmra.mxu0 %v8943
  %v9306 = vpop.f32.mrf.mxu0
  %v9307 = vadd.f32 %v9098, %v9306
  %9308 = vmatmul.f32.gmra.mxu0 %v8945
  %v9309 = vpop.f32.mrf.mxu0
  %v9310 = vadd.f32 %v9101, %v9309
  %9311 = vmatmul.f32.gmra.mxu0 %v8947
  %v9312 = vpop.f32.mrf.mxu0
  %v9313 = vadd.f32 %v9104, %v9312
  %9314 = vmatmul.f32.gmra.mxu0 %v8949
  %v9315 = vpop.f32.mrf.mxu0
  %v9316 = vadd.f32 %v9107, %v9315
  %9317 = vmatmul.f32.gmra.mxu0 %v8951
  %v9318 = vpop.f32.mrf.mxu0
  %v9319 = vadd.f32 %v9110, %v9318
  %9320 = vmatmul.f32.gmra.mxu0 %v8953
  %v9321 = vpop.f32.mrf.mxu0
  %v9322 = vadd.f32 %v9113, %v9321
  %9323 = vmatmul.f32.gmra.mxu0 %v8955
  %v9324 = vpop.f32.mrf.mxu0
  %v9325 = vadd.f32 %v9116, %v9324
  %9326 = vmatmul.f32.gmra.mxu0 %v8957
  %v9327 = vpop.f32.mrf.mxu0
  %v9328 = vadd.f32 %v9119, %v9327
  %9329 = vmatmul.f32.gmra.mxu0 %v8959
  %v9330 = vpop.f32.mrf.mxu0
  %v9331 = vadd.f32 %v9122, %v9330
  %9332 = vmatmul.f32.gmra.mxu0 %v8961
  %v9333 = vpop.f32.mrf.mxu0
  %v9334 = vadd.f32 %v9125, %v9333
  %9335 = vmatmul.f32.gmra.mxu0 %v8963
  %v9336 = vpop.f32.mrf.mxu0
  %v9337 = vadd.f32 %v9128, %v9336
  %9338 = vmatmul.f32.gmra.mxu0 %v8965
  %v9339 = vpop.f32.mrf.mxu0
  %v9340 = vadd.f32 %v9131, %v9339
  %9341 = vmatmul.f32.gmra.mxu0 %v8967
  %v9342 = vpop.f32.mrf.mxu0
  %v9343 = vadd.f32 %v9134, %v9342
  %9344 = vmatmul.f32.gmra.mxu0 %v8969
  %v9345 = vpop.f32.mrf.mxu0
  %v9346 = vadd.f32 %v9137, %v9345
  %9347 = vmatmul.f32.gmra.mxu0 %v8971
  %v9348 = vpop.f32.mrf.mxu0
  %v9349 = vadd.f32 %v9140, %v9348
  %9350 = vmatmul.f32.gmra.mxu0 %v8973
  %v9351 = vpop.f32.mrf.mxu0
  %v9352 = vadd.f32 %v9143, %v9351
  %9353 = vmatmul.f32.gmra.mxu0 %v8975
  %v9354 = vpop.f32.mrf.mxu0
  %v9355 = vadd.f32 %v9146, %v9354
  %9356 = vmatmul.f32.gmra.mxu0 %v8977
  %v9357 = vpop.f32.mrf.mxu0
  %v9358 = vadd.f32 %v9149, %v9357
  %9359 = vmatmul.f32.gmra.mxu0 %v8979
  %v9360 = vpop.f32.mrf.mxu0
  %v9361 = vadd.f32 %v9152, %v9360
  %9362 = vmatmul.f32.gmra.mxu0 %v8981
  %v9363 = vpop.f32.mrf.mxu0
  %v9364 = vadd.f32 %v9155, %v9363
  %9365 = vmatmul.f32.gmra.mxu0 %v8983
  %v9366 = vpop.f32.mrf.mxu0
  %v9367 = vadd.f32 %v9158, %v9366
  %9368 = vmatmul.f32.gmra.mxu0 %v8985
  %v9369 = vpop.f32.mrf.mxu0
  %v9370 = vadd.f32 %v9161, %v9369
  %9371 = vmatmul.f32.gmra.mxu0 %v8987
  %v9372 = vpop.f32.mrf.mxu0
  %v9373 = vadd.f32 %v9164, %v9372
  %9374 = vmatmul.f32.gmra.mxu0 %v8989
  %v9375 = vpop.f32.mrf.mxu0
  %v9376 = vadd.f32 %v9167, %v9375
  %9377 = vmatmul.f32.gmra.mxu0 %v8991
  %v9378 = vpop.f32.mrf.mxu0
  %v9379 = vadd.f32 %v9170, %v9378
  %9380 = vmatmul.f32.gmra.mxu0 %v8993
  %v9381 = vpop.f32.mrf.mxu0
  %v9382 = vadd.f32 %v9173, %v9381
  %9383 = vmatmul.f32.gmra.mxu0 %v8995
  %v9384 = vpop.f32.mrf.mxu0
  %v9385 = vadd.f32 %v9176, %v9384
  %9386 = vmatmul.f32.gmra.mxu0 %v8997
  %v9387 = vpop.f32.mrf.mxu0
  %v9388 = vadd.f32 %v9179, %v9387
  %9389 = vmatmul.f32.gmra.mxu0 %v8999
  %v9390 = vpop.f32.mrf.mxu0
  %v9391 = vadd.f32 %v9182, %v9390
  %9392 = vmatmul.f32.gmra.mxu0 %v9001
  %v9393 = vpop.f32.mrf.mxu0
  %v9394 = vadd.f32 %v9185, %v9393
  %9395 = vmatmul.f32.gmra.mxu0 %v9003
  %v9396 = vpop.f32.mrf.mxu0
  %v9397 = vadd.f32 %v9188, %v9396
  %9398 = vmatmul.f32.gmra.mxu0 %v9005
  %v9399 = vpop.f32.mrf.mxu0
  %v9400 = vadd.f32 %v9191, %v9399
  %9401 = vmatmul.f32.gmra.mxu0 %v9007
  %v9402 = vpop.f32.mrf.mxu0
  %v9403 = vadd.f32 %v9194, %v9402
  %9404 = vmatmul.f32.gmra.mxu0 %v9009
  %v9405 = vpop.f32.mrf.mxu0
  %v9406 = vadd.f32 %v9197, %v9405
  %9407 = vmatmul.f32.gmra.mxu0 %v9011
  %v9408 = vpop.f32.mrf.mxu0
  %v9409 = vadd.f32 %v9200, %v9408
  %9410 = vmatmul.f32.gmra.mxu0 %v9013
  %v9411 = vpop.f32.mrf.mxu0
  %v9412 = vadd.f32 %v9203, %v9411
  %9413 = vmatmul.f32.gmra.mxu0 %v9015
  %v9414 = vpop.f32.mrf.mxu0
  %v9415 = vadd.f32 %v9206, %v9414
  %9416 = vmatmul.f32.gmra.mxu0 %v9017
  %v9417 = vpop.f32.mrf.mxu0
  %v9418 = vadd.f32 %v9209, %v9417
  %9419 = vmatmul.f32.gmra.mxu0 %v9019
  %v9420 = vpop.f32.mrf.mxu0
  %v9421 = vadd.f32 %v9212, %v9420
  %9422 = vmatmul.f32.gmra.mxu0 %v9021
  %v9423 = vpop.f32.mrf.mxu0
  %v9424 = vadd.f32 %v9215, %v9423
  %9425 = vmatmul.f32.gmra.mxu0 %v9023
  %v9426 = vpop.f32.mrf.mxu0
  %v9427 = vadd.f32 %v9218, %v9426
  %9428 = vmatmul.f32.gmra.mxu0 %v9025
  %v9429 = vpop.f32.mrf.mxu0
  %v9430 = vadd.f32 %v9221, %v9429
  %9431 = vmatmul.f32.gmra.mxu0 %v9027
  %v9432 = vpop.f32.mrf.mxu0
  %v9433 = vadd.f32 %v9224, %v9432
  %9434 = vmatmul.f32.gmra.mxu0 %v9029
  %v9435 = vpop.f32.mrf.mxu0
  %v9436 = vadd.f32 %v9227, %v9435
  %9437 = vmatmul.f32.gmra.mxu0 %v9031
  %v9438 = vpop.f32.mrf.mxu0
  %v9439 = vadd.f32 %v9230, %v9438
  %9440 = vmatmul.f32.gmra.mxu0 %v9033
  %v9441 = vpop.f32.mrf.mxu0
  %v9442 = vadd.f32 %v9233, %v9441
  %9443 = vmatmul.f32.gmra.mxu0 %v9035
  %v9444 = vpop.f32.mrf.mxu0
  %v9445 = vadd.f32 %v9236, %v9444
  %9446 = vmatmul.f32.gmra.mxu0 %v9037
  %v9447 = vpop.f32.mrf.mxu0
  %v9448 = vadd.f32 %v9239, %v9447
  %9449 = vmatmul.f32.gmra.mxu0 %v9039
  %v9450 = vpop.f32.mrf.mxu0
  %v9451 = vadd.f32 %v9242, %v9450
  %9452 = vmatmul.f32.gmra.mxu0 %v8977
  %v9453 = vpop.f32.mrf.mxu0
  %v9454 = vadd.f32 %v9245, %v9453
  %9455 = vmatmul.f32.gmra.mxu0 %v8979
  %v9456 = vpop.f32.mrf.mxu0
  %v9457 = vadd.f32 %v9248, %v9456
  %9458 = vdwg.mxu0
  %9459 = vxpose.xlu0.b32.start [1/16] %v9268, 128
  %9460 = vxpose.xlu0.b32.cont [2/16] %v9271, 128
  %9461 = vxpose.xlu0.b32.cont [3/16] %v9274, 128
  %9462 = vxpose.xlu0.b32.cont [4/16] %v9277, 128
  %9463 = vxpose.xlu0.b32.cont [5/16] %v9280, 128
  %9464 = vxpose.xlu0.b32.cont [6/16] %v9283, 128
  %9465 = vxpose.xlu0.b32.cont [7/16] %v9286, 128
  %9466 = vxpose.xlu0.b32.cont [8/16] %v9289, 128
  %9467 = vxpose.xlu0.b32.cont [9/16] %v9292, 128
  %9468 = vxpose.xlu0.b32.cont [10/16] %v9295, 128
  %9469 = vxpose.xlu0.b32.cont [11/16] %v9298, 128
  %9470 = vxpose.xlu0.b32.cont [12/16] %v9301, 128
  %9471 = vxpose.xlu0.b32.cont [13/16] %v9304, 128
  %9472 = vxpose.xlu0.b32.cont [14/16] %v9307, 128
  %9473 = vxpose.xlu0.b32.cont [15/16] %v9310, 128
  %9474 = vxpose.xlu0.b32.end [16/16] %v9313, 128
  %v9475 = vpop.trf.xlu0
  %v9476 = vpop.trf.xlu0
  %v9477 = vpop.trf.xlu0
  %v9478 = vpop.trf.xlu0
  %v9479 = vpop.trf.xlu0
  %v9480 = vpop.trf.xlu0
  %v9481 = vpop.trf.xlu0
  %v9482 = vpop.trf.xlu0
  %v9483 = vpop.trf.xlu0
  %v9484 = vpop.trf.xlu0
  %v9485 = vpop.trf.xlu0
  %v9486 = vpop.trf.xlu0
  %v9487 = vpop.trf.xlu0
  %v9488 = vpop.trf.xlu0
  %v9489 = vpop.trf.xlu0
  %v9490 = vpop.trf.xlu0
  %9491 = vxpose.xlu0.b32.start [1/16] %v9316, 128
  %9492 = vxpose.xlu0.b32.cont [2/16] %v9319, 128
  %9493 = vxpose.xlu0.b32.cont [3/16] %v9322, 128
  %9494 = vxpose.xlu0.b32.cont [4/16] %v9325, 128
  %9495 = vxpose.xlu0.b32.cont [5/16] %v9328, 128
  %9496 = vxpose.xlu0.b32.cont [6/16] %v9331, 128
  %9497 = vxpose.xlu0.b32.cont [7/16] %v9334, 128
  %9498 = vxpose.xlu0.b32.cont [8/16] %v9337, 128
  %9499 = vxpose.xlu0.b32.cont [9/16] %v9340, 128
  %9500 = vxpose.xlu0.b32.cont [10/16] %v9343, 128
  %9501 = vxpose.xlu0.b32.cont [11/16] %v9346, 128
  %9502 = vxpose.xlu0.b32.cont [12/16] %v9349, 128
  %9503 = vxpose.xlu0.b32.cont [13/16] %v9352, 128
  %9504 = vxpose.xlu0.b32.cont [14/16] %v9355, 128
  %9505 = vxpose.xlu0.b32.cont [15/16] %v9358, 128
  %9506 = vxpose.xlu0.b32.end [16/16] %v9361, 128
  %v9507 = vpop.trf.xlu0
  %v9508 = vpop.trf.xlu0
  %v9509 = vpop.trf.xlu0
  %v9510 = vpop.trf.xlu0
  %v9511 = vpop.trf.xlu0
  %v9512 = vpop.trf.xlu0
  %v9513 = vpop.trf.xlu0
  %v9514 = vpop.trf.xlu0
  %v9515 = vpop.trf.xlu0
  %v9516 = vpop.trf.xlu0
  %v9517 = vpop.trf.xlu0
  %v9518 = vpop.trf.xlu0
  %v9519 = vpop.trf.xlu0
  %v9520 = vpop.trf.xlu0
  %v9521 = vpop.trf.xlu0
  %v9522 = vpop.trf.xlu0
  %9523 = vxpose.xlu0.b32.start [1/16] %v9364, 128
  %9524 = vxpose.xlu0.b32.cont [2/16] %v9367, 128
  %9525 = vxpose.xlu0.b32.cont [3/16] %v9370, 128
  %9526 = vxpose.xlu0.b32.cont [4/16] %v9373, 128
  %9527 = vxpose.xlu0.b32.cont [5/16] %v9376, 128
  %9528 = vxpose.xlu0.b32.cont [6/16] %v9379, 128
  %9529 = vxpose.xlu0.b32.cont [7/16] %v9382, 128
  %9530 = vxpose.xlu0.b32.cont [8/16] %v9385, 128
  %9531 = vxpose.xlu0.b32.cont [9/16] %v9388, 128
  %9532 = vxpose.xlu0.b32.cont [10/16] %v9391, 128
  %9533 = vxpose.xlu0.b32.cont [11/16] %v9394, 128
  %9534 = vxpose.xlu0.b32.cont [12/16] %v9397, 128
  %9535 = vxpose.xlu0.b32.cont [13/16] %v9400, 128
  %9536 = vxpose.xlu0.b32.cont [14/16] %v9403, 128
  %9537 = vxpose.xlu0.b32.cont [15/16] %v9406, 128
  %9538 = vxpose.xlu0.b32.end [16/16] %v9409, 128
  %v9539 = vpop.trf.xlu0
  %v9540 = vpop.trf.xlu0
  %v9541 = vpop.trf.xlu0
  %v9542 = vpop.trf.xlu0
  %v9543 = vpop.trf.xlu0
  %v9544 = vpop.trf.xlu0
  %v9545 = vpop.trf.xlu0
  %v9546 = vpop.trf.xlu0
  %v9547 = vpop.trf.xlu0
  %v9548 = vpop.trf.xlu0
  %v9549 = vpop.trf.xlu0
  %v9550 = vpop.trf.xlu0
  %v9551 = vpop.trf.xlu0
  %v9552 = vpop.trf.xlu0
  %v9553 = vpop.trf.xlu0
  %v9554 = vpop.trf.xlu0
  %9555 = vxpose.xlu0.b32.start [1/16] %v9412, 128
  %9556 = vxpose.xlu0.b32.cont [2/16] %v9415, 128
  %9557 = vxpose.xlu0.b32.cont [3/16] %v9418, 128
  %9558 = vxpose.xlu0.b32.cont [4/16] %v9421, 128
  %9559 = vxpose.xlu0.b32.cont [5/16] %v9424, 128
  %9560 = vxpose.xlu0.b32.cont [6/16] %v9427, 128
  %9561 = vxpose.xlu0.b32.cont [7/16] %v9430, 128
  %9562 = vxpose.xlu0.b32.cont [8/16] %v9433, 128
  %9563 = vxpose.xlu0.b32.cont [9/16] %v9436, 128
  %9564 = vxpose.xlu0.b32.cont [10/16] %v9439, 128
  %9565 = vxpose.xlu0.b32.cont [11/16] %v9442, 128
  %9566 = vxpose.xlu0.b32.cont [12/16] %v9445, 128
  %9567 = vxpose.xlu0.b32.cont [13/16] %v9448, 128
  %9568 = vxpose.xlu0.b32.cont [14/16] %v9451, 128
  %9569 = vxpose.xlu0.b32.cont [15/16] %v9454, 128
  %9570 = vxpose.xlu0.b32.end [16/16] %v9457, 128
  %v9571 = vpop.trf.xlu0
  %v9572 = vpop.trf.xlu0
  %v9573 = vpop.trf.xlu0
  %v9574 = vpop.trf.xlu0
  %v9575 = vpop.trf.xlu0
  %v9576 = vpop.trf.xlu0
  %v9577 = vpop.trf.xlu0
  %v9578 = vpop.trf.xlu0
  %v9579 = vpop.trf.xlu0
  %v9580 = vpop.trf.xlu0
  %v9581 = vpop.trf.xlu0
  %v9582 = vpop.trf.xlu0
  %v9583 = vpop.trf.xlu0
  %v9584 = vpop.trf.xlu0
  %v9585 = vpop.trf.xlu0
  %v9586 = vpop.trf.xlu0
  %v9587 = vxor.u32 %v9475, 2147483648
  %v9588 = vxor.u32 %v9507, 2147483648
  %v9589 = vxor.u32 %v9539, 2147483648
  %v9590 = vxor.u32 %v9571, 2147483648
  %v9591 = vmul.f32 %v9587, 1.442695
  %v9592 = vpow.pop %v9591
  %v9593 = vmul.f32 %v9588, 1.442695
  %v9594 = vpow.pop %v9593
  %v9595 = vmul.f32 %v9589, 1.442695
  %v9596 = vpow.pop %v9595
  %v9597 = vmul.f32 %v9590, 1.442695
  %v9598 = vpow.pop %v9597
  %v9599 = vadd.f32 %v9592, 1.0
  %v9600 = vadd.f32 %v9594, 1.0
  %v9601 = vadd.f32 %v9596, 1.0
  %v9602 = vadd.f32 %v9598, 1.0
  %v9603 = vrcp.pop %v9599
  %v9604 = vmul.f32 %v9599, %v9603
  %v9605 = vsub.f32 1.0, %v9604
  %v9606 = vmul.f32 %v9603, %v9605
  %v9607 = vadd.f32 %v9603, %v9606
  %vm9608 = vweird.f32 %v9599
  %vm9609 = vweird.f32 %v9603
  %vm9610 = vmor %vm9608, %vm9609
  %v9611 = vsel %vm9610, %v9603, %v9607
  %v9612 = vand.u32 2147483647, %v9599
  %vm9613 = vcmp.eq.f32.partialorder %v9612, 8.507059e+37
  %v9614 = vand.u32 %v9599, 2147483648
  %v9615 = vor.u32 1.1754944e-38, %v9614
  %v9616 = vsel %vm9613, %v9615, %v9611
  %v9617 = vmul.f32 1.0, %v9616
  %v9618 = vrcp.pop %v9600
  %v9619 = vmul.f32 %v9600, %v9618
  %v9620 = vsub.f32 1.0, %v9619
  %v9621 = vmul.f32 %v9618, %v9620
  %v9622 = vadd.f32 %v9618, %v9621
  %vm9623 = vweird.f32 %v9600
  %vm9624 = vweird.f32 %v9618
  %vm9625 = vmor %vm9623, %vm9624
  %v9626 = vsel %vm9625, %v9618, %v9622
  %v9627 = vand.u32 2147483647, %v9600
  %vm9628 = vcmp.eq.f32.partialorder %v9627, 8.507059e+37
  %v9629 = vand.u32 %v9600, 2147483648
  %v9630 = vor.u32 1.1754944e-38, %v9629
  %v9631 = vsel %vm9628, %v9630, %v9626
  %v9632 = vmul.f32 1.0, %v9631
  %v9633 = vrcp.pop %v9601
  %v9634 = vmul.f32 %v9601, %v9633
  %v9635 = vsub.f32 1.0, %v9634
  %v9636 = vmul.f32 %v9633, %v9635
  %v9637 = vadd.f32 %v9633, %v9636
  %vm9638 = vweird.f32 %v9601
  %vm9639 = vweird.f32 %v9633
  %vm9640 = vmor %vm9638, %vm9639
  %v9641 = vsel %vm9640, %v9633, %v9637
  %v9642 = vand.u32 2147483647, %v9601
  %vm9643 = vcmp.eq.f32.partialorder %v9642, 8.507059e+37
  %v9644 = vand.u32 %v9601, 2147483648
  %v9645 = vor.u32 1.1754944e-38, %v9644
  %v9646 = vsel %vm9643, %v9645, %v9641
  %v9647 = vmul.f32 1.0, %v9646
  %v9648 = vrcp.pop %v9602
  %v9649 = vmul.f32 %v9602, %v9648
  %v9650 = vsub.f32 1.0, %v9649
  %v9651 = vmul.f32 %v9648, %v9650
  %v9652 = vadd.f32 %v9648, %v9651
  %vm9653 = vweird.f32 %v9602
  %vm9654 = vweird.f32 %v9648
  %vm9655 = vmor %vm9653, %vm9654
  %v9656 = vsel %vm9655, %v9648, %v9652
  %v9657 = vand.u32 2147483647, %v9602
  %vm9658 = vcmp.eq.f32.partialorder %v9657, 8.507059e+37
  %v9659 = vand.u32 %v9602, 2147483648
  %v9660 = vor.u32 1.1754944e-38, %v9659
  %v9661 = vsel %vm9658, %v9660, %v9656
  %v9662 = vmul.f32 1.0, %v9661
  %9663 = vst [vmem:[%s13] sm:$0x7] %v9617
  %9664 = vst [vmem:[%s13 + $0x8] sm:$0x7] %v9632
  %v9667 = vrot.slane %v9647, 5
  %v9668 = vrot.slane %v9662, 5
  %9671 = vst [vmem:[%s13] sm:$0x38] %v9667
  %9672 = vst [vmem:[%s13 + $0x8] sm:$0x38] %v9668
  // Predicated region
  $region54: #{generator_forward.1} parent=0 // pred_check
    _
  $region55: #{generator_forward.1} parent=0 // pred_check_branch
    %9674 = sbr.rel (0) target = $region57
  $region56: #{generator_forward.1} parent=0 // pred_region
    _
  $region57: #{generator_forward.1} parent=0 // pred_fallthru
    _
  // Predicated region
  $region58: #{generator_forward.1} parent=0 // pred_check
    _
  $region59: #{generator_forward.1} parent=0 // pred_check_branch
    %9676 = sbr.rel (0) target = $region61
  $region60: #{generator_forward.1} parent=0 // pred_region
    _
  $region61: #{generator_forward.1} parent=0 // pred_fallthru
    _

</llo_original>
